<compile_context>
chip_gen: v6e
topology: v6e:2x2x1
jax: 0.10.0
libtpu: 0.0.40
codegen_flags: <defaults>
</compile_context>

<pallas_src>
import jax
import jax.numpy as jnp
from jax.experimental import pallas as pl
from jax.experimental.pallas import tpu as pltpu

EPS = 1e-5            # PyTorch BatchNorm2d default eps
LANE = 128            # TPU lane width

_VMEM_LIMIT_CACHE = None


def _vmem_limit():
    """Generation-aware VMEM budget: 3/4 of physical VMEM (48 MiB fallback)."""
    global _VMEM_LIMIT_CACHE
    if _VMEM_LIMIT_CACHE is None:
        try:
            cap = int(pltpu.get_tpu_info().vmem_capacity_bytes)
            _VMEM_LIMIT_CACHE = cap * 3 // 4
        except Exception:
            _VMEM_LIMIT_CACHE = 48 * 1024 * 1024
    return _VMEM_LIMIT_CACHE


def _round_up(x, m):
    return (x + m - 1) // m * m


def _pad_axis(a, axis, new_size):
    if a.shape[axis] == new_size:
        return a
    pads = [(0, 0)] * a.ndim
    pads[axis] = (0, new_size - a.shape[axis])
    return jnp.pad(a, pads)


# ------------------------------ fused conv kernel ----------------------------

def _make_conv_kernel(KH, KW, pad, H, W, Hout, Wout,
                      has_prologue, has_film, res_mode, emit_stats):
    """res_mode in (None, "identity", "proj")."""

    def kernel(*refs):
        it = iter(refs)
        x_ref = next(it)                       # (1, H, W, Cin)
        w_ref = next(it)                       # (KH, KW*Cin, TCO) bf16
        b_ref = next(it)                       # (1, TCO) f32
        if has_prologue:
            scale_ref = next(it)               # (1, Cin) f32
            off_ref = next(it)                 # (1, Cin) f32
        if has_film:
            fs_ref = next(it)                  # (1, 1, TCO) f32
            ft_ref = next(it)                  # (1, 1, TCO) f32
        if res_mode == "proj":
            r_ref = next(it)                   # (1, H, W, Cres)
            rw_ref = next(it)                  # (Cres, TCO) bf16
            rb_ref = next(it)                  # (1, TCO) f32
        elif res_mode == "identity":
            r_ref = next(it)                   # (1, H, W, TCO)
        o_ref = next(it)                       # (1, Hout, Wout, TCO)
        if emit_stats:
            ps_ref = next(it)                  # (1, 2, TCO) f32
        big_ref = next(it)                     # scratch (H+2*pad, Wout, KW*Cin) bf16

        co = pl.program_id(1)
        Cin = x_ref.shape[-1]
        TCO = o_ref.shape[-1]

        # ---- prologue: BN affine + SiLU -> zero-padded, kw-merged bf16 slab.
        # The slab depends only on the image, not on the Cout tile, so it is
        # built once (co == 0) and reused from VMEM scratch for co > 0.
        @pl.when(co == 0)
        def _():
            x = x_ref[0].astype(jnp.float32)                       # (H, W, Cin)
            if has_prologue:
                a = (x * scale_ref[...].reshape(1, 1, Cin)
                     + off_ref[...].reshape(1, 1, Cin))
                a = a * jax.nn.sigmoid(a)                          # SiLU (EUP)
            else:
                a = x
            a = a.astype(jnp.bfloat16)
            if pad > 0:
                big_ref[...] = jnp.zeros_like(big_ref)             # zero halo
            for kw in range(KW):
                lo = max(0, pad - kw)
                hi = min(Wout, W + pad - kw)
                big_ref[pad:pad + H, lo:hi, kw * Cin:(kw + 1) * Cin] = (
                    a[:, lo + kw - pad:hi + kw - pad, :])

        # ---- body: KH dots of K = KW*Cin (bf16 operands, f32 accumulation).
        acc = jnp.zeros((Hout * Wout, TCO), jnp.float32)
        for kh in range(KH):
            slab = big_ref[kh:kh + Hout, :, :].reshape(Hout * Wout, KW * Cin)
            acc = acc + jnp.dot(slab, w_ref[kh],
                                preferred_element_type=jnp.float32)
        out = acc + b_ref[...]

        # ---- epilogue: FiLM, residual, BN statistics for the next BatchNorm.
        if has_film:
            out = out * (1.0 + fs_ref[0]) + ft_ref[0]
        if res_mode == "proj":
            r2 = r_ref[0].astype(jnp.bfloat16).reshape(Hout * Wout, -1)
            out = out + (jnp.dot(r2, rw_ref[...],
                                 preferred_element_type=jnp.float32)
                         + rb_ref[...])
        elif res_mode == "identity":
            out = out + r_ref[0].astype(jnp.float32).reshape(Hout * Wout, TCO)

        if emit_stats:
            s1 = jnp.sum(out, axis=0, keepdims=True)
            s2 = jnp.sum(out * out, axis=0, keepdims=True)
            ps_ref[0] = jnp.concatenate([s1, s2], axis=0)          # (2, TCO)

        o_ref[0] = out.reshape(Hout, Wout, TCO).astype(o_ref.dtype)

    return kernel


def fused_conv(x, w, b, *, pad, prologue=None, film=None, residual=None,
               emit_stats=False):
    """x: (N, H, W, Cin) NHWC with lane-padded channels (unpadded spatially).

    w: (KH, KW, Cin, Cout); pad: symmetric spatial zero padding applied (to the
    post-BN/SiLU tensor) inside the kernel.  prologue=(scale, offset) is a
    per-channel BN affine applied before SiLU; film=(scale, shift) are per-image
    FiLM vectors; residual is (src,) for identity or (src, w1x1, b1x1) for a
    fused 1x1 projection; emit_stats adds an (N, 2, Cout) sum/sumsq output.
    """
    N, H, W, Cin = x.shape
    KH, KW, _, Cout = w.shape
    Hout = H + 2 * pad - KH + 1
    Wout = W + 2 * pad - KW + 1
    TCO = LANE
    assert Cin % LANE == 0 and Cout % LANE == 0

    wm = w.reshape(KH, KW * Cin, Cout).astype(jnp.bfloat16)
    inputs = [x, wm, b.reshape(1, Cout).astype(jnp.float32)]
    in_specs = [
        pl.BlockSpec((1, H, W, Cin), lambda n, co: (n, 0, 0, 0)),
        pl.BlockSpec((KH, KW * Cin, TCO), lambda n, co: (0, 0, co)),
        pl.BlockSpec((1, TCO), lambda n, co: (0, co)),
    ]
    if prologue is not None:
        s, o = prologue
        inputs += [s.reshape(1, Cin).astype(jnp.float32),
                   o.reshape(1, Cin).astype(jnp.float32)]
        in_specs += [pl.BlockSpec((1, Cin), lambda n, co: (0, 0)),
                     pl.BlockSpec((1, Cin), lambda n, co: (0, 0))]
    if film is not None:
        fs, ft = film
        inputs += [fs.reshape(N, 1, Cout).astype(jnp.float32),
                   ft.reshape(N, 1, Cout).astype(jnp.float32)]
        in_specs += [pl.BlockSpec((1, 1, TCO), lambda n, co: (n, 0, co)),
                     pl.BlockSpec((1, 1, TCO), lambda n, co: (n, 0, co))]
    res_mode = None
    if residual is not None:
        if len(residual) == 3:                       # fused 1x1 projection
            rsrc, rw, rb = residual
            res_mode = "proj"
            Cres = rsrc.shape[-1]
            inputs += [rsrc, rw.astype(jnp.bfloat16),
                       rb.reshape(1, Cout).astype(jnp.float32)]
            in_specs += [pl.BlockSpec((1, H, W, Cres), lambda n, co: (n, 0, 0, 0)),
                         pl.BlockSpec((Cres, TCO), lambda n, co: (0, co)),
                         pl.BlockSpec((1, TCO), lambda n, co: (0, co))]
        else:                                        # identity residual
            (rsrc,) = residual
            res_mode = "identity"
            inputs += [rsrc]
            in_specs += [pl.BlockSpec((1, H, W, TCO), lambda n, co: (n, 0, 0, co))]

    if emit_stats:
        out_shape = (jax.ShapeDtypeStruct((N, Hout, Wout, Cout), x.dtype),
                     jax.ShapeDtypeStruct((N, 2, Cout), jnp.float32))
        out_specs = (pl.BlockSpec((1, Hout, Wout, TCO), lambda n, co: (n, 0, 0, co)),
                     pl.BlockSpec((1, 2, TCO), lambda n, co: (n, 0, co)))
    else:
        out_shape = jax.ShapeDtypeStruct((N, Hout, Wout, Cout), x.dtype)
        out_specs = pl.BlockSpec((1, Hout, Wout, TCO), lambda n, co: (n, 0, 0, co))

    kern = _make_conv_kernel(KH, KW, pad, H, W, Hout, Wout,
                             prologue is not None, film is not None,
                             res_mode, emit_stats)
    return pl.pallas_call(
        kern,
        grid=(N, Cout // TCO),
        in_specs=in_specs,
        out_specs=out_specs,
        out_shape=out_shape,
        scratch_shapes=[pltpu.VMEM((H + 2 * pad, Wout, KW * Cin), jnp.bfloat16)],
        compiler_params=pltpu.CompilerParams(
            # Cout axis kept "arbitrary" so the per-image scratch cache keyed on
            # co == 0 stays valid under megacore partitioning of the batch axis.
            dimension_semantics=("parallel", "arbitrary"),
            vmem_limit_bytes=_vmem_limit()),
    )(*inputs)


# ------------------------------ BN helpers (host/XLA) ------------------------

def _bn_affine(gamma, beta, mean, var):
    inv = jax.lax.rsqrt(var + EPS)
    scale = gamma * inv
    return scale, beta - mean * scale


def _moments_from_psum(psum, count):
    # NOTE: single-pass E[x^2]-E[x]^2 in f32, guarded with max(var, 0).
    s = jnp.sum(psum.astype(jnp.float32), axis=0)          # (2, C)
    mean = s[0] / count
    var = jnp.maximum(s[1] / count - mean * mean, 0.0)
    return mean, var


# ------------------------ stride-2 downsample conv ---------------------------
# Space-to-depth on the padded input turns the 3x3 stride-2 conv into a 2x2
# stride-1 "valid" conv over 4*C phase channels (no strided output gather).

def down_conv_stride2(x, w, b):
    N, H, W, C = x.shape
    assert H % 2 == 0 and W % 2 == 0
    Cout = w.shape[-1]
    xp = jnp.pad(x, ((0, 0), (1, 1), (1, 1), (0, 0)))
    Hp, Wp = H + 2, W + 2
    xs = xp.reshape(N, Hp // 2, 2, Wp // 2, 2, C)
    xs = xs.transpose(0, 1, 3, 2, 4, 5).reshape(N, Hp // 2, Wp // 2, 4 * C)
    w4 = jnp.zeros((4, 4, C, Cout), w.dtype).at[:3, :3].set(w)
    ws = w4.reshape(2, 2, 2, 2, C, Cout).transpose(0, 2, 1, 3, 4, 5)
    ws = ws.reshape(2, 2, 4 * C, Cout)
    return fused_conv(xs, ws, b, pad=0)


# ------------------------------ module forward -------------------------------

def emb_res_blk(x, t_emb_p, p, bn1_mean, bn1_var, emit_out_stats):
    """x: (N, H, W, Cin_p) NHWC (lane-padded).  Returns (N, H, W, Cout_p) and,
    if emit_out_stats, the (mean, var) of the output for the next BatchNorm."""
    N, H, W, _ = x.shape
    Cout = p["conv1_w"].shape[-1]
    count = float(N * H * W)

    s1, o1 = _bn_affine(p["bn1_gamma"], p["bn1_beta"], bn1_mean, bn1_var)

    # Timestep-embedding FiLM projection: M = batch rows, pure launch overhead
    # in a pallas_call, so it runs as a plain XLA matmul.
    emb = jnp.dot(jax.nn.silu(t_emb_p), p["emb_w"]) + p["emb_b"]   # (N, 2*Cout)
    film = (emb[:, :Cout], emb[:, Cout:])

    # conv_block 1 (BN -> SiLU -> Conv3x3) fused; FiLM in the epilogue, which
    # also emits the channel sums feeding BN2 (no extra HBM pass over h).
    h, psum1 = fused_conv(x, p["conv1_w"], p["conv1_b"], pad=1,
                          prologue=(s1, o1), film=film, emit_stats=True)
    mean2, var2 = _moments_from_psum(psum1, count)
    s2, o2 = _bn_affine(p["bn2_gamma"], p["bn2_beta"], mean2, var2)

    # conv_block 2 fused with the residual branch (identity or 1x1 projection)
    # folded into the epilogue (one extra MXU dot, no HBM round trip).
    residual = (x, p["id_w"], p["id_b"]) if "id_w" in p else (x,)
    outs = fused_conv(h, p["conv2_w"], p["conv2_b"], pad=1,
                      prologue=(s2, o2), residual=residual,
                      emit_stats=emit_out_stats)
    if emit_out_stats:
        y, psum2 = outs
        return y, _moments_from_psum(psum2, count)
    return outs, None


def _pad_params(params, in_dim, emb_dim):
    """Zero-pad every channel dim to a multiple of 128 (padded lanes stay 0)."""
    emb_p = _round_up(emb_dim, LANE)
    out = {"res_blks": []}
    cin = in_dim
    for blk in params["res_blks"]:
        cout = blk["conv1_w"].shape[-1]
        cin_p, cout_p = _round_up(cin, LANE), _round_up(cout, LANE)
        nb = {
            "bn1_gamma": _pad_axis(blk["bn1_gamma"], 0, cin_p),
            "bn1_beta": _pad_axis(blk["bn1_beta"], 0, cin_p),
            "conv1_w": _pad_axis(_pad_axis(blk["conv1_w"], 2, cin_p), 3, cout_p),
            "conv1_b": _pad_axis(blk["conv1_b"], 0, cout_p),
            "bn2_gamma": _pad_axis(blk["bn2_gamma"], 0, cout_p),
            "bn2_beta": _pad_axis(blk["bn2_beta"], 0, cout_p),
            "conv2_w": _pad_axis(_pad_axis(blk["conv2_w"], 2, cout_p), 3, cout_p),
            "conv2_b": _pad_axis(blk["conv2_b"], 0, cout_p),
        }
        ew, eb = blk["emb_w"], blk["emb_b"]
        ew_p = jnp.zeros((emb_p, 2 * cout_p), ew.dtype)
        ew_p = ew_p.at[:emb_dim, :cout].set(ew[:, :cout])
        ew_p = ew_p.at[:emb_dim, cout_p:cout_p + cout].set(ew[:, cout:])
        eb_p = jnp.zeros((2 * cout_p,), eb.dtype)
        eb_p = eb_p.at[:cout].set(eb[:cout]).at[cout_p:cout_p + cout].set(eb[cout:])
        nb["emb_w"], nb["emb_b"] = ew_p, eb_p
        if "id_w" in blk:
            nb["id_w"] = _pad_axis(_pad_axis(blk["id_w"], 0, cin_p), 1, cout_p)
            nb["id_b"] = _pad_axis(blk["id_b"], 0, cout_p)
        out["res_blks"].append(nb)
        cin = cout
    if params["down_w"] is not None:
        cout = params["down_w"].shape[-1]
        cout_p = _round_up(cout, LANE)
        out["down_w"] = _pad_axis(_pad_axis(params["down_w"], 2, cout_p), 3, cout_p)
        out["down_b"] = _pad_axis(params["down_b"], 0, cout_p)
    else:
        out["down_w"] = None
        out["down_b"] = None
    return out


def down_blk_forward(x_nchw, t_emb, params):
    N, Cin, H, W = x_nchw.shape
    emb_dim = t_emb.shape[-1]
    out_dim = params["res_blks"][-1]["conv1_w"].shape[-1]

    # NCHW -> NHWC, lane-pad channels; pad the timestep embedding likewise.
    x = _pad_axis(jnp.transpose(x_nchw, (0, 2, 3, 1)), 3, _round_up(Cin, LANE))
    t_emb_p = _pad_axis(t_emb, 1, _round_up(emb_dim, LANE))
    pp = _pad_params(params, Cin, emb_dim)

    # BN1 stats of the first block come from a single cheap XLA reduction over
    # x; every later BatchNorm's stats are emitted by the conv epilogues.
    mean = jnp.mean(x, axis=(0, 1, 2))
    var = jnp.var(x, axis=(0, 1, 2))

    saved = []                                        # mirrors self.saved
    n_blocks = len(pp["res_blks"])
    for i, blk in enumerate(pp["res_blks"]):
        need_stats = i + 1 < n_blocks
        x, nxt = emb_res_blk(x, t_emb_p, blk, mean, var, need_stats)
        saved.append(x)
        if need_stats:
            mean, var = nxt
    if pp["down_w"] is not None:
        x = down_conv_stride2(x, pp["down_w"], pp["down_b"])
        saved.append(x)

    # Converted back to NCHW only to match the PyTorch interface.
    def to_nchw(a):
        return jnp.transpose(a[..., :out_dim], (0, 3, 1, 2))
    return to_nchw(x), [to_nchw(s) for s in saved]


# ------------------------------ parameter init -------------------------------

def init_params(key, emb_dim, in_dim, out_dim, layers=1, add_down=True):
    params = {"res_blks": []}
    for i in range(layers):
        cin = in_dim if i == 0 else out_dim
        key, *ks = jax.random.split(key, 9)
        blk = {
            "bn1_gamma": jnp.ones((cin,), jnp.float32),
            "bn1_beta": jnp.zeros((cin,), jnp.float32),
            "conv1_w": 0.1 * jax.random.normal(ks[0], (3, 3, cin, out_dim), jnp.float32),
            "conv1_b": 0.1 * jax.random.normal(ks[1], (out_dim,), jnp.float32),
            "emb_w": 0.1 * jax.random.normal(ks[2], (emb_dim, 2 * out_dim), jnp.float32),
            "emb_b": 0.1 * jax.random.normal(ks[3], (2 * out_dim,), jnp.float32),
            "bn2_gamma": jnp.ones((out_dim,), jnp.float32),
            "bn2_beta": jnp.zeros((out_dim,), jnp.float32),
            "conv2_w": 0.1 * jax.random.normal(ks[4], (3, 3, out_dim, out_dim), jnp.float32),
            "conv2_b": 0.1 * jax.random.normal(ks[5], (out_dim,), jnp.float32),
        }
        if cin != out_dim:
            blk["id_w"] = 0.1 * jax.random.normal(ks[6], (cin, out_dim), jnp.float32)
            blk["id_b"] = 0.1 * jax.random.normal(ks[7], (out_dim,), jnp.float32)
        params["res_blks"].append(blk)
    if add_down:
        key, k1, k2 = jax.random.split(key, 3)
        params["down_w"] = 0.1 * jax.random.normal(k1, (3, 3, out_dim, out_dim), jnp.float32)
        params["down_b"] = 0.1 * jax.random.normal(k2, (out_dim,), jnp.float32)
    else:
        params["down_w"] = None
        params["down_b"] = None
    return params


# ----------------------------------- main ------------------------------------

if __name__ == "__main__":
    key = jax.random.PRNGKey(0)
    kx, kt, kp = jax.random.split(key, 3)

    N, Cin, H, W = 2, 4, 16, 16       # x: NCHW, PyTorch convention
    emb_dim, Cout = 16, 8

    x = jax.random.normal(kx, (N, Cin, H, W), jnp.float32)
    t_emb = jax.random.normal(kt, (N, emb_dim), jnp.float32)
    params = init_params(kp, emb_dim, Cin, Cout, layers=1, add_down=True)

    fwd = jax.jit(down_blk_forward)
    out, saved = fwd(x, t_emb, params)
    out = jax.block_until_ready(out)

    assert out.shape == (N, Cout, H // 2, W // 2), out.shape
    assert out.dtype == jnp.float32
    assert len(saved) == 2            # one per res block + downsample (save_intermediate)
    assert saved[0].shape == (N, Cout, H, W)
    assert saved[1].shape == (N, Cout, H // 2, W // 2)
    print("KERNEL_OK")
</pallas_src>

<mosaic_0001>
module attributes {stable_mosaic.version = 11 : i64} {
  func.func @kernel(%arg0: i32, %arg1: i32, %arg2: memref<1x16x16x128xf32, #tpu.memory_space<vmem>>, %arg3: memref<3x384x128xbf16, #tpu.memory_space<vmem>>, %arg4: memref<1x128xf32, #tpu.memory_space<vmem>>, %arg5: memref<1x128xf32, #tpu.memory_space<vmem>>, %arg6: memref<1x128xf32, #tpu.memory_space<vmem>>, %arg7: memref<1x1x128xf32, #tpu.memory_space<vmem>>, %arg8: memref<1x1x128xf32, #tpu.memory_space<vmem>>, %arg9: memref<1x16x16x128xf32, #tpu.memory_space<vmem>>, %arg10: memref<1x2x128xf32, #tpu.memory_space<vmem>>, %arg11: memref<18x16x384xbf16, #tpu.memory_space<vmem>>) attributes {dimension_semantics = [#tpu.dimension_semantics<parallel>, #tpu.dimension_semantics<arbitrary>], iteration_bounds = array<i64: 2, 1>, scalar_prefetch = 0 : i64, scratch_operands = 1 : i64, tpu.core_type = #tpu.core_type<tc>, window_params = [{transform_indices = @transform_0, window_bounds = array<i64: 1, 16, 16, 128>}, {transform_indices = @transform_1, window_bounds = array<i64: 3, 384, 128>}, {transform_indices = @transform_2, window_bounds = array<i64: 1, 128>}, {pipeline_mode = #tpu.pipeline_mode<synchronous>, transform_indices = @transform_3, window_bounds = array<i64: 1, 128>}, {pipeline_mode = #tpu.pipeline_mode<synchronous>, transform_indices = @transform_4, window_bounds = array<i64: 1, 128>}, {transform_indices = @transform_5, window_bounds = array<i64: 1, 1, 128>}, {transform_indices = @transform_6, window_bounds = array<i64: 1, 1, 128>}, {transform_indices = @transform_7, window_bounds = array<i64: 1, 16, 16, 128>}, {transform_indices = @transform_8, window_bounds = array<i64: 1, 2, 128>}]} {
    %c0_i32 = arith.constant 0 : i32
    %0 = arith.cmpi eq, %arg1, %c0_i32 : i32
    %1 = arith.extui %0 : i1 to i32
    %c0_i32_0 = arith.constant 0 : i32
    %2 = arith.cmpi ne, %1, %c0_i32_0 : i32
    scf.if %2 {
      %c0_37 = arith.constant 0 : index
      %c0_38 = arith.constant 0 : index
      %c0_39 = arith.constant 0 : index
      %c0_40 = arith.constant 0 : index
      %48 = vector.load %arg2[%c0_37, %c0_38, %c0_39, %c0_40] : memref<1x16x16x128xf32, #tpu.memory_space<vmem>>, vector<1x16x16x128xf32>
      %49 = vector.shape_cast %48 : vector<1x16x16x128xf32> to vector<16x16x128xf32>
      %c0_41 = arith.constant 0 : index
      %c0_42 = arith.constant 0 : index
      %50 = vector.load %arg5[%c0_41, %c0_42] : memref<1x128xf32, #tpu.memory_space<vmem>>, vector<1x128xf32>
      %51 = vector.shape_cast %50 : vector<1x128xf32> to vector<1x1x128xf32>
      %52 = vector.broadcast %51 : vector<1x1x128xf32> to vector<16x16x128xf32>
      %53 = arith.mulf %49, %52 : vector<16x16x128xf32>
      %c0_43 = arith.constant 0 : index
      %c0_44 = arith.constant 0 : index
      %54 = vector.load %arg6[%c0_43, %c0_44] : memref<1x128xf32, #tpu.memory_space<vmem>>, vector<1x128xf32>
      %55 = vector.shape_cast %54 : vector<1x128xf32> to vector<1x1x128xf32>
      %56 = vector.broadcast %55 : vector<1x1x128xf32> to vector<16x16x128xf32>
      %57 = arith.addf %53, %56 : vector<16x16x128xf32>
      %58 = arith.negf %57 : vector<16x16x128xf32>
      %59 = math.exp %58 : vector<16x16x128xf32>
      %cst_45 = arith.constant 1.000000e+00 : f32
      %60 = vector.broadcast %cst_45 : f32 to vector<16x16x128xf32>
      %61 = arith.addf %60, %59 : vector<16x16x128xf32>
      %62 = arith.divf %60, %61 : vector<16x16x128xf32>
      %63 = arith.mulf %57, %62 : vector<16x16x128xf32>
      %64 = arith.truncf %63 : vector<16x16x128xf32> to vector<16x16x128xbf16>
      %cst_46 = arith.constant 0.000000e+00 : bf16
      %65 = vector.broadcast %cst_46 : bf16 to vector<18x16x384xbf16>
      %c0_47 = arith.constant 0 : index
      %c0_48 = arith.constant 0 : index
      %c0_49 = arith.constant 0 : index
      %66 = vector.load %arg11[%c0_47, %c0_48, %c0_49] : memref<18x16x384xbf16, #tpu.memory_space<vmem>>, vector<18x16x384xbf16>
      tpu.vector_store %arg11[%c0_47, %c0_48, %c0_49], %65 {strides = array<i32>} : memref<18x16x384xbf16, #tpu.memory_space<vmem>>, vector<18x16x384xbf16>,
      %67 = vector.extract_strided_slice %64 {offsets = [0, 0, 0], sizes = [16, 15, 128], strides = [1, 1, 1]} : vector<16x16x128xbf16> to vector<16x15x128xbf16>
      %c1_50 = arith.constant 1 : index
      %c1_51 = arith.constant 1 : index
      %c0_52 = arith.constant 0 : index
      %68 = vector.load %arg11[%c1_50, %c1_51, %c0_52] : memref<18x16x384xbf16, #tpu.memory_space<vmem>>, vector<16x15x128xbf16>
      tpu.vector_store %arg11[%c1_50, %c1_51, %c0_52], %67 {strides = array<i32>} : memref<18x16x384xbf16, #tpu.memory_space<vmem>>, vector<16x15x128xbf16>,
      %c1_53 = arith.constant 1 : index
      %c0_54 = arith.constant 0 : index
      %c128 = arith.constant 128 : index
      %69 = vector.load %arg11[%c1_53, %c0_54, %c128] : memref<18x16x384xbf16, #tpu.memory_space<vmem>>, vector<16x16x128xbf16>
      tpu.vector_store %arg11[%c1_53, %c0_54, %c128], %64 {strides = array<i32>} : memref<18x16x384xbf16, #tpu.memory_space<vmem>>, vector<16x16x128xbf16>,
      %70 = vector.extract_strided_slice %64 {offsets = [0, 1, 0], sizes = [16, 15, 128], strides = [1, 1, 1]} : vector<16x16x128xbf16> to vector<16x15x128xbf16>
      %c1_55 = arith.constant 1 : index
      %c0_56 = arith.constant 0 : index
      %c256 = arith.constant 256 : index
      %71 = vector.load %arg11[%c1_55, %c0_56, %c256] : memref<18x16x384xbf16, #tpu.memory_space<vmem>>, vector<16x15x128xbf16>
      tpu.vector_store %arg11[%c1_55, %c0_56, %c256], %70 {strides = array<i32>} : memref<18x16x384xbf16, #tpu.memory_space<vmem>>, vector<16x15x128xbf16>,
    } else {
    }
    %cst = arith.constant 0.000000e+00 : f32
    %3 = vector.broadcast %cst : f32 to vector<256x128xf32>
    %c0 = arith.constant 0 : index
    %c0_1 = arith.constant 0 : index
    %c0_2 = arith.constant 0 : index
    %4 = vector.load %arg11[%c0, %c0_1, %c0_2] : memref<18x16x384xbf16, #tpu.memory_space<vmem>>, vector<16x16x384xbf16>
    %5 = vector.shape_cast %4 : vector<16x16x384xbf16> to vector<256x384xbf16>
    %c0_3 = arith.constant 0 : index
    %c0_4 = arith.constant 0 : index
    %c0_5 = arith.constant 0 : index
    %6 = vector.load %arg3[%c0_3, %c0_4, %c0_5] : memref<3x384x128xbf16, #tpu.memory_space<vmem>>, vector<1x384x128xbf16>
    %7 = vector.shape_cast %6 : vector<1x384x128xbf16> to vector<384x128xbf16>
    %cst_6 = arith.constant dense<0.000000e+00> : vector<256x128xf32>
    %8 = tpu.matmul %5, %7, %cst_6 {dimension_numbers = #tpu.dot_dimension_numbers<[1], [0], [0], [1], [0, 0, 1, 1], [], []>} : vector<256x384xbf16>, vector<384x128xbf16>, vector<256x128xf32> -> vector<256x128xf32>
    %9 = arith.addf %3, %8 : vector<256x128xf32>
    %c1 = arith.constant 1 : index
    %c0_7 = arith.constant 0 : index
    %c0_8 = arith.constant 0 : index
    %10 = vector.load %arg11[%c1, %c0_7, %c0_8] : memref<18x16x384xbf16, #tpu.memory_space<vmem>>, vector<16x16x384xbf16>
    %11 = vector.shape_cast %10 : vector<16x16x384xbf16> to vector<256x384xbf16>
    %c1_9 = arith.constant 1 : index
    %c0_10 = arith.constant 0 : index
    %c0_11 = arith.constant 0 : index
    %12 = vector.load %arg3[%c1_9, %c0_10, %c0_11] : memref<3x384x128xbf16, #tpu.memory_space<vmem>>, vector<1x384x128xbf16>
    %13 = vector.shape_cast %12 : vector<1x384x128xbf16> to vector<384x128xbf16>
    %cst_12 = arith.constant dense<0.000000e+00> : vector<256x128xf32>
    %14 = tpu.matmul %11, %13, %cst_12 {dimension_numbers = #tpu.dot_dimension_numbers<[1], [0], [0], [1], [0, 0, 1, 1], [], []>} : vector<256x384xbf16>, vector<384x128xbf16>, vector<256x128xf32> -> vector<256x128xf32>
    %15 = arith.addf %9, %14 : vector<256x128xf32>
    %c2 = arith.constant 2 : index
    %c0_13 = arith.constant 0 : index
    %c0_14 = arith.constant 0 : index
    %16 = vector.load %arg11[%c2, %c0_13, %c0_14] : memref<18x16x384xbf16, #tpu.memory_space<vmem>>, vector<16x16x384xbf16>
    %17 = vector.shape_cast %16 : vector<16x16x384xbf16> to vector<256x384xbf16>
    %c2_15 = arith.constant 2 : index
    %c0_16 = arith.constant 0 : index
    %c0_17 = arith.constant 0 : index
    %18 = vector.load %arg3[%c2_15, %c0_16, %c0_17] : memref<3x384x128xbf16, #tpu.memory_space<vmem>>, vector<1x384x128xbf16>
    %19 = vector.shape_cast %18 : vector<1x384x128xbf16> to vector<384x128xbf16>
    %cst_18 = arith.constant dense<0.000000e+00> : vector<256x128xf32>
    %20 = tpu.matmul %17, %19, %cst_18 {dimension_numbers = #tpu.dot_dimension_numbers<[1], [0], [0], [1], [0, 0, 1, 1], [], []>} : vector<256x384xbf16>, vector<384x128xbf16>, vector<256x128xf32> -> vector<256x128xf32>
    %21 = arith.addf %15, %20 : vector<256x128xf32>
    %c0_19 = arith.constant 0 : index
    %c0_20 = arith.constant 0 : index
    %22 = vector.load %arg4[%c0_19, %c0_20] : memref<1x128xf32, #tpu.memory_space<vmem>>, vector<1x128xf32>
    %23 = vector.broadcast %22 : vector<1x128xf32> to vector<256x128xf32>
    %24 = arith.addf %21, %23 : vector<256x128xf32>
    %c0_21 = arith.constant 0 : index
    %c0_22 = arith.constant 0 : index
    %c0_23 = arith.constant 0 : index
    %25 = vector.load %arg7[%c0_21, %c0_22, %c0_23] : memref<1x1x128xf32, #tpu.memory_space<vmem>>, vector<1x1x128xf32>
    %26 = vector.shape_cast %25 : vector<1x1x128xf32> to vector<1x128xf32>
    %cst_24 = arith.constant 1.000000e+00 : f32
    %27 = vector.broadcast %cst_24 : f32 to vector<1x128xf32>
    %28 = arith.addf %27, %26 : vector<1x128xf32>
    %29 = vector.broadcast %28 : vector<1x128xf32> to vector<256x128xf32>
    %30 = arith.mulf %24, %29 : vector<256x128xf32>
    %c0_25 = arith.constant 0 : index
    %c0_26 = arith.constant 0 : index
    %c0_27 = arith.constant 0 : index
    %31 = vector.load %arg8[%c0_25, %c0_26, %c0_27] : memref<1x1x128xf32, #tpu.memory_space<vmem>>, vector<1x1x128xf32>
    %32 = vector.shape_cast %31 : vector<1x1x128xf32> to vector<1x128xf32>
    %33 = vector.broadcast %32 : vector<1x128xf32> to vector<256x128xf32>
    %34 = arith.addf %30, %33 : vector<256x128xf32>
    %cst_28 = arith.constant dense<0.000000e+00> : vector<128xf32>
    %35 = vector.multi_reduction <add>, %34, %cst_28 [0] : vector<256x128xf32> to vector<128xf32>
    %36 = vector.shape_cast %35 : vector<128xf32> to vector<1x128xf32>
    %37 = arith.mulf %34, %34 : vector<256x128xf32>
    %cst_29 = arith.constant dense<0.000000e+00> : vector<128xf32>
    %38 = vector.multi_reduction <add>, %37, %cst_29 [0] : vector<256x128xf32> to vector<128xf32>
    %39 = vector.shape_cast %38 : vector<128xf32> to vector<1x128xf32>
    %40 = tpu.concatenate %36, %39 in 0 : vector<1x128xf32>, vector<1x128xf32> -> vector<2x128xf32>
    %c0_30 = arith.constant 0 : index
    %c0_31 = arith.constant 0 : index
    %c0_32 = arith.constant 0 : index
    %41 = vector.load %arg10[%c0_30, %c0_31, %c0_32] : memref<1x2x128xf32, #tpu.memory_space<vmem>>, vector<1x2x128xf32>
    %42 = vector.shape_cast %41 : vector<1x2x128xf32> to vector<2x128xf32>
    %43 = vector.shape_cast %40 : vector<2x128xf32> to vector<1x2x128xf32>
    tpu.vector_store %arg10[%c0_30, %c0_31, %c0_32], %43 {strides = array<i32>} : memref<1x2x128xf32, #tpu.memory_space<vmem>>, vector<1x2x128xf32>,
    %44 = vector.shape_cast %34 : vector<256x128xf32> to vector<16x16x128xf32>
    %c0_33 = arith.constant 0 : index
    %c0_34 = arith.constant 0 : index
    %c0_35 = arith.constant 0 : index
    %c0_36 = arith.constant 0 : index
    %45 = vector.load %arg9[%c0_33, %c0_34, %c0_35, %c0_36] : memref<1x16x16x128xf32, #tpu.memory_space<vmem>>, vector<1x16x16x128xf32>
    %46 = vector.shape_cast %45 : vector<1x16x16x128xf32> to vector<16x16x128xf32>
    %47 = vector.shape_cast %44 : vector<16x16x128xf32> to vector<1x16x16x128xf32>
    tpu.vector_store %arg9[%c0_33, %c0_34, %c0_35, %c0_36], %47 {strides = array<i32>} : memref<1x16x16x128xf32, #tpu.memory_space<vmem>>, vector<1x16x16x128xf32>,
    return
  }
  func.func @transform_0(%arg0: i32, %arg1: i32) -> (i32, i32, i32, i32) {
    %c0_i32 = arith.constant 0 : i32
    %c0_i32_0 = arith.constant 0 : i32
    %c0_i32_1 = arith.constant 0 : i32
    %c0_i32_2 = arith.constant 0 : i32
    return %arg0, %c0_i32, %c0_i32_0, %c0_i32_1 : i32, i32, i32, i32
  }
  func.func @transform_1(%arg0: i32, %arg1: i32) -> (i32, i32, i32) {
    %c0_i32 = arith.constant 0 : i32
    %c0_i32_0 = arith.constant 0 : i32
    %c0_i32_1 = arith.constant 0 : i32
    return %c0_i32, %c0_i32_0, %arg1 : i32, i32, i32
  }
  func.func @transform_2(%arg0: i32, %arg1: i32) -> (i32, i32) {
    %c0_i32 = arith.constant 0 : i32
    %c0_i32_0 = arith.constant 0 : i32
    return %c0_i32, %arg1 : i32, i32
  }
  func.func @transform_3(%arg0: i32, %arg1: i32) -> (i32, i32) {
    %c0_i32 = arith.constant 0 : i32
    %c0_i32_0 = arith.constant 0 : i32
    %c0_i32_1 = arith.constant 0 : i32
    return %c0_i32, %c0_i32_0 : i32, i32
  }
  func.func @transform_4(%arg0: i32, %arg1: i32) -> (i32, i32) {
    %c0_i32 = arith.constant 0 : i32
    %c0_i32_0 = arith.constant 0 : i32
    %c0_i32_1 = arith.constant 0 : i32
    return %c0_i32, %c0_i32_0 : i32, i32
  }
  func.func @transform_5(%arg0: i32, %arg1: i32) -> (i32, i32, i32) {
    %c0_i32 = arith.constant 0 : i32
    %c0_i32_0 = arith.constant 0 : i32
    return %arg0, %c0_i32, %arg1 : i32, i32, i32
  }
  func.func @transform_6(%arg0: i32, %arg1: i32) -> (i32, i32, i32) {
    %c0_i32 = arith.constant 0 : i32
    %c0_i32_0 = arith.constant 0 : i32
    return %arg0, %c0_i32, %arg1 : i32, i32, i32
  }
  func.func @transform_7(%arg0: i32, %arg1: i32) -> (i32, i32, i32, i32) {
    %c0_i32 = arith.constant 0 : i32
    %c0_i32_0 = arith.constant 0 : i32
    %c0_i32_1 = arith.constant 0 : i32
    return %arg0, %c0_i32, %c0_i32_0, %arg1 : i32, i32, i32, i32
  }
  func.func @transform_8(%arg0: i32, %arg1: i32) -> (i32, i32, i32) {
    %c0_i32 = arith.constant 0 : i32
    %c0_i32_0 = arith.constant 0 : i32
    return %arg0, %c0_i32, %arg1 : i32, i32, i32
  }
}

module attributes {stable_mosaic.version = 11 : i64} {
  func.func @kernel(%arg0: i32, %arg1: i32, %arg2: memref<1x16x16x128xf32, #tpu.memory_space<vmem>>, %arg3: memref<3x384x128xbf16, #tpu.memory_space<vmem>>, %arg4: memref<1x128xf32, #tpu.memory_space<vmem>>, %arg5: memref<1x128xf32, #tpu.memory_space<vmem>>, %arg6: memref<1x128xf32, #tpu.memory_space<vmem>>, %arg7: memref<1x16x16x128xf32, #tpu.memory_space<vmem>>, %arg8: memref<128x128xbf16, #tpu.memory_space<vmem>>, %arg9: memref<1x128xf32, #tpu.memory_space<vmem>>, %arg10: memref<1x16x16x128xf32, #tpu.memory_space<vmem>>, %arg11: memref<18x16x384xbf16, #tpu.memory_space<vmem>>) attributes {dimension_semantics = [#tpu.dimension_semantics<parallel>, #tpu.dimension_semantics<arbitrary>], iteration_bounds = array<i64: 2, 1>, scalar_prefetch = 0 : i64, scratch_operands = 1 : i64, tpu.core_type = #tpu.core_type<tc>, window_params = [{transform_indices = @transform_0, window_bounds = array<i64: 1, 16, 16, 128>}, {transform_indices = @transform_1, window_bounds = array<i64: 3, 384, 128>}, {transform_indices = @transform_2, window_bounds = array<i64: 1, 128>}, {pipeline_mode = #tpu.pipeline_mode<synchronous>, transform_indices = @transform_3, window_bounds = array<i64: 1, 128>}, {pipeline_mode = #tpu.pipeline_mode<synchronous>, transform_indices = @transform_4, window_bounds = array<i64: 1, 128>}, {transform_indices = @transform_5, window_bounds = array<i64: 1, 16, 16, 128>}, {transform_indices = @transform_6, window_bounds = array<i64: 128, 128>}, {transform_indices = @transform_7, window_bounds = array<i64: 1, 128>}, {transform_indices = @transform_8, window_bounds = array<i64: 1, 16, 16, 128>}]} {
    %c0_i32 = arith.constant 0 : i32
    %0 = arith.cmpi eq, %arg1, %c0_i32 : i32
    %1 = arith.extui %0 : i1 to i32
    %c0_i32_0 = arith.constant 0 : i32
    %2 = arith.cmpi ne, %1, %c0_i32_0 : i32
    scf.if %2 {
      %c0_34 = arith.constant 0 : index
      %c0_35 = arith.constant 0 : index
      %c0_36 = arith.constant 0 : index
      %c0_37 = arith.constant 0 : index
      %39 = vector.load %arg2[%c0_34, %c0_35, %c0_36, %c0_37] : memref<1x16x16x128xf32, #tpu.memory_space<vmem>>, vector<1x16x16x128xf32>
      %40 = vector.shape_cast %39 : vector<1x16x16x128xf32> to vector<16x16x128xf32>
      %c0_38 = arith.constant 0 : index
      %c0_39 = arith.constant 0 : index
      %41 = vector.load %arg5[%c0_38, %c0_39] : memref<1x128xf32, #tpu.memory_space<vmem>>, vector<1x128xf32>
      %42 = vector.shape_cast %41 : vector<1x128xf32> to vector<1x1x128xf32>
      %43 = vector.broadcast %42 : vector<1x1x128xf32> to vector<16x16x128xf32>
      %44 = arith.mulf %40, %43 : vector<16x16x128xf32>
      %c0_40 = arith.constant 0 : index
      %c0_41 = arith.constant 0 : index
      %45 = vector.load %arg6[%c0_40, %c0_41] : memref<1x128xf32, #tpu.memory_space<vmem>>, vector<1x128xf32>
      %46 = vector.shape_cast %45 : vector<1x128xf32> to vector<1x1x128xf32>
      %47 = vector.broadcast %46 : vector<1x1x128xf32> to vector<16x16x128xf32>
      %48 = arith.addf %44, %47 : vector<16x16x128xf32>
      %49 = arith.negf %48 : vector<16x16x128xf32>
      %50 = math.exp %49 : vector<16x16x128xf32>
      %cst_42 = arith.constant 1.000000e+00 : f32
      %51 = vector.broadcast %cst_42 : f32 to vector<16x16x128xf32>
      %52 = arith.addf %51, %50 : vector<16x16x128xf32>
      %53 = arith.divf %51, %52 : vector<16x16x128xf32>
      %54 = arith.mulf %48, %53 : vector<16x16x128xf32>
      %55 = arith.truncf %54 : vector<16x16x128xf32> to vector<16x16x128xbf16>
      %cst_43 = arith.constant 0.000000e+00 : bf16
      %56 = vector.broadcast %cst_43 : bf16 to vector<18x16x384xbf16>
      %c0_44 = arith.constant 0 : index
      %c0_45 = arith.constant 0 : index
      %c0_46 = arith.constant 0 : index
      %57 = vector.load %arg11[%c0_44, %c0_45, %c0_46] : memref<18x16x384xbf16, #tpu.memory_space<vmem>>, vector<18x16x384xbf16>
      tpu.vector_store %arg11[%c0_44, %c0_45, %c0_46], %56 {strides = array<i32>} : memref<18x16x384xbf16, #tpu.memory_space<vmem>>, vector<18x16x384xbf16>,
      %58 = vector.extract_strided_slice %55 {offsets = [0, 0, 0], sizes = [16, 15, 128], strides = [1, 1, 1]} : vector<16x16x128xbf16> to vector<16x15x128xbf16>
      %c1_47 = arith.constant 1 : index
      %c1_48 = arith.constant 1 : index
      %c0_49 = arith.constant 0 : index
      %59 = vector.load %arg11[%c1_47, %c1_48, %c0_49] : memref<18x16x384xbf16, #tpu.memory_space<vmem>>, vector<16x15x128xbf16>
      tpu.vector_store %arg11[%c1_47, %c1_48, %c0_49], %58 {strides = array<i32>} : memref<18x16x384xbf16, #tpu.memory_space<vmem>>, vector<16x15x128xbf16>,
      %c1_50 = arith.constant 1 : index
      %c0_51 = arith.constant 0 : index
      %c128 = arith.constant 128 : index
      %60 = vector.load %arg11[%c1_50, %c0_51, %c128] : memref<18x16x384xbf16, #tpu.memory_space<vmem>>, vector<16x16x128xbf16>
      tpu.vector_store %arg11[%c1_50, %c0_51, %c128], %55 {strides = array<i32>} : memref<18x16x384xbf16, #tpu.memory_space<vmem>>, vector<16x16x128xbf16>,
      %61 = vector.extract_strided_slice %55 {offsets = [0, 1, 0], sizes = [16, 15, 128], strides = [1, 1, 1]} : vector<16x16x128xbf16> to vector<16x15x128xbf16>
      %c1_52 = arith.constant 1 : index
      %c0_53 = arith.constant 0 : index
      %c256 = arith.constant 256 : index
      %62 = vector.load %arg11[%c1_52, %c0_53, %c256] : memref<18x16x384xbf16, #tpu.memory_space<vmem>>, vector<16x15x128xbf16>
      tpu.vector_store %arg11[%c1_52, %c0_53, %c256], %61 {strides = array<i32>} : memref<18x16x384xbf16, #tpu.memory_space<vmem>>, vector<16x15x128xbf16>,
    } else {
    }
    %cst = arith.constant 0.000000e+00 : f32
    %3 = vector.broadcast %cst : f32 to vector<256x128xf32>
    %c0 = arith.constant 0 : index
    %c0_1 = arith.constant 0 : index
    %c0_2 = arith.constant 0 : index
    %4 = vector.load %arg11[%c0, %c0_1, %c0_2] : memref<18x16x384xbf16, #tpu.memory_space<vmem>>, vector<16x16x384xbf16>
    %5 = vector.shape_cast %4 : vector<16x16x384xbf16> to vector<256x384xbf16>
    %c0_3 = arith.constant 0 : index
    %c0_4 = arith.constant 0 : index
    %c0_5 = arith.constant 0 : index
    %6 = vector.load %arg3[%c0_3, %c0_4, %c0_5] : memref<3x384x128xbf16, #tpu.memory_space<vmem>>, vector<1x384x128xbf16>
    %7 = vector.shape_cast %6 : vector<1x384x128xbf16> to vector<384x128xbf16>
    %cst_6 = arith.constant dense<0.000000e+00> : vector<256x128xf32>
    %8 = tpu.matmul %5, %7, %cst_6 {dimension_numbers = #tpu.dot_dimension_numbers<[1], [0], [0], [1], [0, 0, 1, 1], [], []>} : vector<256x384xbf16>, vector<384x128xbf16>, vector<256x128xf32> -> vector<256x128xf32>
    %9 = arith.addf %3, %8 : vector<256x128xf32>
    %c1 = arith.constant 1 : index
    %c0_7 = arith.constant 0 : index
    %c0_8 = arith.constant 0 : index
    %10 = vector.load %arg11[%c1, %c0_7, %c0_8] : memref<18x16x384xbf16, #tpu.memory_space<vmem>>, vector<16x16x384xbf16>
    %11 = vector.shape_cast %10 : vector<16x16x384xbf16> to vector<256x384xbf16>
    %c1_9 = arith.constant 1 : index
    %c0_10 = arith.constant 0 : index
    %c0_11 = arith.constant 0 : index
    %12 = vector.load %arg3[%c1_9, %c0_10, %c0_11] : memref<3x384x128xbf16, #tpu.memory_space<vmem>>, vector<1x384x128xbf16>
    %13 = vector.shape_cast %12 : vector<1x384x128xbf16> to vector<384x128xbf16>
    %cst_12 = arith.constant dense<0.000000e+00> : vector<256x128xf32>
    %14 = tpu.matmul %11, %13, %cst_12 {dimension_numbers = #tpu.dot_dimension_numbers<[1], [0], [0], [1], [0, 0, 1, 1], [], []>} : vector<256x384xbf16>, vector<384x128xbf16>, vector<256x128xf32> -> vector<256x128xf32>
    %15 = arith.addf %9, %14 : vector<256x128xf32>
    %c2 = arith.constant 2 : index
    %c0_13 = arith.constant 0 : index
    %c0_14 = arith.constant 0 : index
    %16 = vector.load %arg11[%c2, %c0_13, %c0_14] : memref<18x16x384xbf16, #tpu.memory_space<vmem>>, vector<16x16x384xbf16>
    %17 = vector.shape_cast %16 : vector<16x16x384xbf16> to vector<256x384xbf16>
    %c2_15 = arith.constant 2 : index
    %c0_16 = arith.constant 0 : index
    %c0_17 = arith.constant 0 : index
    %18 = vector.load %arg3[%c2_15, %c0_16, %c0_17] : memref<3x384x128xbf16, #tpu.memory_space<vmem>>, vector<1x384x128xbf16>
    %19 = vector.shape_cast %18 : vector<1x384x128xbf16> to vector<384x128xbf16>
    %cst_18 = arith.constant dense<0.000000e+00> : vector<256x128xf32>
    %20 = tpu.matmul %17, %19, %cst_18 {dimension_numbers = #tpu.dot_dimension_numbers<[1], [0], [0], [1], [0, 0, 1, 1], [], []>} : vector<256x384xbf16>, vector<384x128xbf16>, vector<256x128xf32> -> vector<256x128xf32>
    %21 = arith.addf %15, %20 : vector<256x128xf32>
    %c0_19 = arith.constant 0 : index
    %c0_20 = arith.constant 0 : index
    %22 = vector.load %arg4[%c0_19, %c0_20] : memref<1x128xf32, #tpu.memory_space<vmem>>, vector<1x128xf32>
    %23 = vector.broadcast %22 : vector<1x128xf32> to vector<256x128xf32>
    %24 = arith.addf %21, %23 : vector<256x128xf32>
    %c0_21 = arith.constant 0 : index
    %c0_22 = arith.constant 0 : index
    %c0_23 = arith.constant 0 : index
    %c0_24 = arith.constant 0 : index
    %25 = vector.load %arg7[%c0_21, %c0_22, %c0_23, %c0_24] : memref<1x16x16x128xf32, #tpu.memory_space<vmem>>, vector<1x16x16x128xf32>
    %26 = vector.shape_cast %25 : vector<1x16x16x128xf32> to vector<16x16x128xf32>
    %27 = arith.truncf %26 : vector<16x16x128xf32> to vector<16x16x128xbf16>
    %28 = vector.shape_cast %27 : vector<16x16x128xbf16> to vector<256x128xbf16>
    %c0_25 = arith.constant 0 : index
    %c0_26 = arith.constant 0 : index
    %29 = vector.load %arg8[%c0_25, %c0_26] : memref<128x128xbf16, #tpu.memory_space<vmem>>, vector<128x128xbf16>
    %cst_27 = arith.constant dense<0.000000e+00> : vector<256x128xf32>
    %30 = tpu.matmul %28, %29, %cst_27 {dimension_numbers = #tpu.dot_dimension_numbers<[1], [0], [0], [1], [0, 0, 1, 1], [], []>} : vector<256x128xbf16>, vector<128x128xbf16>, vector<256x128xf32> -> vector<256x128xf32>
    %c0_28 = arith.constant 0 : index
    %c0_29 = arith.constant 0 : index
    %31 = vector.load %arg9[%c0_28, %c0_29] : memref<1x128xf32, #tpu.memory_space<vmem>>, vector<1x128xf32>
    %32 = vector.broadcast %31 : vector<1x128xf32> to vector<256x128xf32>
    %33 = arith.addf %30, %32 : vector<256x128xf32>
    %34 = arith.addf %24, %33 : vector<256x128xf32>
    %35 = vector.shape_cast %34 : vector<256x128xf32> to vector<16x16x128xf32>
    %c0_30 = arith.constant 0 : index
    %c0_31 = arith.constant 0 : index
    %c0_32 = arith.constant 0 : index
    %c0_33 = arith.constant 0 : index
    %36 = vector.load %arg10[%c0_30, %c0_31, %c0_32, %c0_33] : memref<1x16x16x128xf32, #tpu.memory_space<vmem>>, vector<1x16x16x128xf32>
    %37 = vector.shape_cast %36 : vector<1x16x16x128xf32> to vector<16x16x128xf32>
    %38 = vector.shape_cast %35 : vector<16x16x128xf32> to vector<1x16x16x128xf32>
    tpu.vector_store %arg10[%c0_30, %c0_31, %c0_32, %c0_33], %38 {strides = array<i32>} : memref<1x16x16x128xf32, #tpu.memory_space<vmem>>, vector<1x16x16x128xf32>,
    return
  }
  func.func @transform_0(%arg0: i32, %arg1: i32) -> (i32, i32, i32, i32) {
    %c0_i32 = arith.constant 0 : i32
    %c0_i32_0 = arith.constant 0 : i32
    %c0_i32_1 = arith.constant 0 : i32
    %c0_i32_2 = arith.constant 0 : i32
    return %arg0, %c0_i32, %c0_i32_0, %c0_i32_1 : i32, i32, i32, i32
  }
  func.func @transform_1(%arg0: i32, %arg1: i32) -> (i32, i32, i32) {
    %c0_i32 = arith.constant 0 : i32
    %c0_i32_0 = arith.constant 0 : i32
    %c0_i32_1 = arith.constant 0 : i32
    return %c0_i32, %c0_i32_0, %arg1 : i32, i32, i32
  }
  func.func @transform_2(%arg0: i32, %arg1: i32) -> (i32, i32) {
    %c0_i32 = arith.constant 0 : i32
    %c0_i32_0 = arith.constant 0 : i32
    return %c0_i32, %arg1 : i32, i32
  }
  func.func @transform_3(%arg0: i32, %arg1: i32) -> (i32, i32) {
    %c0_i32 = arith.constant 0 : i32
    %c0_i32_0 = arith.constant 0 : i32
    %c0_i32_1 = arith.constant 0 : i32
    return %c0_i32, %c0_i32_0 : i32, i32
  }
  func.func @transform_4(%arg0: i32, %arg1: i32) -> (i32, i32) {
    %c0_i32 = arith.constant 0 : i32
    %c0_i32_0 = arith.constant 0 : i32
    %c0_i32_1 = arith.constant 0 : i32
    return %c0_i32, %c0_i32_0 : i32, i32
  }
  func.func @transform_5(%arg0: i32, %arg1: i32) -> (i32, i32, i32, i32) {
    %c0_i32 = arith.constant 0 : i32
    %c0_i32_0 = arith.constant 0 : i32
    %c0_i32_1 = arith.constant 0 : i32
    %c0_i32_2 = arith.constant 0 : i32
    return %arg0, %c0_i32, %c0_i32_0, %c0_i32_1 : i32, i32, i32, i32
  }
  func.func @transform_6(%arg0: i32, %arg1: i32) -> (i32, i32) {
    %c0_i32 = arith.constant 0 : i32
    %c0_i32_0 = arith.constant 0 : i32
    return %c0_i32, %arg1 : i32, i32
  }
  func.func @transform_7(%arg0: i32, %arg1: i32) -> (i32, i32) {
    %c0_i32 = arith.constant 0 : i32
    %c0_i32_0 = arith.constant 0 : i32
    return %c0_i32, %arg1 : i32, i32
  }
  func.func @transform_8(%arg0: i32, %arg1: i32) -> (i32, i32, i32, i32) {
    %c0_i32 = arith.constant 0 : i32
    %c0_i32_0 = arith.constant 0 : i32
    %c0_i32_1 = arith.constant 0 : i32
    return %arg0, %c0_i32, %c0_i32_0, %arg1 : i32, i32, i32, i32
  }
}

module attributes {stable_mosaic.version = 11 : i64} {
  func.func @kernel(%arg0: i32, %arg1: i32, %arg2: memref<1x9x9x512xf32, #tpu.memory_space<vmem>>, %arg3: memref<2x1024x128xbf16, #tpu.memory_space<vmem>>, %arg4: memref<1x128xf32, #tpu.memory_space<vmem>>, %arg5: memref<1x8x8x128xf32, #tpu.memory_space<vmem>>, %arg6: memref<9x8x1024xbf16, #tpu.memory_space<vmem>>) attributes {dimension_semantics = [#tpu.dimension_semantics<parallel>, #tpu.dimension_semantics<arbitrary>], iteration_bounds = array<i64: 2, 1>, scalar_prefetch = 0 : i64, scratch_operands = 1 : i64, tpu.core_type = #tpu.core_type<tc>, window_params = [{transform_indices = @transform_0, window_bounds = array<i64: 1, 9, 9, 512>}, {transform_indices = @transform_1, window_bounds = array<i64: 2, 1024, 128>}, {transform_indices = @transform_2, window_bounds = array<i64: 1, 128>}, {transform_indices = @transform_3, window_bounds = array<i64: 1, 8, 8, 128>}]} {
    %c0_i32 = arith.constant 0 : i32
    %0 = arith.cmpi eq, %arg1, %c0_i32 : i32
    %1 = arith.extui %0 : i1 to i32
    %c0_i32_0 = arith.constant 0 : i32
    %2 = arith.cmpi ne, %1, %c0_i32_0 : i32
    scf.if %2 {
      %c0_19 = arith.constant 0 : index
      %c0_20 = arith.constant 0 : index
      %c0_21 = arith.constant 0 : index
      %c0_22 = arith.constant 0 : index
      %23 = vector.load %arg2[%c0_19, %c0_20, %c0_21, %c0_22] : memref<1x9x9x512xf32, #tpu.memory_space<vmem>>, vector<1x9x9x512xf32>
      %24 = vector.shape_cast %23 : vector<1x9x9x512xf32> to vector<9x9x512xf32>
      %25 = arith.truncf %24 : vector<9x9x512xf32> to vector<9x9x512xbf16>
      %26 = vector.extract_strided_slice %25 {offsets = [0, 0, 0], sizes = [9, 8, 512], strides = [1, 1, 1]} : vector<9x9x512xbf16> to vector<9x8x512xbf16>
      %c0_23 = arith.constant 0 : index
      %c0_24 = arith.constant 0 : index
      %c0_25 = arith.constant 0 : index
      %27 = vector.load %arg6[%c0_23, %c0_24, %c0_25] : memref<9x8x1024xbf16, #tpu.memory_space<vmem>>, vector<9x8x512xbf16>
      tpu.vector_store %arg6[%c0_23, %c0_24, %c0_25], %26 {strides = array<i32>} : memref<9x8x1024xbf16, #tpu.memory_space<vmem>>, vector<9x8x512xbf16>,
      %28 = vector.extract_strided_slice %25 {offsets = [0, 1, 0], sizes = [9, 8, 512], strides = [1, 1, 1]} : vector<9x9x512xbf16> to vector<9x8x512xbf16>
      %c0_26 = arith.constant 0 : index
      %c0_27 = arith.constant 0 : index
      %c512 = arith.constant 512 : index
      %29 = vector.load %arg6[%c0_26, %c0_27, %c512] : memref<9x8x1024xbf16, #tpu.memory_space<vmem>>, vector<9x8x512xbf16>
      tpu.vector_store %arg6[%c0_26, %c0_27, %c512], %28 {strides = array<i32>} : memref<9x8x1024xbf16, #tpu.memory_space<vmem>>, vector<9x8x512xbf16>,
    } else {
    }
    %cst = arith.constant 0.000000e+00 : f32
    %3 = vector.broadcast %cst : f32 to vector<64x128xf32>
    %c0 = arith.constant 0 : index
    %c0_1 = arith.constant 0 : index
    %c0_2 = arith.constant 0 : index
    %4 = vector.load %arg6[%c0, %c0_1, %c0_2] : memref<9x8x1024xbf16, #tpu.memory_space<vmem>>, vector<8x8x1024xbf16>
    %5 = vector.shape_cast %4 : vector<8x8x1024xbf16> to vector<64x1024xbf16>
    %c0_3 = arith.constant 0 : index
    %c0_4 = arith.constant 0 : index
    %c0_5 = arith.constant 0 : index
    %6 = vector.load %arg3[%c0_3, %c0_4, %c0_5] : memref<2x1024x128xbf16, #tpu.memory_space<vmem>>, vector<1x1024x128xbf16>
    %7 = vector.shape_cast %6 : vector<1x1024x128xbf16> to vector<1024x128xbf16>
    %cst_6 = arith.constant dense<0.000000e+00> : vector<64x128xf32>
    %8 = tpu.matmul %5, %7, %cst_6 {dimension_numbers = #tpu.dot_dimension_numbers<[1], [0], [0], [1], [0, 0, 1, 1], [], []>} : vector<64x1024xbf16>, vector<1024x128xbf16>, vector<64x128xf32> -> vector<64x128xf32>
    %9 = arith.addf %3, %8 : vector<64x128xf32>
    %c1 = arith.constant 1 : index
    %c0_7 = arith.constant 0 : index
    %c0_8 = arith.constant 0 : index
    %10 = vector.load %arg6[%c1, %c0_7, %c0_8] : memref<9x8x1024xbf16, #tpu.memory_space<vmem>>, vector<8x8x1024xbf16>
    %11 = vector.shape_cast %10 : vector<8x8x1024xbf16> to vector<64x1024xbf16>
    %c1_9 = arith.constant 1 : index
    %c0_10 = arith.constant 0 : index
    %c0_11 = arith.constant 0 : index
    %12 = vector.load %arg3[%c1_9, %c0_10, %c0_11] : memref<2x1024x128xbf16, #tpu.memory_space<vmem>>, vector<1x1024x128xbf16>
    %13 = vector.shape_cast %12 : vector<1x1024x128xbf16> to vector<1024x128xbf16>
    %cst_12 = arith.constant dense<0.000000e+00> : vector<64x128xf32>
    %14 = tpu.matmul %11, %13, %cst_12 {dimension_numbers = #tpu.dot_dimension_numbers<[1], [0], [0], [1], [0, 0, 1, 1], [], []>} : vector<64x1024xbf16>, vector<1024x128xbf16>, vector<64x128xf32> -> vector<64x128xf32>
    %15 = arith.addf %9, %14 : vector<64x128xf32>
    %c0_13 = arith.constant 0 : index
    %c0_14 = arith.constant 0 : index
    %16 = vector.load %arg4[%c0_13, %c0_14] : memref<1x128xf32, #tpu.memory_space<vmem>>, vector<1x128xf32>
    %17 = vector.broadcast %16 : vector<1x128xf32> to vector<64x128xf32>
    %18 = arith.addf %15, %17 : vector<64x128xf32>
    %19 = vector.shape_cast %18 : vector<64x128xf32> to vector<8x8x128xf32>
    %c0_15 = arith.constant 0 : index
    %c0_16 = arith.constant 0 : index
    %c0_17 = arith.constant 0 : index
    %c0_18 = arith.constant 0 : index
    %20 = vector.load %arg5[%c0_15, %c0_16, %c0_17, %c0_18] : memref<1x8x8x128xf32, #tpu.memory_space<vmem>>, vector<1x8x8x128xf32>
    %21 = vector.shape_cast %20 : vector<1x8x8x128xf32> to vector<8x8x128xf32>
    %22 = vector.shape_cast %19 : vector<8x8x128xf32> to vector<1x8x8x128xf32>
    tpu.vector_store %arg5[%c0_15, %c0_16, %c0_17, %c0_18], %22 {strides = array<i32>} : memref<1x8x8x128xf32, #tpu.memory_space<vmem>>, vector<1x8x8x128xf32>,
    return
  }
  func.func @transform_0(%arg0: i32, %arg1: i32) -> (i32, i32, i32, i32) {
    %c0_i32 = arith.constant 0 : i32
    %c0_i32_0 = arith.constant 0 : i32
    %c0_i32_1 = arith.constant 0 : i32
    %c0_i32_2 = arith.constant 0 : i32
    return %arg0, %c0_i32, %c0_i32_0, %c0_i32_1 : i32, i32, i32, i32
  }
  func.func @transform_1(%arg0: i32, %arg1: i32) -> (i32, i32, i32) {
    %c0_i32 = arith.constant 0 : i32
    %c0_i32_0 = arith.constant 0 : i32
    %c0_i32_1 = arith.constant 0 : i32
    return %c0_i32, %c0_i32_0, %arg1 : i32, i32, i32
  }
  func.func @transform_2(%arg0: i32, %arg1: i32) -> (i32, i32) {
    %c0_i32 = arith.constant 0 : i32
    %c0_i32_0 = arith.constant 0 : i32
    return %c0_i32, %arg1 : i32, i32
  }
  func.func @transform_3(%arg0: i32, %arg1: i32) -> (i32, i32, i32, i32) {
    %c0_i32 = arith.constant 0 : i32
    %c0_i32_0 = arith.constant 0 : i32
    %c0_i32_1 = arith.constant 0 : i32
    return %arg0, %c0_i32, %c0_i32_0, %arg1 : i32, i32, i32, i32
  }
}

</mosaic_0001>

<llo_original>
// kernel: down_blk_forward.3
$region0: #{down_blk_forward.3}
  #allocation0 [shape = 'u32[]', space=smem, size = 0x4, offset = 0x4, fixed_abs, tag = 'smem constant byte address 0x4 - core index']
  #allocation1 [shape = 'u32[144,128]{1,0:T(1,128)}', space=vmem, size = 0x12000, scoped, tag = 'internal scratch']
  #allocation2 [shape = 'bf16[18,16,384]{2,1,0:T(8,128)(2,1)}', space=vmem, size = 0x36000, scoped, tag = 'scratch operand']
  %s0 = inlined_call_operand.vmem [shape: f32[2,16,16,128], index: 0, kind: input, shape index: {}]
  %s1 = inlined_call_operand.vmem [shape: bf16[3,384,128], index: 1, kind: input, shape index: {}]
  %s2 = inlined_call_operand.vmem [shape: f32[1,128], index: 2, kind: input, shape index: {}]
  %s3 = inlined_call_operand.vmem [shape: f32[1,128], index: 3, kind: input, shape index: {}]
  %s4 = inlined_call_operand.vmem [shape: f32[1,128], index: 4, kind: input, shape index: {}]
  %s5 = inlined_call_operand.vmem [shape: f32[2,1,128], index: 5, kind: input, shape index: {}]
  %s6 = inlined_call_operand.vmem [shape: f32[2,1,128], index: 6, kind: input, shape index: {}]
  %s7 = inlined_call_operand.vmem [shape: f32[2,16,16,128], index: 7, kind: output, shape index: {0}]
  %s8 = inlined_call_operand.vmem [shape: f32[2,2,128], index: 8, kind: output, shape index: {1}]
  %9 = xla_tuple %s7, %s8
  %s10 = sld [smem:[#allocation0]]
  $region73: #{down_blk_forward.3} parent=0
    _
  %s12 = ssub.s32 1, %s10
  %s13 = scalar_select 0, %s12, %s10
  loop: start=0, step=1, limit=4
  $region2: #{down_blk_forward.3} parent=0 // loop_pre_header
    _
  $region3: #{down_blk_forward.3} parent=0 // loop_header
    %s15 = sphi 0, %s19
    %p16 = scmp.ge.s32.totalorder %s15, 4
    %s22 = sphi 0, %s34
    %s23 = sphi 0, %s30
    %s24 = sphi 0, %s22
    %s25 = sphi 0, %s23
    %s26 = sphi 0, %s24
    %s27 = sphi 0, %s25
    %s37 = sphi 0, %s39
    %s40 = sphi 0, %s37
    %s41 = sphi 0, %s40
    %s57 = sphi 0, %s41
    %s63 = sphi 0, %s65
    %s66 = sphi 0, %s63
    %s67 = sphi 0, %s66
    %s83 = sphi 0, %s67
    %s89 = sphi 0, %s91
    %s92 = sphi 0, %s89
    %s93 = sphi 0, %s92
    %s109 = sphi 0, %s93
    %s113 = sphi 0, %s113
    %s115 = sphi 0, %s113
    %s116 = sphi 0, %s115
    %s130 = sphi 0, %s116
    %s134 = sphi 0, %s134
    %s136 = sphi 0, %s134
    %s137 = sphi 0, %s136
    %s151 = sphi 0, %s137
    %s159 = sphi 0, %s161
    %s162 = sphi 0, %s159
    %s163 = sphi 0, %s162
    %s179 = sphi 0, %s163
    %s187 = sphi 0, %s189
    %s190 = sphi 0, %s187
    %s191 = sphi 0, %s190
    %s207 = sphi 0, %s191
    %s215 = sphi 0, %s217
    %s218 = sphi 0, %s215
    %s219 = sphi 0, %s218
    %s235 = sphi 0, %s219
    %s243 = sphi 0, %s245
    %s246 = sphi 0, %s243
    %s247 = sphi 0, %s246
    %s263 = sphi 0, %s247
  $region4: #{down_blk_forward.3} parent=0 // loop_header_branch
    %18 = sbr.rel (%p16) target = $region8
  $region5: #{down_blk_forward.3} parent=0 // loop_body
    %s20 = ssub.s32 %s15, 1
    %s21 = ssub.s32 %s15, 2
    %s28 = sadd.s32 1, %s23
    %p29 = scmp.ge.s32.totalorder %s28, 1
    %s30 = scalar_select %p29, 0, %s28
    %s31 = sadd.s32 1, %s22
    %s32 = scalar_select %p29, %s31, %s22
    %p33 = scmp.ge.s32.totalorder %s32, 2
    %s34 = scalar_select %p33, 0, %s32
    %s35 = ssub.s32 %s22, %s34
    %p36 = scmp.eq.s32.totalorder %s35, 0
    %s38 = sadd.s32 %s37, 1
    %s39 = scalar_select %p36, %s37, %s38
    %p42 = pneg %p36
    %p43 = scmp.eq.s32.totalorder %s15, 1
    %p44 = por %p42, %p43
    %p45 = scmp.ne.s32.totalorder %s37, %s40
    %p46 = scmp.eq.s32.totalorder %s15, 0
    %p47 = por %p45, %p46
    %p48 = scmp.ne.s32.totalorder %s37, %s40
    %p49 = scmp.eq.s32.totalorder %s20, 1
    %p50 = por %p48, %p49
    %p51 = scmp.ne.s32.totalorder %s40, %s41
    %p52 = scmp.eq.s32.totalorder %s20, 0
    %p53 = por %p51, %p52
    %p54 = scmp.ne.s32.totalorder %s40, %s41
    %p55 = scmp.eq.s32.totalorder %s21, 1
    %p56 = por %p54, %p55
    %p58 = scmp.ne.s32.totalorder %s41, %s57
    %p59 = scmp.eq.s32.totalorder %s21, 0
    %p60 = por %p58, %p59
    %s61 = ssub.s32 %s23, %s30
    %p62 = scmp.eq.s32.totalorder %s61, 0
    %s64 = sadd.s32 %s63, 1
    %s65 = scalar_select %p62, %s63, %s64
    %p68 = pneg %p62
    %p69 = scmp.eq.s32.totalorder %s15, 1
    %p70 = por %p68, %p69
    %p71 = scmp.ne.s32.totalorder %s63, %s66
    %p72 = scmp.eq.s32.totalorder %s15, 0
    %p73 = por %p71, %p72
    %p74 = scmp.ne.s32.totalorder %s63, %s66
    %p75 = scmp.eq.s32.totalorder %s20, 1
    %p76 = por %p74, %p75
    %p77 = scmp.ne.s32.totalorder %s66, %s67
    %p78 = scmp.eq.s32.totalorder %s20, 0
    %p79 = por %p77, %p78
    %p80 = scmp.ne.s32.totalorder %s66, %s67
    %p81 = scmp.eq.s32.totalorder %s21, 1
    %p82 = por %p80, %p81
    %p84 = scmp.ne.s32.totalorder %s67, %s83
    %p85 = scmp.eq.s32.totalorder %s21, 0
    %p86 = por %p84, %p85
    %s87 = ssub.s32 %s23, %s30
    %p88 = scmp.eq.s32.totalorder %s87, 0
    %s90 = sadd.s32 %s89, 1
    %s91 = scalar_select %p88, %s89, %s90
    %p94 = pneg %p88
    %p95 = scmp.eq.s32.totalorder %s15, 1
    %p96 = por %p94, %p95
    %p97 = scmp.ne.s32.totalorder %s89, %s92
    %p98 = scmp.eq.s32.totalorder %s15, 0
    %p99 = por %p97, %p98
    %p100 = scmp.ne.s32.totalorder %s89, %s92
    %p101 = scmp.eq.s32.totalorder %s20, 1
    %p102 = por %p100, %p101
    %p103 = scmp.ne.s32.totalorder %s92, %s93
    %p104 = scmp.eq.s32.totalorder %s20, 0
    %p105 = por %p103, %p104
    %p106 = scmp.ne.s32.totalorder %s92, %s93
    %p107 = scmp.eq.s32.totalorder %s21, 1
    %p108 = por %p106, %p107
    %p110 = scmp.ne.s32.totalorder %s93, %s109
    %p111 = scmp.eq.s32.totalorder %s21, 0
    %p112 = por %p110, %p111
    %s114 = sadd.s32 %s113, 1
    %p117 = scmp.eq.s32.totalorder %s15, 1
    %p118 = scmp.ne.s32.totalorder %s113, %s115
    %p119 = scmp.eq.s32.totalorder %s15, 0
    %p120 = por %p118, %p119
    %p121 = scmp.ne.s32.totalorder %s113, %s115
    %p122 = scmp.eq.s32.totalorder %s20, 1
    %p123 = por %p121, %p122
    %p124 = scmp.ne.s32.totalorder %s115, %s116
    %p125 = scmp.eq.s32.totalorder %s20, 0
    %p126 = por %p124, %p125
    %p127 = scmp.ne.s32.totalorder %s115, %s116
    %p128 = scmp.eq.s32.totalorder %s21, 1
    %p129 = por %p127, %p128
    %p131 = scmp.ne.s32.totalorder %s116, %s130
    %p132 = scmp.eq.s32.totalorder %s21, 0
    %p133 = por %p131, %p132
    %s135 = sadd.s32 %s134, 1
    %p138 = scmp.eq.s32.totalorder %s15, 1
    %p139 = scmp.ne.s32.totalorder %s134, %s136
    %p140 = scmp.eq.s32.totalorder %s15, 0
    %p141 = por %p139, %p140
    %p142 = scmp.ne.s32.totalorder %s134, %s136
    %p143 = scmp.eq.s32.totalorder %s20, 1
    %p144 = por %p142, %p143
    %p145 = scmp.ne.s32.totalorder %s136, %s137
    %p146 = scmp.eq.s32.totalorder %s20, 0
    %p147 = por %p145, %p146
    %p148 = scmp.ne.s32.totalorder %s136, %s137
    %p149 = scmp.eq.s32.totalorder %s21, 1
    %p150 = por %p148, %p149
    %p152 = scmp.ne.s32.totalorder %s137, %s151
    %p153 = scmp.eq.s32.totalorder %s21, 0
    %p154 = por %p152, %p153
    %s155 = ssub.s32 %s22, %s34
    %s156 = ssub.s32 %s23, %s30
    %s157 = sor.u32 %s155, %s156
    %p158 = scmp.eq.s32.totalorder %s157, 0
    %s160 = sadd.s32 %s159, 1
    %s161 = scalar_select %p158, %s159, %s160
    %p164 = pneg %p158
    %p165 = scmp.eq.s32.totalorder %s15, 1
    %p166 = por %p164, %p165
    %p167 = scmp.ne.s32.totalorder %s159, %s162
    %p168 = scmp.eq.s32.totalorder %s15, 0
    %p169 = por %p167, %p168
    %p170 = scmp.ne.s32.totalorder %s159, %s162
    %p171 = scmp.eq.s32.totalorder %s20, 1
    %p172 = por %p170, %p171
    %p173 = scmp.ne.s32.totalorder %s162, %s163
    %p174 = scmp.eq.s32.totalorder %s20, 0
    %p175 = por %p173, %p174
    %p176 = scmp.ne.s32.totalorder %s162, %s163
    %p177 = scmp.eq.s32.totalorder %s21, 1
    %p178 = por %p176, %p177
    %p180 = scmp.ne.s32.totalorder %s163, %s179
    %p181 = scmp.eq.s32.totalorder %s21, 0
    %p182 = por %p180, %p181
    %s183 = ssub.s32 %s22, %s34
    %s184 = ssub.s32 %s23, %s30
    %s185 = sor.u32 %s183, %s184
    %p186 = scmp.eq.s32.totalorder %s185, 0
    %s188 = sadd.s32 %s187, 1
    %s189 = scalar_select %p186, %s187, %s188
    %p192 = pneg %p186
    %p193 = scmp.eq.s32.totalorder %s15, 1
    %p194 = por %p192, %p193
    %p195 = scmp.ne.s32.totalorder %s187, %s190
    %p196 = scmp.eq.s32.totalorder %s15, 0
    %p197 = por %p195, %p196
    %p198 = scmp.ne.s32.totalorder %s187, %s190
    %p199 = scmp.eq.s32.totalorder %s20, 1
    %p200 = por %p198, %p199
    %p201 = scmp.ne.s32.totalorder %s190, %s191
    %p202 = scmp.eq.s32.totalorder %s20, 0
    %p203 = por %p201, %p202
    %p204 = scmp.ne.s32.totalorder %s190, %s191
    %p205 = scmp.eq.s32.totalorder %s21, 1
    %p206 = por %p204, %p205
    %p208 = scmp.ne.s32.totalorder %s191, %s207
    %p209 = scmp.eq.s32.totalorder %s21, 0
    %p210 = por %p208, %p209
    %s211 = ssub.s32 %s22, %s34
    %s212 = ssub.s32 %s23, %s30
    %s213 = sor.u32 %s211, %s212
    %p214 = scmp.eq.s32.totalorder %s213, 0
    %s216 = sadd.s32 %s215, 1
    %s217 = scalar_select %p214, %s215, %s216
    %p220 = pneg %p214
    %p221 = scmp.eq.s32.totalorder %s15, 1
    %p222 = por %p220, %p221
    %p223 = scmp.ne.s32.totalorder %s215, %s218
    %p224 = scmp.eq.s32.totalorder %s15, 0
    %p225 = por %p223, %p224
    %p226 = scmp.ne.s32.totalorder %s215, %s218
    %p227 = scmp.eq.s32.totalorder %s20, 1
    %p228 = por %p226, %p227
    %p229 = scmp.ne.s32.totalorder %s218, %s219
    %p230 = scmp.eq.s32.totalorder %s20, 0
    %p231 = por %p229, %p230
    %p232 = scmp.ne.s32.totalorder %s218, %s219
    %p233 = scmp.eq.s32.totalorder %s21, 1
    %p234 = por %p232, %p233
    %p236 = scmp.ne.s32.totalorder %s219, %s235
    %p237 = scmp.eq.s32.totalorder %s21, 0
    %p238 = por %p236, %p237
    %s239 = ssub.s32 %s22, %s34
    %s240 = ssub.s32 %s23, %s30
    %s241 = sor.u32 %s239, %s240
    %p242 = scmp.eq.s32.totalorder %s241, 0
    %s244 = sadd.s32 %s243, 1
    %s245 = scalar_select %p242, %s243, %s244
    %p248 = pneg %p242
    %p249 = scmp.eq.s32.totalorder %s15, 1
    %p250 = por %p248, %p249
    %p251 = scmp.ne.s32.totalorder %s243, %s246
    %p252 = scmp.eq.s32.totalorder %s15, 0
    %p253 = por %p251, %p252
    %p254 = scmp.ne.s32.totalorder %s243, %s246
    %p255 = scmp.eq.s32.totalorder %s20, 1
    %p256 = por %p254, %p255
    %p257 = scmp.ne.s32.totalorder %s246, %s247
    %p258 = scmp.eq.s32.totalorder %s20, 0
    %p259 = por %p257, %p258
    %p260 = scmp.ne.s32.totalorder %s246, %s247
    %p261 = scmp.eq.s32.totalorder %s21, 1
    %p262 = por %p260, %p261
    %p264 = scmp.ne.s32.totalorder %s247, %s263
    %p265 = scmp.eq.s32.totalorder %s21, 0
    %p266 = por %p264, %p265
    %p267 = scmp.le.s32.totalorder 1, %s15
    %p268 = scmp.lt.s32.totalorder %s15, 3
    %p269 = pnand %p267, %p268
    %p270 = pneg %p269
    // Predicated region
    $region9: #{down_blk_forward.3} parent=5 // pred_check
      _
    $region10: #{down_blk_forward.3} parent=5 // pred_check_branch
      %272 = sbr.rel (%p269) target = $region12
    $region11: #{down_blk_forward.3} parent=5 // pred_region
      %s273 = ssub.s32 %s15, 1
      // Predicated region
      $region13: #{down_blk_forward.3} parent=11 // pred_check
        %p274 = pneg %p79
      $region14: #{down_blk_forward.3} parent=11 // pred_check_branch
        %276 = sbr.rel (%p274) target = $region16
      $region15: #{down_blk_forward.3} parent=11 // pred_region
        %p277 = scmp.lt.s32.totalorder %s25, 0
        %s278 = scalar_select %p277, %s25, 0
        %s279 = smul.addr %s278, 4
        %s280 = scalar_lea.vmem %s1, %s279
      $region16: #{down_blk_forward.3} parent=11 // pred_fallthru
        _
      // Predicated region
      $region17: #{down_blk_forward.3} parent=11 // pred_check
        %p281 = pneg %p105
      $region18: #{down_blk_forward.3} parent=11 // pred_check_branch
        %283 = sbr.rel (%p281) target = $region20
      $region19: #{down_blk_forward.3} parent=11 // pred_region
        %p284 = scmp.lt.s32.totalorder %s25, 0
        %s285 = scalar_select %p284, %s25, 0
        %s286 = scalar_lea.vmem %s2, %s285
      $region20: #{down_blk_forward.3} parent=11 // pred_fallthru
        _
      // Predicated region
      $region21: #{down_blk_forward.3} parent=11 // pred_check
        %p287 = pneg %p126
      $region22: #{down_blk_forward.3} parent=11 // pred_check_branch
        %289 = sbr.rel (%p287) target = $region24
      $region23: #{down_blk_forward.3} parent=11 // pred_region
        _
      $region24: #{down_blk_forward.3} parent=11 // pred_fallthru
        _
      // Predicated region
      $region25: #{down_blk_forward.3} parent=11 // pred_check
        %p290 = pneg %p147
      $region26: #{down_blk_forward.3} parent=11 // pred_check_branch
        %292 = sbr.rel (%p290) target = $region28
      $region27: #{down_blk_forward.3} parent=11 // pred_region
        _
      $region28: #{down_blk_forward.3} parent=11 // pred_fallthru
        _
    $region12: #{down_blk_forward.3} parent=5 // pred_fallthru
      _
    %p293 = scmp.lt.s32.totalorder %s15, 2
    // Predicated region
    $region29: #{down_blk_forward.3} parent=5 // pred_check
      %p294 = pneg %p293
    $region30: #{down_blk_forward.3} parent=5 // pred_check_branch
      %296 = sbr.rel (%p294) target = $region32
    $region31: #{down_blk_forward.3} parent=5 // pred_region
      // Predicated region
      $region33: #{down_blk_forward.3} parent=31 // pred_check
        %p297 = pneg %p47
      $region34: #{down_blk_forward.3} parent=31 // pred_check_branch
        %299 = sbr.rel (%p297) target = $region36
      $region35: #{down_blk_forward.3} parent=31 // pred_region
        %p300 = scmp.lt.s32.totalorder %s22, 1
        %s301 = scalar_select %p300, %s22, 1
        %s302 = smul.addr %s301, 32
        %s303 = smul.addr %s302, 8
        %s304 = scalar_lea.vmem %s0, %s303
      $region36: #{down_blk_forward.3} parent=31 // pred_fallthru
        _
      // Predicated region
      $region37: #{down_blk_forward.3} parent=31 // pred_check
        %p305 = pneg %p169
      $region38: #{down_blk_forward.3} parent=31 // pred_check_branch
        %307 = sbr.rel (%p305) target = $region40
      $region39: #{down_blk_forward.3} parent=31 // pred_region
        %p308 = scmp.lt.s32.totalorder %s22, 1
        %s309 = scalar_select %p308, %s22, 1
        %p310 = scmp.lt.s32.totalorder %s23, 0
        %s311 = scalar_select %p310, %s23, 0
        %s312 = sadd.s32 %s311, %s309
        %s313 = scalar_lea.vmem %s5, %s312
      $region40: #{down_blk_forward.3} parent=31 // pred_fallthru
        _
      // Predicated region
      $region41: #{down_blk_forward.3} parent=31 // pred_check
        %p314 = pneg %p197
      $region42: #{down_blk_forward.3} parent=31 // pred_check_branch
        %316 = sbr.rel (%p314) target = $region44
      $region43: #{down_blk_forward.3} parent=31 // pred_region
        %p317 = scmp.lt.s32.totalorder %s22, 1
        %s318 = scalar_select %p317, %s22, 1
        %p319 = scmp.lt.s32.totalorder %s23, 0
        %s320 = scalar_select %p319, %s23, 0
        %s321 = sadd.s32 %s320, %s318
        %s322 = scalar_lea.vmem %s6, %s321
      $region44: #{down_blk_forward.3} parent=31 // pred_fallthru
        _
    $region32: #{down_blk_forward.3} parent=5 // pred_fallthru
      _
    %p323 = scmp.le.s32.totalorder 1, %s15
    %p324 = scmp.lt.s32.totalorder %s15, 3
    %p325 = pnand %p323, %p324
    %p326 = pneg %p325
    // Predicated region
    $region45: #{down_blk_forward.3} parent=5 // pred_check
      _
    $region46: #{down_blk_forward.3} parent=5 // pred_check_branch
      %328 = sbr.rel (%p325) target = $region48
    $region47: #{down_blk_forward.3} parent=5 // pred_region
      %s329 = ssub.s32 %s15, 1
      %p330 = scmp.lt.s32.totalorder %s24, 1
      %s331 = scalar_select %p330, %s24, 1
      %s332 = smul.addr %s331, 32
      %s333 = smul.addr %s332, 8
      %s334 = scalar_lea.vmem %s0, %s333
      %p335 = pneg %p53
      %p336 = pneg %p50
      %p337 = scmp.lt.s32.totalorder %s25, 0
      %s338 = scalar_select %p337, %s25, 0
      %s339 = smul.addr %s338, 4
      %s340 = scalar_lea.vmem %s1, %s339
      %p341 = pneg %p79
      %p342 = pneg %p76
      %p343 = scmp.lt.s32.totalorder %s25, 0
      %s344 = scalar_select %p343, %s25, 0
      %s345 = scalar_lea.vmem %s2, %s344
      %p346 = pneg %p105
      %p347 = pneg %p102
      %p348 = pneg %p126
      %p349 = pneg %p123
      %p350 = pneg %p147
      %p351 = pneg %p144
      %p352 = scmp.lt.s32.totalorder %s24, 1
      %s353 = scalar_select %p352, %s24, 1
      %p354 = scmp.lt.s32.totalorder %s25, 0
      %s355 = scalar_select %p354, %s25, 0
      %s356 = sadd.s32 %s355, %s353
      %s357 = scalar_lea.vmem %s5, %s356
      %p358 = pneg %p175
      %p359 = pneg %p172
      %p360 = scmp.lt.s32.totalorder %s24, 1
      %s361 = scalar_select %p360, %s24, 1
      %p362 = scmp.lt.s32.totalorder %s25, 0
      %s363 = scalar_select %p362, %s25, 0
      %s364 = sadd.s32 %s363, %s361
      %s365 = scalar_lea.vmem %s6, %s364
      %p366 = pneg %p203
      %p367 = pneg %p200
      %p368 = pneg %p231
      %p369 = pneg %p228
      %p370 = scmp.lt.s32.totalorder %s24, 1
      %s371 = scalar_select %p370, %s24, 1
      %p372 = scmp.lt.s32.totalorder %s25, 0
      %s373 = scalar_select %p372, %s25, 0
      %s374 = smul.addr %s371, 32
      %s375 = sadd.s32 %s373, %s374
      %s376 = smul.addr %s375, 8
      %s377 = scalar_lea.vmem %s7, %s376
      %p378 = pneg %p259
      %p379 = pneg %p256
      %p380 = scmp.lt.s32.totalorder %s24, 1
      %s381 = scalar_select %p380, %s24, 1
      %p382 = scmp.lt.s32.totalorder %s25, 0
      %s383 = scalar_select %p382, %s25, 0
      %s384 = sadd.s32 %s383, %s381
      %s385 = smul.addr %s384, 2
      %s386 = scalar_lea.vmem %s8, %s385
      %p387 = scmp.lt.s32.totalorder %s24, 1
      %s388 = scalar_select %p387, %s24, 1
      %s389 = smul.addr %s388, 32
      %s390 = smul.addr %s389, 8
      %s391 = scalar_lea.vmem %s0, %s390
      %p392 = scmp.lt.s32.totalorder %s25, 0
      %s393 = scalar_select %p392, %s25, 0
      %s394 = smul.addr %s393, 4
      %s395 = scalar_lea.vmem %s1, %s394
      %p396 = scmp.lt.s32.totalorder %s25, 0
      %s397 = scalar_select %p396, %s25, 0
      %s398 = scalar_lea.vmem %s2, %s397
      %p399 = scmp.lt.s32.totalorder %s24, 1
      %s400 = scalar_select %p399, %s24, 1
      %p401 = scmp.lt.s32.totalorder %s25, 0
      %s402 = scalar_select %p401, %s25, 0
      %s403 = sadd.s32 %s402, %s400
      %s404 = scalar_lea.vmem %s5, %s403
      %p405 = scmp.lt.s32.totalorder %s24, 1
      %s406 = scalar_select %p405, %s24, 1
      %p407 = scmp.lt.s32.totalorder %s25, 0
      %s408 = scalar_select %p407, %s25, 0
      %s409 = sadd.s32 %s408, %s406
      %s410 = scalar_lea.vmem %s6, %s409
      %p411 = scmp.lt.s32.totalorder %s24, 1
      %s412 = scalar_select %p411, %s24, 1
      %p413 = scmp.lt.s32.totalorder %s25, 0
      %s414 = scalar_select %p413, %s25, 0
      %s415 = smul.addr %s412, 32
      %s416 = sadd.s32 %s414, %s415
      %s417 = smul.addr %s416, 8
      %s418 = scalar_lea.vmem %s7, %s417
      %p419 = scmp.lt.s32.totalorder %s24, 1
      %s420 = scalar_select %p419, %s24, 1
      %p421 = scmp.lt.s32.totalorder %s25, 0
      %s422 = scalar_select %p421, %s25, 0
      %s423 = sadd.s32 %s422, %s420
      %s424 = smul.addr %s423, 2
      %s425 = scalar_lea.vmem %s8, %s424
      %p427 = scmp.eq.s32.totalorder %s25, 0
      // Predicated region
      $region49: #{down_blk_forward.3} parent=47 // pred_check
        %p428 = pneg %p427
      $region50: #{down_blk_forward.3} parent=47 // pred_check_branch
        %430 = sbr.rel (%p428) target = $region52
      $region51: #{down_blk_forward.3} parent=47 // pred_region
        %v431 = vld [vmem:[%s391] sm:$0xff]
        %v432 = vld [vmem:[%s391 + $0x8] sm:$0xff]
        %v433 = vld [vmem:[%s391 + $0x10] sm:$0xff]
        %v434 = vld [vmem:[%s391 + $0x18] sm:$0xff]
        %v435 = vld [vmem:[%s391 + $0x20] sm:$0xff]
        %v436 = vld [vmem:[%s391 + $0x28] sm:$0xff]
        %v437 = vld [vmem:[%s391 + $0x30] sm:$0xff]
        %v438 = vld [vmem:[%s391 + $0x38] sm:$0xff]
        %v439 = vld [vmem:[%s391 + $0x40] sm:$0xff]
        %v440 = vld [vmem:[%s391 + $0x48] sm:$0xff]
        %v441 = vld [vmem:[%s391 + $0x50] sm:$0xff]
        %v442 = vld [vmem:[%s391 + $0x58] sm:$0xff]
        %v443 = vld [vmem:[%s391 + $0x60] sm:$0xff]
        %v444 = vld [vmem:[%s391 + $0x68] sm:$0xff]
        %v445 = vld [vmem:[%s391 + $0x70] sm:$0xff]
        %v446 = vld [vmem:[%s391 + $0x78] sm:$0xff]
        %v447 = vld [vmem:[%s391 + $0x80] sm:$0xff]
        %v448 = vld [vmem:[%s391 + $0x88] sm:$0xff]
        %v449 = vld [vmem:[%s391 + $0x90] sm:$0xff]
        %v450 = vld [vmem:[%s391 + $0x98] sm:$0xff]
        %v451 = vld [vmem:[%s391 + $0xa0] sm:$0xff]
        %v452 = vld [vmem:[%s391 + $0xa8] sm:$0xff]
        %v453 = vld [vmem:[%s391 + $0xb0] sm:$0xff]
        %v454 = vld [vmem:[%s391 + $0xb8] sm:$0xff]
        %v455 = vld [vmem:[%s391 + $0xc0] sm:$0xff]
        %v456 = vld [vmem:[%s391 + $0xc8] sm:$0xff]
        %v457 = vld [vmem:[%s391 + $0xd0] sm:$0xff]
        %v458 = vld [vmem:[%s391 + $0xd8] sm:$0xff]
        %v459 = vld [vmem:[%s391 + $0xe0] sm:$0xff]
        %v460 = vld [vmem:[%s391 + $0xe8] sm:$0xff]
        %v461 = vld [vmem:[%s391 + $0xf0] sm:$0xff]
        %v462 = vld [vmem:[%s391 + $0xf8] sm:$0xff]
        %v463 = vld [vmem:[%s3] sm:$0x1]
        %v465 = vlaneseq
        %v466 = vshrl.u32 %v465, 7
        %v467 = vsub.s32 0, %v466
        %v468 = vrot.slane %v463, %v467
        %v470 = vmul.f32 %v431, %v468
        %v471 = vmul.f32 %v432, %v468
        %v472 = vmul.f32 %v433, %v468
        %v473 = vmul.f32 %v434, %v468
        %v474 = vmul.f32 %v435, %v468
        %v475 = vmul.f32 %v436, %v468
        %v476 = vmul.f32 %v437, %v468
        %v477 = vmul.f32 %v438, %v468
        %v478 = vmul.f32 %v439, %v468
        %v479 = vmul.f32 %v440, %v468
        %v480 = vmul.f32 %v441, %v468
        %v481 = vmul.f32 %v442, %v468
        %v482 = vmul.f32 %v443, %v468
        %v483 = vmul.f32 %v444, %v468
        %v484 = vmul.f32 %v445, %v468
        %v485 = vmul.f32 %v446, %v468
        %v486 = vmul.f32 %v447, %v468
        %v487 = vmul.f32 %v448, %v468
        %v488 = vmul.f32 %v449, %v468
        %v489 = vmul.f32 %v450, %v468
        %v490 = vmul.f32 %v451, %v468
        %v491 = vmul.f32 %v452, %v468
        %v492 = vmul.f32 %v453, %v468
        %v493 = vmul.f32 %v454, %v468
        %v494 = vmul.f32 %v455, %v468
        %v495 = vmul.f32 %v456, %v468
        %v496 = vmul.f32 %v457, %v468
        %v497 = vmul.f32 %v458, %v468
        %v498 = vmul.f32 %v459, %v468
        %v499 = vmul.f32 %v460, %v468
        %v500 = vmul.f32 %v461, %v468
        %v501 = vmul.f32 %v462, %v468
        %v502 = vld [vmem:[%s4] sm:$0x1]
        %v504 = vlaneseq
        %v505 = vshrl.u32 %v504, 7
        %v506 = vsub.s32 0, %v505
        %v507 = vrot.slane %v502, %v506
        %v509 = vadd.f32 %v470, %v507
        %v510 = vadd.f32 %v471, %v507
        %v511 = vadd.f32 %v472, %v507
        %v512 = vadd.f32 %v473, %v507
        %v513 = vadd.f32 %v474, %v507
        %v514 = vadd.f32 %v475, %v507
        %v515 = vadd.f32 %v476, %v507
        %v516 = vadd.f32 %v477, %v507
        %v517 = vadd.f32 %v478, %v507
        %v518 = vadd.f32 %v479, %v507
        %v519 = vadd.f32 %v480, %v507
        %v520 = vadd.f32 %v481, %v507
        %v521 = vadd.f32 %v482, %v507
        %v522 = vadd.f32 %v483, %v507
        %v523 = vadd.f32 %v484, %v507
        %v524 = vadd.f32 %v485, %v507
        %v525 = vadd.f32 %v486, %v507
        %v526 = vadd.f32 %v487, %v507
        %v527 = vadd.f32 %v488, %v507
        %v528 = vadd.f32 %v489, %v507
        %v529 = vadd.f32 %v490, %v507
        %v530 = vadd.f32 %v491, %v507
        %v531 = vadd.f32 %v492, %v507
        %v532 = vadd.f32 %v493, %v507
        %v533 = vadd.f32 %v494, %v507
        %v534 = vadd.f32 %v495, %v507
        %v535 = vadd.f32 %v496, %v507
        %v536 = vadd.f32 %v497, %v507
        %v537 = vadd.f32 %v498, %v507
        %v538 = vadd.f32 %v499, %v507
        %v539 = vadd.f32 %v500, %v507
        %v540 = vadd.f32 %v501, %v507
        %v541 = vxor.u32 %v509, 2147483648
        %v542 = vxor.u32 %v510, 2147483648
        %v543 = vxor.u32 %v511, 2147483648
        %v544 = vxor.u32 %v512, 2147483648
        %v545 = vxor.u32 %v513, 2147483648
        %v546 = vxor.u32 %v514, 2147483648
        %v547 = vxor.u32 %v515, 2147483648
        %v548 = vxor.u32 %v516, 2147483648
        %v549 = vxor.u32 %v517, 2147483648
        %v550 = vxor.u32 %v518, 2147483648
        %v551 = vxor.u32 %v519, 2147483648
        %v552 = vxor.u32 %v520, 2147483648
        %v553 = vxor.u32 %v521, 2147483648
        %v554 = vxor.u32 %v522, 2147483648
        %v555 = vxor.u32 %v523, 2147483648
        %v556 = vxor.u32 %v524, 2147483648
        %v557 = vxor.u32 %v525, 2147483648
        %v558 = vxor.u32 %v526, 2147483648
        %v559 = vxor.u32 %v527, 2147483648
        %v560 = vxor.u32 %v528, 2147483648
        %v561 = vxor.u32 %v529, 2147483648
        %v562 = vxor.u32 %v530, 2147483648
        %v563 = vxor.u32 %v531, 2147483648
        %v564 = vxor.u32 %v532, 2147483648
        %v565 = vxor.u32 %v533, 2147483648
        %v566 = vxor.u32 %v534, 2147483648
        %v567 = vxor.u32 %v535, 2147483648
        %v568 = vxor.u32 %v536, 2147483648
        %v569 = vxor.u32 %v537, 2147483648
        %v570 = vxor.u32 %v538, 2147483648
        %v571 = vxor.u32 %v539, 2147483648
        %v572 = vxor.u32 %v540, 2147483648
        %v573 = vmul.f32 %v541, 1.442695
        %v574 = vpow.pop %v573
        %v575 = vmul.f32 %v542, 1.442695
        %v576 = vpow.pop %v575
        %v577 = vmul.f32 %v543, 1.442695
        %v578 = vpow.pop %v577
        %v579 = vmul.f32 %v544, 1.442695
        %v580 = vpow.pop %v579
        %v581 = vmul.f32 %v545, 1.442695
        %v582 = vpow.pop %v581
        %v583 = vmul.f32 %v546, 1.442695
        %v584 = vpow.pop %v583
        %v585 = vmul.f32 %v547, 1.442695
        %v586 = vpow.pop %v585
        %v587 = vmul.f32 %v548, 1.442695
        %v588 = vpow.pop %v587
        %v589 = vmul.f32 %v549, 1.442695
        %v590 = vpow.pop %v589
        %v591 = vmul.f32 %v550, 1.442695
        %v592 = vpow.pop %v591
        %v593 = vmul.f32 %v551, 1.442695
        %v594 = vpow.pop %v593
        %v595 = vmul.f32 %v552, 1.442695
        %v596 = vpow.pop %v595
        %v597 = vmul.f32 %v553, 1.442695
        %v598 = vpow.pop %v597
        %v599 = vmul.f32 %v554, 1.442695
        %v600 = vpow.pop %v599
        %v601 = vmul.f32 %v555, 1.442695
        %v602 = vpow.pop %v601
        %v603 = vmul.f32 %v556, 1.442695
        %v604 = vpow.pop %v603
        %v605 = vmul.f32 %v557, 1.442695
        %v606 = vpow.pop %v605
        %v607 = vmul.f32 %v558, 1.442695
        %v608 = vpow.pop %v607
        %v609 = vmul.f32 %v559, 1.442695
        %v610 = vpow.pop %v609
        %v611 = vmul.f32 %v560, 1.442695
        %v612 = vpow.pop %v611
        %v613 = vmul.f32 %v561, 1.442695
        %v614 = vpow.pop %v613
        %v615 = vmul.f32 %v562, 1.442695
        %v616 = vpow.pop %v615
        %v617 = vmul.f32 %v563, 1.442695
        %v618 = vpow.pop %v617
        %v619 = vmul.f32 %v564, 1.442695
        %v620 = vpow.pop %v619
        %v621 = vmul.f32 %v565, 1.442695
        %v622 = vpow.pop %v621
        %v623 = vmul.f32 %v566, 1.442695
        %v624 = vpow.pop %v623
        %v625 = vmul.f32 %v567, 1.442695
        %v626 = vpow.pop %v625
        %v627 = vmul.f32 %v568, 1.442695
        %v628 = vpow.pop %v627
        %v629 = vmul.f32 %v569, 1.442695
        %v630 = vpow.pop %v629
        %v631 = vmul.f32 %v570, 1.442695
        %v632 = vpow.pop %v631
        %v633 = vmul.f32 %v571, 1.442695
        %v634 = vpow.pop %v633
        %v635 = vmul.f32 %v572, 1.442695
        %v636 = vpow.pop %v635
        %v637 = vadd.f32 %v574, 1.0
        %v638 = vadd.f32 %v576, 1.0
        %v639 = vadd.f32 %v578, 1.0
        %v640 = vadd.f32 %v580, 1.0
        %v641 = vadd.f32 %v582, 1.0
        %v642 = vadd.f32 %v584, 1.0
        %v643 = vadd.f32 %v586, 1.0
        %v644 = vadd.f32 %v588, 1.0
        %v645 = vadd.f32 %v590, 1.0
        %v646 = vadd.f32 %v592, 1.0
        %v647 = vadd.f32 %v594, 1.0
        %v648 = vadd.f32 %v596, 1.0
        %v649 = vadd.f32 %v598, 1.0
        %v650 = vadd.f32 %v600, 1.0
        %v651 = vadd.f32 %v602, 1.0
        %v652 = vadd.f32 %v604, 1.0
        %v653 = vadd.f32 %v606, 1.0
        %v654 = vadd.f32 %v608, 1.0
        %v655 = vadd.f32 %v610, 1.0
        %v656 = vadd.f32 %v612, 1.0
        %v657 = vadd.f32 %v614, 1.0
        %v658 = vadd.f32 %v616, 1.0
        %v659 = vadd.f32 %v618, 1.0
        %v660 = vadd.f32 %v620, 1.0
        %v661 = vadd.f32 %v622, 1.0
        %v662 = vadd.f32 %v624, 1.0
        %v663 = vadd.f32 %v626, 1.0
        %v664 = vadd.f32 %v628, 1.0
        %v665 = vadd.f32 %v630, 1.0
        %v666 = vadd.f32 %v632, 1.0
        %v667 = vadd.f32 %v634, 1.0
        %v668 = vadd.f32 %v636, 1.0
        %v669 = vrcp.pop %v637
        %v670 = vmul.f32 1.0, %v669
        %v671 = vrcp.pop %v638
        %v672 = vmul.f32 1.0, %v671
        %v673 = vrcp.pop %v639
        %v674 = vmul.f32 1.0, %v673
        %v675 = vrcp.pop %v640
        %v676 = vmul.f32 1.0, %v675
        %v677 = vrcp.pop %v641
        %v678 = vmul.f32 1.0, %v677
        %v679 = vrcp.pop %v642
        %v680 = vmul.f32 1.0, %v679
        %v681 = vrcp.pop %v643
        %v682 = vmul.f32 1.0, %v681
        %v683 = vrcp.pop %v644
        %v684 = vmul.f32 1.0, %v683
        %v685 = vrcp.pop %v645
        %v686 = vmul.f32 1.0, %v685
        %v687 = vrcp.pop %v646
        %v688 = vmul.f32 1.0, %v687
        %v689 = vrcp.pop %v647
        %v690 = vmul.f32 1.0, %v689
        %v691 = vrcp.pop %v648
        %v692 = vmul.f32 1.0, %v691
        %v693 = vrcp.pop %v649
        %v694 = vmul.f32 1.0, %v693
        %v695 = vrcp.pop %v650
        %v696 = vmul.f32 1.0, %v695
        %v697 = vrcp.pop %v651
        %v698 = vmul.f32 1.0, %v697
        %v699 = vrcp.pop %v652
        %v700 = vmul.f32 1.0, %v699
        %v701 = vrcp.pop %v653
        %v702 = vmul.f32 1.0, %v701
        %v703 = vrcp.pop %v654
        %v704 = vmul.f32 1.0, %v703
        %v705 = vrcp.pop %v655
        %v706 = vmul.f32 1.0, %v705
        %v707 = vrcp.pop %v656
        %v708 = vmul.f32 1.0, %v707
        %v709 = vrcp.pop %v657
        %v710 = vmul.f32 1.0, %v709
        %v711 = vrcp.pop %v658
        %v712 = vmul.f32 1.0, %v711
        %v713 = vrcp.pop %v659
        %v714 = vmul.f32 1.0, %v713
        %v715 = vrcp.pop %v660
        %v716 = vmul.f32 1.0, %v715
        %v717 = vrcp.pop %v661
        %v718 = vmul.f32 1.0, %v717
        %v719 = vrcp.pop %v662
        %v720 = vmul.f32 1.0, %v719
        %v721 = vrcp.pop %v663
        %v722 = vmul.f32 1.0, %v721
        %v723 = vrcp.pop %v664
        %v724 = vmul.f32 1.0, %v723
        %v725 = vrcp.pop %v665
        %v726 = vmul.f32 1.0, %v725
        %v727 = vrcp.pop %v666
        %v728 = vmul.f32 1.0, %v727
        %v729 = vrcp.pop %v667
        %v730 = vmul.f32 1.0, %v729
        %v731 = vrcp.pop %v668
        %v732 = vmul.f32 1.0, %v731
        %v733 = vmul.f32 %v509, %v670
        %v734 = vmul.f32 %v510, %v672
        %v735 = vmul.f32 %v511, %v674
        %v736 = vmul.f32 %v512, %v676
        %v737 = vmul.f32 %v513, %v678
        %v738 = vmul.f32 %v514, %v680
        %v739 = vmul.f32 %v515, %v682
        %v740 = vmul.f32 %v516, %v684
        %v741 = vmul.f32 %v517, %v686
        %v742 = vmul.f32 %v518, %v688
        %v743 = vmul.f32 %v519, %v690
        %v744 = vmul.f32 %v520, %v692
        %v745 = vmul.f32 %v521, %v694
        %v746 = vmul.f32 %v522, %v696
        %v747 = vmul.f32 %v523, %v698
        %v748 = vmul.f32 %v524, %v700
        %v749 = vmul.f32 %v525, %v702
        %v750 = vmul.f32 %v526, %v704
        %v751 = vmul.f32 %v527, %v706
        %v752 = vmul.f32 %v528, %v708
        %v753 = vmul.f32 %v529, %v710
        %v754 = vmul.f32 %v530, %v712
        %v755 = vmul.f32 %v531, %v714
        %v756 = vmul.f32 %v532, %v716
        %v757 = vmul.f32 %v533, %v718
        %v758 = vmul.f32 %v534, %v720
        %v759 = vmul.f32 %v535, %v722
        %v760 = vmul.f32 %v536, %v724
        %v761 = vmul.f32 %v537, %v726
        %v762 = vmul.f32 %v538, %v728
        %v763 = vmul.f32 %v539, %v730
        %v764 = vmul.f32 %v540, %v732
        %v765 = vpack.c.bf16 %v734, %v733
        %v766 = vpack.c.bf16 %v736, %v735
        %v767 = vpack.c.bf16 %v738, %v737
        %v768 = vpack.c.bf16 %v740, %v739
        %v769 = vpack.c.bf16 %v742, %v741
        %v770 = vpack.c.bf16 %v744, %v743
        %v771 = vpack.c.bf16 %v746, %v745
        %v772 = vpack.c.bf16 %v748, %v747
        %v773 = vpack.c.bf16 %v750, %v749
        %v774 = vpack.c.bf16 %v752, %v751
        %v775 = vpack.c.bf16 %v754, %v753
        %v776 = vpack.c.bf16 %v756, %v755
        %v777 = vpack.c.bf16 %v758, %v757
        %v778 = vpack.c.bf16 %v760, %v759
        %v779 = vpack.c.bf16 %v762, %v761
        %v780 = vpack.c.bf16 %v764, %v763
        %781 = vst [vmem:[#allocation2] sm:$0xff] 0
        %782 = vst [vmem:[#allocation2 + $0x8] sm:$0xf] 0
        %783 = vst [vmem:[#allocation2 + $0xc] sm:$0xff] 0
        %784 = vst [vmem:[#allocation2 + $0x14] sm:$0xf] 0
        %785 = vst [vmem:[#allocation2 + $0x18] sm:$0xff] 0
        %786 = vst [vmem:[#allocation2 + $0x20] sm:$0xf] 0
        %787 = vst [vmem:[#allocation2 + $0x24] sm:$0xff] 0
        %788 = vst [vmem:[#allocation2 + $0x2c] sm:$0xf] 0
        %789 = vst [vmem:[#allocation2 + $0x30] sm:$0xff] 0
        %790 = vst [vmem:[#allocation2 + $0x38] sm:$0xf] 0
        %791 = vst [vmem:[#allocation2 + $0x3c] sm:$0xff] 0
        %792 = vst [vmem:[#allocation2 + $0x44] sm:$0xf] 0
        %793 = vst [vmem:[#allocation2 + $0x48] sm:$0xff] 0
        %794 = vst [vmem:[#allocation2 + $0x50] sm:$0xf] 0
        %795 = vst [vmem:[#allocation2 + $0x54] sm:$0xff] 0
        %796 = vst [vmem:[#allocation2 + $0x5c] sm:$0xf] 0
        %797 = vst [vmem:[#allocation2 + $0x60] sm:$0xff] 0
        %798 = vst [vmem:[#allocation2 + $0x68] sm:$0xf] 0
        %799 = vst [vmem:[#allocation2 + $0x6c] sm:$0xff] 0
        %800 = vst [vmem:[#allocation2 + $0x74] sm:$0xf] 0
        %801 = vst [vmem:[#allocation2 + $0x78] sm:$0xff] 0
        %802 = vst [vmem:[#allocation2 + $0x80] sm:$0xf] 0
        %803 = vst [vmem:[#allocation2 + $0x84] sm:$0xff] 0
        %804 = vst [vmem:[#allocation2 + $0x8c] sm:$0xf] 0
        %805 = vst [vmem:[#allocation2 + $0x90] sm:$0xff] 0
        %806 = vst [vmem:[#allocation2 + $0x98] sm:$0xf] 0
        %807 = vst [vmem:[#allocation2 + $0x9c] sm:$0xff] 0
        %808 = vst [vmem:[#allocation2 + $0xa4] sm:$0xf] 0
        %809 = vst [vmem:[#allocation2 + $0xa8] sm:$0xff] 0
        %810 = vst [vmem:[#allocation2 + $0xb0] sm:$0xf] 0
        %811 = vst [vmem:[#allocation2 + $0xb4] sm:$0xff] 0
        %812 = vst [vmem:[#allocation2 + $0xbc] sm:$0xf] 0
        %813 = vst [vmem:[#allocation2 + $0xc0] sm:$0xff] 0
        %814 = vst [vmem:[#allocation2 + $0xc8] sm:$0xf] 0
        %815 = vst [vmem:[#allocation2 + $0xcc] sm:$0xff] 0
        %816 = vst [vmem:[#allocation2 + $0xd4] sm:$0xf] 0
        %817 = vst [vmem:[#allocation2 + $0xd8] sm:$0xff] 0
        %818 = vst [vmem:[#allocation2 + $0xe0] sm:$0xf] 0
        %819 = vst [vmem:[#allocation2 + $0xe4] sm:$0xff] 0
        %820 = vst [vmem:[#allocation2 + $0xec] sm:$0xf] 0
        %821 = vst [vmem:[#allocation2 + $0xf0] sm:$0xff] 0
        %822 = vst [vmem:[#allocation2 + $0xf8] sm:$0xf] 0
        %823 = vst [vmem:[#allocation2 + $0xfc] sm:$0xff] 0
        %824 = vst [vmem:[#allocation2 + $0x104] sm:$0xf] 0
        %825 = vst [vmem:[#allocation2 + $0x108] sm:$0xff] 0
        %826 = vst [vmem:[#allocation2 + $0x110] sm:$0xf] 0
        %827 = vst [vmem:[#allocation2 + $0x114] sm:$0xff] 0
        %828 = vst [vmem:[#allocation2 + $0x11c] sm:$0xf] 0
        %829 = vst [vmem:[#allocation2 + $0x120] sm:$0xff] 0
        %830 = vst [vmem:[#allocation2 + $0x128] sm:$0xf] 0
        %831 = vst [vmem:[#allocation2 + $0x12c] sm:$0xff] 0
        %832 = vst [vmem:[#allocation2 + $0x134] sm:$0xf] 0
        %833 = vst [vmem:[#allocation2 + $0x138] sm:$0xff] 0
        %834 = vst [vmem:[#allocation2 + $0x140] sm:$0xf] 0
        %835 = vst [vmem:[#allocation2 + $0x144] sm:$0xff] 0
        %836 = vst [vmem:[#allocation2 + $0x14c] sm:$0xf] 0
        %837 = vst [vmem:[#allocation2 + $0x150] sm:$0xff] 0
        %838 = vst [vmem:[#allocation2 + $0x158] sm:$0xf] 0
        %839 = vst [vmem:[#allocation2 + $0x15c] sm:$0xff] 0
        %840 = vst [vmem:[#allocation2 + $0x164] sm:$0xf] 0
        %841 = vst [vmem:[#allocation2 + $0x168] sm:$0xff] 0
        %842 = vst [vmem:[#allocation2 + $0x170] sm:$0xf] 0
        %843 = vst [vmem:[#allocation2 + $0x174] sm:$0xff] 0
        %844 = vst [vmem:[#allocation2 + $0x17c] sm:$0xf] 0
        %845 = vst [vmem:[#allocation2 + $0x180] sm:$0xff] 0
        %846 = vst [vmem:[#allocation2 + $0x188] sm:$0xf] 0
        %847 = vst [vmem:[#allocation2 + $0x18c] sm:$0xff] 0
        %848 = vst [vmem:[#allocation2 + $0x194] sm:$0xf] 0
        %849 = vst [vmem:[#allocation2 + $0x198] sm:$0xff] 0
        %850 = vst [vmem:[#allocation2 + $0x1a0] sm:$0xf] 0
        %851 = vst [vmem:[#allocation2 + $0x1a4] sm:$0xff] 0
        %852 = vst [vmem:[#allocation2 + $0x1ac] sm:$0xf] 0
        %v869 = vunpack.c.l.b16 %v765
        %v870 = vunpack.c.h.b16 %v765
        %v871 = vunpack.c.l.b16 %v766
        %v872 = vunpack.c.h.b16 %v766
        %v873 = vunpack.c.l.b16 %v767
        %v874 = vunpack.c.h.b16 %v767
        %v875 = vunpack.c.l.b16 %v768
        %v876 = vunpack.c.h.b16 %v768
        %v877 = vunpack.c.l.b16 %v769
        %v878 = vunpack.c.h.b16 %v769
        %v879 = vunpack.c.l.b16 %v770
        %v880 = vunpack.c.h.b16 %v770
        %v881 = vunpack.c.l.b16 %v771
        %v882 = vunpack.c.h.b16 %v771
        %v883 = vunpack.c.l.b16 %v772
        %v884 = vunpack.c.h.b16 %v772
        %v885 = vunpack.c.l.b16 %v773
        %v886 = vunpack.c.h.b16 %v773
        %v887 = vunpack.c.l.b16 %v774
        %v888 = vunpack.c.h.b16 %v774
        %v889 = vunpack.c.l.b16 %v775
        %v890 = vunpack.c.h.b16 %v775
        %v891 = vunpack.c.l.b16 %v776
        %v892 = vunpack.c.h.b16 %v776
        %v893 = vunpack.c.l.b16 %v777
        %v894 = vunpack.c.h.b16 %v777
        %v895 = vunpack.c.l.b16 %v778
        %v896 = vunpack.c.h.b16 %v778
        %v897 = vunpack.c.l.b16 %v779
        %v898 = vunpack.c.h.b16 %v779
        %v899 = vunpack.c.l.b16 %v780
        %v900 = vunpack.c.h.b16 %v780
        %v901 = vpack.c.b16 %v869, %v869
        %v902 = vpack.c.b16 %v870, %v870
        %v903 = vpack.c.b16 %v871, %v871
        %v904 = vpack.c.b16 %v872, %v872
        %v905 = vpack.c.b16 %v873, %v873
        %v906 = vpack.c.b16 %v874, %v874
        %v907 = vpack.c.b16 %v875, %v875
        %v908 = vpack.c.b16 %v876, %v876
        %v909 = vpack.c.b16 %v877, %v877
        %v910 = vpack.c.b16 %v878, %v878
        %v911 = vpack.c.b16 %v879, %v879
        %v912 = vpack.c.b16 %v880, %v880
        %v913 = vpack.c.b16 %v881, %v881
        %v914 = vpack.c.b16 %v882, %v882
        %v915 = vpack.c.b16 %v883, %v883
        %v916 = vpack.c.b16 %v884, %v884
        %v917 = vpack.c.b16 %v885, %v885
        %v918 = vpack.c.b16 %v886, %v886
        %v919 = vpack.c.b16 %v887, %v887
        %v920 = vpack.c.b16 %v888, %v888
        %v921 = vpack.c.b16 %v889, %v889
        %v922 = vpack.c.b16 %v890, %v890
        %v923 = vpack.c.b16 %v891, %v891
        %v924 = vpack.c.b16 %v892, %v892
        %v925 = vpack.c.b16 %v893, %v893
        %v926 = vpack.c.b16 %v894, %v894
        %v927 = vpack.c.b16 %v895, %v895
        %v928 = vpack.c.b16 %v896, %v896
        %v929 = vpack.c.b16 %v897, %v897
        %v930 = vpack.c.b16 %v898, %v898
        %v931 = vpack.c.b16 %v899, %v899
        %v932 = vpack.c.b16 %v900, %v900
        %vm933 = vsmask.f32 256
        %vm934 = vsmask.f32 4368
        %vm935 = vmor %vm933, %vm934
        %v937 = vshrl.u32 %v901, 16
        %v939 = vrot.slane %v937, 7
        %v940 = vshll.u32 %v901, 16
        %v942 = vor.u32 %v939, %v940
        %v943 = vrot.slane %v939, 4
        %v945 = vshrl.u32 %v902, 16
        %v947 = vrot.slane %v945, 7
        %v948 = vshll.u32 %v902, 16
        %v950 = vor.u32 %v947, %v948
        %v951 = vsel %vm935, %v943, %v950
        %v953 = vshrl.u32 %v903, 16
        %v955 = vrot.slane %v953, 7
        %v956 = vshll.u32 %v903, 16
        %v958 = vor.u32 %v955, %v956
        %v959 = vrot.slane %v955, 4
        %v961 = vshrl.u32 %v904, 16
        %v963 = vrot.slane %v961, 7
        %v964 = vshll.u32 %v904, 16
        %v966 = vor.u32 %v963, %v964
        %v967 = vsel %vm935, %v959, %v966
        %v969 = vshrl.u32 %v905, 16
        %v971 = vrot.slane %v969, 7
        %v972 = vshll.u32 %v905, 16
        %v974 = vor.u32 %v971, %v972
        %v975 = vrot.slane %v971, 4
        %v977 = vshrl.u32 %v906, 16
        %v979 = vrot.slane %v977, 7
        %v980 = vshll.u32 %v906, 16
        %v982 = vor.u32 %v979, %v980
        %v983 = vsel %vm935, %v975, %v982
        %v985 = vshrl.u32 %v907, 16
        %v987 = vrot.slane %v985, 7
        %v988 = vshll.u32 %v907, 16
        %v990 = vor.u32 %v987, %v988
        %v991 = vrot.slane %v987, 4
        %v993 = vshrl.u32 %v908, 16
        %v995 = vrot.slane %v993, 7
        %v996 = vshll.u32 %v908, 16
        %v998 = vor.u32 %v995, %v996
        %v999 = vsel %vm935, %v991, %v998
        %v1001 = vshrl.u32 %v909, 16
        %v1003 = vrot.slane %v1001, 7
        %v1004 = vshll.u32 %v909, 16
        %v1006 = vor.u32 %v1003, %v1004
        %v1007 = vrot.slane %v1003, 4
        %v1009 = vshrl.u32 %v910, 16
        %v1011 = vrot.slane %v1009, 7
        %v1012 = vshll.u32 %v910, 16
        %v1014 = vor.u32 %v1011, %v1012
        %v1015 = vsel %vm935, %v1007, %v1014
        %v1017 = vshrl.u32 %v911, 16
        %v1019 = vrot.slane %v1017, 7
        %v1020 = vshll.u32 %v911, 16
        %v1022 = vor.u32 %v1019, %v1020
        %v1023 = vrot.slane %v1019, 4
        %v1025 = vshrl.u32 %v912, 16
        %v1027 = vrot.slane %v1025, 7
        %v1028 = vshll.u32 %v912, 16
        %v1030 = vor.u32 %v1027, %v1028
        %v1031 = vsel %vm935, %v1023, %v1030
        %v1033 = vshrl.u32 %v913, 16
        %v1035 = vrot.slane %v1033, 7
        %v1036 = vshll.u32 %v913, 16
        %v1038 = vor.u32 %v1035, %v1036
        %v1039 = vrot.slane %v1035, 4
        %v1041 = vshrl.u32 %v914, 16
        %v1043 = vrot.slane %v1041, 7
        %v1044 = vshll.u32 %v914, 16
        %v1046 = vor.u32 %v1043, %v1044
        %v1047 = vsel %vm935, %v1039, %v1046
        %v1049 = vshrl.u32 %v915, 16
        %v1051 = vrot.slane %v1049, 7
        %v1052 = vshll.u32 %v915, 16
        %v1054 = vor.u32 %v1051, %v1052
        %v1055 = vrot.slane %v1051, 4
        %v1057 = vshrl.u32 %v916, 16
        %v1059 = vrot.slane %v1057, 7
        %v1060 = vshll.u32 %v916, 16
        %v1062 = vor.u32 %v1059, %v1060
        %v1063 = vsel %vm935, %v1055, %v1062
        %v1065 = vshrl.u32 %v917, 16
        %v1067 = vrot.slane %v1065, 7
        %v1068 = vshll.u32 %v917, 16
        %v1070 = vor.u32 %v1067, %v1068
        %v1071 = vrot.slane %v1067, 4
        %v1073 = vshrl.u32 %v918, 16
        %v1075 = vrot.slane %v1073, 7
        %v1076 = vshll.u32 %v918, 16
        %v1078 = vor.u32 %v1075, %v1076
        %v1079 = vsel %vm935, %v1071, %v1078
        %v1081 = vshrl.u32 %v919, 16
        %v1083 = vrot.slane %v1081, 7
        %v1084 = vshll.u32 %v919, 16
        %v1086 = vor.u32 %v1083, %v1084
        %v1087 = vrot.slane %v1083, 4
        %v1089 = vshrl.u32 %v920, 16
        %v1091 = vrot.slane %v1089, 7
        %v1092 = vshll.u32 %v920, 16
        %v1094 = vor.u32 %v1091, %v1092
        %v1095 = vsel %vm935, %v1087, %v1094
        %v1097 = vshrl.u32 %v921, 16
        %v1099 = vrot.slane %v1097, 7
        %v1100 = vshll.u32 %v921, 16
        %v1102 = vor.u32 %v1099, %v1100
        %v1103 = vrot.slane %v1099, 4
        %v1105 = vshrl.u32 %v922, 16
        %v1107 = vrot.slane %v1105, 7
        %v1108 = vshll.u32 %v922, 16
        %v1110 = vor.u32 %v1107, %v1108
        %v1111 = vsel %vm935, %v1103, %v1110
        %v1113 = vshrl.u32 %v923, 16
        %v1115 = vrot.slane %v1113, 7
        %v1116 = vshll.u32 %v923, 16
        %v1118 = vor.u32 %v1115, %v1116
        %v1119 = vrot.slane %v1115, 4
        %v1121 = vshrl.u32 %v924, 16
        %v1123 = vrot.slane %v1121, 7
        %v1124 = vshll.u32 %v924, 16
        %v1126 = vor.u32 %v1123, %v1124
        %v1127 = vsel %vm935, %v1119, %v1126
        %v1129 = vshrl.u32 %v925, 16
        %v1131 = vrot.slane %v1129, 7
        %v1132 = vshll.u32 %v925, 16
        %v1134 = vor.u32 %v1131, %v1132
        %v1135 = vrot.slane %v1131, 4
        %v1137 = vshrl.u32 %v926, 16
        %v1139 = vrot.slane %v1137, 7
        %v1140 = vshll.u32 %v926, 16
        %v1142 = vor.u32 %v1139, %v1140
        %v1143 = vsel %vm935, %v1135, %v1142
        %v1145 = vshrl.u32 %v927, 16
        %v1147 = vrot.slane %v1145, 7
        %v1148 = vshll.u32 %v927, 16
        %v1150 = vor.u32 %v1147, %v1148
        %v1151 = vrot.slane %v1147, 4
        %v1153 = vshrl.u32 %v928, 16
        %v1155 = vrot.slane %v1153, 7
        %v1156 = vshll.u32 %v928, 16
        %v1158 = vor.u32 %v1155, %v1156
        %v1159 = vsel %vm935, %v1151, %v1158
        %v1161 = vshrl.u32 %v929, 16
        %v1163 = vrot.slane %v1161, 7
        %v1164 = vshll.u32 %v929, 16
        %v1166 = vor.u32 %v1163, %v1164
        %v1167 = vrot.slane %v1163, 4
        %v1169 = vshrl.u32 %v930, 16
        %v1171 = vrot.slane %v1169, 7
        %v1172 = vshll.u32 %v930, 16
        %v1174 = vor.u32 %v1171, %v1172
        %v1175 = vsel %vm935, %v1167, %v1174
        %v1177 = vshrl.u32 %v931, 16
        %v1179 = vrot.slane %v1177, 7
        %v1180 = vshll.u32 %v931, 16
        %v1182 = vor.u32 %v1179, %v1180
        %v1183 = vrot.slane %v1179, 4
        %v1185 = vshrl.u32 %v932, 16
        %v1187 = vrot.slane %v1185, 7
        %v1188 = vshll.u32 %v932, 16
        %v1190 = vor.u32 %v1187, %v1188
        %v1191 = vsel %vm935, %v1183, %v1190
        %s1224 = scalar_lea.vmem [#allocation2], 24
        %vm1225 = vcmask 1043456
        %vm1226 = vsmask.f32 7938
        %vm1227 = vmand %vm1225, %vm1226
        %v1228 = vld [vmem:[%s1224] sm:$0xf]
        %v1229 = vsel %vm1227, %v942, %v1228
        %1230 = vst [vmem:[%s1224] sm:$0xf] %v1229
        %1231 = vst [vmem:[%s1224 + $0xc] sm:$0xf] %v951
        %v1232 = vld [vmem:[%s1224 + $0x18] sm:$0xf]
        %v1233 = vsel %vm1227, %v958, %v1232
        %1234 = vst [vmem:[%s1224 + $0x18] sm:$0xf] %v1233
        %1235 = vst [vmem:[%s1224 + $0x24] sm:$0xf] %v967
        %v1236 = vld [vmem:[%s1224 + $0x30] sm:$0xf]
        %v1237 = vsel %vm1227, %v974, %v1236
        %1238 = vst [vmem:[%s1224 + $0x30] sm:$0xf] %v1237
        %1239 = vst [vmem:[%s1224 + $0x3c] sm:$0xf] %v983
        %v1240 = vld [vmem:[%s1224 + $0x48] sm:$0xf]
        %v1241 = vsel %vm1227, %v990, %v1240
        %1242 = vst [vmem:[%s1224 + $0x48] sm:$0xf] %v1241
        %1243 = vst [vmem:[%s1224 + $0x54] sm:$0xf] %v999
        %v1244 = vld [vmem:[%s1224 + $0x60] sm:$0xf]
        %v1245 = vsel %vm1227, %v1006, %v1244
        %1246 = vst [vmem:[%s1224 + $0x60] sm:$0xf] %v1245
        %1247 = vst [vmem:[%s1224 + $0x6c] sm:$0xf] %v1015
        %v1248 = vld [vmem:[%s1224 + $0x78] sm:$0xf]
        %v1249 = vsel %vm1227, %v1022, %v1248
        %1250 = vst [vmem:[%s1224 + $0x78] sm:$0xf] %v1249
        %1251 = vst [vmem:[%s1224 + $0x84] sm:$0xf] %v1031
        %v1252 = vld [vmem:[%s1224 + $0x90] sm:$0xf]
        %v1253 = vsel %vm1227, %v1038, %v1252
        %1254 = vst [vmem:[%s1224 + $0x90] sm:$0xf] %v1253
        %1255 = vst [vmem:[%s1224 + $0x9c] sm:$0xf] %v1047
        %v1256 = vld [vmem:[%s1224 + $0xa8] sm:$0xf]
        %v1257 = vsel %vm1227, %v1054, %v1256
        %1258 = vst [vmem:[%s1224 + $0xa8] sm:$0xf] %v1257
        %1259 = vst [vmem:[%s1224 + $0xb4] sm:$0xf] %v1063
        %v1260 = vld [vmem:[%s1224 + $0xc0] sm:$0xf]
        %v1261 = vsel %vm1227, %v1070, %v1260
        %1262 = vst [vmem:[%s1224 + $0xc0] sm:$0xf] %v1261
        %1263 = vst [vmem:[%s1224 + $0xcc] sm:$0xf] %v1079
        %v1264 = vld [vmem:[%s1224 + $0xd8] sm:$0xf]
        %v1265 = vsel %vm1227, %v1086, %v1264
        %1266 = vst [vmem:[%s1224 + $0xd8] sm:$0xf] %v1265
        %1267 = vst [vmem:[%s1224 + $0xe4] sm:$0xf] %v1095
        %v1268 = vld [vmem:[%s1224 + $0xf0] sm:$0xf]
        %v1269 = vsel %vm1227, %v1102, %v1268
        %1270 = vst [vmem:[%s1224 + $0xf0] sm:$0xf] %v1269
        %1271 = vst [vmem:[%s1224 + $0xfc] sm:$0xf] %v1111
        %v1272 = vld [vmem:[%s1224 + $0x108] sm:$0xf]
        %v1273 = vsel %vm1227, %v1118, %v1272
        %1274 = vst [vmem:[%s1224 + $0x108] sm:$0xf] %v1273
        %1275 = vst [vmem:[%s1224 + $0x114] sm:$0xf] %v1127
        %v1276 = vld [vmem:[%s1224 + $0x120] sm:$0xf]
        %v1277 = vsel %vm1227, %v1134, %v1276
        %1278 = vst [vmem:[%s1224 + $0x120] sm:$0xf] %v1277
        %1279 = vst [vmem:[%s1224 + $0x12c] sm:$0xf] %v1143
        %v1280 = vld [vmem:[%s1224 + $0x138] sm:$0xf]
        %v1281 = vsel %vm1227, %v1150, %v1280
        %1282 = vst [vmem:[%s1224 + $0x138] sm:$0xf] %v1281
        %1283 = vst [vmem:[%s1224 + $0x144] sm:$0xf] %v1159
        %v1284 = vld [vmem:[%s1224 + $0x150] sm:$0xf]
        %v1285 = vsel %vm1227, %v1166, %v1284
        %1286 = vst [vmem:[%s1224 + $0x150] sm:$0xf] %v1285
        %1287 = vst [vmem:[%s1224 + $0x15c] sm:$0xf] %v1175
        %v1288 = vld [vmem:[%s1224 + $0x168] sm:$0xf]
        %v1289 = vsel %vm1227, %v1182, %v1288
        %1290 = vst [vmem:[%s1224 + $0x168] sm:$0xf] %v1289
        %1291 = vst [vmem:[%s1224 + $0x174] sm:$0xf] %v1191
        %1324 = vst [vmem:[%s1224 + $0x4] sm:$0xf] %v901
        %1325 = vst [vmem:[%s1224 + $0x10] sm:$0xf] %v902
        %1326 = vst [vmem:[%s1224 + $0x1c] sm:$0xf] %v903
        %1327 = vst [vmem:[%s1224 + $0x28] sm:$0xf] %v904
        %1328 = vst [vmem:[%s1224 + $0x34] sm:$0xf] %v905
        %1329 = vst [vmem:[%s1224 + $0x40] sm:$0xf] %v906
        %1330 = vst [vmem:[%s1224 + $0x4c] sm:$0xf] %v907
        %1331 = vst [vmem:[%s1224 + $0x58] sm:$0xf] %v908
        %1332 = vst [vmem:[%s1224 + $0x64] sm:$0xf] %v909
        %1333 = vst [vmem:[%s1224 + $0x70] sm:$0xf] %v910
        %1334 = vst [vmem:[%s1224 + $0x7c] sm:$0xf] %v911
        %1335 = vst [vmem:[%s1224 + $0x88] sm:$0xf] %v912
        %1336 = vst [vmem:[%s1224 + $0x94] sm:$0xf] %v913
        %1337 = vst [vmem:[%s1224 + $0xa0] sm:$0xf] %v914
        %1338 = vst [vmem:[%s1224 + $0xac] sm:$0xf] %v915
        %1339 = vst [vmem:[%s1224 + $0xb8] sm:$0xf] %v916
        %1340 = vst [vmem:[%s1224 + $0xc4] sm:$0xf] %v917
        %1341 = vst [vmem:[%s1224 + $0xd0] sm:$0xf] %v918
        %1342 = vst [vmem:[%s1224 + $0xdc] sm:$0xf] %v919
        %1343 = vst [vmem:[%s1224 + $0xe8] sm:$0xf] %v920
        %1344 = vst [vmem:[%s1224 + $0xf4] sm:$0xf] %v921
        %1345 = vst [vmem:[%s1224 + $0x100] sm:$0xf] %v922
        %1346 = vst [vmem:[%s1224 + $0x10c] sm:$0xf] %v923
        %1347 = vst [vmem:[%s1224 + $0x118] sm:$0xf] %v924
        %1348 = vst [vmem:[%s1224 + $0x124] sm:$0xf] %v925
        %1349 = vst [vmem:[%s1224 + $0x130] sm:$0xf] %v926
        %1350 = vst [vmem:[%s1224 + $0x13c] sm:$0xf] %v927
        %1351 = vst [vmem:[%s1224 + $0x148] sm:$0xf] %v928
        %1352 = vst [vmem:[%s1224 + $0x154] sm:$0xf] %v929
        %1353 = vst [vmem:[%s1224 + $0x160] sm:$0xf] %v930
        %1354 = vst [vmem:[%s1224 + $0x16c] sm:$0xf] %v931
        %1355 = vst [vmem:[%s1224 + $0x178] sm:$0xf] %v932
        %vm1356 = vsmask.f32 3328
        %vm1357 = vsmask.f32 7440
        %vm1358 = vmor %vm1356, %vm1357
        %v1359 = vrot.slane %v937, 4
        %v1360 = vrot.slane %v940, 5
        %v1361 = vor.u32 %v1359, %v1360
        %v1362 = vrot.slane %v1361, 4
        %v1363 = vrot.slane %v948, 5
        %v1364 = vsel %vm1358, %v1362, %v1363
        %v1365 = vrot.slane %v945, 4
        %v1366 = vor.u32 %v1365, %v1363
        %v1367 = vrot.slane %v1366, 4
        %v1368 = vrot.slane %v953, 4
        %v1369 = vrot.slane %v956, 5
        %v1370 = vor.u32 %v1368, %v1369
        %v1371 = vrot.slane %v1370, 4
        %v1372 = vrot.slane %v964, 5
        %v1373 = vsel %vm1358, %v1371, %v1372
        %v1374 = vrot.slane %v961, 4
        %v1375 = vor.u32 %v1374, %v1372
        %v1376 = vrot.slane %v1375, 4
        %v1377 = vrot.slane %v969, 4
        %v1378 = vrot.slane %v972, 5
        %v1379 = vor.u32 %v1377, %v1378
        %v1380 = vrot.slane %v1379, 4
        %v1381 = vrot.slane %v980, 5
        %v1382 = vsel %vm1358, %v1380, %v1381
        %v1383 = vrot.slane %v977, 4
        %v1384 = vor.u32 %v1383, %v1381
        %v1385 = vrot.slane %v1384, 4
        %v1386 = vrot.slane %v985, 4
        %v1387 = vrot.slane %v988, 5
        %v1388 = vor.u32 %v1386, %v1387
        %v1389 = vrot.slane %v1388, 4
        %v1390 = vrot.slane %v996, 5
        %v1391 = vsel %vm1358, %v1389, %v1390
        %v1392 = vrot.slane %v993, 4
        %v1393 = vor.u32 %v1392, %v1390
        %v1394 = vrot.slane %v1393, 4
        %v1395 = vrot.slane %v1001, 4
        %v1396 = vrot.slane %v1004, 5
        %v1397 = vor.u32 %v1395, %v1396
        %v1398 = vrot.slane %v1397, 4
        %v1399 = vrot.slane %v1012, 5
        %v1400 = vsel %vm1358, %v1398, %v1399
        %v1401 = vrot.slane %v1009, 4
        %v1402 = vor.u32 %v1401, %v1399
        %v1403 = vrot.slane %v1402, 4
        %v1404 = vrot.slane %v1017, 4
        %v1405 = vrot.slane %v1020, 5
        %v1406 = vor.u32 %v1404, %v1405
        %v1407 = vrot.slane %v1406, 4
        %v1408 = vrot.slane %v1028, 5
        %v1409 = vsel %vm1358, %v1407, %v1408
        %v1410 = vrot.slane %v1025, 4
        %v1411 = vor.u32 %v1410, %v1408
        %v1412 = vrot.slane %v1411, 4
        %v1413 = vrot.slane %v1033, 4
        %v1414 = vrot.slane %v1036, 5
        %v1415 = vor.u32 %v1413, %v1414
        %v1416 = vrot.slane %v1415, 4
        %v1417 = vrot.slane %v1044, 5
        %v1418 = vsel %vm1358, %v1416, %v1417
        %v1419 = vrot.slane %v1041, 4
        %v1420 = vor.u32 %v1419, %v1417
        %v1421 = vrot.slane %v1420, 4
        %v1422 = vrot.slane %v1049, 4
        %v1423 = vrot.slane %v1052, 5
        %v1424 = vor.u32 %v1422, %v1423
        %v1425 = vrot.slane %v1424, 4
        %v1426 = vrot.slane %v1060, 5
        %v1427 = vsel %vm1358, %v1425, %v1426
        %v1428 = vrot.slane %v1057, 4
        %v1429 = vor.u32 %v1428, %v1426
        %v1430 = vrot.slane %v1429, 4
        %v1431 = vrot.slane %v1065, 4
        %v1432 = vrot.slane %v1068, 5
        %v1433 = vor.u32 %v1431, %v1432
        %v1434 = vrot.slane %v1433, 4
        %v1435 = vrot.slane %v1076, 5
        %v1436 = vsel %vm1358, %v1434, %v1435
        %v1437 = vrot.slane %v1073, 4
        %v1438 = vor.u32 %v1437, %v1435
        %v1439 = vrot.slane %v1438, 4
        %v1440 = vrot.slane %v1081, 4
        %v1441 = vrot.slane %v1084, 5
        %v1442 = vor.u32 %v1440, %v1441
        %v1443 = vrot.slane %v1442, 4
        %v1444 = vrot.slane %v1092, 5
        %v1445 = vsel %vm1358, %v1443, %v1444
        %v1446 = vrot.slane %v1089, 4
        %v1447 = vor.u32 %v1446, %v1444
        %v1448 = vrot.slane %v1447, 4
        %v1449 = vrot.slane %v1097, 4
        %v1450 = vrot.slane %v1100, 5
        %v1451 = vor.u32 %v1449, %v1450
        %v1452 = vrot.slane %v1451, 4
        %v1453 = vrot.slane %v1108, 5
        %v1454 = vsel %vm1358, %v1452, %v1453
        %v1455 = vrot.slane %v1105, 4
        %v1456 = vor.u32 %v1455, %v1453
        %v1457 = vrot.slane %v1456, 4
        %v1458 = vrot.slane %v1113, 4
        %v1459 = vrot.slane %v1116, 5
        %v1460 = vor.u32 %v1458, %v1459
        %v1461 = vrot.slane %v1460, 4
        %v1462 = vrot.slane %v1124, 5
        %v1463 = vsel %vm1358, %v1461, %v1462
        %v1464 = vrot.slane %v1121, 4
        %v1465 = vor.u32 %v1464, %v1462
        %v1466 = vrot.slane %v1465, 4
        %v1467 = vrot.slane %v1129, 4
        %v1468 = vrot.slane %v1132, 5
        %v1469 = vor.u32 %v1467, %v1468
        %v1470 = vrot.slane %v1469, 4
        %v1471 = vrot.slane %v1140, 5
        %v1472 = vsel %vm1358, %v1470, %v1471
        %v1473 = vrot.slane %v1137, 4
        %v1474 = vor.u32 %v1473, %v1471
        %v1475 = vrot.slane %v1474, 4
        %v1476 = vrot.slane %v1145, 4
        %v1477 = vrot.slane %v1148, 5
        %v1478 = vor.u32 %v1476, %v1477
        %v1479 = vrot.slane %v1478, 4
        %v1480 = vrot.slane %v1156, 5
        %v1481 = vsel %vm1358, %v1479, %v1480
        %v1482 = vrot.slane %v1153, 4
        %v1483 = vor.u32 %v1482, %v1480
        %v1484 = vrot.slane %v1483, 4
        %v1485 = vrot.slane %v1161, 4
        %v1486 = vrot.slane %v1164, 5
        %v1487 = vor.u32 %v1485, %v1486
        %v1488 = vrot.slane %v1487, 4
        %v1489 = vrot.slane %v1172, 5
        %v1490 = vsel %vm1358, %v1488, %v1489
        %v1491 = vrot.slane %v1169, 4
        %v1492 = vor.u32 %v1491, %v1489
        %v1493 = vrot.slane %v1492, 4
        %v1494 = vrot.slane %v1177, 4
        %v1495 = vrot.slane %v1180, 5
        %v1496 = vor.u32 %v1494, %v1495
        %v1497 = vrot.slane %v1496, 4
        %v1498 = vrot.slane %v1188, 5
        %v1499 = vsel %vm1358, %v1497, %v1498
        %v1500 = vrot.slane %v1185, 4
        %v1501 = vor.u32 %v1500, %v1498
        %v1502 = vrot.slane %v1501, 4
        %1535 = vst [vmem:[%s1224 + $0x8] sm:$0xf] %v1364
        %vm1536 = vmand %vm1225, %vm1356
        %v1537 = vld [vmem:[%s1224 + $0x14] sm:$0xf]
        %v1538 = vsel %vm1536, %v1367, %v1537
        %1539 = vst [vmem:[%s1224 + $0x14] sm:$0xf] %v1538
        %1540 = vst [vmem:[%s1224 + $0x20] sm:$0xf] %v1373
        %v1541 = vld [vmem:[%s1224 + $0x2c] sm:$0xf]
        %v1542 = vsel %vm1536, %v1376, %v1541
        %1543 = vst [vmem:[%s1224 + $0x2c] sm:$0xf] %v1542
        %1544 = vst [vmem:[%s1224 + $0x38] sm:$0xf] %v1382
        %v1545 = vld [vmem:[%s1224 + $0x44] sm:$0xf]
        %v1546 = vsel %vm1536, %v1385, %v1545
        %1547 = vst [vmem:[%s1224 + $0x44] sm:$0xf] %v1546
        %1548 = vst [vmem:[%s1224 + $0x50] sm:$0xf] %v1391
        %v1549 = vld [vmem:[%s1224 + $0x5c] sm:$0xf]
        %v1550 = vsel %vm1536, %v1394, %v1549
        %1551 = vst [vmem:[%s1224 + $0x5c] sm:$0xf] %v1550
        %1552 = vst [vmem:[%s1224 + $0x68] sm:$0xf] %v1400
        %v1553 = vld [vmem:[%s1224 + $0x74] sm:$0xf]
        %v1554 = vsel %vm1536, %v1403, %v1553
        %1555 = vst [vmem:[%s1224 + $0x74] sm:$0xf] %v1554
        %1556 = vst [vmem:[%s1224 + $0x80] sm:$0xf] %v1409
        %v1557 = vld [vmem:[%s1224 + $0x8c] sm:$0xf]
        %v1558 = vsel %vm1536, %v1412, %v1557
        %1559 = vst [vmem:[%s1224 + $0x8c] sm:$0xf] %v1558
        %1560 = vst [vmem:[%s1224 + $0x98] sm:$0xf] %v1418
        %v1561 = vld [vmem:[%s1224 + $0xa4] sm:$0xf]
        %v1562 = vsel %vm1536, %v1421, %v1561
        %1563 = vst [vmem:[%s1224 + $0xa4] sm:$0xf] %v1562
        %1564 = vst [vmem:[%s1224 + $0xb0] sm:$0xf] %v1427
        %v1565 = vld [vmem:[%s1224 + $0xbc] sm:$0xf]
        %v1566 = vsel %vm1536, %v1430, %v1565
        %1567 = vst [vmem:[%s1224 + $0xbc] sm:$0xf] %v1566
        %1568 = vst [vmem:[%s1224 + $0xc8] sm:$0xf] %v1436
        %v1569 = vld [vmem:[%s1224 + $0xd4] sm:$0xf]
        %v1570 = vsel %vm1536, %v1439, %v1569
        %1571 = vst [vmem:[%s1224 + $0xd4] sm:$0xf] %v1570
        %1572 = vst [vmem:[%s1224 + $0xe0] sm:$0xf] %v1445
        %v1573 = vld [vmem:[%s1224 + $0xec] sm:$0xf]
        %v1574 = vsel %vm1536, %v1448, %v1573
        %1575 = vst [vmem:[%s1224 + $0xec] sm:$0xf] %v1574
        %1576 = vst [vmem:[%s1224 + $0xf8] sm:$0xf] %v1454
        %v1577 = vld [vmem:[%s1224 + $0x104] sm:$0xf]
        %v1578 = vsel %vm1536, %v1457, %v1577
        %1579 = vst [vmem:[%s1224 + $0x104] sm:$0xf] %v1578
        %1580 = vst [vmem:[%s1224 + $0x110] sm:$0xf] %v1463
        %v1581 = vld [vmem:[%s1224 + $0x11c] sm:$0xf]
        %v1582 = vsel %vm1536, %v1466, %v1581
        %1583 = vst [vmem:[%s1224 + $0x11c] sm:$0xf] %v1582
        %1584 = vst [vmem:[%s1224 + $0x128] sm:$0xf] %v1472
        %v1585 = vld [vmem:[%s1224 + $0x134] sm:$0xf]
        %v1586 = vsel %vm1536, %v1475, %v1585
        %1587 = vst [vmem:[%s1224 + $0x134] sm:$0xf] %v1586
        %1588 = vst [vmem:[%s1224 + $0x140] sm:$0xf] %v1481
        %v1589 = vld [vmem:[%s1224 + $0x14c] sm:$0xf]
        %v1590 = vsel %vm1536, %v1484, %v1589
        %1591 = vst [vmem:[%s1224 + $0x14c] sm:$0xf] %v1590
        %1592 = vst [vmem:[%s1224 + $0x158] sm:$0xf] %v1490
        %v1593 = vld [vmem:[%s1224 + $0x164] sm:$0xf]
        %v1594 = vsel %vm1536, %v1493, %v1593
        %1595 = vst [vmem:[%s1224 + $0x164] sm:$0xf] %v1594
        %1596 = vst [vmem:[%s1224 + $0x170] sm:$0xf] %v1499
        %v1597 = vld [vmem:[%s1224 + $0x17c] sm:$0xf]
        %v1598 = vsel %vm1536, %v1502, %v1597
        %1599 = vst [vmem:[%s1224 + $0x17c] sm:$0xf] %v1598
      $region52: #{down_blk_forward.3} parent=47 // pred_fallthru
        _
      %v1600 = vld [vmem:[#allocation2] sm:$0xff]
      %v1601 = vld [vmem:[#allocation2 + $0x8] sm:$0xf]
      %v1602 = vld [vmem:[#allocation2 + $0xc] sm:$0xff]
      %v1603 = vld [vmem:[#allocation2 + $0x14] sm:$0xf]
      %v1604 = vld [vmem:[#allocation2 + $0x18] sm:$0xff]
      %v1605 = vld [vmem:[#allocation2 + $0x20] sm:$0xf]
      %v1606 = vld [vmem:[#allocation2 + $0x24] sm:$0xff]
      %v1607 = vld [vmem:[#allocation2 + $0x2c] sm:$0xf]
      %v1608 = vld [vmem:[#allocation2 + $0x30] sm:$0xff]
      %v1609 = vld [vmem:[#allocation2 + $0x38] sm:$0xf]
      %v1610 = vld [vmem:[#allocation2 + $0x3c] sm:$0xff]
      %v1611 = vld [vmem:[#allocation2 + $0x44] sm:$0xf]
      %v1612 = vld [vmem:[#allocation2 + $0x48] sm:$0xff]
      %v1613 = vld [vmem:[#allocation2 + $0x50] sm:$0xf]
      %v1614 = vld [vmem:[#allocation2 + $0x54] sm:$0xff]
      %v1615 = vld [vmem:[#allocation2 + $0x5c] sm:$0xf]
      %v1616 = vld [vmem:[#allocation2 + $0x60] sm:$0xff]
      %v1617 = vld [vmem:[#allocation2 + $0x68] sm:$0xf]
      %v1618 = vld [vmem:[#allocation2 + $0x6c] sm:$0xff]
      %v1619 = vld [vmem:[#allocation2 + $0x74] sm:$0xf]
      %v1620 = vld [vmem:[#allocation2 + $0x78] sm:$0xff]
      %v1621 = vld [vmem:[#allocation2 + $0x80] sm:$0xf]
      %v1622 = vld [vmem:[#allocation2 + $0x84] sm:$0xff]
      %v1623 = vld [vmem:[#allocation2 + $0x8c] sm:$0xf]
      %v1624 = vld [vmem:[#allocation2 + $0x90] sm:$0xff]
      %v1625 = vld [vmem:[#allocation2 + $0x98] sm:$0xf]
      %v1626 = vld [vmem:[#allocation2 + $0x9c] sm:$0xff]
      %v1627 = vld [vmem:[#allocation2 + $0xa4] sm:$0xf]
      %v1628 = vld [vmem:[#allocation2 + $0xa8] sm:$0xff]
      %v1629 = vld [vmem:[#allocation2 + $0xb0] sm:$0xf]
      %v1630 = vld [vmem:[#allocation2 + $0xb4] sm:$0xff]
      %v1631 = vld [vmem:[#allocation2 + $0xbc] sm:$0xf]
      %v1632 = vld [vmem:[#allocation2 + $0xc0] sm:$0xff]
      %v1633 = vld [vmem:[#allocation2 + $0xc8] sm:$0xf]
      %v1634 = vld [vmem:[#allocation2 + $0xcc] sm:$0xff]
      %v1635 = vld [vmem:[#allocation2 + $0xd4] sm:$0xf]
      %v1636 = vld [vmem:[#allocation2 + $0xd8] sm:$0xff]
      %v1637 = vld [vmem:[#allocation2 + $0xe0] sm:$0xf]
      %v1638 = vld [vmem:[#allocation2 + $0xe4] sm:$0xff]
      %v1639 = vld [vmem:[#allocation2 + $0xec] sm:$0xf]
      %v1640 = vld [vmem:[#allocation2 + $0xf0] sm:$0xff]
      %v1641 = vld [vmem:[#allocation2 + $0xf8] sm:$0xf]
      %v1642 = vld [vmem:[#allocation2 + $0xfc] sm:$0xff]
      %v1643 = vld [vmem:[#allocation2 + $0x104] sm:$0xf]
      %v1644 = vld [vmem:[#allocation2 + $0x108] sm:$0xff]
      %v1645 = vld [vmem:[#allocation2 + $0x110] sm:$0xf]
      %v1646 = vld [vmem:[#allocation2 + $0x114] sm:$0xff]
      %v1647 = vld [vmem:[#allocation2 + $0x11c] sm:$0xf]
      %v1648 = vld [vmem:[#allocation2 + $0x120] sm:$0xff]
      %v1649 = vld [vmem:[#allocation2 + $0x128] sm:$0xf]
      %v1650 = vld [vmem:[#allocation2 + $0x12c] sm:$0xff]
      %v1651 = vld [vmem:[#allocation2 + $0x134] sm:$0xf]
      %v1652 = vld [vmem:[#allocation2 + $0x138] sm:$0xff]
      %v1653 = vld [vmem:[#allocation2 + $0x140] sm:$0xf]
      %v1654 = vld [vmem:[#allocation2 + $0x144] sm:$0xff]
      %v1655 = vld [vmem:[#allocation2 + $0x14c] sm:$0xf]
      %v1656 = vld [vmem:[#allocation2 + $0x150] sm:$0xff]
      %v1657 = vld [vmem:[#allocation2 + $0x158] sm:$0xf]
      %v1658 = vld [vmem:[#allocation2 + $0x15c] sm:$0xff]
      %v1659 = vld [vmem:[#allocation2 + $0x164] sm:$0xf]
      %v1660 = vld [vmem:[#allocation2 + $0x168] sm:$0xff]
      %v1661 = vld [vmem:[#allocation2 + $0x170] sm:$0xf]
      %v1662 = vld [vmem:[#allocation2 + $0x174] sm:$0xff]
      %v1663 = vld [vmem:[#allocation2 + $0x17c] sm:$0xf]
      %v1664 = vld [vmem:[%s395] sm:$0xf]
      %v1665 = vld [vmem:[%s395 + $0x4] sm:$0xf]
      %v1666 = vld [vmem:[%s395 + $0x8] sm:$0xf]
      %v1667 = vld [vmem:[%s395 + $0xc] sm:$0xf]
      %v1668 = vld [vmem:[%s395 + $0x10] sm:$0xf]
      %v1669 = vld [vmem:[%s395 + $0x14] sm:$0xf]
      %v1670 = vld [vmem:[%s395 + $0x18] sm:$0xf]
      %v1671 = vld [vmem:[%s395 + $0x1c] sm:$0xf]
      %v1672 = vld [vmem:[%s395 + $0x20] sm:$0xf]
      %v1673 = vld [vmem:[%s395 + $0x24] sm:$0xf]
      %v1674 = vld [vmem:[%s395 + $0x28] sm:$0xf]
      %v1675 = vld [vmem:[%s395 + $0x2c] sm:$0xf]
      %v1676 = vld [vmem:[%s395 + $0x30] sm:$0xf]
      %v1677 = vld [vmem:[%s395 + $0x34] sm:$0xf]
      %v1678 = vld [vmem:[%s395 + $0x38] sm:$0xf]
      %v1679 = vld [vmem:[%s395 + $0x3c] sm:$0xf]
      %v1680 = vld [vmem:[%s395 + $0x40] sm:$0xf]
      %v1681 = vld [vmem:[%s395 + $0x44] sm:$0xf]
      %v1682 = vld [vmem:[%s395 + $0x48] sm:$0xf]
      %v1683 = vld [vmem:[%s395 + $0x4c] sm:$0xf]
      %v1684 = vld [vmem:[%s395 + $0x50] sm:$0xf]
      %v1685 = vld [vmem:[%s395 + $0x54] sm:$0xf]
      %v1686 = vld [vmem:[%s395 + $0x58] sm:$0xf]
      %v1687 = vld [vmem:[%s395 + $0x5c] sm:$0xf]
      %v1688 = vld [vmem:[%s395 + $0x60] sm:$0xf]
      %v1689 = vld [vmem:[%s395 + $0x64] sm:$0xf]
      %v1690 = vld [vmem:[%s395 + $0x68] sm:$0xf]
      %v1691 = vld [vmem:[%s395 + $0x6c] sm:$0xf]
      %v1692 = vld [vmem:[%s395 + $0x70] sm:$0xf]
      %v1693 = vld [vmem:[%s395 + $0x74] sm:$0xf]
      %v1694 = vld [vmem:[%s395 + $0x78] sm:$0xf]
      %v1695 = vld [vmem:[%s395 + $0x7c] sm:$0xf]
      %v1696 = vld [vmem:[%s395 + $0x80] sm:$0xf]
      %v1697 = vld [vmem:[%s395 + $0x84] sm:$0xf]
      %v1698 = vld [vmem:[%s395 + $0x88] sm:$0xf]
      %v1699 = vld [vmem:[%s395 + $0x8c] sm:$0xf]
      %v1700 = vld [vmem:[%s395 + $0x90] sm:$0xf]
      %v1701 = vld [vmem:[%s395 + $0x94] sm:$0xf]
      %v1702 = vld [vmem:[%s395 + $0x98] sm:$0xf]
      %v1703 = vld [vmem:[%s395 + $0x9c] sm:$0xf]
      %v1704 = vld [vmem:[%s395 + $0xa0] sm:$0xf]
      %v1705 = vld [vmem:[%s395 + $0xa4] sm:$0xf]
      %v1706 = vld [vmem:[%s395 + $0xa8] sm:$0xf]
      %v1707 = vld [vmem:[%s395 + $0xac] sm:$0xf]
      %v1708 = vld [vmem:[%s395 + $0xb0] sm:$0xf]
      %v1709 = vld [vmem:[%s395 + $0xb4] sm:$0xf]
      %v1710 = vld [vmem:[%s395 + $0xb8] sm:$0xf]
      %v1711 = vld [vmem:[%s395 + $0xbc] sm:$0xf]
      %s1712 = scalar_lea.vmem [#allocation2], 24
      %v1713 = vld [vmem:[%s1712] sm:$0xff]
      %v1714 = vld [vmem:[%s1712 + $0x8] sm:$0xf]
      %v1715 = vld [vmem:[%s1712 + $0xc] sm:$0xff]
      %v1716 = vld [vmem:[%s1712 + $0x14] sm:$0xf]
      %v1717 = vld [vmem:[%s1712 + $0x18] sm:$0xff]
      %v1718 = vld [vmem:[%s1712 + $0x20] sm:$0xf]
      %v1719 = vld [vmem:[%s1712 + $0x24] sm:$0xff]
      %v1720 = vld [vmem:[%s1712 + $0x2c] sm:$0xf]
      %v1721 = vld [vmem:[%s1712 + $0x30] sm:$0xff]
      %v1722 = vld [vmem:[%s1712 + $0x38] sm:$0xf]
      %v1723 = vld [vmem:[%s1712 + $0x3c] sm:$0xff]
      %v1724 = vld [vmem:[%s1712 + $0x44] sm:$0xf]
      %v1725 = vld [vmem:[%s1712 + $0x48] sm:$0xff]
      %v1726 = vld [vmem:[%s1712 + $0x50] sm:$0xf]
      %v1727 = vld [vmem:[%s1712 + $0x54] sm:$0xff]
      %v1728 = vld [vmem:[%s1712 + $0x5c] sm:$0xf]
      %v1729 = vld [vmem:[%s1712 + $0x60] sm:$0xff]
      %v1730 = vld [vmem:[%s1712 + $0x68] sm:$0xf]
      %v1731 = vld [vmem:[%s1712 + $0x6c] sm:$0xff]
      %v1732 = vld [vmem:[%s1712 + $0x74] sm:$0xf]
      %v1733 = vld [vmem:[%s1712 + $0x78] sm:$0xff]
      %v1734 = vld [vmem:[%s1712 + $0x80] sm:$0xf]
      %v1735 = vld [vmem:[%s1712 + $0x84] sm:$0xff]
      %v1736 = vld [vmem:[%s1712 + $0x8c] sm:$0xf]
      %v1737 = vld [vmem:[%s1712 + $0x90] sm:$0xff]
      %v1738 = vld [vmem:[%s1712 + $0x98] sm:$0xf]
      %v1739 = vld [vmem:[%s1712 + $0x9c] sm:$0xff]
      %v1740 = vld [vmem:[%s1712 + $0xa4] sm:$0xf]
      %v1741 = vld [vmem:[%s1712 + $0xa8] sm:$0xff]
      %v1742 = vld [vmem:[%s1712 + $0xb0] sm:$0xf]
      %v1743 = vld [vmem:[%s1712 + $0xb4] sm:$0xff]
      %v1744 = vld [vmem:[%s1712 + $0xbc] sm:$0xf]
      %v1745 = vld [vmem:[%s1712 + $0xc0] sm:$0xff]
      %v1746 = vld [vmem:[%s1712 + $0xc8] sm:$0xf]
      %v1747 = vld [vmem:[%s1712 + $0xcc] sm:$0xff]
      %v1748 = vld [vmem:[%s1712 + $0xd4] sm:$0xf]
      %v1749 = vld [vmem:[%s1712 + $0xd8] sm:$0xff]
      %v1750 = vld [vmem:[%s1712 + $0xe0] sm:$0xf]
      %v1751 = vld [vmem:[%s1712 + $0xe4] sm:$0xff]
      %v1752 = vld [vmem:[%s1712 + $0xec] sm:$0xf]
      %v1753 = vld [vmem:[%s1712 + $0xf0] sm:$0xff]
      %v1754 = vld [vmem:[%s1712 + $0xf8] sm:$0xf]
      %v1755 = vld [vmem:[%s1712 + $0xfc] sm:$0xff]
      %v1756 = vld [vmem:[%s1712 + $0x104] sm:$0xf]
      %v1757 = vld [vmem:[%s1712 + $0x108] sm:$0xff]
      %v1758 = vld [vmem:[%s1712 + $0x110] sm:$0xf]
      %v1759 = vld [vmem:[%s1712 + $0x114] sm:$0xff]
      %v1760 = vld [vmem:[%s1712 + $0x11c] sm:$0xf]
      %v1761 = vld [vmem:[%s1712 + $0x120] sm:$0xff]
      %v1762 = vld [vmem:[%s1712 + $0x128] sm:$0xf]
      %v1763 = vld [vmem:[%s1712 + $0x12c] sm:$0xff]
      %v1764 = vld [vmem:[%s1712 + $0x134] sm:$0xf]
      %v1765 = vld [vmem:[%s1712 + $0x138] sm:$0xff]
      %v1766 = vld [vmem:[%s1712 + $0x140] sm:$0xf]
      %v1767 = vld [vmem:[%s1712 + $0x144] sm:$0xff]
      %v1768 = vld [vmem:[%s1712 + $0x14c] sm:$0xf]
      %v1769 = vld [vmem:[%s1712 + $0x150] sm:$0xff]
      %v1770 = vld [vmem:[%s1712 + $0x158] sm:$0xf]
      %v1771 = vld [vmem:[%s1712 + $0x15c] sm:$0xff]
      %v1772 = vld [vmem:[%s1712 + $0x164] sm:$0xf]
      %v1773 = vld [vmem:[%s1712 + $0x168] sm:$0xff]
      %v1774 = vld [vmem:[%s1712 + $0x170] sm:$0xf]
      %v1775 = vld [vmem:[%s1712 + $0x174] sm:$0xff]
      %v1776 = vld [vmem:[%s1712 + $0x17c] sm:$0xf]
      %s1777 = scalar_lea.vmem %s395, 192
      %v1778 = vld [vmem:[%s1777] sm:$0xf]
      %v1779 = vld [vmem:[%s1777 + $0x4] sm:$0xf]
      %v1780 = vld [vmem:[%s1777 + $0x8] sm:$0xf]
      %v1781 = vld [vmem:[%s1777 + $0xc] sm:$0xf]
      %v1782 = vld [vmem:[%s1777 + $0x10] sm:$0xf]
      %v1783 = vld [vmem:[%s1777 + $0x14] sm:$0xf]
      %v1784 = vld [vmem:[%s1777 + $0x18] sm:$0xf]
      %v1785 = vld [vmem:[%s1777 + $0x1c] sm:$0xf]
      %v1786 = vld [vmem:[%s1777 + $0x20] sm:$0xf]
      %v1787 = vld [vmem:[%s1777 + $0x24] sm:$0xf]
      %v1788 = vld [vmem:[%s1777 + $0x28] sm:$0xf]
      %v1789 = vld [vmem:[%s1777 + $0x2c] sm:$0xf]
      %v1790 = vld [vmem:[%s1777 + $0x30] sm:$0xf]
      %v1791 = vld [vmem:[%s1777 + $0x34] sm:$0xf]
      %v1792 = vld [vmem:[%s1777 + $0x38] sm:$0xf]
      %v1793 = vld [vmem:[%s1777 + $0x3c] sm:$0xf]
      %v1794 = vld [vmem:[%s1777 + $0x40] sm:$0xf]
      %v1795 = vld [vmem:[%s1777 + $0x44] sm:$0xf]
      %v1796 = vld [vmem:[%s1777 + $0x48] sm:$0xf]
      %v1797 = vld [vmem:[%s1777 + $0x4c] sm:$0xf]
      %v1798 = vld [vmem:[%s1777 + $0x50] sm:$0xf]
      %v1799 = vld [vmem:[%s1777 + $0x54] sm:$0xf]
      %v1800 = vld [vmem:[%s1777 + $0x58] sm:$0xf]
      %v1801 = vld [vmem:[%s1777 + $0x5c] sm:$0xf]
      %v1802 = vld [vmem:[%s1777 + $0x60] sm:$0xf]
      %v1803 = vld [vmem:[%s1777 + $0x64] sm:$0xf]
      %v1804 = vld [vmem:[%s1777 + $0x68] sm:$0xf]
      %v1805 = vld [vmem:[%s1777 + $0x6c] sm:$0xf]
      %v1806 = vld [vmem:[%s1777 + $0x70] sm:$0xf]
      %v1807 = vld [vmem:[%s1777 + $0x74] sm:$0xf]
      %v1808 = vld [vmem:[%s1777 + $0x78] sm:$0xf]
      %v1809 = vld [vmem:[%s1777 + $0x7c] sm:$0xf]
      %v1810 = vld [vmem:[%s1777 + $0x80] sm:$0xf]
      %v1811 = vld [vmem:[%s1777 + $0x84] sm:$0xf]
      %v1812 = vld [vmem:[%s1777 + $0x88] sm:$0xf]
      %v1813 = vld [vmem:[%s1777 + $0x8c] sm:$0xf]
      %v1814 = vld [vmem:[%s1777 + $0x90] sm:$0xf]
      %v1815 = vld [vmem:[%s1777 + $0x94] sm:$0xf]
      %v1816 = vld [vmem:[%s1777 + $0x98] sm:$0xf]
      %v1817 = vld [vmem:[%s1777 + $0x9c] sm:$0xf]
      %v1818 = vld [vmem:[%s1777 + $0xa0] sm:$0xf]
      %v1819 = vld [vmem:[%s1777 + $0xa4] sm:$0xf]
      %v1820 = vld [vmem:[%s1777 + $0xa8] sm:$0xf]
      %v1821 = vld [vmem:[%s1777 + $0xac] sm:$0xf]
      %v1822 = vld [vmem:[%s1777 + $0xb0] sm:$0xf]
      %v1823 = vld [vmem:[%s1777 + $0xb4] sm:$0xf]
      %v1824 = vld [vmem:[%s1777 + $0xb8] sm:$0xf]
      %v1825 = vld [vmem:[%s1777 + $0xbc] sm:$0xf]
      %v1890 = vunpack.c.l.b16 %v1713
      %v1891 = vunpack.c.h.b16 %v1713
      %v1892 = vunpack.c.l.b16 %v1714
      %v1893 = vunpack.c.l.b16 %v1715
      %v1894 = vunpack.c.h.b16 %v1715
      %v1895 = vunpack.c.l.b16 %v1716
      %v1896 = vunpack.c.l.b16 %v1717
      %v1897 = vunpack.c.h.b16 %v1717
      %v1898 = vunpack.c.l.b16 %v1718
      %v1899 = vunpack.c.l.b16 %v1719
      %v1900 = vunpack.c.h.b16 %v1719
      %v1901 = vunpack.c.l.b16 %v1720
      %v1902 = vunpack.c.l.b16 %v1721
      %v1903 = vunpack.c.h.b16 %v1721
      %v1904 = vunpack.c.l.b16 %v1722
      %v1905 = vunpack.c.l.b16 %v1723
      %v1906 = vunpack.c.h.b16 %v1723
      %v1907 = vunpack.c.l.b16 %v1724
      %v1908 = vunpack.c.l.b16 %v1725
      %v1909 = vunpack.c.h.b16 %v1725
      %v1910 = vunpack.c.l.b16 %v1726
      %v1911 = vunpack.c.l.b16 %v1727
      %v1912 = vunpack.c.h.b16 %v1727
      %v1913 = vunpack.c.l.b16 %v1728
      %v1914 = vunpack.c.l.b16 %v1729
      %v1915 = vunpack.c.h.b16 %v1729
      %v1916 = vunpack.c.l.b16 %v1730
      %v1917 = vunpack.c.l.b16 %v1731
      %v1918 = vunpack.c.h.b16 %v1731
      %v1919 = vunpack.c.l.b16 %v1732
      %v1920 = vunpack.c.l.b16 %v1733
      %v1921 = vunpack.c.h.b16 %v1733
      %v1922 = vunpack.c.l.b16 %v1734
      %v1923 = vunpack.c.l.b16 %v1735
      %v1924 = vunpack.c.h.b16 %v1735
      %v1925 = vunpack.c.l.b16 %v1736
      %v1926 = vunpack.c.l.b16 %v1737
      %v1927 = vunpack.c.h.b16 %v1737
      %v1928 = vunpack.c.l.b16 %v1738
      %v1929 = vunpack.c.l.b16 %v1739
      %v1930 = vunpack.c.h.b16 %v1739
      %v1931 = vunpack.c.l.b16 %v1740
      %v1932 = vunpack.c.l.b16 %v1741
      %v1933 = vunpack.c.h.b16 %v1741
      %v1934 = vunpack.c.l.b16 %v1742
      %v1935 = vunpack.c.l.b16 %v1743
      %v1936 = vunpack.c.h.b16 %v1743
      %v1937 = vunpack.c.l.b16 %v1744
      %v1938 = vunpack.c.l.b16 %v1745
      %v1939 = vunpack.c.h.b16 %v1745
      %v1940 = vunpack.c.l.b16 %v1746
      %v1941 = vunpack.c.l.b16 %v1747
      %v1942 = vunpack.c.h.b16 %v1747
      %v1943 = vunpack.c.l.b16 %v1748
      %v1944 = vunpack.c.l.b16 %v1749
      %v1945 = vunpack.c.h.b16 %v1749
      %v1946 = vunpack.c.l.b16 %v1750
      %v1947 = vunpack.c.l.b16 %v1751
      %v1948 = vunpack.c.h.b16 %v1751
      %v1949 = vunpack.c.l.b16 %v1752
      %v1950 = vunpack.c.l.b16 %v1753
      %v1951 = vunpack.c.h.b16 %v1753
      %v1952 = vunpack.c.l.b16 %v1754
      %v1953 = vunpack.c.l.b16 %v1755
      %v1954 = vunpack.c.h.b16 %v1755
      %v1955 = vunpack.c.l.b16 %v1756
      %v1956 = vunpack.c.l.b16 %v1757
      %v1957 = vunpack.c.h.b16 %v1757
      %v1958 = vunpack.c.l.b16 %v1758
      %v1959 = vunpack.c.l.b16 %v1759
      %v1960 = vunpack.c.h.b16 %v1759
      %v1961 = vunpack.c.l.b16 %v1760
      %v1962 = vunpack.c.l.b16 %v1761
      %v1963 = vunpack.c.h.b16 %v1761
      %v1964 = vunpack.c.l.b16 %v1762
      %v1965 = vunpack.c.l.b16 %v1763
      %v1966 = vunpack.c.h.b16 %v1763
      %v1967 = vunpack.c.l.b16 %v1764
      %v1968 = vunpack.c.l.b16 %v1765
      %v1969 = vunpack.c.h.b16 %v1765
      %v1970 = vunpack.c.l.b16 %v1766
      %v1971 = vunpack.c.l.b16 %v1767
      %v1972 = vunpack.c.h.b16 %v1767
      %v1973 = vunpack.c.l.b16 %v1768
      %v1974 = vunpack.c.l.b16 %v1769
      %v1975 = vunpack.c.h.b16 %v1769
      %v1976 = vunpack.c.l.b16 %v1770
      %v1977 = vunpack.c.l.b16 %v1771
      %v1978 = vunpack.c.h.b16 %v1771
      %v1979 = vunpack.c.l.b16 %v1772
      %v1980 = vunpack.c.l.b16 %v1773
      %v1981 = vunpack.c.h.b16 %v1773
      %v1982 = vunpack.c.l.b16 %v1774
      %v1983 = vunpack.c.l.b16 %v1775
      %v1984 = vunpack.c.h.b16 %v1775
      %v1985 = vunpack.c.l.b16 %v1776
      %v1986 = vpack.c.b16 %v1893, %v1890
      %v1987 = vpack.c.b16 %v1894, %v1891
      %v1988 = vpack.c.b16 %v1895, %v1892
      %v1989 = vpack.c.b16 %v1899, %v1896
      %v1990 = vpack.c.b16 %v1900, %v1897
      %v1991 = vpack.c.b16 %v1901, %v1898
      %v1992 = vpack.c.b16 %v1905, %v1902
      %v1993 = vpack.c.b16 %v1906, %v1903
      %v1994 = vpack.c.b16 %v1907, %v1904
      %v1995 = vpack.c.b16 %v1911, %v1908
      %v1996 = vpack.c.b16 %v1912, %v1909
      %v1997 = vpack.c.b16 %v1913, %v1910
      %v1998 = vpack.c.b16 %v1917, %v1914
      %v1999 = vpack.c.b16 %v1918, %v1915
      %v2000 = vpack.c.b16 %v1919, %v1916
      %v2001 = vpack.c.b16 %v1923, %v1920
      %v2002 = vpack.c.b16 %v1924, %v1921
      %v2003 = vpack.c.b16 %v1925, %v1922
      %v2004 = vpack.c.b16 %v1929, %v1926
      %v2005 = vpack.c.b16 %v1930, %v1927
      %v2006 = vpack.c.b16 %v1931, %v1928
      %v2007 = vpack.c.b16 %v1935, %v1932
      %v2008 = vpack.c.b16 %v1936, %v1933
      %v2009 = vpack.c.b16 %v1937, %v1934
      %v2010 = vpack.c.b16 %v1941, %v1938
      %v2011 = vpack.c.b16 %v1942, %v1939
      %v2012 = vpack.c.b16 %v1943, %v1940
      %v2013 = vpack.c.b16 %v1947, %v1944
      %v2014 = vpack.c.b16 %v1948, %v1945
      %v2015 = vpack.c.b16 %v1949, %v1946
      %v2016 = vpack.c.b16 %v1953, %v1950
      %v2017 = vpack.c.b16 %v1954, %v1951
      %v2018 = vpack.c.b16 %v1955, %v1952
      %v2019 = vpack.c.b16 %v1959, %v1956
      %v2020 = vpack.c.b16 %v1960, %v1957
      %v2021 = vpack.c.b16 %v1961, %v1958
      %v2022 = vpack.c.b16 %v1965, %v1962
      %v2023 = vpack.c.b16 %v1966, %v1963
      %v2024 = vpack.c.b16 %v1967, %v1964
      %v2025 = vpack.c.b16 %v1971, %v1968
      %v2026 = vpack.c.b16 %v1972, %v1969
      %v2027 = vpack.c.b16 %v1973, %v1970
      %v2028 = vpack.c.b16 %v1977, %v1974
      %v2029 = vpack.c.b16 %v1978, %v1975
      %v2030 = vpack.c.b16 %v1979, %v1976
      %v2031 = vpack.c.b16 %v1983, %v1980
      %v2032 = vpack.c.b16 %v1984, %v1981
      %v2033 = vpack.c.b16 %v1985, %v1982
      %v2130 = vunpack.c.l.b16 %v1778
      %v2131 = vunpack.c.l.b16 %v1779
      %v2132 = vunpack.c.l.b16 %v1780
      %v2133 = vunpack.c.l.b16 %v1781
      %v2134 = vunpack.c.l.b16 %v1782
      %v2135 = vunpack.c.l.b16 %v1783
      %v2136 = vunpack.c.l.b16 %v1784
      %v2137 = vunpack.c.l.b16 %v1785
      %v2138 = vunpack.c.l.b16 %v1786
      %v2139 = vunpack.c.l.b16 %v1787
      %v2140 = vunpack.c.l.b16 %v1788
      %v2141 = vunpack.c.l.b16 %v1789
      %v2142 = vunpack.c.l.b16 %v1790
      %v2143 = vunpack.c.l.b16 %v1791
      %v2144 = vunpack.c.l.b16 %v1792
      %v2145 = vunpack.c.l.b16 %v1793
      %v2146 = vunpack.c.l.b16 %v1794
      %v2147 = vunpack.c.l.b16 %v1795
      %v2148 = vunpack.c.l.b16 %v1796
      %v2149 = vunpack.c.l.b16 %v1797
      %v2150 = vunpack.c.l.b16 %v1798
      %v2151 = vunpack.c.l.b16 %v1799
      %v2152 = vunpack.c.l.b16 %v1800
      %v2153 = vunpack.c.l.b16 %v1801
      %v2154 = vunpack.c.l.b16 %v1802
      %v2155 = vunpack.c.l.b16 %v1803
      %v2156 = vunpack.c.l.b16 %v1804
      %v2157 = vunpack.c.l.b16 %v1805
      %v2158 = vunpack.c.l.b16 %v1806
      %v2159 = vunpack.c.l.b16 %v1807
      %v2160 = vunpack.c.l.b16 %v1808
      %v2161 = vunpack.c.l.b16 %v1809
      %v2162 = vunpack.c.l.b16 %v1810
      %v2163 = vunpack.c.l.b16 %v1811
      %v2164 = vunpack.c.l.b16 %v1812
      %v2165 = vunpack.c.l.b16 %v1813
      %v2166 = vunpack.c.l.b16 %v1814
      %v2167 = vunpack.c.l.b16 %v1815
      %v2168 = vunpack.c.l.b16 %v1816
      %v2169 = vunpack.c.l.b16 %v1817
      %v2170 = vunpack.c.l.b16 %v1818
      %v2171 = vunpack.c.l.b16 %v1819
      %v2172 = vunpack.c.l.b16 %v1820
      %v2173 = vunpack.c.l.b16 %v1821
      %v2174 = vunpack.c.l.b16 %v1822
      %v2175 = vunpack.c.l.b16 %v1823
      %v2176 = vunpack.c.l.b16 %v1824
      %v2177 = vunpack.c.l.b16 %v1825
      %v2178 = vpack.c.b16 %v2131, %v2130
      %v2179 = vpack.c.b16 %v2133, %v2132
      %v2180 = vpack.c.b16 %v2135, %v2134
      %v2181 = vpack.c.b16 %v2137, %v2136
      %v2182 = vpack.c.b16 %v2139, %v2138
      %v2183 = vpack.c.b16 %v2141, %v2140
      %v2184 = vpack.c.b16 %v2143, %v2142
      %v2185 = vpack.c.b16 %v2145, %v2144
      %v2186 = vpack.c.b16 %v2147, %v2146
      %v2187 = vpack.c.b16 %v2149, %v2148
      %v2188 = vpack.c.b16 %v2151, %v2150
      %v2189 = vpack.c.b16 %v2153, %v2152
      %v2190 = vpack.c.b16 %v2155, %v2154
      %v2191 = vpack.c.b16 %v2157, %v2156
      %v2192 = vpack.c.b16 %v2159, %v2158
      %v2193 = vpack.c.b16 %v2161, %v2160
      %v2194 = vpack.c.b16 %v2163, %v2162
      %v2195 = vpack.c.b16 %v2165, %v2164
      %v2196 = vpack.c.b16 %v2167, %v2166
      %v2197 = vpack.c.b16 %v2169, %v2168
      %v2198 = vpack.c.b16 %v2171, %v2170
      %v2199 = vpack.c.b16 %v2173, %v2172
      %v2200 = vpack.c.b16 %v2175, %v2174
      %v2201 = vpack.c.b16 %v2177, %v2176
      %2226 = vmatprep.subr.bf16.mxu0 0
      %2227 = vmatpush1.bf16.msra.mxu0 %v2185
      %2228 = vmatprep.subr.bf16.mxu0 0
      %2229 = vmatpush1.bf16.msra.mxu0 %v2184
      %2230 = vmatprep.subr.bf16.mxu0 0
      %2231 = vmatpush1.bf16.msra.mxu0 %v2183
      %2232 = vmatprep.subr.bf16.mxu0 0
      %2233 = vmatpush1.bf16.msra.mxu0 %v2182
      %2234 = vmatprep.subr.bf16.mxu0 0
      %2235 = vmatpush1.bf16.msra.mxu0 %v2181
      %2236 = vmatprep.subr.bf16.mxu0 0
      %2237 = vmatpush1.bf16.msra.mxu0 %v2180
      %2238 = vmatprep.subr.bf16.mxu0 0
      %2239 = vmatpush1.bf16.msra.mxu0 %v2179
      %2240 = vmatprep.subr.bf16.mxu0 0
      %2241 = vmatpush1.bf16.msra.mxu0 %v2178
      %2242 = vmatprep.subr.bf16.mxu0 0
      %2243 = vmatpush2.bf16.msra.mxu0 %v2193
      %2244 = vmatprep.subr.bf16.mxu0 0
      %2245 = vmatpush2.bf16.msra.mxu0 %v2192
      %2246 = vmatprep.subr.bf16.mxu0 0
      %2247 = vmatpush2.bf16.msra.mxu0 %v2191
      %2248 = vmatprep.subr.bf16.mxu0 0
      %2249 = vmatpush2.bf16.msra.mxu0 %v2190
      %2250 = vmatprep.subr.bf16.mxu0 0
      %2251 = vmatpush2.bf16.msra.mxu0 %v2189
      %2252 = vmatprep.subr.bf16.mxu0 0
      %2253 = vmatpush2.bf16.msra.mxu0 %v2188
      %2254 = vmatprep.subr.bf16.mxu0 0
      %2255 = vmatpush2.bf16.msra.mxu0 %v2187
      %2256 = vmatprep.subr.bf16.mxu0 0
      %2257 = vmatpush2.bf16.msra.mxu0 %v2186
      %2258 = vmatprep.mubr.bf16.mxu0 %v1987
      %2259 = vmatmul.mubr.bf16.gmra.mxu0 %v1986
      %v2260 = vpop.f32.mrf.mxu0
      %v2261 = vadd.f32 0.0, %v2260
      %v2262 = vpop.f32.mrf.mxu0
      %v2263 = vpop.f32.mrf.mxu0
      %v2264 = vadd.f32 0.0, %v2263
      %v2265 = vpop.f32.mrf.mxu0
      %2266 = vmatprep.mubr.bf16.mxu0 %v1990
      %2267 = vmatmul.mubr.bf16.gmra.mxu0 %v1989
      %v2268 = vpop.f32.mrf.mxu0
      %v2269 = vadd.f32 0.0, %v2268
      %v2270 = vpop.f32.mrf.mxu0
      %v2271 = vpop.f32.mrf.mxu0
      %v2272 = vadd.f32 0.0, %v2271
      %v2273 = vpop.f32.mrf.mxu0
      %2274 = vmatprep.mubr.bf16.mxu0 %v1993
      %2275 = vmatmul.mubr.bf16.gmra.mxu0 %v1992
      %v2276 = vpop.f32.mrf.mxu0
      %v2277 = vadd.f32 0.0, %v2276
      %v2278 = vpop.f32.mrf.mxu0
      %v2279 = vpop.f32.mrf.mxu0
      %v2280 = vadd.f32 0.0, %v2279
      %v2281 = vpop.f32.mrf.mxu0
      %2282 = vmatprep.mubr.bf16.mxu0 %v1996
      %2283 = vmatmul.mubr.bf16.gmra.mxu0 %v1995
      %v2284 = vpop.f32.mrf.mxu0
      %v2285 = vadd.f32 0.0, %v2284
      %v2286 = vpop.f32.mrf.mxu0
      %v2287 = vpop.f32.mrf.mxu0
      %v2288 = vadd.f32 0.0, %v2287
      %v2289 = vpop.f32.mrf.mxu0
      %2290 = vmatprep.mubr.bf16.mxu0 %v1999
      %2291 = vmatmul.mubr.bf16.gmra.mxu0 %v1998
      %v2292 = vpop.f32.mrf.mxu0
      %v2293 = vadd.f32 0.0, %v2292
      %v2294 = vpop.f32.mrf.mxu0
      %v2295 = vpop.f32.mrf.mxu0
      %v2296 = vadd.f32 0.0, %v2295
      %v2297 = vpop.f32.mrf.mxu0
      %2298 = vmatprep.mubr.bf16.mxu0 %v2002
      %2299 = vmatmul.mubr.bf16.gmra.mxu0 %v2001
      %v2300 = vpop.f32.mrf.mxu0
      %v2301 = vadd.f32 0.0, %v2300
      %v2302 = vpop.f32.mrf.mxu0
      %v2303 = vpop.f32.mrf.mxu0
      %v2304 = vadd.f32 0.0, %v2303
      %v2305 = vpop.f32.mrf.mxu0
      %2306 = vmatprep.mubr.bf16.mxu0 %v2005
      %2307 = vmatmul.mubr.bf16.gmra.mxu0 %v2004
      %v2308 = vpop.f32.mrf.mxu0
      %v2309 = vadd.f32 0.0, %v2308
      %v2310 = vpop.f32.mrf.mxu0
      %v2311 = vpop.f32.mrf.mxu0
      %v2312 = vadd.f32 0.0, %v2311
      %v2313 = vpop.f32.mrf.mxu0
      %2314 = vmatprep.mubr.bf16.mxu0 %v2008
      %2315 = vmatmul.mubr.bf16.gmra.mxu0 %v2007
      %v2316 = vpop.f32.mrf.mxu0
      %v2317 = vadd.f32 0.0, %v2316
      %v2318 = vpop.f32.mrf.mxu0
      %v2319 = vpop.f32.mrf.mxu0
      %v2320 = vadd.f32 0.0, %v2319
      %v2321 = vpop.f32.mrf.mxu0
      %2322 = vmatprep.mubr.bf16.mxu0 %v2011
      %2323 = vmatmul.mubr.bf16.gmra.mxu0 %v2010
      %v2324 = vpop.f32.mrf.mxu0
      %v2325 = vadd.f32 0.0, %v2324
      %v2326 = vpop.f32.mrf.mxu0
      %v2327 = vpop.f32.mrf.mxu0
      %v2328 = vadd.f32 0.0, %v2327
      %v2329 = vpop.f32.mrf.mxu0
      %2330 = vmatprep.mubr.bf16.mxu0 %v2014
      %2331 = vmatmul.mubr.bf16.gmra.mxu0 %v2013
      %v2332 = vpop.f32.mrf.mxu0
      %v2333 = vadd.f32 0.0, %v2332
      %v2334 = vpop.f32.mrf.mxu0
      %v2335 = vpop.f32.mrf.mxu0
      %v2336 = vadd.f32 0.0, %v2335
      %v2337 = vpop.f32.mrf.mxu0
      %2338 = vmatprep.mubr.bf16.mxu0 %v2017
      %2339 = vmatmul.mubr.bf16.gmra.mxu0 %v2016
      %v2340 = vpop.f32.mrf.mxu0
      %v2341 = vadd.f32 0.0, %v2340
      %v2342 = vpop.f32.mrf.mxu0
      %v2343 = vpop.f32.mrf.mxu0
      %v2344 = vadd.f32 0.0, %v2343
      %v2345 = vpop.f32.mrf.mxu0
      %2346 = vmatprep.mubr.bf16.mxu0 %v2020
      %2347 = vmatmul.mubr.bf16.gmra.mxu0 %v2019
      %v2348 = vpop.f32.mrf.mxu0
      %v2349 = vadd.f32 0.0, %v2348
      %v2350 = vpop.f32.mrf.mxu0
      %v2351 = vpop.f32.mrf.mxu0
      %v2352 = vadd.f32 0.0, %v2351
      %v2353 = vpop.f32.mrf.mxu0
      %2354 = vmatprep.mubr.bf16.mxu0 %v2023
      %2355 = vmatmul.mubr.bf16.gmra.mxu0 %v2022
      %v2356 = vpop.f32.mrf.mxu0
      %v2357 = vadd.f32 0.0, %v2356
      %v2358 = vpop.f32.mrf.mxu0
      %v2359 = vpop.f32.mrf.mxu0
      %v2360 = vadd.f32 0.0, %v2359
      %v2361 = vpop.f32.mrf.mxu0
      %2362 = vmatprep.mubr.bf16.mxu0 %v2026
      %2363 = vmatmul.mubr.bf16.gmra.mxu0 %v2025
      %v2364 = vpop.f32.mrf.mxu0
      %v2365 = vadd.f32 0.0, %v2364
      %v2366 = vpop.f32.mrf.mxu0
      %v2367 = vpop.f32.mrf.mxu0
      %v2368 = vadd.f32 0.0, %v2367
      %v2369 = vpop.f32.mrf.mxu0
      %2370 = vmatprep.mubr.bf16.mxu0 %v2029
      %2371 = vmatmul.mubr.bf16.gmra.mxu0 %v2028
      %v2372 = vpop.f32.mrf.mxu0
      %v2373 = vadd.f32 0.0, %v2372
      %v2374 = vpop.f32.mrf.mxu0
      %v2375 = vpop.f32.mrf.mxu0
      %v2376 = vadd.f32 0.0, %v2375
      %v2377 = vpop.f32.mrf.mxu0
      %2378 = vmatprep.mubr.bf16.mxu0 %v2032
      %2379 = vmatmul.mubr.bf16.gmra.mxu0 %v2031
      %v2380 = vpop.f32.mrf.mxu0
      %v2381 = vadd.f32 0.0, %v2380
      %v2382 = vpop.f32.mrf.mxu0
      %v2383 = vpop.f32.mrf.mxu0
      %v2384 = vadd.f32 0.0, %v2383
      %v2385 = vpop.f32.mrf.mxu0
      %2386 = vdwg.mxu0
      %2387 = vmatprep.subr.bf16.mxu0 0
      %2388 = vmatpush1.bf16.msra.mxu0 %v2201
      %2389 = vmatprep.subr.bf16.mxu0 0
      %2390 = vmatpush1.bf16.msra.mxu0 %v2200
      %2391 = vmatprep.subr.bf16.mxu0 0
      %2392 = vmatpush1.bf16.msra.mxu0 %v2199
      %2393 = vmatprep.subr.bf16.mxu0 0
      %2394 = vmatpush1.bf16.msra.mxu0 %v2198
      %2395 = vmatprep.subr.bf16.mxu0 0
      %2396 = vmatpush1.bf16.msra.mxu0 %v2197
      %2397 = vmatprep.subr.bf16.mxu0 0
      %2398 = vmatpush1.bf16.msra.mxu0 %v2196
      %2399 = vmatprep.subr.bf16.mxu0 0
      %2400 = vmatpush1.bf16.msra.mxu0 %v2195
      %2401 = vmatprep.subr.bf16.mxu0 0
      %2402 = vmatpush1.bf16.msra.mxu0 %v2194
      %2403 = vmatprep.subr.bf16.mxu0 0
      %2404 = vmatpush2.bf16.msra.mxu0 0
      %2405 = vmatprep.subr.bf16.mxu0 0
      %2406 = vmatpush2.bf16.msra.mxu0 0
      %2407 = vmatprep.subr.bf16.mxu0 0
      %2408 = vmatpush2.bf16.msra.mxu0 0
      %2409 = vmatprep.subr.bf16.mxu0 0
      %2410 = vmatpush2.bf16.msra.mxu0 0
      %2411 = vmatprep.subr.bf16.mxu0 0
      %2412 = vmatpush2.bf16.msra.mxu0 0
      %2413 = vmatprep.subr.bf16.mxu0 0
      %2414 = vmatpush2.bf16.msra.mxu0 0
      %2415 = vmatprep.subr.bf16.mxu0 0
      %2416 = vmatpush2.bf16.msra.mxu0 0
      %2417 = vmatprep.subr.bf16.mxu0 0
      %2418 = vmatpush2.bf16.msra.mxu0 0
      %2419 = vmatprep.mubr.bf16.mxu0 0
      %2420 = vmatmul.mubr.bf16.gmra.mxu0 %v1988
      %v2421 = vpop.f32.mrf.mxu0
      %v2422 = vadd.f32 %v2261, %v2421
      %v2423 = vpop.f32.mrf.mxu0
      %v2424 = vpop.f32.mrf.mxu0
      %v2425 = vadd.f32 %v2264, %v2424
      %v2426 = vpop.f32.mrf.mxu0
      %2427 = vmatprep.mubr.bf16.mxu0 0
      %2428 = vmatmul.mubr.bf16.gmra.mxu0 %v1991
      %v2429 = vpop.f32.mrf.mxu0
      %v2430 = vadd.f32 %v2269, %v2429
      %v2431 = vpop.f32.mrf.mxu0
      %v2432 = vpop.f32.mrf.mxu0
      %v2433 = vadd.f32 %v2272, %v2432
      %v2434 = vpop.f32.mrf.mxu0
      %2435 = vmatprep.mubr.bf16.mxu0 0
      %2436 = vmatmul.mubr.bf16.gmra.mxu0 %v1994
      %v2437 = vpop.f32.mrf.mxu0
      %v2438 = vadd.f32 %v2277, %v2437
      %v2439 = vpop.f32.mrf.mxu0
      %v2440 = vpop.f32.mrf.mxu0
      %v2441 = vadd.f32 %v2280, %v2440
      %v2442 = vpop.f32.mrf.mxu0
      %2443 = vmatprep.mubr.bf16.mxu0 0
      %2444 = vmatmul.mubr.bf16.gmra.mxu0 %v1997
      %v2445 = vpop.f32.mrf.mxu0
      %v2446 = vadd.f32 %v2285, %v2445
      %v2447 = vpop.f32.mrf.mxu0
      %v2448 = vpop.f32.mrf.mxu0
      %v2449 = vadd.f32 %v2288, %v2448
      %v2450 = vpop.f32.mrf.mxu0
      %2451 = vmatprep.mubr.bf16.mxu0 0
      %2452 = vmatmul.mubr.bf16.gmra.mxu0 %v2000
      %v2453 = vpop.f32.mrf.mxu0
      %v2454 = vadd.f32 %v2293, %v2453
      %v2455 = vpop.f32.mrf.mxu0
      %v2456 = vpop.f32.mrf.mxu0
      %v2457 = vadd.f32 %v2296, %v2456
      %v2458 = vpop.f32.mrf.mxu0
      %2459 = vmatprep.mubr.bf16.mxu0 0
      %2460 = vmatmul.mubr.bf16.gmra.mxu0 %v2003
      %v2461 = vpop.f32.mrf.mxu0
      %v2462 = vadd.f32 %v2301, %v2461
      %v2463 = vpop.f32.mrf.mxu0
      %v2464 = vpop.f32.mrf.mxu0
      %v2465 = vadd.f32 %v2304, %v2464
      %v2466 = vpop.f32.mrf.mxu0
      %2467 = vmatprep.mubr.bf16.mxu0 0
      %2468 = vmatmul.mubr.bf16.gmra.mxu0 %v2006
      %v2469 = vpop.f32.mrf.mxu0
      %v2470 = vadd.f32 %v2309, %v2469
      %v2471 = vpop.f32.mrf.mxu0
      %v2472 = vpop.f32.mrf.mxu0
      %v2473 = vadd.f32 %v2312, %v2472
      %v2474 = vpop.f32.mrf.mxu0
      %2475 = vmatprep.mubr.bf16.mxu0 0
      %2476 = vmatmul.mubr.bf16.gmra.mxu0 %v2009
      %v2477 = vpop.f32.mrf.mxu0
      %v2478 = vadd.f32 %v2317, %v2477
      %v2479 = vpop.f32.mrf.mxu0
      %v2480 = vpop.f32.mrf.mxu0
      %v2481 = vadd.f32 %v2320, %v2480
      %v2482 = vpop.f32.mrf.mxu0
      %2483 = vmatprep.mubr.bf16.mxu0 0
      %2484 = vmatmul.mubr.bf16.gmra.mxu0 %v2012
      %v2485 = vpop.f32.mrf.mxu0
      %v2486 = vadd.f32 %v2325, %v2485
      %v2487 = vpop.f32.mrf.mxu0
      %v2488 = vpop.f32.mrf.mxu0
      %v2489 = vadd.f32 %v2328, %v2488
      %v2490 = vpop.f32.mrf.mxu0
      %2491 = vmatprep.mubr.bf16.mxu0 0
      %2492 = vmatmul.mubr.bf16.gmra.mxu0 %v2015
      %v2493 = vpop.f32.mrf.mxu0
      %v2494 = vadd.f32 %v2333, %v2493
      %v2495 = vpop.f32.mrf.mxu0
      %v2496 = vpop.f32.mrf.mxu0
      %v2497 = vadd.f32 %v2336, %v2496
      %v2498 = vpop.f32.mrf.mxu0
      %2499 = vmatprep.mubr.bf16.mxu0 0
      %2500 = vmatmul.mubr.bf16.gmra.mxu0 %v2018
      %v2501 = vpop.f32.mrf.mxu0
      %v2502 = vadd.f32 %v2341, %v2501
      %v2503 = vpop.f32.mrf.mxu0
      %v2504 = vpop.f32.mrf.mxu0
      %v2505 = vadd.f32 %v2344, %v2504
      %v2506 = vpop.f32.mrf.mxu0
      %2507 = vmatprep.mubr.bf16.mxu0 0
      %2508 = vmatmul.mubr.bf16.gmra.mxu0 %v2021
      %v2509 = vpop.f32.mrf.mxu0
      %v2510 = vadd.f32 %v2349, %v2509
      %v2511 = vpop.f32.mrf.mxu0
      %v2512 = vpop.f32.mrf.mxu0
      %v2513 = vadd.f32 %v2352, %v2512
      %v2514 = vpop.f32.mrf.mxu0
      %2515 = vmatprep.mubr.bf16.mxu0 0
      %2516 = vmatmul.mubr.bf16.gmra.mxu0 %v2024
      %v2517 = vpop.f32.mrf.mxu0
      %v2518 = vadd.f32 %v2357, %v2517
      %v2519 = vpop.f32.mrf.mxu0
      %v2520 = vpop.f32.mrf.mxu0
      %v2521 = vadd.f32 %v2360, %v2520
      %v2522 = vpop.f32.mrf.mxu0
      %2523 = vmatprep.mubr.bf16.mxu0 0
      %2524 = vmatmul.mubr.bf16.gmra.mxu0 %v2027
      %v2525 = vpop.f32.mrf.mxu0
      %v2526 = vadd.f32 %v2365, %v2525
      %v2527 = vpop.f32.mrf.mxu0
      %v2528 = vpop.f32.mrf.mxu0
      %v2529 = vadd.f32 %v2368, %v2528
      %v2530 = vpop.f32.mrf.mxu0
      %2531 = vmatprep.mubr.bf16.mxu0 0
      %2532 = vmatmul.mubr.bf16.gmra.mxu0 %v2030
      %v2533 = vpop.f32.mrf.mxu0
      %v2534 = vadd.f32 %v2373, %v2533
      %v2535 = vpop.f32.mrf.mxu0
      %v2536 = vpop.f32.mrf.mxu0
      %v2537 = vadd.f32 %v2376, %v2536
      %v2538 = vpop.f32.mrf.mxu0
      %2539 = vmatprep.mubr.bf16.mxu0 0
      %2540 = vmatmul.mubr.bf16.gmra.mxu0 %v2033
      %v2541 = vpop.f32.mrf.mxu0
      %v2542 = vadd.f32 %v2381, %v2541
      %v2543 = vpop.f32.mrf.mxu0
      %v2544 = vpop.f32.mrf.mxu0
      %v2545 = vadd.f32 %v2384, %v2544
      %v2546 = vpop.f32.mrf.mxu0
      %2547 = vdwg.mxu0
      %v2612 = vunpack.c.l.b16 %v1600
      %v2613 = vunpack.c.h.b16 %v1600
      %v2614 = vunpack.c.l.b16 %v1601
      %v2615 = vunpack.c.l.b16 %v1602
      %v2616 = vunpack.c.h.b16 %v1602
      %v2617 = vunpack.c.l.b16 %v1603
      %v2618 = vunpack.c.l.b16 %v1604
      %v2619 = vunpack.c.h.b16 %v1604
      %v2620 = vunpack.c.l.b16 %v1605
      %v2621 = vunpack.c.l.b16 %v1606
      %v2622 = vunpack.c.h.b16 %v1606
      %v2623 = vunpack.c.l.b16 %v1607
      %v2624 = vunpack.c.l.b16 %v1608
      %v2625 = vunpack.c.h.b16 %v1608
      %v2626 = vunpack.c.l.b16 %v1609
      %v2627 = vunpack.c.l.b16 %v1610
      %v2628 = vunpack.c.h.b16 %v1610
      %v2629 = vunpack.c.l.b16 %v1611
      %v2630 = vunpack.c.l.b16 %v1612
      %v2631 = vunpack.c.h.b16 %v1612
      %v2632 = vunpack.c.l.b16 %v1613
      %v2633 = vunpack.c.l.b16 %v1614
      %v2634 = vunpack.c.h.b16 %v1614
      %v2635 = vunpack.c.l.b16 %v1615
      %v2636 = vunpack.c.l.b16 %v1616
      %v2637 = vunpack.c.h.b16 %v1616
      %v2638 = vunpack.c.l.b16 %v1617
      %v2639 = vunpack.c.l.b16 %v1618
      %v2640 = vunpack.c.h.b16 %v1618
      %v2641 = vunpack.c.l.b16 %v1619
      %v2642 = vunpack.c.l.b16 %v1620
      %v2643 = vunpack.c.h.b16 %v1620
      %v2644 = vunpack.c.l.b16 %v1621
      %v2645 = vunpack.c.l.b16 %v1622
      %v2646 = vunpack.c.h.b16 %v1622
      %v2647 = vunpack.c.l.b16 %v1623
      %v2648 = vunpack.c.l.b16 %v1624
      %v2649 = vunpack.c.h.b16 %v1624
      %v2650 = vunpack.c.l.b16 %v1625
      %v2651 = vunpack.c.l.b16 %v1626
      %v2652 = vunpack.c.h.b16 %v1626
      %v2653 = vunpack.c.l.b16 %v1627
      %v2654 = vunpack.c.l.b16 %v1628
      %v2655 = vunpack.c.h.b16 %v1628
      %v2656 = vunpack.c.l.b16 %v1629
      %v2657 = vunpack.c.l.b16 %v1630
      %v2658 = vunpack.c.h.b16 %v1630
      %v2659 = vunpack.c.l.b16 %v1631
      %v2660 = vunpack.c.l.b16 %v1632
      %v2661 = vunpack.c.h.b16 %v1632
      %v2662 = vunpack.c.l.b16 %v1633
      %v2663 = vunpack.c.l.b16 %v1634
      %v2664 = vunpack.c.h.b16 %v1634
      %v2665 = vunpack.c.l.b16 %v1635
      %v2666 = vunpack.c.l.b16 %v1636
      %v2667 = vunpack.c.h.b16 %v1636
      %v2668 = vunpack.c.l.b16 %v1637
      %v2669 = vunpack.c.l.b16 %v1638
      %v2670 = vunpack.c.h.b16 %v1638
      %v2671 = vunpack.c.l.b16 %v1639
      %v2672 = vunpack.c.l.b16 %v1640
      %v2673 = vunpack.c.h.b16 %v1640
      %v2674 = vunpack.c.l.b16 %v1641
      %v2675 = vunpack.c.l.b16 %v1642
      %v2676 = vunpack.c.h.b16 %v1642
      %v2677 = vunpack.c.l.b16 %v1643
      %v2678 = vunpack.c.l.b16 %v1644
      %v2679 = vunpack.c.h.b16 %v1644
      %v2680 = vunpack.c.l.b16 %v1645
      %v2681 = vunpack.c.l.b16 %v1646
      %v2682 = vunpack.c.h.b16 %v1646
      %v2683 = vunpack.c.l.b16 %v1647
      %v2684 = vunpack.c.l.b16 %v1648
      %v2685 = vunpack.c.h.b16 %v1648
      %v2686 = vunpack.c.l.b16 %v1649
      %v2687 = vunpack.c.l.b16 %v1650
      %v2688 = vunpack.c.h.b16 %v1650
      %v2689 = vunpack.c.l.b16 %v1651
      %v2690 = vunpack.c.l.b16 %v1652
      %v2691 = vunpack.c.h.b16 %v1652
      %v2692 = vunpack.c.l.b16 %v1653
      %v2693 = vunpack.c.l.b16 %v1654
      %v2694 = vunpack.c.h.b16 %v1654
      %v2695 = vunpack.c.l.b16 %v1655
      %v2696 = vunpack.c.l.b16 %v1656
      %v2697 = vunpack.c.h.b16 %v1656
      %v2698 = vunpack.c.l.b16 %v1657
      %v2699 = vunpack.c.l.b16 %v1658
      %v2700 = vunpack.c.h.b16 %v1658
      %v2701 = vunpack.c.l.b16 %v1659
      %v2702 = vunpack.c.l.b16 %v1660
      %v2703 = vunpack.c.h.b16 %v1660
      %v2704 = vunpack.c.l.b16 %v1661
      %v2705 = vunpack.c.l.b16 %v1662
      %v2706 = vunpack.c.h.b16 %v1662
      %v2707 = vunpack.c.l.b16 %v1663
      %v2708 = vpack.c.b16 %v2615, %v2612
      %v2709 = vpack.c.b16 %v2616, %v2613
      %v2710 = vpack.c.b16 %v2617, %v2614
      %v2711 = vpack.c.b16 %v2621, %v2618
      %v2712 = vpack.c.b16 %v2622, %v2619
      %v2713 = vpack.c.b16 %v2623, %v2620
      %v2714 = vpack.c.b16 %v2627, %v2624
      %v2715 = vpack.c.b16 %v2628, %v2625
      %v2716 = vpack.c.b16 %v2629, %v2626
      %v2717 = vpack.c.b16 %v2633, %v2630
      %v2718 = vpack.c.b16 %v2634, %v2631
      %v2719 = vpack.c.b16 %v2635, %v2632
      %v2720 = vpack.c.b16 %v2639, %v2636
      %v2721 = vpack.c.b16 %v2640, %v2637
      %v2722 = vpack.c.b16 %v2641, %v2638
      %v2723 = vpack.c.b16 %v2645, %v2642
      %v2724 = vpack.c.b16 %v2646, %v2643
      %v2725 = vpack.c.b16 %v2647, %v2644
      %v2726 = vpack.c.b16 %v2651, %v2648
      %v2727 = vpack.c.b16 %v2652, %v2649
      %v2728 = vpack.c.b16 %v2653, %v2650
      %v2729 = vpack.c.b16 %v2657, %v2654
      %v2730 = vpack.c.b16 %v2658, %v2655
      %v2731 = vpack.c.b16 %v2659, %v2656
      %v2732 = vpack.c.b16 %v2663, %v2660
      %v2733 = vpack.c.b16 %v2664, %v2661
      %v2734 = vpack.c.b16 %v2665, %v2662
      %v2735 = vpack.c.b16 %v2669, %v2666
      %v2736 = vpack.c.b16 %v2670, %v2667
      %v2737 = vpack.c.b16 %v2671, %v2668
      %v2738 = vpack.c.b16 %v2675, %v2672
      %v2739 = vpack.c.b16 %v2676, %v2673
      %v2740 = vpack.c.b16 %v2677, %v2674
      %v2741 = vpack.c.b16 %v2681, %v2678
      %v2742 = vpack.c.b16 %v2682, %v2679
      %v2743 = vpack.c.b16 %v2683, %v2680
      %v2744 = vpack.c.b16 %v2687, %v2684
      %v2745 = vpack.c.b16 %v2688, %v2685
      %v2746 = vpack.c.b16 %v2689, %v2686
      %v2747 = vpack.c.b16 %v2693, %v2690
      %v2748 = vpack.c.b16 %v2694, %v2691
      %v2749 = vpack.c.b16 %v2695, %v2692
      %v2750 = vpack.c.b16 %v2699, %v2696
      %v2751 = vpack.c.b16 %v2700, %v2697
      %v2752 = vpack.c.b16 %v2701, %v2698
      %v2753 = vpack.c.b16 %v2705, %v2702
      %v2754 = vpack.c.b16 %v2706, %v2703
      %v2755 = vpack.c.b16 %v2707, %v2704
      %v2852 = vunpack.c.l.b16 %v1664
      %v2853 = vunpack.c.l.b16 %v1665
      %v2854 = vunpack.c.l.b16 %v1666
      %v2855 = vunpack.c.l.b16 %v1667
      %v2856 = vunpack.c.l.b16 %v1668
      %v2857 = vunpack.c.l.b16 %v1669
      %v2858 = vunpack.c.l.b16 %v1670
      %v2859 = vunpack.c.l.b16 %v1671
      %v2860 = vunpack.c.l.b16 %v1672
      %v2861 = vunpack.c.l.b16 %v1673
      %v2862 = vunpack.c.l.b16 %v1674
      %v2863 = vunpack.c.l.b16 %v1675
      %v2864 = vunpack.c.l.b16 %v1676
      %v2865 = vunpack.c.l.b16 %v1677
      %v2866 = vunpack.c.l.b16 %v1678
      %v2867 = vunpack.c.l.b16 %v1679
      %v2868 = vunpack.c.l.b16 %v1680
      %v2869 = vunpack.c.l.b16 %v1681
      %v2870 = vunpack.c.l.b16 %v1682
      %v2871 = vunpack.c.l.b16 %v1683
      %v2872 = vunpack.c.l.b16 %v1684
      %v2873 = vunpack.c.l.b16 %v1685
      %v2874 = vunpack.c.l.b16 %v1686
      %v2875 = vunpack.c.l.b16 %v1687
      %v2876 = vunpack.c.l.b16 %v1688
      %v2877 = vunpack.c.l.b16 %v1689
      %v2878 = vunpack.c.l.b16 %v1690
      %v2879 = vunpack.c.l.b16 %v1691
      %v2880 = vunpack.c.l.b16 %v1692
      %v2881 = vunpack.c.l.b16 %v1693
      %v2882 = vunpack.c.l.b16 %v1694
      %v2883 = vunpack.c.l.b16 %v1695
      %v2884 = vunpack.c.l.b16 %v1696
      %v2885 = vunpack.c.l.b16 %v1697
      %v2886 = vunpack.c.l.b16 %v1698
      %v2887 = vunpack.c.l.b16 %v1699
      %v2888 = vunpack.c.l.b16 %v1700
      %v2889 = vunpack.c.l.b16 %v1701
      %v2890 = vunpack.c.l.b16 %v1702
      %v2891 = vunpack.c.l.b16 %v1703
      %v2892 = vunpack.c.l.b16 %v1704
      %v2893 = vunpack.c.l.b16 %v1705
      %v2894 = vunpack.c.l.b16 %v1706
      %v2895 = vunpack.c.l.b16 %v1707
      %v2896 = vunpack.c.l.b16 %v1708
      %v2897 = vunpack.c.l.b16 %v1709
      %v2898 = vunpack.c.l.b16 %v1710
      %v2899 = vunpack.c.l.b16 %v1711
      %v2900 = vpack.c.b16 %v2853, %v2852
      %v2901 = vpack.c.b16 %v2855, %v2854
      %v2902 = vpack.c.b16 %v2857, %v2856
      %v2903 = vpack.c.b16 %v2859, %v2858
      %v2904 = vpack.c.b16 %v2861, %v2860
      %v2905 = vpack.c.b16 %v2863, %v2862
      %v2906 = vpack.c.b16 %v2865, %v2864
      %v2907 = vpack.c.b16 %v2867, %v2866
      %v2908 = vpack.c.b16 %v2869, %v2868
      %v2909 = vpack.c.b16 %v2871, %v2870
      %v2910 = vpack.c.b16 %v2873, %v2872
      %v2911 = vpack.c.b16 %v2875, %v2874
      %v2912 = vpack.c.b16 %v2877, %v2876
      %v2913 = vpack.c.b16 %v2879, %v2878
      %v2914 = vpack.c.b16 %v2881, %v2880
      %v2915 = vpack.c.b16 %v2883, %v2882
      %v2916 = vpack.c.b16 %v2885, %v2884
      %v2917 = vpack.c.b16 %v2887, %v2886
      %v2918 = vpack.c.b16 %v2889, %v2888
      %v2919 = vpack.c.b16 %v2891, %v2890
      %v2920 = vpack.c.b16 %v2893, %v2892
      %v2921 = vpack.c.b16 %v2895, %v2894
      %v2922 = vpack.c.b16 %v2897, %v2896
      %v2923 = vpack.c.b16 %v2899, %v2898
      %2948 = vmatprep.subr.bf16.mxu0 0
      %2949 = vmatpush1.bf16.msra.mxu0 %v2907
      %2950 = vmatprep.subr.bf16.mxu0 0
      %2951 = vmatpush1.bf16.msra.mxu0 %v2906
      %2952 = vmatprep.subr.bf16.mxu0 0
      %2953 = vmatpush1.bf16.msra.mxu0 %v2905
      %2954 = vmatprep.subr.bf16.mxu0 0
      %2955 = vmatpush1.bf16.msra.mxu0 %v2904
      %2956 = vmatprep.subr.bf16.mxu0 0
      %2957 = vmatpush1.bf16.msra.mxu0 %v2903
      %2958 = vmatprep.subr.bf16.mxu0 0
      %2959 = vmatpush1.bf16.msra.mxu0 %v2902
      %2960 = vmatprep.subr.bf16.mxu0 0
      %2961 = vmatpush1.bf16.msra.mxu0 %v2901
      %2962 = vmatprep.subr.bf16.mxu0 0
      %2963 = vmatpush1.bf16.msra.mxu0 %v2900
      %2964 = vmatprep.subr.bf16.mxu0 0
      %2965 = vmatpush2.bf16.msra.mxu0 %v2915
      %2966 = vmatprep.subr.bf16.mxu0 0
      %2967 = vmatpush2.bf16.msra.mxu0 %v2914
      %2968 = vmatprep.subr.bf16.mxu0 0
      %2969 = vmatpush2.bf16.msra.mxu0 %v2913
      %2970 = vmatprep.subr.bf16.mxu0 0
      %2971 = vmatpush2.bf16.msra.mxu0 %v2912
      %2972 = vmatprep.subr.bf16.mxu0 0
      %2973 = vmatpush2.bf16.msra.mxu0 %v2911
      %2974 = vmatprep.subr.bf16.mxu0 0
      %2975 = vmatpush2.bf16.msra.mxu0 %v2910
      %2976 = vmatprep.subr.bf16.mxu0 0
      %2977 = vmatpush2.bf16.msra.mxu0 %v2909
      %2978 = vmatprep.subr.bf16.mxu0 0
      %2979 = vmatpush2.bf16.msra.mxu0 %v2908
      %2980 = vmatprep.mubr.bf16.mxu0 %v2709
      %2981 = vmatmul.mubr.bf16.gmra.mxu0 %v2708
      %v2982 = vpop.f32.mrf.mxu0
      %v2983 = vadd.f32 %v2422, %v2982
      %v2984 = vpop.f32.mrf.mxu0
      %v2985 = vpop.f32.mrf.mxu0
      %v2986 = vadd.f32 %v2425, %v2985
      %v2987 = vpop.f32.mrf.mxu0
      %2988 = vmatprep.mubr.bf16.mxu0 %v2712
      %2989 = vmatmul.mubr.bf16.gmra.mxu0 %v2711
      %v2990 = vpop.f32.mrf.mxu0
      %v2991 = vadd.f32 %v2430, %v2990
      %v2992 = vpop.f32.mrf.mxu0
      %v2993 = vpop.f32.mrf.mxu0
      %v2994 = vadd.f32 %v2433, %v2993
      %v2995 = vpop.f32.mrf.mxu0
      %2996 = vmatprep.mubr.bf16.mxu0 %v2715
      %2997 = vmatmul.mubr.bf16.gmra.mxu0 %v2714
      %v2998 = vpop.f32.mrf.mxu0
      %v2999 = vadd.f32 %v2438, %v2998
      %v3000 = vpop.f32.mrf.mxu0
      %v3001 = vpop.f32.mrf.mxu0
      %v3002 = vadd.f32 %v2441, %v3001
      %v3003 = vpop.f32.mrf.mxu0
      %3004 = vmatprep.mubr.bf16.mxu0 %v2718
      %3005 = vmatmul.mubr.bf16.gmra.mxu0 %v2717
      %v3006 = vpop.f32.mrf.mxu0
      %v3007 = vadd.f32 %v2446, %v3006
      %v3008 = vpop.f32.mrf.mxu0
      %v3009 = vpop.f32.mrf.mxu0
      %v3010 = vadd.f32 %v2449, %v3009
      %v3011 = vpop.f32.mrf.mxu0
      %3012 = vmatprep.mubr.bf16.mxu0 %v2721
      %3013 = vmatmul.mubr.bf16.gmra.mxu0 %v2720
      %v3014 = vpop.f32.mrf.mxu0
      %v3015 = vadd.f32 %v2454, %v3014
      %v3016 = vpop.f32.mrf.mxu0
      %v3017 = vpop.f32.mrf.mxu0
      %v3018 = vadd.f32 %v2457, %v3017
      %v3019 = vpop.f32.mrf.mxu0
      %3020 = vmatprep.mubr.bf16.mxu0 %v2724
      %3021 = vmatmul.mubr.bf16.gmra.mxu0 %v2723
      %v3022 = vpop.f32.mrf.mxu0
      %v3023 = vadd.f32 %v2462, %v3022
      %v3024 = vpop.f32.mrf.mxu0
      %v3025 = vpop.f32.mrf.mxu0
      %v3026 = vadd.f32 %v2465, %v3025
      %v3027 = vpop.f32.mrf.mxu0
      %3028 = vmatprep.mubr.bf16.mxu0 %v2727
      %3029 = vmatmul.mubr.bf16.gmra.mxu0 %v2726
      %v3030 = vpop.f32.mrf.mxu0
      %v3031 = vadd.f32 %v2470, %v3030
      %v3032 = vpop.f32.mrf.mxu0
      %v3033 = vpop.f32.mrf.mxu0
      %v3034 = vadd.f32 %v2473, %v3033
      %v3035 = vpop.f32.mrf.mxu0
      %3036 = vmatprep.mubr.bf16.mxu0 %v2730
      %3037 = vmatmul.mubr.bf16.gmra.mxu0 %v2729
      %v3038 = vpop.f32.mrf.mxu0
      %v3039 = vadd.f32 %v2478, %v3038
      %v3040 = vpop.f32.mrf.mxu0
      %v3041 = vpop.f32.mrf.mxu0
      %v3042 = vadd.f32 %v2481, %v3041
      %v3043 = vpop.f32.mrf.mxu0
      %3044 = vmatprep.mubr.bf16.mxu0 %v2733
      %3045 = vmatmul.mubr.bf16.gmra.mxu0 %v2732
      %v3046 = vpop.f32.mrf.mxu0
      %v3047 = vadd.f32 %v2486, %v3046
      %v3048 = vpop.f32.mrf.mxu0
      %v3049 = vpop.f32.mrf.mxu0
      %v3050 = vadd.f32 %v2489, %v3049
      %v3051 = vpop.f32.mrf.mxu0
      %3052 = vmatprep.mubr.bf16.mxu0 %v2736
      %3053 = vmatmul.mubr.bf16.gmra.mxu0 %v2735
      %v3054 = vpop.f32.mrf.mxu0
      %v3055 = vadd.f32 %v2494, %v3054
      %v3056 = vpop.f32.mrf.mxu0
      %v3057 = vpop.f32.mrf.mxu0
      %v3058 = vadd.f32 %v2497, %v3057
      %v3059 = vpop.f32.mrf.mxu0
      %3060 = vmatprep.mubr.bf16.mxu0 %v2739
      %3061 = vmatmul.mubr.bf16.gmra.mxu0 %v2738
      %v3062 = vpop.f32.mrf.mxu0
      %v3063 = vadd.f32 %v2502, %v3062
      %v3064 = vpop.f32.mrf.mxu0
      %v3065 = vpop.f32.mrf.mxu0
      %v3066 = vadd.f32 %v2505, %v3065
      %v3067 = vpop.f32.mrf.mxu0
      %3068 = vmatprep.mubr.bf16.mxu0 %v2742
      %3069 = vmatmul.mubr.bf16.gmra.mxu0 %v2741
      %v3070 = vpop.f32.mrf.mxu0
      %v3071 = vadd.f32 %v2510, %v3070
      %v3072 = vpop.f32.mrf.mxu0
      %v3073 = vpop.f32.mrf.mxu0
      %v3074 = vadd.f32 %v2513, %v3073
      %v3075 = vpop.f32.mrf.mxu0
      %3076 = vmatprep.mubr.bf16.mxu0 %v2745
      %3077 = vmatmul.mubr.bf16.gmra.mxu0 %v2744
      %v3078 = vpop.f32.mrf.mxu0
      %v3079 = vadd.f32 %v2518, %v3078
      %v3080 = vpop.f32.mrf.mxu0
      %v3081 = vpop.f32.mrf.mxu0
      %v3082 = vadd.f32 %v2521, %v3081
      %v3083 = vpop.f32.mrf.mxu0
      %3084 = vmatprep.mubr.bf16.mxu0 %v2748
      %3085 = vmatmul.mubr.bf16.gmra.mxu0 %v2747
      %v3086 = vpop.f32.mrf.mxu0
      %v3087 = vadd.f32 %v2526, %v3086
      %v3088 = vpop.f32.mrf.mxu0
      %v3089 = vpop.f32.mrf.mxu0
      %v3090 = vadd.f32 %v2529, %v3089
      %v3091 = vpop.f32.mrf.mxu0
      %3092 = vmatprep.mubr.bf16.mxu0 %v2751
      %3093 = vmatmul.mubr.bf16.gmra.mxu0 %v2750
      %v3094 = vpop.f32.mrf.mxu0
      %v3095 = vadd.f32 %v2534, %v3094
      %v3096 = vpop.f32.mrf.mxu0
      %v3097 = vpop.f32.mrf.mxu0
      %v3098 = vadd.f32 %v2537, %v3097
      %v3099 = vpop.f32.mrf.mxu0
      %3100 = vmatprep.mubr.bf16.mxu0 %v2754
      %3101 = vmatmul.mubr.bf16.gmra.mxu0 %v2753
      %v3102 = vpop.f32.mrf.mxu0
      %v3103 = vadd.f32 %v2542, %v3102
      %v3104 = vpop.f32.mrf.mxu0
      %v3105 = vpop.f32.mrf.mxu0
      %v3106 = vadd.f32 %v2545, %v3105
      %v3107 = vpop.f32.mrf.mxu0
      %3108 = vdwg.mxu0
      %3109 = vmatprep.subr.bf16.mxu0 0
      %3110 = vmatpush1.bf16.msra.mxu0 %v2923
      %3111 = vmatprep.subr.bf16.mxu0 0
      %3112 = vmatpush1.bf16.msra.mxu0 %v2922
      %3113 = vmatprep.subr.bf16.mxu0 0
      %3114 = vmatpush1.bf16.msra.mxu0 %v2921
      %3115 = vmatprep.subr.bf16.mxu0 0
      %3116 = vmatpush1.bf16.msra.mxu0 %v2920
      %3117 = vmatprep.subr.bf16.mxu0 0
      %3118 = vmatpush1.bf16.msra.mxu0 %v2919
      %3119 = vmatprep.subr.bf16.mxu0 0
      %3120 = vmatpush1.bf16.msra.mxu0 %v2918
      %3121 = vmatprep.subr.bf16.mxu0 0
      %3122 = vmatpush1.bf16.msra.mxu0 %v2917
      %3123 = vmatprep.subr.bf16.mxu0 0
      %3124 = vmatpush1.bf16.msra.mxu0 %v2916
      %3125 = vmatprep.subr.bf16.mxu0 0
      %3126 = vmatpush2.bf16.msra.mxu0 0
      %3127 = vmatprep.subr.bf16.mxu0 0
      %3128 = vmatpush2.bf16.msra.mxu0 0
      %3129 = vmatprep.subr.bf16.mxu0 0
      %3130 = vmatpush2.bf16.msra.mxu0 0
      %3131 = vmatprep.subr.bf16.mxu0 0
      %3132 = vmatpush2.bf16.msra.mxu0 0
      %3133 = vmatprep.subr.bf16.mxu0 0
      %3134 = vmatpush2.bf16.msra.mxu0 0
      %3135 = vmatprep.subr.bf16.mxu0 0
      %3136 = vmatpush2.bf16.msra.mxu0 0
      %3137 = vmatprep.subr.bf16.mxu0 0
      %3138 = vmatpush2.bf16.msra.mxu0 0
      %3139 = vmatprep.subr.bf16.mxu0 0
      %3140 = vmatpush2.bf16.msra.mxu0 0
      %3141 = vmatprep.mubr.bf16.mxu0 0
      %3142 = vmatmul.mubr.bf16.gmra.mxu0 %v2710
      %v3143 = vpop.f32.mrf.mxu0
      %v3144 = vadd.f32 %v2983, %v3143
      %v3145 = vpop.f32.mrf.mxu0
      %v3146 = vpop.f32.mrf.mxu0
      %v3147 = vadd.f32 %v2986, %v3146
      %v3148 = vpop.f32.mrf.mxu0
      %3149 = vmatprep.mubr.bf16.mxu0 0
      %3150 = vmatmul.mubr.bf16.gmra.mxu0 %v2713
      %v3151 = vpop.f32.mrf.mxu0
      %v3152 = vadd.f32 %v2991, %v3151
      %v3153 = vpop.f32.mrf.mxu0
      %v3154 = vpop.f32.mrf.mxu0
      %v3155 = vadd.f32 %v2994, %v3154
      %v3156 = vpop.f32.mrf.mxu0
      %3157 = vmatprep.mubr.bf16.mxu0 0
      %3158 = vmatmul.mubr.bf16.gmra.mxu0 %v2716
      %v3159 = vpop.f32.mrf.mxu0
      %v3160 = vadd.f32 %v2999, %v3159
      %v3161 = vpop.f32.mrf.mxu0
      %v3162 = vpop.f32.mrf.mxu0
      %v3163 = vadd.f32 %v3002, %v3162
      %v3164 = vpop.f32.mrf.mxu0
      %3165 = vmatprep.mubr.bf16.mxu0 0
      %3166 = vmatmul.mubr.bf16.gmra.mxu0 %v2719
      %v3167 = vpop.f32.mrf.mxu0
      %v3168 = vadd.f32 %v3007, %v3167
      %v3169 = vpop.f32.mrf.mxu0
      %v3170 = vpop.f32.mrf.mxu0
      %v3171 = vadd.f32 %v3010, %v3170
      %v3172 = vpop.f32.mrf.mxu0
      %3173 = vmatprep.mubr.bf16.mxu0 0
      %3174 = vmatmul.mubr.bf16.gmra.mxu0 %v2722
      %v3175 = vpop.f32.mrf.mxu0
      %v3176 = vadd.f32 %v3015, %v3175
      %v3177 = vpop.f32.mrf.mxu0
      %v3178 = vpop.f32.mrf.mxu0
      %v3179 = vadd.f32 %v3018, %v3178
      %v3180 = vpop.f32.mrf.mxu0
      %3181 = vmatprep.mubr.bf16.mxu0 0
      %3182 = vmatmul.mubr.bf16.gmra.mxu0 %v2725
      %v3183 = vpop.f32.mrf.mxu0
      %v3184 = vadd.f32 %v3023, %v3183
      %v3185 = vpop.f32.mrf.mxu0
      %v3186 = vpop.f32.mrf.mxu0
      %v3187 = vadd.f32 %v3026, %v3186
      %v3188 = vpop.f32.mrf.mxu0
      %3189 = vmatprep.mubr.bf16.mxu0 0
      %3190 = vmatmul.mubr.bf16.gmra.mxu0 %v2728
      %v3191 = vpop.f32.mrf.mxu0
      %v3192 = vadd.f32 %v3031, %v3191
      %v3193 = vpop.f32.mrf.mxu0
      %v3194 = vpop.f32.mrf.mxu0
      %v3195 = vadd.f32 %v3034, %v3194
      %v3196 = vpop.f32.mrf.mxu0
      %3197 = vmatprep.mubr.bf16.mxu0 0
      %3198 = vmatmul.mubr.bf16.gmra.mxu0 %v2731
      %v3199 = vpop.f32.mrf.mxu0
      %v3200 = vadd.f32 %v3039, %v3199
      %v3201 = vpop.f32.mrf.mxu0
      %v3202 = vpop.f32.mrf.mxu0
      %v3203 = vadd.f32 %v3042, %v3202
      %v3204 = vpop.f32.mrf.mxu0
      %3205 = vmatprep.mubr.bf16.mxu0 0
      %3206 = vmatmul.mubr.bf16.gmra.mxu0 %v2734
      %v3207 = vpop.f32.mrf.mxu0
      %v3208 = vadd.f32 %v3047, %v3207
      %v3209 = vpop.f32.mrf.mxu0
      %v3210 = vpop.f32.mrf.mxu0
      %v3211 = vadd.f32 %v3050, %v3210
      %v3212 = vpop.f32.mrf.mxu0
      %3213 = vmatprep.mubr.bf16.mxu0 0
      %3214 = vmatmul.mubr.bf16.gmra.mxu0 %v2737
      %v3215 = vpop.f32.mrf.mxu0
      %v3216 = vadd.f32 %v3055, %v3215
      %v3217 = vpop.f32.mrf.mxu0
      %v3218 = vpop.f32.mrf.mxu0
      %v3219 = vadd.f32 %v3058, %v3218
      %v3220 = vpop.f32.mrf.mxu0
      %3221 = vmatprep.mubr.bf16.mxu0 0
      %3222 = vmatmul.mubr.bf16.gmra.mxu0 %v2740
      %v3223 = vpop.f32.mrf.mxu0
      %v3224 = vadd.f32 %v3063, %v3223
      %v3225 = vpop.f32.mrf.mxu0
      %v3226 = vpop.f32.mrf.mxu0
      %v3227 = vadd.f32 %v3066, %v3226
      %v3228 = vpop.f32.mrf.mxu0
      %3229 = vmatprep.mubr.bf16.mxu0 0
      %3230 = vmatmul.mubr.bf16.gmra.mxu0 %v2743
      %v3231 = vpop.f32.mrf.mxu0
      %v3232 = vadd.f32 %v3071, %v3231
      %v3233 = vpop.f32.mrf.mxu0
      %v3234 = vpop.f32.mrf.mxu0
      %v3235 = vadd.f32 %v3074, %v3234
      %v3236 = vpop.f32.mrf.mxu0
      %3237 = vmatprep.mubr.bf16.mxu0 0
      %3238 = vmatmul.mubr.bf16.gmra.mxu0 %v2746
      %v3239 = vpop.f32.mrf.mxu0
      %v3240 = vadd.f32 %v3079, %v3239
      %v3241 = vpop.f32.mrf.mxu0
      %v3242 = vpop.f32.mrf.mxu0
      %v3243 = vadd.f32 %v3082, %v3242
      %v3244 = vpop.f32.mrf.mxu0
      %3245 = vmatprep.mubr.bf16.mxu0 0
      %3246 = vmatmul.mubr.bf16.gmra.mxu0 %v2749
      %v3247 = vpop.f32.mrf.mxu0
      %v3248 = vadd.f32 %v3087, %v3247
      %v3249 = vpop.f32.mrf.mxu0
      %v3250 = vpop.f32.mrf.mxu0
      %v3251 = vadd.f32 %v3090, %v3250
      %v3252 = vpop.f32.mrf.mxu0
      %3253 = vmatprep.mubr.bf16.mxu0 0
      %3254 = vmatmul.mubr.bf16.gmra.mxu0 %v2752
      %v3255 = vpop.f32.mrf.mxu0
      %v3256 = vadd.f32 %v3095, %v3255
      %v3257 = vpop.f32.mrf.mxu0
      %v3258 = vpop.f32.mrf.mxu0
      %v3259 = vadd.f32 %v3098, %v3258
      %v3260 = vpop.f32.mrf.mxu0
      %3261 = vmatprep.mubr.bf16.mxu0 0
      %3262 = vmatmul.mubr.bf16.gmra.mxu0 %v2755
      %v3263 = vpop.f32.mrf.mxu0
      %v3264 = vadd.f32 %v3103, %v3263
      %v3265 = vpop.f32.mrf.mxu0
      %v3266 = vpop.f32.mrf.mxu0
      %v3267 = vadd.f32 %v3106, %v3266
      %v3268 = vpop.f32.mrf.mxu0
      %3269 = vdwg.mxu0
      %s3270 = scalar_lea.vmem [#allocation2], 48
      %v3271 = vld [vmem:[%s3270] sm:$0xff]
      %v3272 = vld [vmem:[%s3270 + $0x8] sm:$0xf]
      %v3273 = vld [vmem:[%s3270 + $0xc] sm:$0xff]
      %v3274 = vld [vmem:[%s3270 + $0x14] sm:$0xf]
      %v3275 = vld [vmem:[%s3270 + $0x18] sm:$0xff]
      %v3276 = vld [vmem:[%s3270 + $0x20] sm:$0xf]
      %v3277 = vld [vmem:[%s3270 + $0x24] sm:$0xff]
      %v3278 = vld [vmem:[%s3270 + $0x2c] sm:$0xf]
      %v3279 = vld [vmem:[%s3270 + $0x30] sm:$0xff]
      %v3280 = vld [vmem:[%s3270 + $0x38] sm:$0xf]
      %v3281 = vld [vmem:[%s3270 + $0x3c] sm:$0xff]
      %v3282 = vld [vmem:[%s3270 + $0x44] sm:$0xf]
      %v3283 = vld [vmem:[%s3270 + $0x48] sm:$0xff]
      %v3284 = vld [vmem:[%s3270 + $0x50] sm:$0xf]
      %v3285 = vld [vmem:[%s3270 + $0x54] sm:$0xff]
      %v3286 = vld [vmem:[%s3270 + $0x5c] sm:$0xf]
      %v3287 = vld [vmem:[%s3270 + $0x60] sm:$0xff]
      %v3288 = vld [vmem:[%s3270 + $0x68] sm:$0xf]
      %v3289 = vld [vmem:[%s3270 + $0x6c] sm:$0xff]
      %v3290 = vld [vmem:[%s3270 + $0x74] sm:$0xf]
      %v3291 = vld [vmem:[%s3270 + $0x78] sm:$0xff]
      %v3292 = vld [vmem:[%s3270 + $0x80] sm:$0xf]
      %v3293 = vld [vmem:[%s3270 + $0x84] sm:$0xff]
      %v3294 = vld [vmem:[%s3270 + $0x8c] sm:$0xf]
      %v3295 = vld [vmem:[%s3270 + $0x90] sm:$0xff]
      %v3296 = vld [vmem:[%s3270 + $0x98] sm:$0xf]
      %v3297 = vld [vmem:[%s3270 + $0x9c] sm:$0xff]
      %v3298 = vld [vmem:[%s3270 + $0xa4] sm:$0xf]
      %v3299 = vld [vmem:[%s3270 + $0xa8] sm:$0xff]
      %v3300 = vld [vmem:[%s3270 + $0xb0] sm:$0xf]
      %v3301 = vld [vmem:[%s3270 + $0xb4] sm:$0xff]
      %v3302 = vld [vmem:[%s3270 + $0xbc] sm:$0xf]
      %v3303 = vld [vmem:[%s3270 + $0xc0] sm:$0xff]
      %v3304 = vld [vmem:[%s3270 + $0xc8] sm:$0xf]
      %v3305 = vld [vmem:[%s3270 + $0xcc] sm:$0xff]
      %v3306 = vld [vmem:[%s3270 + $0xd4] sm:$0xf]
      %v3307 = vld [vmem:[%s3270 + $0xd8] sm:$0xff]
      %v3308 = vld [vmem:[%s3270 + $0xe0] sm:$0xf]
      %v3309 = vld [vmem:[%s3270 + $0xe4] sm:$0xff]
      %v3310 = vld [vmem:[%s3270 + $0xec] sm:$0xf]
      %v3311 = vld [vmem:[%s3270 + $0xf0] sm:$0xff]
      %v3312 = vld [vmem:[%s3270 + $0xf8] sm:$0xf]
      %v3313 = vld [vmem:[%s3270 + $0xfc] sm:$0xff]
      %v3314 = vld [vmem:[%s3270 + $0x104] sm:$0xf]
      %v3315 = vld [vmem:[%s3270 + $0x108] sm:$0xff]
      %v3316 = vld [vmem:[%s3270 + $0x110] sm:$0xf]
      %v3317 = vld [vmem:[%s3270 + $0x114] sm:$0xff]
      %v3318 = vld [vmem:[%s3270 + $0x11c] sm:$0xf]
      %v3319 = vld [vmem:[%s3270 + $0x120] sm:$0xff]
      %v3320 = vld [vmem:[%s3270 + $0x128] sm:$0xf]
      %v3321 = vld [vmem:[%s3270 + $0x12c] sm:$0xff]
      %v3322 = vld [vmem:[%s3270 + $0x134] sm:$0xf]
      %v3323 = vld [vmem:[%s3270 + $0x138] sm:$0xff]
      %v3324 = vld [vmem:[%s3270 + $0x140] sm:$0xf]
      %v3325 = vld [vmem:[%s3270 + $0x144] sm:$0xff]
      %v3326 = vld [vmem:[%s3270 + $0x14c] sm:$0xf]
      %v3327 = vld [vmem:[%s3270 + $0x150] sm:$0xff]
      %v3328 = vld [vmem:[%s3270 + $0x158] sm:$0xf]
      %v3329 = vld [vmem:[%s3270 + $0x15c] sm:$0xff]
      %v3330 = vld [vmem:[%s3270 + $0x164] sm:$0xf]
      %v3331 = vld [vmem:[%s3270 + $0x168] sm:$0xff]
      %v3332 = vld [vmem:[%s3270 + $0x170] sm:$0xf]
      %v3333 = vld [vmem:[%s3270 + $0x174] sm:$0xff]
      %v3334 = vld [vmem:[%s3270 + $0x17c] sm:$0xf]
      %s3335 = scalar_lea.vmem %s395, 384
      %v3336 = vld [vmem:[%s3335] sm:$0xf]
      %v3337 = vld [vmem:[%s3335 + $0x4] sm:$0xf]
      %v3338 = vld [vmem:[%s3335 + $0x8] sm:$0xf]
      %v3339 = vld [vmem:[%s3335 + $0xc] sm:$0xf]
      %v3340 = vld [vmem:[%s3335 + $0x10] sm:$0xf]
      %v3341 = vld [vmem:[%s3335 + $0x14] sm:$0xf]
      %v3342 = vld [vmem:[%s3335 + $0x18] sm:$0xf]
      %v3343 = vld [vmem:[%s3335 + $0x1c] sm:$0xf]
      %v3344 = vld [vmem:[%s3335 + $0x20] sm:$0xf]
      %v3345 = vld [vmem:[%s3335 + $0x24] sm:$0xf]
      %v3346 = vld [vmem:[%s3335 + $0x28] sm:$0xf]
      %v3347 = vld [vmem:[%s3335 + $0x2c] sm:$0xf]
      %v3348 = vld [vmem:[%s3335 + $0x30] sm:$0xf]
      %v3349 = vld [vmem:[%s3335 + $0x34] sm:$0xf]
      %v3350 = vld [vmem:[%s3335 + $0x38] sm:$0xf]
      %v3351 = vld [vmem:[%s3335 + $0x3c] sm:$0xf]
      %v3352 = vld [vmem:[%s3335 + $0x40] sm:$0xf]
      %v3353 = vld [vmem:[%s3335 + $0x44] sm:$0xf]
      %v3354 = vld [vmem:[%s3335 + $0x48] sm:$0xf]
      %v3355 = vld [vmem:[%s3335 + $0x4c] sm:$0xf]
      %v3356 = vld [vmem:[%s3335 + $0x50] sm:$0xf]
      %v3357 = vld [vmem:[%s3335 + $0x54] sm:$0xf]
      %v3358 = vld [vmem:[%s3335 + $0x58] sm:$0xf]
      %v3359 = vld [vmem:[%s3335 + $0x5c] sm:$0xf]
      %v3360 = vld [vmem:[%s3335 + $0x60] sm:$0xf]
      %v3361 = vld [vmem:[%s3335 + $0x64] sm:$0xf]
      %v3362 = vld [vmem:[%s3335 + $0x68] sm:$0xf]
      %v3363 = vld [vmem:[%s3335 + $0x6c] sm:$0xf]
      %v3364 = vld [vmem:[%s3335 + $0x70] sm:$0xf]
      %v3365 = vld [vmem:[%s3335 + $0x74] sm:$0xf]
      %v3366 = vld [vmem:[%s3335 + $0x78] sm:$0xf]
      %v3367 = vld [vmem:[%s3335 + $0x7c] sm:$0xf]
      %v3368 = vld [vmem:[%s3335 + $0x80] sm:$0xf]
      %v3369 = vld [vmem:[%s3335 + $0x84] sm:$0xf]
      %v3370 = vld [vmem:[%s3335 + $0x88] sm:$0xf]
      %v3371 = vld [vmem:[%s3335 + $0x8c] sm:$0xf]
      %v3372 = vld [vmem:[%s3335 + $0x90] sm:$0xf]
      %v3373 = vld [vmem:[%s3335 + $0x94] sm:$0xf]
      %v3374 = vld [vmem:[%s3335 + $0x98] sm:$0xf]
      %v3375 = vld [vmem:[%s3335 + $0x9c] sm:$0xf]
      %v3376 = vld [vmem:[%s3335 + $0xa0] sm:$0xf]
      %v3377 = vld [vmem:[%s3335 + $0xa4] sm:$0xf]
      %v3378 = vld [vmem:[%s3335 + $0xa8] sm:$0xf]
      %v3379 = vld [vmem:[%s3335 + $0xac] sm:$0xf]
      %v3380 = vld [vmem:[%s3335 + $0xb0] sm:$0xf]
      %v3381 = vld [vmem:[%s3335 + $0xb4] sm:$0xf]
      %v3382 = vld [vmem:[%s3335 + $0xb8] sm:$0xf]
      %v3383 = vld [vmem:[%s3335 + $0xbc] sm:$0xf]
      %v3448 = vunpack.c.l.b16 %v3271
      %v3449 = vunpack.c.h.b16 %v3271
      %v3450 = vunpack.c.l.b16 %v3272
      %v3451 = vunpack.c.l.b16 %v3273
      %v3452 = vunpack.c.h.b16 %v3273
      %v3453 = vunpack.c.l.b16 %v3274
      %v3454 = vunpack.c.l.b16 %v3275
      %v3455 = vunpack.c.h.b16 %v3275
      %v3456 = vunpack.c.l.b16 %v3276
      %v3457 = vunpack.c.l.b16 %v3277
      %v3458 = vunpack.c.h.b16 %v3277
      %v3459 = vunpack.c.l.b16 %v3278
      %v3460 = vunpack.c.l.b16 %v3279
      %v3461 = vunpack.c.h.b16 %v3279
      %v3462 = vunpack.c.l.b16 %v3280
      %v3463 = vunpack.c.l.b16 %v3281
      %v3464 = vunpack.c.h.b16 %v3281
      %v3465 = vunpack.c.l.b16 %v3282
      %v3466 = vunpack.c.l.b16 %v3283
      %v3467 = vunpack.c.h.b16 %v3283
      %v3468 = vunpack.c.l.b16 %v3284
      %v3469 = vunpack.c.l.b16 %v3285
      %v3470 = vunpack.c.h.b16 %v3285
      %v3471 = vunpack.c.l.b16 %v3286
      %v3472 = vunpack.c.l.b16 %v3287
      %v3473 = vunpack.c.h.b16 %v3287
      %v3474 = vunpack.c.l.b16 %v3288
      %v3475 = vunpack.c.l.b16 %v3289
      %v3476 = vunpack.c.h.b16 %v3289
      %v3477 = vunpack.c.l.b16 %v3290
      %v3478 = vunpack.c.l.b16 %v3291
      %v3479 = vunpack.c.h.b16 %v3291
      %v3480 = vunpack.c.l.b16 %v3292
      %v3481 = vunpack.c.l.b16 %v3293
      %v3482 = vunpack.c.h.b16 %v3293
      %v3483 = vunpack.c.l.b16 %v3294
      %v3484 = vunpack.c.l.b16 %v3295
      %v3485 = vunpack.c.h.b16 %v3295
      %v3486 = vunpack.c.l.b16 %v3296
      %v3487 = vunpack.c.l.b16 %v3297
      %v3488 = vunpack.c.h.b16 %v3297
      %v3489 = vunpack.c.l.b16 %v3298
      %v3490 = vunpack.c.l.b16 %v3299
      %v3491 = vunpack.c.h.b16 %v3299
      %v3492 = vunpack.c.l.b16 %v3300
      %v3493 = vunpack.c.l.b16 %v3301
      %v3494 = vunpack.c.h.b16 %v3301
      %v3495 = vunpack.c.l.b16 %v3302
      %v3496 = vunpack.c.l.b16 %v3303
      %v3497 = vunpack.c.h.b16 %v3303
      %v3498 = vunpack.c.l.b16 %v3304
      %v3499 = vunpack.c.l.b16 %v3305
      %v3500 = vunpack.c.h.b16 %v3305
      %v3501 = vunpack.c.l.b16 %v3306
      %v3502 = vunpack.c.l.b16 %v3307
      %v3503 = vunpack.c.h.b16 %v3307
      %v3504 = vunpack.c.l.b16 %v3308
      %v3505 = vunpack.c.l.b16 %v3309
      %v3506 = vunpack.c.h.b16 %v3309
      %v3507 = vunpack.c.l.b16 %v3310
      %v3508 = vunpack.c.l.b16 %v3311
      %v3509 = vunpack.c.h.b16 %v3311
      %v3510 = vunpack.c.l.b16 %v3312
      %v3511 = vunpack.c.l.b16 %v3313
      %v3512 = vunpack.c.h.b16 %v3313
      %v3513 = vunpack.c.l.b16 %v3314
      %v3514 = vunpack.c.l.b16 %v3315
      %v3515 = vunpack.c.h.b16 %v3315
      %v3516 = vunpack.c.l.b16 %v3316
      %v3517 = vunpack.c.l.b16 %v3317
      %v3518 = vunpack.c.h.b16 %v3317
      %v3519 = vunpack.c.l.b16 %v3318
      %v3520 = vunpack.c.l.b16 %v3319
      %v3521 = vunpack.c.h.b16 %v3319
      %v3522 = vunpack.c.l.b16 %v3320
      %v3523 = vunpack.c.l.b16 %v3321
      %v3524 = vunpack.c.h.b16 %v3321
      %v3525 = vunpack.c.l.b16 %v3322
      %v3526 = vunpack.c.l.b16 %v3323
      %v3527 = vunpack.c.h.b16 %v3323
      %v3528 = vunpack.c.l.b16 %v3324
      %v3529 = vunpack.c.l.b16 %v3325
      %v3530 = vunpack.c.h.b16 %v3325
      %v3531 = vunpack.c.l.b16 %v3326
      %v3532 = vunpack.c.l.b16 %v3327
      %v3533 = vunpack.c.h.b16 %v3327
      %v3534 = vunpack.c.l.b16 %v3328
      %v3535 = vunpack.c.l.b16 %v3329
      %v3536 = vunpack.c.h.b16 %v3329
      %v3537 = vunpack.c.l.b16 %v3330
      %v3538 = vunpack.c.l.b16 %v3331
      %v3539 = vunpack.c.h.b16 %v3331
      %v3540 = vunpack.c.l.b16 %v3332
      %v3541 = vunpack.c.l.b16 %v3333
      %v3542 = vunpack.c.h.b16 %v3333
      %v3543 = vunpack.c.l.b16 %v3334
      %v3544 = vpack.c.b16 %v3451, %v3448
      %v3545 = vpack.c.b16 %v3452, %v3449
      %v3546 = vpack.c.b16 %v3453, %v3450
      %v3547 = vpack.c.b16 %v3457, %v3454
      %v3548 = vpack.c.b16 %v3458, %v3455
      %v3549 = vpack.c.b16 %v3459, %v3456
      %v3550 = vpack.c.b16 %v3463, %v3460
      %v3551 = vpack.c.b16 %v3464, %v3461
      %v3552 = vpack.c.b16 %v3465, %v3462
      %v3553 = vpack.c.b16 %v3469, %v3466
      %v3554 = vpack.c.b16 %v3470, %v3467
      %v3555 = vpack.c.b16 %v3471, %v3468
      %v3556 = vpack.c.b16 %v3475, %v3472
      %v3557 = vpack.c.b16 %v3476, %v3473
      %v3558 = vpack.c.b16 %v3477, %v3474
      %v3559 = vpack.c.b16 %v3481, %v3478
      %v3560 = vpack.c.b16 %v3482, %v3479
      %v3561 = vpack.c.b16 %v3483, %v3480
      %v3562 = vpack.c.b16 %v3487, %v3484
      %v3563 = vpack.c.b16 %v3488, %v3485
      %v3564 = vpack.c.b16 %v3489, %v3486
      %v3565 = vpack.c.b16 %v3493, %v3490
      %v3566 = vpack.c.b16 %v3494, %v3491
      %v3567 = vpack.c.b16 %v3495, %v3492
      %v3568 = vpack.c.b16 %v3499, %v3496
      %v3569 = vpack.c.b16 %v3500, %v3497
      %v3570 = vpack.c.b16 %v3501, %v3498
      %v3571 = vpack.c.b16 %v3505, %v3502
      %v3572 = vpack.c.b16 %v3506, %v3503
      %v3573 = vpack.c.b16 %v3507, %v3504
      %v3574 = vpack.c.b16 %v3511, %v3508
      %v3575 = vpack.c.b16 %v3512, %v3509
      %v3576 = vpack.c.b16 %v3513, %v3510
      %v3577 = vpack.c.b16 %v3517, %v3514
      %v3578 = vpack.c.b16 %v3518, %v3515
      %v3579 = vpack.c.b16 %v3519, %v3516
      %v3580 = vpack.c.b16 %v3523, %v3520
      %v3581 = vpack.c.b16 %v3524, %v3521
      %v3582 = vpack.c.b16 %v3525, %v3522
      %v3583 = vpack.c.b16 %v3529, %v3526
      %v3584 = vpack.c.b16 %v3530, %v3527
      %v3585 = vpack.c.b16 %v3531, %v3528
      %v3586 = vpack.c.b16 %v3535, %v3532
      %v3587 = vpack.c.b16 %v3536, %v3533
      %v3588 = vpack.c.b16 %v3537, %v3534
      %v3589 = vpack.c.b16 %v3541, %v3538
      %v3590 = vpack.c.b16 %v3542, %v3539
      %v3591 = vpack.c.b16 %v3543, %v3540
      %v3688 = vunpack.c.l.b16 %v3336
      %v3689 = vunpack.c.l.b16 %v3337
      %v3690 = vunpack.c.l.b16 %v3338
      %v3691 = vunpack.c.l.b16 %v3339
      %v3692 = vunpack.c.l.b16 %v3340
      %v3693 = vunpack.c.l.b16 %v3341
      %v3694 = vunpack.c.l.b16 %v3342
      %v3695 = vunpack.c.l.b16 %v3343
      %v3696 = vunpack.c.l.b16 %v3344
      %v3697 = vunpack.c.l.b16 %v3345
      %v3698 = vunpack.c.l.b16 %v3346
      %v3699 = vunpack.c.l.b16 %v3347
      %v3700 = vunpack.c.l.b16 %v3348
      %v3701 = vunpack.c.l.b16 %v3349
      %v3702 = vunpack.c.l.b16 %v3350
      %v3703 = vunpack.c.l.b16 %v3351
      %v3704 = vunpack.c.l.b16 %v3352
      %v3705 = vunpack.c.l.b16 %v3353
      %v3706 = vunpack.c.l.b16 %v3354
      %v3707 = vunpack.c.l.b16 %v3355
      %v3708 = vunpack.c.l.b16 %v3356
      %v3709 = vunpack.c.l.b16 %v3357
      %v3710 = vunpack.c.l.b16 %v3358
      %v3711 = vunpack.c.l.b16 %v3359
      %v3712 = vunpack.c.l.b16 %v3360
      %v3713 = vunpack.c.l.b16 %v3361
      %v3714 = vunpack.c.l.b16 %v3362
      %v3715 = vunpack.c.l.b16 %v3363
      %v3716 = vunpack.c.l.b16 %v3364
      %v3717 = vunpack.c.l.b16 %v3365
      %v3718 = vunpack.c.l.b16 %v3366
      %v3719 = vunpack.c.l.b16 %v3367
      %v3720 = vunpack.c.l.b16 %v3368
      %v3721 = vunpack.c.l.b16 %v3369
      %v3722 = vunpack.c.l.b16 %v3370
      %v3723 = vunpack.c.l.b16 %v3371
      %v3724 = vunpack.c.l.b16 %v3372
      %v3725 = vunpack.c.l.b16 %v3373
      %v3726 = vunpack.c.l.b16 %v3374
      %v3727 = vunpack.c.l.b16 %v3375
      %v3728 = vunpack.c.l.b16 %v3376
      %v3729 = vunpack.c.l.b16 %v3377
      %v3730 = vunpack.c.l.b16 %v3378
      %v3731 = vunpack.c.l.b16 %v3379
      %v3732 = vunpack.c.l.b16 %v3380
      %v3733 = vunpack.c.l.b16 %v3381
      %v3734 = vunpack.c.l.b16 %v3382
      %v3735 = vunpack.c.l.b16 %v3383
      %v3736 = vpack.c.b16 %v3689, %v3688
      %v3737 = vpack.c.b16 %v3691, %v3690
      %v3738 = vpack.c.b16 %v3693, %v3692
      %v3739 = vpack.c.b16 %v3695, %v3694
      %v3740 = vpack.c.b16 %v3697, %v3696
      %v3741 = vpack.c.b16 %v3699, %v3698
      %v3742 = vpack.c.b16 %v3701, %v3700
      %v3743 = vpack.c.b16 %v3703, %v3702
      %v3744 = vpack.c.b16 %v3705, %v3704
      %v3745 = vpack.c.b16 %v3707, %v3706
      %v3746 = vpack.c.b16 %v3709, %v3708
      %v3747 = vpack.c.b16 %v3711, %v3710
      %v3748 = vpack.c.b16 %v3713, %v3712
      %v3749 = vpack.c.b16 %v3715, %v3714
      %v3750 = vpack.c.b16 %v3717, %v3716
      %v3751 = vpack.c.b16 %v3719, %v3718
      %v3752 = vpack.c.b16 %v3721, %v3720
      %v3753 = vpack.c.b16 %v3723, %v3722
      %v3754 = vpack.c.b16 %v3725, %v3724
      %v3755 = vpack.c.b16 %v3727, %v3726
      %v3756 = vpack.c.b16 %v3729, %v3728
      %v3757 = vpack.c.b16 %v3731, %v3730
      %v3758 = vpack.c.b16 %v3733, %v3732
      %v3759 = vpack.c.b16 %v3735, %v3734
      %3784 = vmatprep.subr.bf16.mxu0 0
      %3785 = vmatpush1.bf16.msra.mxu0 %v3743
      %3786 = vmatprep.subr.bf16.mxu0 0
      %3787 = vmatpush1.bf16.msra.mxu0 %v3742
      %3788 = vmatprep.subr.bf16.mxu0 0
      %3789 = vmatpush1.bf16.msra.mxu0 %v3741
      %3790 = vmatprep.subr.bf16.mxu0 0
      %3791 = vmatpush1.bf16.msra.mxu0 %v3740
      %3792 = vmatprep.subr.bf16.mxu0 0
      %3793 = vmatpush1.bf16.msra.mxu0 %v3739
      %3794 = vmatprep.subr.bf16.mxu0 0
      %3795 = vmatpush1.bf16.msra.mxu0 %v3738
      %3796 = vmatprep.subr.bf16.mxu0 0
      %3797 = vmatpush1.bf16.msra.mxu0 %v3737
      %3798 = vmatprep.subr.bf16.mxu0 0
      %3799 = vmatpush1.bf16.msra.mxu0 %v3736
      %3800 = vmatprep.subr.bf16.mxu0 0
      %3801 = vmatpush2.bf16.msra.mxu0 %v3751
      %3802 = vmatprep.subr.bf16.mxu0 0
      %3803 = vmatpush2.bf16.msra.mxu0 %v3750
      %3804 = vmatprep.subr.bf16.mxu0 0
      %3805 = vmatpush2.bf16.msra.mxu0 %v3749
      %3806 = vmatprep.subr.bf16.mxu0 0
      %3807 = vmatpush2.bf16.msra.mxu0 %v3748
      %3808 = vmatprep.subr.bf16.mxu0 0
      %3809 = vmatpush2.bf16.msra.mxu0 %v3747
      %3810 = vmatprep.subr.bf16.mxu0 0
      %3811 = vmatpush2.bf16.msra.mxu0 %v3746
      %3812 = vmatprep.subr.bf16.mxu0 0
      %3813 = vmatpush2.bf16.msra.mxu0 %v3745
      %3814 = vmatprep.subr.bf16.mxu0 0
      %3815 = vmatpush2.bf16.msra.mxu0 %v3744
      %3816 = vmatprep.mubr.bf16.mxu0 %v3545
      %3817 = vmatmul.mubr.bf16.gmra.mxu0 %v3544
      %v3818 = vpop.f32.mrf.mxu0
      %v3819 = vadd.f32 0.0, %v3818
      %v3820 = vpop.f32.mrf.mxu0
      %v3821 = vpop.f32.mrf.mxu0
      %v3822 = vadd.f32 0.0, %v3821
      %v3823 = vpop.f32.mrf.mxu0
      %3824 = vmatprep.mubr.bf16.mxu0 %v3548
      %3825 = vmatmul.mubr.bf16.gmra.mxu0 %v3547
      %v3826 = vpop.f32.mrf.mxu0
      %v3827 = vadd.f32 0.0, %v3826
      %v3828 = vpop.f32.mrf.mxu0
      %v3829 = vpop.f32.mrf.mxu0
      %v3830 = vadd.f32 0.0, %v3829
      %v3831 = vpop.f32.mrf.mxu0
      %3832 = vmatprep.mubr.bf16.mxu0 %v3551
      %3833 = vmatmul.mubr.bf16.gmra.mxu0 %v3550
      %v3834 = vpop.f32.mrf.mxu0
      %v3835 = vadd.f32 0.0, %v3834
      %v3836 = vpop.f32.mrf.mxu0
      %v3837 = vpop.f32.mrf.mxu0
      %v3838 = vadd.f32 0.0, %v3837
      %v3839 = vpop.f32.mrf.mxu0
      %3840 = vmatprep.mubr.bf16.mxu0 %v3554
      %3841 = vmatmul.mubr.bf16.gmra.mxu0 %v3553
      %v3842 = vpop.f32.mrf.mxu0
      %v3843 = vadd.f32 0.0, %v3842
      %v3844 = vpop.f32.mrf.mxu0
      %v3845 = vpop.f32.mrf.mxu0
      %v3846 = vadd.f32 0.0, %v3845
      %v3847 = vpop.f32.mrf.mxu0
      %3848 = vmatprep.mubr.bf16.mxu0 %v3557
      %3849 = vmatmul.mubr.bf16.gmra.mxu0 %v3556
      %v3850 = vpop.f32.mrf.mxu0
      %v3851 = vadd.f32 0.0, %v3850
      %v3852 = vpop.f32.mrf.mxu0
      %v3853 = vpop.f32.mrf.mxu0
      %v3854 = vadd.f32 0.0, %v3853
      %v3855 = vpop.f32.mrf.mxu0
      %3856 = vmatprep.mubr.bf16.mxu0 %v3560
      %3857 = vmatmul.mubr.bf16.gmra.mxu0 %v3559
      %v3858 = vpop.f32.mrf.mxu0
      %v3859 = vadd.f32 0.0, %v3858
      %v3860 = vpop.f32.mrf.mxu0
      %v3861 = vpop.f32.mrf.mxu0
      %v3862 = vadd.f32 0.0, %v3861
      %v3863 = vpop.f32.mrf.mxu0
      %3864 = vmatprep.mubr.bf16.mxu0 %v3563
      %3865 = vmatmul.mubr.bf16.gmra.mxu0 %v3562
      %v3866 = vpop.f32.mrf.mxu0
      %v3867 = vadd.f32 0.0, %v3866
      %v3868 = vpop.f32.mrf.mxu0
      %v3869 = vpop.f32.mrf.mxu0
      %v3870 = vadd.f32 0.0, %v3869
      %v3871 = vpop.f32.mrf.mxu0
      %3872 = vmatprep.mubr.bf16.mxu0 %v3566
      %3873 = vmatmul.mubr.bf16.gmra.mxu0 %v3565
      %v3874 = vpop.f32.mrf.mxu0
      %v3875 = vadd.f32 0.0, %v3874
      %v3876 = vpop.f32.mrf.mxu0
      %v3877 = vpop.f32.mrf.mxu0
      %v3878 = vadd.f32 0.0, %v3877
      %v3879 = vpop.f32.mrf.mxu0
      %3880 = vmatprep.mubr.bf16.mxu0 %v3569
      %3881 = vmatmul.mubr.bf16.gmra.mxu0 %v3568
      %v3882 = vpop.f32.mrf.mxu0
      %v3883 = vadd.f32 0.0, %v3882
      %v3884 = vpop.f32.mrf.mxu0
      %v3885 = vpop.f32.mrf.mxu0
      %v3886 = vadd.f32 0.0, %v3885
      %v3887 = vpop.f32.mrf.mxu0
      %3888 = vmatprep.mubr.bf16.mxu0 %v3572
      %3889 = vmatmul.mubr.bf16.gmra.mxu0 %v3571
      %v3890 = vpop.f32.mrf.mxu0
      %v3891 = vadd.f32 0.0, %v3890
      %v3892 = vpop.f32.mrf.mxu0
      %v3893 = vpop.f32.mrf.mxu0
      %v3894 = vadd.f32 0.0, %v3893
      %v3895 = vpop.f32.mrf.mxu0
      %3896 = vmatprep.mubr.bf16.mxu0 %v3575
      %3897 = vmatmul.mubr.bf16.gmra.mxu0 %v3574
      %v3898 = vpop.f32.mrf.mxu0
      %v3899 = vadd.f32 0.0, %v3898
      %v3900 = vpop.f32.mrf.mxu0
      %v3901 = vpop.f32.mrf.mxu0
      %v3902 = vadd.f32 0.0, %v3901
      %v3903 = vpop.f32.mrf.mxu0
      %3904 = vmatprep.mubr.bf16.mxu0 %v3578
      %3905 = vmatmul.mubr.bf16.gmra.mxu0 %v3577
      %v3906 = vpop.f32.mrf.mxu0
      %v3907 = vadd.f32 0.0, %v3906
      %v3908 = vpop.f32.mrf.mxu0
      %v3909 = vpop.f32.mrf.mxu0
      %v3910 = vadd.f32 0.0, %v3909
      %v3911 = vpop.f32.mrf.mxu0
      %3912 = vmatprep.mubr.bf16.mxu0 %v3581
      %3913 = vmatmul.mubr.bf16.gmra.mxu0 %v3580
      %v3914 = vpop.f32.mrf.mxu0
      %v3915 = vadd.f32 0.0, %v3914
      %v3916 = vpop.f32.mrf.mxu0
      %v3917 = vpop.f32.mrf.mxu0
      %v3918 = vadd.f32 0.0, %v3917
      %v3919 = vpop.f32.mrf.mxu0
      %3920 = vmatprep.mubr.bf16.mxu0 %v3584
      %3921 = vmatmul.mubr.bf16.gmra.mxu0 %v3583
      %v3922 = vpop.f32.mrf.mxu0
      %v3923 = vadd.f32 0.0, %v3922
      %v3924 = vpop.f32.mrf.mxu0
      %v3925 = vpop.f32.mrf.mxu0
      %v3926 = vadd.f32 0.0, %v3925
      %v3927 = vpop.f32.mrf.mxu0
      %3928 = vmatprep.mubr.bf16.mxu0 %v3587
      %3929 = vmatmul.mubr.bf16.gmra.mxu0 %v3586
      %v3930 = vpop.f32.mrf.mxu0
      %v3931 = vadd.f32 0.0, %v3930
      %v3932 = vpop.f32.mrf.mxu0
      %v3933 = vpop.f32.mrf.mxu0
      %v3934 = vadd.f32 0.0, %v3933
      %v3935 = vpop.f32.mrf.mxu0
      %3936 = vmatprep.mubr.bf16.mxu0 %v3590
      %3937 = vmatmul.mubr.bf16.gmra.mxu0 %v3589
      %v3938 = vpop.f32.mrf.mxu0
      %v3939 = vadd.f32 0.0, %v3938
      %v3940 = vpop.f32.mrf.mxu0
      %v3941 = vpop.f32.mrf.mxu0
      %v3942 = vadd.f32 0.0, %v3941
      %v3943 = vpop.f32.mrf.mxu0
      %3944 = vdwg.mxu0
      %3945 = vmatprep.subr.bf16.mxu0 0
      %3946 = vmatpush1.bf16.msra.mxu0 %v3759
      %3947 = vmatprep.subr.bf16.mxu0 0
      %3948 = vmatpush1.bf16.msra.mxu0 %v3758
      %3949 = vmatprep.subr.bf16.mxu0 0
      %3950 = vmatpush1.bf16.msra.mxu0 %v3757
      %3951 = vmatprep.subr.bf16.mxu0 0
      %3952 = vmatpush1.bf16.msra.mxu0 %v3756
      %3953 = vmatprep.subr.bf16.mxu0 0
      %3954 = vmatpush1.bf16.msra.mxu0 %v3755
      %3955 = vmatprep.subr.bf16.mxu0 0
      %3956 = vmatpush1.bf16.msra.mxu0 %v3754
      %3957 = vmatprep.subr.bf16.mxu0 0
      %3958 = vmatpush1.bf16.msra.mxu0 %v3753
      %3959 = vmatprep.subr.bf16.mxu0 0
      %3960 = vmatpush1.bf16.msra.mxu0 %v3752
      %3961 = vmatprep.subr.bf16.mxu0 0
      %3962 = vmatpush2.bf16.msra.mxu0 0
      %3963 = vmatprep.subr.bf16.mxu0 0
      %3964 = vmatpush2.bf16.msra.mxu0 0
      %3965 = vmatprep.subr.bf16.mxu0 0
      %3966 = vmatpush2.bf16.msra.mxu0 0
      %3967 = vmatprep.subr.bf16.mxu0 0
      %3968 = vmatpush2.bf16.msra.mxu0 0
      %3969 = vmatprep.subr.bf16.mxu0 0
      %3970 = vmatpush2.bf16.msra.mxu0 0
      %3971 = vmatprep.subr.bf16.mxu0 0
      %3972 = vmatpush2.bf16.msra.mxu0 0
      %3973 = vmatprep.subr.bf16.mxu0 0
      %3974 = vmatpush2.bf16.msra.mxu0 0
      %3975 = vmatprep.subr.bf16.mxu0 0
      %3976 = vmatpush2.bf16.msra.mxu0 0
      %3977 = vmatprep.mubr.bf16.mxu0 0
      %3978 = vmatmul.mubr.bf16.gmra.mxu0 %v3546
      %v3979 = vpop.f32.mrf.mxu0
      %v3980 = vadd.f32 %v3819, %v3979
      %v3981 = vpop.f32.mrf.mxu0
      %v3982 = vpop.f32.mrf.mxu0
      %v3983 = vadd.f32 %v3822, %v3982
      %v3984 = vpop.f32.mrf.mxu0
      %3985 = vmatprep.mubr.bf16.mxu0 0
      %3986 = vmatmul.mubr.bf16.gmra.mxu0 %v3549
      %v3987 = vpop.f32.mrf.mxu0
      %v3988 = vadd.f32 %v3827, %v3987
      %v3989 = vpop.f32.mrf.mxu0
      %v3990 = vpop.f32.mrf.mxu0
      %v3991 = vadd.f32 %v3830, %v3990
      %v3992 = vpop.f32.mrf.mxu0
      %3993 = vmatprep.mubr.bf16.mxu0 0
      %3994 = vmatmul.mubr.bf16.gmra.mxu0 %v3552
      %v3995 = vpop.f32.mrf.mxu0
      %v3996 = vadd.f32 %v3835, %v3995
      %v3997 = vpop.f32.mrf.mxu0
      %v3998 = vpop.f32.mrf.mxu0
      %v3999 = vadd.f32 %v3838, %v3998
      %v4000 = vpop.f32.mrf.mxu0
      %4001 = vmatprep.mubr.bf16.mxu0 0
      %4002 = vmatmul.mubr.bf16.gmra.mxu0 %v3555
      %v4003 = vpop.f32.mrf.mxu0
      %v4004 = vadd.f32 %v3843, %v4003
      %v4005 = vpop.f32.mrf.mxu0
      %v4006 = vpop.f32.mrf.mxu0
      %v4007 = vadd.f32 %v3846, %v4006
      %v4008 = vpop.f32.mrf.mxu0
      %4009 = vmatprep.mubr.bf16.mxu0 0
      %4010 = vmatmul.mubr.bf16.gmra.mxu0 %v3558
      %v4011 = vpop.f32.mrf.mxu0
      %v4012 = vadd.f32 %v3851, %v4011
      %v4013 = vpop.f32.mrf.mxu0
      %v4014 = vpop.f32.mrf.mxu0
      %v4015 = vadd.f32 %v3854, %v4014
      %v4016 = vpop.f32.mrf.mxu0
      %4017 = vmatprep.mubr.bf16.mxu0 0
      %4018 = vmatmul.mubr.bf16.gmra.mxu0 %v3561
      %v4019 = vpop.f32.mrf.mxu0
      %v4020 = vadd.f32 %v3859, %v4019
      %v4021 = vpop.f32.mrf.mxu0
      %v4022 = vpop.f32.mrf.mxu0
      %v4023 = vadd.f32 %v3862, %v4022
      %v4024 = vpop.f32.mrf.mxu0
      %4025 = vmatprep.mubr.bf16.mxu0 0
      %4026 = vmatmul.mubr.bf16.gmra.mxu0 %v3564
      %v4027 = vpop.f32.mrf.mxu0
      %v4028 = vadd.f32 %v3867, %v4027
      %v4029 = vpop.f32.mrf.mxu0
      %v4030 = vpop.f32.mrf.mxu0
      %v4031 = vadd.f32 %v3870, %v4030
      %v4032 = vpop.f32.mrf.mxu0
      %4033 = vmatprep.mubr.bf16.mxu0 0
      %4034 = vmatmul.mubr.bf16.gmra.mxu0 %v3567
      %v4035 = vpop.f32.mrf.mxu0
      %v4036 = vadd.f32 %v3875, %v4035
      %v4037 = vpop.f32.mrf.mxu0
      %v4038 = vpop.f32.mrf.mxu0
      %v4039 = vadd.f32 %v3878, %v4038
      %v4040 = vpop.f32.mrf.mxu0
      %4041 = vmatprep.mubr.bf16.mxu0 0
      %4042 = vmatmul.mubr.bf16.gmra.mxu0 %v3570
      %v4043 = vpop.f32.mrf.mxu0
      %v4044 = vadd.f32 %v3883, %v4043
      %v4045 = vpop.f32.mrf.mxu0
      %v4046 = vpop.f32.mrf.mxu0
      %v4047 = vadd.f32 %v3886, %v4046
      %v4048 = vpop.f32.mrf.mxu0
      %4049 = vmatprep.mubr.bf16.mxu0 0
      %4050 = vmatmul.mubr.bf16.gmra.mxu0 %v3573
      %v4051 = vpop.f32.mrf.mxu0
      %v4052 = vadd.f32 %v3891, %v4051
      %v4053 = vpop.f32.mrf.mxu0
      %v4054 = vpop.f32.mrf.mxu0
      %v4055 = vadd.f32 %v3894, %v4054
      %v4056 = vpop.f32.mrf.mxu0
      %4057 = vmatprep.mubr.bf16.mxu0 0
      %4058 = vmatmul.mubr.bf16.gmra.mxu0 %v3576
      %v4059 = vpop.f32.mrf.mxu0
      %v4060 = vadd.f32 %v3899, %v4059
      %v4061 = vpop.f32.mrf.mxu0
      %v4062 = vpop.f32.mrf.mxu0
      %v4063 = vadd.f32 %v3902, %v4062
      %v4064 = vpop.f32.mrf.mxu0
      %4065 = vmatprep.mubr.bf16.mxu0 0
      %4066 = vmatmul.mubr.bf16.gmra.mxu0 %v3579
      %v4067 = vpop.f32.mrf.mxu0
      %v4068 = vadd.f32 %v3907, %v4067
      %v4069 = vpop.f32.mrf.mxu0
      %v4070 = vpop.f32.mrf.mxu0
      %v4071 = vadd.f32 %v3910, %v4070
      %v4072 = vpop.f32.mrf.mxu0
      %4073 = vmatprep.mubr.bf16.mxu0 0
      %4074 = vmatmul.mubr.bf16.gmra.mxu0 %v3582
      %v4075 = vpop.f32.mrf.mxu0
      %v4076 = vadd.f32 %v3915, %v4075
      %v4077 = vpop.f32.mrf.mxu0
      %v4078 = vpop.f32.mrf.mxu0
      %v4079 = vadd.f32 %v3918, %v4078
      %v4080 = vpop.f32.mrf.mxu0
      %4081 = vmatprep.mubr.bf16.mxu0 0
      %4082 = vmatmul.mubr.bf16.gmra.mxu0 %v3585
      %v4083 = vpop.f32.mrf.mxu0
      %v4084 = vadd.f32 %v3923, %v4083
      %v4085 = vpop.f32.mrf.mxu0
      %v4086 = vpop.f32.mrf.mxu0
      %v4087 = vadd.f32 %v3926, %v4086
      %v4088 = vpop.f32.mrf.mxu0
      %4089 = vmatprep.mubr.bf16.mxu0 0
      %4090 = vmatmul.mubr.bf16.gmra.mxu0 %v3588
      %v4091 = vpop.f32.mrf.mxu0
      %v4092 = vadd.f32 %v3931, %v4091
      %v4093 = vpop.f32.mrf.mxu0
      %v4094 = vpop.f32.mrf.mxu0
      %v4095 = vadd.f32 %v3934, %v4094
      %v4096 = vpop.f32.mrf.mxu0
      %4097 = vmatprep.mubr.bf16.mxu0 0
      %4098 = vmatmul.mubr.bf16.gmra.mxu0 %v3591
      %v4099 = vpop.f32.mrf.mxu0
      %v4100 = vadd.f32 %v3939, %v4099
      %v4101 = vpop.f32.mrf.mxu0
      %v4102 = vpop.f32.mrf.mxu0
      %v4103 = vadd.f32 %v3942, %v4102
      %v4104 = vpop.f32.mrf.mxu0
      %4105 = vdwg.mxu0
      %v4106 = vadd.f32 %v3144, %v3980
      %v4107 = vadd.f32 %v3147, %v3983
      %v4108 = vadd.f32 %v3152, %v3988
      %v4109 = vadd.f32 %v3155, %v3991
      %v4110 = vadd.f32 %v3160, %v3996
      %v4111 = vadd.f32 %v3163, %v3999
      %v4112 = vadd.f32 %v3168, %v4004
      %v4113 = vadd.f32 %v3171, %v4007
      %v4114 = vadd.f32 %v3176, %v4012
      %v4115 = vadd.f32 %v3179, %v4015
      %v4116 = vadd.f32 %v3184, %v4020
      %v4117 = vadd.f32 %v3187, %v4023
      %v4118 = vadd.f32 %v3192, %v4028
      %v4119 = vadd.f32 %v3195, %v4031
      %v4120 = vadd.f32 %v3200, %v4036
      %v4121 = vadd.f32 %v3203, %v4039
      %v4122 = vadd.f32 %v3208, %v4044
      %v4123 = vadd.f32 %v3211, %v4047
      %v4124 = vadd.f32 %v3216, %v4052
      %v4125 = vadd.f32 %v3219, %v4055
      %v4126 = vadd.f32 %v3224, %v4060
      %v4127 = vadd.f32 %v3227, %v4063
      %v4128 = vadd.f32 %v3232, %v4068
      %v4129 = vadd.f32 %v3235, %v4071
      %v4130 = vadd.f32 %v3240, %v4076
      %v4131 = vadd.f32 %v3243, %v4079
      %v4132 = vadd.f32 %v3248, %v4084
      %v4133 = vadd.f32 %v3251, %v4087
      %v4134 = vadd.f32 %v3256, %v4092
      %v4135 = vadd.f32 %v3259, %v4095
      %v4136 = vadd.f32 %v3264, %v4100
      %v4137 = vadd.f32 %v3267, %v4103
      %v4138 = vld [vmem:[%s398] sm:$0x1]
      %v4140 = vlaneseq
      %v4141 = vshrl.u32 %v4140, 7
      %v4142 = vsub.s32 0, %v4141
      %v4143 = vrot.slane %v4138, %v4142
      %v4145 = vadd.f32 %v4106, %v4143
      %v4146 = vadd.f32 %v4107, %v4143
      %v4147 = vadd.f32 %v4108, %v4143
      %v4148 = vadd.f32 %v4109, %v4143
      %v4149 = vadd.f32 %v4110, %v4143
      %v4150 = vadd.f32 %v4111, %v4143
      %v4151 = vadd.f32 %v4112, %v4143
      %v4152 = vadd.f32 %v4113, %v4143
      %v4153 = vadd.f32 %v4114, %v4143
      %v4154 = vadd.f32 %v4115, %v4143
      %v4155 = vadd.f32 %v4116, %v4143
      %v4156 = vadd.f32 %v4117, %v4143
      %v4157 = vadd.f32 %v4118, %v4143
      %v4158 = vadd.f32 %v4119, %v4143
      %v4159 = vadd.f32 %v4120, %v4143
      %v4160 = vadd.f32 %v4121, %v4143
      %v4161 = vadd.f32 %v4122, %v4143
      %v4162 = vadd.f32 %v4123, %v4143
      %v4163 = vadd.f32 %v4124, %v4143
      %v4164 = vadd.f32 %v4125, %v4143
      %v4165 = vadd.f32 %v4126, %v4143
      %v4166 = vadd.f32 %v4127, %v4143
      %v4167 = vadd.f32 %v4128, %v4143
      %v4168 = vadd.f32 %v4129, %v4143
      %v4169 = vadd.f32 %v4130, %v4143
      %v4170 = vadd.f32 %v4131, %v4143
      %v4171 = vadd.f32 %v4132, %v4143
      %v4172 = vadd.f32 %v4133, %v4143
      %v4173 = vadd.f32 %v4134, %v4143
      %v4174 = vadd.f32 %v4135, %v4143
      %v4175 = vadd.f32 %v4136, %v4143
      %v4176 = vadd.f32 %v4137, %v4143
      %v4177 = vld [vmem:[%s404] sm:$0x1]
      %v4178 = vadd.f32 %v4177, 1.0
      %v4180 = vlaneseq
      %v4181 = vshrl.u32 %v4180, 7
      %v4182 = vsub.s32 0, %v4181
      %v4183 = vrot.slane %v4178, %v4182
      %v4185 = vmul.f32 %v4145, %v4183
      %v4186 = vmul.f32 %v4146, %v4183
      %v4187 = vmul.f32 %v4147, %v4183
      %v4188 = vmul.f32 %v4148, %v4183
      %v4189 = vmul.f32 %v4149, %v4183
      %v4190 = vmul.f32 %v4150, %v4183
      %v4191 = vmul.f32 %v4151, %v4183
      %v4192 = vmul.f32 %v4152, %v4183
      %v4193 = vmul.f32 %v4153, %v4183
      %v4194 = vmul.f32 %v4154, %v4183
      %v4195 = vmul.f32 %v4155, %v4183
      %v4196 = vmul.f32 %v4156, %v4183
      %v4197 = vmul.f32 %v4157, %v4183
      %v4198 = vmul.f32 %v4158, %v4183
      %v4199 = vmul.f32 %v4159, %v4183
      %v4200 = vmul.f32 %v4160, %v4183
      %v4201 = vmul.f32 %v4161, %v4183
      %v4202 = vmul.f32 %v4162, %v4183
      %v4203 = vmul.f32 %v4163, %v4183
      %v4204 = vmul.f32 %v4164, %v4183
      %v4205 = vmul.f32 %v4165, %v4183
      %v4206 = vmul.f32 %v4166, %v4183
      %v4207 = vmul.f32 %v4167, %v4183
      %v4208 = vmul.f32 %v4168, %v4183
      %v4209 = vmul.f32 %v4169, %v4183
      %v4210 = vmul.f32 %v4170, %v4183
      %v4211 = vmul.f32 %v4171, %v4183
      %v4212 = vmul.f32 %v4172, %v4183
      %v4213 = vmul.f32 %v4173, %v4183
      %v4214 = vmul.f32 %v4174, %v4183
      %v4215 = vmul.f32 %v4175, %v4183
      %v4216 = vmul.f32 %v4176, %v4183
      %v4217 = vld [vmem:[%s410] sm:$0x1]
      %v4219 = vlaneseq
      %v4220 = vshrl.u32 %v4219, 7
      %v4221 = vsub.s32 0, %v4220
      %v4222 = vrot.slane %v4217, %v4221
      %v4224 = vadd.f32 %v4185, %v4222
      %v4225 = vadd.f32 %v4186, %v4222
      %v4226 = vadd.f32 %v4187, %v4222
      %v4227 = vadd.f32 %v4188, %v4222
      %v4228 = vadd.f32 %v4189, %v4222
      %v4229 = vadd.f32 %v4190, %v4222
      %v4230 = vadd.f32 %v4191, %v4222
      %v4231 = vadd.f32 %v4192, %v4222
      %v4232 = vadd.f32 %v4193, %v4222
      %v4233 = vadd.f32 %v4194, %v4222
      %v4234 = vadd.f32 %v4195, %v4222
      %v4235 = vadd.f32 %v4196, %v4222
      %v4236 = vadd.f32 %v4197, %v4222
      %v4237 = vadd.f32 %v4198, %v4222
      %v4238 = vadd.f32 %v4199, %v4222
      %v4239 = vadd.f32 %v4200, %v4222
      %v4240 = vadd.f32 %v4201, %v4222
      %v4241 = vadd.f32 %v4202, %v4222
      %v4242 = vadd.f32 %v4203, %v4222
      %v4243 = vadd.f32 %v4204, %v4222
      %v4244 = vadd.f32 %v4205, %v4222
      %v4245 = vadd.f32 %v4206, %v4222
      %v4246 = vadd.f32 %v4207, %v4222
      %v4247 = vadd.f32 %v4208, %v4222
      %v4248 = vadd.f32 %v4209, %v4222
      %v4249 = vadd.f32 %v4210, %v4222
      %v4250 = vadd.f32 %v4211, %v4222
      %v4251 = vadd.f32 %v4212, %v4222
      %v4252 = vadd.f32 %v4213, %v4222
      %v4253 = vadd.f32 %v4214, %v4222
      %v4254 = vadd.f32 %v4215, %v4222
      %v4255 = vadd.f32 %v4216, %v4222
      %v4256 = vadd.f32 %v4224, %v4225
      %v4257 = vadd.f32 %v4256, %v4226
      %v4258 = vadd.f32 %v4257, %v4227
      %v4259 = vadd.f32 %v4258, %v4228
      %v4260 = vadd.f32 %v4259, %v4229
      %v4261 = vadd.f32 %v4260, %v4230
      %v4262 = vadd.f32 %v4261, %v4231
      %v4263 = vadd.f32 %v4262, %v4232
      %v4264 = vadd.f32 %v4263, %v4233
      %v4265 = vadd.f32 %v4264, %v4234
      %v4266 = vadd.f32 %v4265, %v4235
      %v4267 = vadd.f32 %v4266, %v4236
      %v4268 = vadd.f32 %v4267, %v4237
      %v4269 = vadd.f32 %v4268, %v4238
      %v4270 = vadd.f32 %v4269, %v4239
      %v4271 = vadd.f32 %v4270, %v4240
      %v4272 = vadd.f32 %v4271, %v4241
      %v4273 = vadd.f32 %v4272, %v4242
      %v4274 = vadd.f32 %v4273, %v4243
      %v4275 = vadd.f32 %v4274, %v4244
      %v4276 = vadd.f32 %v4275, %v4245
      %v4277 = vadd.f32 %v4276, %v4246
      %v4278 = vadd.f32 %v4277, %v4247
      %v4279 = vadd.f32 %v4278, %v4248
      %v4280 = vadd.f32 %v4279, %v4249
      %v4281 = vadd.f32 %v4280, %v4250
      %v4282 = vadd.f32 %v4281, %v4251
      %v4283 = vadd.f32 %v4282, %v4252
      %v4284 = vadd.f32 %v4283, %v4253
      %v4285 = vadd.f32 %v4284, %v4254
      %v4286 = vadd.f32 %v4285, %v4255
      %v4287 = vrot.slane %v4286, 4
      %v4288 = vadd.f32 %v4286, %v4287
      %v4289 = vrot.slane %v4288, 2
      %v4290 = vadd.f32 %v4288, %v4289
      %v4291 = vrot.slane %v4290, 1
      %v4292 = vadd.f32 %v4290, %v4291
      %v4293 = vmul.f32 %v4224, %v4224
      %v4294 = vmul.f32 %v4225, %v4225
      %v4295 = vmul.f32 %v4226, %v4226
      %v4296 = vmul.f32 %v4227, %v4227
      %v4297 = vmul.f32 %v4228, %v4228
      %v4298 = vmul.f32 %v4229, %v4229
      %v4299 = vmul.f32 %v4230, %v4230
      %v4300 = vmul.f32 %v4231, %v4231
      %v4301 = vmul.f32 %v4232, %v4232
      %v4302 = vmul.f32 %v4233, %v4233
      %v4303 = vmul.f32 %v4234, %v4234
      %v4304 = vmul.f32 %v4235, %v4235
      %v4305 = vmul.f32 %v4236, %v4236
      %v4306 = vmul.f32 %v4237, %v4237
      %v4307 = vmul.f32 %v4238, %v4238
      %v4308 = vmul.f32 %v4239, %v4239
      %v4309 = vmul.f32 %v4240, %v4240
      %v4310 = vmul.f32 %v4241, %v4241
      %v4311 = vmul.f32 %v4242, %v4242
      %v4312 = vmul.f32 %v4243, %v4243
      %v4313 = vmul.f32 %v4244, %v4244
      %v4314 = vmul.f32 %v4245, %v4245
      %v4315 = vmul.f32 %v4246, %v4246
      %v4316 = vmul.f32 %v4247, %v4247
      %v4317 = vmul.f32 %v4248, %v4248
      %v4318 = vmul.f32 %v4249, %v4249
      %v4319 = vmul.f32 %v4250, %v4250
      %v4320 = vmul.f32 %v4251, %v4251
      %v4321 = vmul.f32 %v4252, %v4252
      %v4322 = vmul.f32 %v4253, %v4253
      %v4323 = vmul.f32 %v4254, %v4254
      %v4324 = vmul.f32 %v4255, %v4255
      %v4325 = vadd.f32 %v4293, %v4294
      %v4326 = vadd.f32 %v4325, %v4295
      %v4327 = vadd.f32 %v4326, %v4296
      %v4328 = vadd.f32 %v4327, %v4297
      %v4329 = vadd.f32 %v4328, %v4298
      %v4330 = vadd.f32 %v4329, %v4299
      %v4331 = vadd.f32 %v4330, %v4300
      %v4332 = vadd.f32 %v4331, %v4301
      %v4333 = vadd.f32 %v4332, %v4302
      %v4334 = vadd.f32 %v4333, %v4303
      %v4335 = vadd.f32 %v4334, %v4304
      %v4336 = vadd.f32 %v4335, %v4305
      %v4337 = vadd.f32 %v4336, %v4306
      %v4338 = vadd.f32 %v4337, %v4307
      %v4339 = vadd.f32 %v4338, %v4308
      %v4340 = vadd.f32 %v4339, %v4309
      %v4341 = vadd.f32 %v4340, %v4310
      %v4342 = vadd.f32 %v4341, %v4311
      %v4343 = vadd.f32 %v4342, %v4312
      %v4344 = vadd.f32 %v4343, %v4313
      %v4345 = vadd.f32 %v4344, %v4314
      %v4346 = vadd.f32 %v4345, %v4315
      %v4347 = vadd.f32 %v4346, %v4316
      %v4348 = vadd.f32 %v4347, %v4317
      %v4349 = vadd.f32 %v4348, %v4318
      %v4350 = vadd.f32 %v4349, %v4319
      %v4351 = vadd.f32 %v4350, %v4320
      %v4352 = vadd.f32 %v4351, %v4321
      %v4353 = vadd.f32 %v4352, %v4322
      %v4354 = vadd.f32 %v4353, %v4323
      %v4355 = vadd.f32 %v4354, %v4324
      %v4356 = vrot.slane %v4355, 4
      %v4357 = vadd.f32 %v4355, %v4356
      %v4358 = vrot.slane %v4357, 2
      %v4359 = vadd.f32 %v4357, %v4358
      %v4360 = vrot.slane %v4359, 1
      %v4361 = vadd.f32 %v4359, %v4360
      %vm4362 = vcmask 1040384
      %v4363 = vsel %vm4362, %v4292, %v4361
      %4364 = vst [vmem:[%s425] sm:$0x3] %v4363
      %4365 = vst [vmem:[%s418] sm:$0xff] %v4224
      %4366 = vst [vmem:[%s418 + $0x8] sm:$0xff] %v4225
      %4367 = vst [vmem:[%s418 + $0x10] sm:$0xff] %v4226
      %4368 = vst [vmem:[%s418 + $0x18] sm:$0xff] %v4227
      %4369 = vst [vmem:[%s418 + $0x20] sm:$0xff] %v4228
      %4370 = vst [vmem:[%s418 + $0x28] sm:$0xff] %v4229
      %4371 = vst [vmem:[%s418 + $0x30] sm:$0xff] %v4230
      %4372 = vst [vmem:[%s418 + $0x38] sm:$0xff] %v4231
      %4373 = vst [vmem:[%s418 + $0x40] sm:$0xff] %v4232
      %4374 = vst [vmem:[%s418 + $0x48] sm:$0xff] %v4233
      %4375 = vst [vmem:[%s418 + $0x50] sm:$0xff] %v4234
      %4376 = vst [vmem:[%s418 + $0x58] sm:$0xff] %v4235
      %4377 = vst [vmem:[%s418 + $0x60] sm:$0xff] %v4236
      %4378 = vst [vmem:[%s418 + $0x68] sm:$0xff] %v4237
      %4379 = vst [vmem:[%s418 + $0x70] sm:$0xff] %v4238
      %4380 = vst [vmem:[%s418 + $0x78] sm:$0xff] %v4239
      %4381 = vst [vmem:[%s418 + $0x80] sm:$0xff] %v4240
      %4382 = vst [vmem:[%s418 + $0x88] sm:$0xff] %v4241
      %4383 = vst [vmem:[%s418 + $0x90] sm:$0xff] %v4242
      %4384 = vst [vmem:[%s418 + $0x98] sm:$0xff] %v4243
      %4385 = vst [vmem:[%s418 + $0xa0] sm:$0xff] %v4244
      %4386 = vst [vmem:[%s418 + $0xa8] sm:$0xff] %v4245
      %4387 = vst [vmem:[%s418 + $0xb0] sm:$0xff] %v4246
      %4388 = vst [vmem:[%s418 + $0xb8] sm:$0xff] %v4247
      %4389 = vst [vmem:[%s418 + $0xc0] sm:$0xff] %v4248
      %4390 = vst [vmem:[%s418 + $0xc8] sm:$0xff] %v4249
      %4391 = vst [vmem:[%s418 + $0xd0] sm:$0xff] %v4250
      %4392 = vst [vmem:[%s418 + $0xd8] sm:$0xff] %v4251
      %4393 = vst [vmem:[%s418 + $0xe0] sm:$0xff] %v4252
      %4394 = vst [vmem:[%s418 + $0xe8] sm:$0xff] %v4253
      %4395 = vst [vmem:[%s418 + $0xf0] sm:$0xff] %v4254
      %4396 = vst [vmem:[%s418 + $0xf8] sm:$0xff] %v4255
      %p4397 = scmp.lt.s32.totalorder %s24, 1
      %s4398 = scalar_select %p4397, %s24, 1
      %p4399 = scmp.lt.s32.totalorder %s25, 0
      %s4400 = scalar_select %p4399, %s25, 0
      %s4401 = smul.addr %s4398, 32
      %s4402 = sadd.s32 %s4400, %s4401
      %s4403 = smul.addr %s4402, 8
      %s4404 = scalar_lea.vmem %s7, %s4403
      %p4405 = scmp.lt.s32.totalorder %s24, 1
      %s4406 = scalar_select %p4405, %s24, 1
      %p4407 = scmp.lt.s32.totalorder %s25, 0
      %s4408 = scalar_select %p4407, %s25, 0
      %s4409 = sadd.s32 %s4408, %s4406
      %s4410 = smul.addr %s4409, 2
      %s4411 = scalar_lea.vmem %s8, %s4410
      // Predicated region
      $region53: #{down_blk_forward.3} parent=47 // pred_check
        %p4412 = pneg %p228
      $region54: #{down_blk_forward.3} parent=47 // pred_check_branch
        %4414 = sbr.rel (%p4412) target = $region56
      $region55: #{down_blk_forward.3} parent=47 // pred_region
        _
      $region56: #{down_blk_forward.3} parent=47 // pred_fallthru
        _
      // Predicated region
      $region57: #{down_blk_forward.3} parent=47 // pred_check
        %p4415 = pneg %p256
      $region58: #{down_blk_forward.3} parent=47 // pred_check_branch
        %4417 = sbr.rel (%p4415) target = $region60
      $region59: #{down_blk_forward.3} parent=47 // pred_region
        _
      $region60: #{down_blk_forward.3} parent=47 // pred_fallthru
        _
    $region48: #{down_blk_forward.3} parent=5 // pred_fallthru
      _
    %p4418 = scmp.le.s32.totalorder 2, %s15
    // Predicated region
    $region61: #{down_blk_forward.3} parent=5 // pred_check
      %p4419 = pneg %p4418
    $region62: #{down_blk_forward.3} parent=5 // pred_check_branch
      %4421 = sbr.rel (%p4419) target = $region64
    $region63: #{down_blk_forward.3} parent=5 // pred_region
      %s4422 = ssub.s32 %s15, 2
      // Predicated region
      $region65: #{down_blk_forward.3} parent=63 // pred_check
        %p4423 = pneg %p234
      $region66: #{down_blk_forward.3} parent=63 // pred_check_branch
        %4425 = sbr.rel (%p4423) target = $region68
      $region67: #{down_blk_forward.3} parent=63 // pred_region
        %p4426 = scmp.lt.s32.totalorder %s26, 1
        %s4427 = scalar_select %p4426, %s26, 1
        %p4428 = scmp.lt.s32.totalorder %s27, 0
        %s4429 = scalar_select %p4428, %s27, 0
        %s4430 = smul.addr %s4427, 32
        %s4431 = sadd.s32 %s4429, %s4430
        %s4432 = smul.addr %s4431, 8
        %s4433 = scalar_lea.vmem %s7, %s4432
      $region68: #{down_blk_forward.3} parent=63 // pred_fallthru
        _
      // Predicated region
      $region69: #{down_blk_forward.3} parent=63 // pred_check
        %p4434 = pneg %p262
      $region70: #{down_blk_forward.3} parent=63 // pred_check_branch
        %4436 = sbr.rel (%p4434) target = $region72
      $region71: #{down_blk_forward.3} parent=63 // pred_region
        %p4437 = scmp.lt.s32.totalorder %s26, 1
        %s4438 = scalar_select %p4437, %s26, 1
        %p4439 = scmp.lt.s32.totalorder %s27, 0
        %s4440 = scalar_select %p4439, %s27, 0
        %s4441 = sadd.s32 %s4440, %s4438
        %s4442 = smul.addr %s4441, 2
        %s4443 = scalar_lea.vmem %s8, %s4442
      $region72: #{down_blk_forward.3} parent=63 // pred_fallthru
        _
    $region64: #{down_blk_forward.3} parent=5 // pred_fallthru
      _
  $region6: #{down_blk_forward.3} parent=0 // loop_footer
    %s19 = sadd.s32 1, %s15
  $region7: #{down_blk_forward.3} parent=0 // loop_footer_branch
    %14 = sbr.rel target = $region3
  $region8: #{down_blk_forward.3} parent=0 // loop_exit
    _

// kernel: down_blk_forward.4
$region0: #{down_blk_forward.4}
  #allocation0 [shape = 'u32[]', space=smem, size = 0x4, offset = 0x4, fixed_abs, tag = 'smem constant byte address 0x4 - core index']
  #allocation1 [shape = 'u32[144,128]{1,0:T(1,128)}', space=vmem, size = 0x12000, scoped, tag = 'internal scratch']
  #allocation2 [shape = 'bf16[18,16,384]{2,1,0:T(8,128)(2,1)}', space=vmem, size = 0x36000, scoped, tag = 'scratch operand']
  %s0 = inlined_call_operand.vmem [shape: f32[2,16,16,128], index: 0, kind: input, shape index: {}]
  %s1 = inlined_call_operand.vmem [shape: bf16[3,384,128], index: 1, kind: input, shape index: {}]
  %s2 = inlined_call_operand.vmem [shape: f32[1,128], index: 2, kind: input, shape index: {}]
  %s3 = inlined_call_operand.vmem [shape: f32[1,128], index: 3, kind: input, shape index: {}]
  %s4 = inlined_call_operand.vmem [shape: f32[1,128], index: 4, kind: input, shape index: {}]
  %s5 = inlined_call_operand.vmem [shape: f32[2,16,16,128], index: 5, kind: input, shape index: {}]
  %s6 = inlined_call_operand.vmem [shape: bf16[128,128], index: 6, kind: input, shape index: {}]
  %s7 = inlined_call_operand.vmem [shape: f32[1,128], index: 7, kind: input, shape index: {}]
  %s8 = inlined_call_operand.vmem [shape: f32[2,16,16,128], index: 8, kind: output, shape index: {}]
  %s9 = sld [smem:[#allocation0]]
  $region69: #{down_blk_forward.4} parent=0
    _
  %s11 = ssub.s32 1, %s9
  %s12 = scalar_select 0, %s11, %s9
  loop: start=0, step=1, limit=4
  $region2: #{down_blk_forward.4} parent=0 // loop_pre_header
    _
  $region3: #{down_blk_forward.4} parent=0 // loop_header
    %s14 = sphi 0, %s18
    %p15 = scmp.ge.s32.totalorder %s14, 4
    %s21 = sphi 0, %s33
    %s22 = sphi 0, %s29
    %s23 = sphi 0, %s21
    %s24 = sphi 0, %s22
    %s25 = sphi 0, %s23
    %s26 = sphi 0, %s24
    %s36 = sphi 0, %s38
    %s39 = sphi 0, %s36
    %s40 = sphi 0, %s39
    %s56 = sphi 0, %s40
    %s62 = sphi 0, %s64
    %s65 = sphi 0, %s62
    %s66 = sphi 0, %s65
    %s82 = sphi 0, %s66
    %s88 = sphi 0, %s90
    %s91 = sphi 0, %s88
    %s92 = sphi 0, %s91
    %s108 = sphi 0, %s92
    %s112 = sphi 0, %s112
    %s114 = sphi 0, %s112
    %s115 = sphi 0, %s114
    %s129 = sphi 0, %s115
    %s133 = sphi 0, %s133
    %s135 = sphi 0, %s133
    %s136 = sphi 0, %s135
    %s150 = sphi 0, %s136
    %s156 = sphi 0, %s158
    %s159 = sphi 0, %s156
    %s160 = sphi 0, %s159
    %s176 = sphi 0, %s160
    %s182 = sphi 0, %s184
    %s185 = sphi 0, %s182
    %s186 = sphi 0, %s185
    %s202 = sphi 0, %s186
    %s208 = sphi 0, %s210
    %s211 = sphi 0, %s208
    %s212 = sphi 0, %s211
    %s228 = sphi 0, %s212
    %s236 = sphi 0, %s238
    %s239 = sphi 0, %s236
    %s240 = sphi 0, %s239
    %s256 = sphi 0, %s240
  $region4: #{down_blk_forward.4} parent=0 // loop_header_branch
    %17 = sbr.rel (%p15) target = $region8
  $region5: #{down_blk_forward.4} parent=0 // loop_body
    %s19 = ssub.s32 %s14, 1
    %s20 = ssub.s32 %s14, 2
    %s27 = sadd.s32 1, %s22
    %p28 = scmp.ge.s32.totalorder %s27, 1
    %s29 = scalar_select %p28, 0, %s27
    %s30 = sadd.s32 1, %s21
    %s31 = scalar_select %p28, %s30, %s21
    %p32 = scmp.ge.s32.totalorder %s31, 2
    %s33 = scalar_select %p32, 0, %s31
    %s34 = ssub.s32 %s21, %s33
    %p35 = scmp.eq.s32.totalorder %s34, 0
    %s37 = sadd.s32 %s36, 1
    %s38 = scalar_select %p35, %s36, %s37
    %p41 = pneg %p35
    %p42 = scmp.eq.s32.totalorder %s14, 1
    %p43 = por %p41, %p42
    %p44 = scmp.ne.s32.totalorder %s36, %s39
    %p45 = scmp.eq.s32.totalorder %s14, 0
    %p46 = por %p44, %p45
    %p47 = scmp.ne.s32.totalorder %s36, %s39
    %p48 = scmp.eq.s32.totalorder %s19, 1
    %p49 = por %p47, %p48
    %p50 = scmp.ne.s32.totalorder %s39, %s40
    %p51 = scmp.eq.s32.totalorder %s19, 0
    %p52 = por %p50, %p51
    %p53 = scmp.ne.s32.totalorder %s39, %s40
    %p54 = scmp.eq.s32.totalorder %s20, 1
    %p55 = por %p53, %p54
    %p57 = scmp.ne.s32.totalorder %s40, %s56
    %p58 = scmp.eq.s32.totalorder %s20, 0
    %p59 = por %p57, %p58
    %s60 = ssub.s32 %s22, %s29
    %p61 = scmp.eq.s32.totalorder %s60, 0
    %s63 = sadd.s32 %s62, 1
    %s64 = scalar_select %p61, %s62, %s63
    %p67 = pneg %p61
    %p68 = scmp.eq.s32.totalorder %s14, 1
    %p69 = por %p67, %p68
    %p70 = scmp.ne.s32.totalorder %s62, %s65
    %p71 = scmp.eq.s32.totalorder %s14, 0
    %p72 = por %p70, %p71
    %p73 = scmp.ne.s32.totalorder %s62, %s65
    %p74 = scmp.eq.s32.totalorder %s19, 1
    %p75 = por %p73, %p74
    %p76 = scmp.ne.s32.totalorder %s65, %s66
    %p77 = scmp.eq.s32.totalorder %s19, 0
    %p78 = por %p76, %p77
    %p79 = scmp.ne.s32.totalorder %s65, %s66
    %p80 = scmp.eq.s32.totalorder %s20, 1
    %p81 = por %p79, %p80
    %p83 = scmp.ne.s32.totalorder %s66, %s82
    %p84 = scmp.eq.s32.totalorder %s20, 0
    %p85 = por %p83, %p84
    %s86 = ssub.s32 %s22, %s29
    %p87 = scmp.eq.s32.totalorder %s86, 0
    %s89 = sadd.s32 %s88, 1
    %s90 = scalar_select %p87, %s88, %s89
    %p93 = pneg %p87
    %p94 = scmp.eq.s32.totalorder %s14, 1
    %p95 = por %p93, %p94
    %p96 = scmp.ne.s32.totalorder %s88, %s91
    %p97 = scmp.eq.s32.totalorder %s14, 0
    %p98 = por %p96, %p97
    %p99 = scmp.ne.s32.totalorder %s88, %s91
    %p100 = scmp.eq.s32.totalorder %s19, 1
    %p101 = por %p99, %p100
    %p102 = scmp.ne.s32.totalorder %s91, %s92
    %p103 = scmp.eq.s32.totalorder %s19, 0
    %p104 = por %p102, %p103
    %p105 = scmp.ne.s32.totalorder %s91, %s92
    %p106 = scmp.eq.s32.totalorder %s20, 1
    %p107 = por %p105, %p106
    %p109 = scmp.ne.s32.totalorder %s92, %s108
    %p110 = scmp.eq.s32.totalorder %s20, 0
    %p111 = por %p109, %p110
    %s113 = sadd.s32 %s112, 1
    %p116 = scmp.eq.s32.totalorder %s14, 1
    %p117 = scmp.ne.s32.totalorder %s112, %s114
    %p118 = scmp.eq.s32.totalorder %s14, 0
    %p119 = por %p117, %p118
    %p120 = scmp.ne.s32.totalorder %s112, %s114
    %p121 = scmp.eq.s32.totalorder %s19, 1
    %p122 = por %p120, %p121
    %p123 = scmp.ne.s32.totalorder %s114, %s115
    %p124 = scmp.eq.s32.totalorder %s19, 0
    %p125 = por %p123, %p124
    %p126 = scmp.ne.s32.totalorder %s114, %s115
    %p127 = scmp.eq.s32.totalorder %s20, 1
    %p128 = por %p126, %p127
    %p130 = scmp.ne.s32.totalorder %s115, %s129
    %p131 = scmp.eq.s32.totalorder %s20, 0
    %p132 = por %p130, %p131
    %s134 = sadd.s32 %s133, 1
    %p137 = scmp.eq.s32.totalorder %s14, 1
    %p138 = scmp.ne.s32.totalorder %s133, %s135
    %p139 = scmp.eq.s32.totalorder %s14, 0
    %p140 = por %p138, %p139
    %p141 = scmp.ne.s32.totalorder %s133, %s135
    %p142 = scmp.eq.s32.totalorder %s19, 1
    %p143 = por %p141, %p142
    %p144 = scmp.ne.s32.totalorder %s135, %s136
    %p145 = scmp.eq.s32.totalorder %s19, 0
    %p146 = por %p144, %p145
    %p147 = scmp.ne.s32.totalorder %s135, %s136
    %p148 = scmp.eq.s32.totalorder %s20, 1
    %p149 = por %p147, %p148
    %p151 = scmp.ne.s32.totalorder %s136, %s150
    %p152 = scmp.eq.s32.totalorder %s20, 0
    %p153 = por %p151, %p152
    %s154 = ssub.s32 %s21, %s33
    %p155 = scmp.eq.s32.totalorder %s154, 0
    %s157 = sadd.s32 %s156, 1
    %s158 = scalar_select %p155, %s156, %s157
    %p161 = pneg %p155
    %p162 = scmp.eq.s32.totalorder %s14, 1
    %p163 = por %p161, %p162
    %p164 = scmp.ne.s32.totalorder %s156, %s159
    %p165 = scmp.eq.s32.totalorder %s14, 0
    %p166 = por %p164, %p165
    %p167 = scmp.ne.s32.totalorder %s156, %s159
    %p168 = scmp.eq.s32.totalorder %s19, 1
    %p169 = por %p167, %p168
    %p170 = scmp.ne.s32.totalorder %s159, %s160
    %p171 = scmp.eq.s32.totalorder %s19, 0
    %p172 = por %p170, %p171
    %p173 = scmp.ne.s32.totalorder %s159, %s160
    %p174 = scmp.eq.s32.totalorder %s20, 1
    %p175 = por %p173, %p174
    %p177 = scmp.ne.s32.totalorder %s160, %s176
    %p178 = scmp.eq.s32.totalorder %s20, 0
    %p179 = por %p177, %p178
    %s180 = ssub.s32 %s22, %s29
    %p181 = scmp.eq.s32.totalorder %s180, 0
    %s183 = sadd.s32 %s182, 1
    %s184 = scalar_select %p181, %s182, %s183
    %p187 = pneg %p181
    %p188 = scmp.eq.s32.totalorder %s14, 1
    %p189 = por %p187, %p188
    %p190 = scmp.ne.s32.totalorder %s182, %s185
    %p191 = scmp.eq.s32.totalorder %s14, 0
    %p192 = por %p190, %p191
    %p193 = scmp.ne.s32.totalorder %s182, %s185
    %p194 = scmp.eq.s32.totalorder %s19, 1
    %p195 = por %p193, %p194
    %p196 = scmp.ne.s32.totalorder %s185, %s186
    %p197 = scmp.eq.s32.totalorder %s19, 0
    %p198 = por %p196, %p197
    %p199 = scmp.ne.s32.totalorder %s185, %s186
    %p200 = scmp.eq.s32.totalorder %s20, 1
    %p201 = por %p199, %p200
    %p203 = scmp.ne.s32.totalorder %s186, %s202
    %p204 = scmp.eq.s32.totalorder %s20, 0
    %p205 = por %p203, %p204
    %s206 = ssub.s32 %s22, %s29
    %p207 = scmp.eq.s32.totalorder %s206, 0
    %s209 = sadd.s32 %s208, 1
    %s210 = scalar_select %p207, %s208, %s209
    %p213 = pneg %p207
    %p214 = scmp.eq.s32.totalorder %s14, 1
    %p215 = por %p213, %p214
    %p216 = scmp.ne.s32.totalorder %s208, %s211
    %p217 = scmp.eq.s32.totalorder %s14, 0
    %p218 = por %p216, %p217
    %p219 = scmp.ne.s32.totalorder %s208, %s211
    %p220 = scmp.eq.s32.totalorder %s19, 1
    %p221 = por %p219, %p220
    %p222 = scmp.ne.s32.totalorder %s211, %s212
    %p223 = scmp.eq.s32.totalorder %s19, 0
    %p224 = por %p222, %p223
    %p225 = scmp.ne.s32.totalorder %s211, %s212
    %p226 = scmp.eq.s32.totalorder %s20, 1
    %p227 = por %p225, %p226
    %p229 = scmp.ne.s32.totalorder %s212, %s228
    %p230 = scmp.eq.s32.totalorder %s20, 0
    %p231 = por %p229, %p230
    %s232 = ssub.s32 %s21, %s33
    %s233 = ssub.s32 %s22, %s29
    %s234 = sor.u32 %s232, %s233
    %p235 = scmp.eq.s32.totalorder %s234, 0
    %s237 = sadd.s32 %s236, 1
    %s238 = scalar_select %p235, %s236, %s237
    %p241 = pneg %p235
    %p242 = scmp.eq.s32.totalorder %s14, 1
    %p243 = por %p241, %p242
    %p244 = scmp.ne.s32.totalorder %s236, %s239
    %p245 = scmp.eq.s32.totalorder %s14, 0
    %p246 = por %p244, %p245
    %p247 = scmp.ne.s32.totalorder %s236, %s239
    %p248 = scmp.eq.s32.totalorder %s19, 1
    %p249 = por %p247, %p248
    %p250 = scmp.ne.s32.totalorder %s239, %s240
    %p251 = scmp.eq.s32.totalorder %s19, 0
    %p252 = por %p250, %p251
    %p253 = scmp.ne.s32.totalorder %s239, %s240
    %p254 = scmp.eq.s32.totalorder %s20, 1
    %p255 = por %p253, %p254
    %p257 = scmp.ne.s32.totalorder %s240, %s256
    %p258 = scmp.eq.s32.totalorder %s20, 0
    %p259 = por %p257, %p258
    %p260 = scmp.le.s32.totalorder 1, %s14
    %p261 = scmp.lt.s32.totalorder %s14, 3
    %p262 = pnand %p260, %p261
    %p263 = pneg %p262
    // Predicated region
    $region9: #{down_blk_forward.4} parent=5 // pred_check
      _
    $region10: #{down_blk_forward.4} parent=5 // pred_check_branch
      %265 = sbr.rel (%p262) target = $region12
    $region11: #{down_blk_forward.4} parent=5 // pred_region
      %s266 = ssub.s32 %s14, 1
      // Predicated region
      $region13: #{down_blk_forward.4} parent=11 // pred_check
        %p267 = pneg %p78
      $region14: #{down_blk_forward.4} parent=11 // pred_check_branch
        %269 = sbr.rel (%p267) target = $region16
      $region15: #{down_blk_forward.4} parent=11 // pred_region
        %p270 = scmp.lt.s32.totalorder %s24, 0
        %s271 = scalar_select %p270, %s24, 0
        %s272 = smul.addr %s271, 4
        %s273 = scalar_lea.vmem %s1, %s272
      $region16: #{down_blk_forward.4} parent=11 // pred_fallthru
        _
      // Predicated region
      $region17: #{down_blk_forward.4} parent=11 // pred_check
        %p274 = pneg %p104
      $region18: #{down_blk_forward.4} parent=11 // pred_check_branch
        %276 = sbr.rel (%p274) target = $region20
      $region19: #{down_blk_forward.4} parent=11 // pred_region
        %p277 = scmp.lt.s32.totalorder %s24, 0
        %s278 = scalar_select %p277, %s24, 0
        %s279 = scalar_lea.vmem %s2, %s278
      $region20: #{down_blk_forward.4} parent=11 // pred_fallthru
        _
      // Predicated region
      $region21: #{down_blk_forward.4} parent=11 // pred_check
        %p280 = pneg %p125
      $region22: #{down_blk_forward.4} parent=11 // pred_check_branch
        %282 = sbr.rel (%p280) target = $region24
      $region23: #{down_blk_forward.4} parent=11 // pred_region
        _
      $region24: #{down_blk_forward.4} parent=11 // pred_fallthru
        _
      // Predicated region
      $region25: #{down_blk_forward.4} parent=11 // pred_check
        %p283 = pneg %p146
      $region26: #{down_blk_forward.4} parent=11 // pred_check_branch
        %285 = sbr.rel (%p283) target = $region28
      $region27: #{down_blk_forward.4} parent=11 // pred_region
        _
      $region28: #{down_blk_forward.4} parent=11 // pred_fallthru
        _
      // Predicated region
      $region29: #{down_blk_forward.4} parent=11 // pred_check
        %p286 = pneg %p198
      $region30: #{down_blk_forward.4} parent=11 // pred_check_branch
        %288 = sbr.rel (%p286) target = $region32
      $region31: #{down_blk_forward.4} parent=11 // pred_region
        %p289 = scmp.lt.s32.totalorder %s24, 0
        %s290 = scalar_select %p289, %s24, 0
        %s291 = smul.addr %s290, 4
        %s292 = scalar_lea.vmem %s6, %s291
      $region32: #{down_blk_forward.4} parent=11 // pred_fallthru
        _
      // Predicated region
      $region33: #{down_blk_forward.4} parent=11 // pred_check
        %p293 = pneg %p224
      $region34: #{down_blk_forward.4} parent=11 // pred_check_branch
        %295 = sbr.rel (%p293) target = $region36
      $region35: #{down_blk_forward.4} parent=11 // pred_region
        %p296 = scmp.lt.s32.totalorder %s24, 0
        %s297 = scalar_select %p296, %s24, 0
        %s298 = scalar_lea.vmem %s7, %s297
      $region36: #{down_blk_forward.4} parent=11 // pred_fallthru
        _
    $region12: #{down_blk_forward.4} parent=5 // pred_fallthru
      _
    %p299 = scmp.lt.s32.totalorder %s14, 2
    // Predicated region
    $region37: #{down_blk_forward.4} parent=5 // pred_check
      %p300 = pneg %p299
    $region38: #{down_blk_forward.4} parent=5 // pred_check_branch
      %302 = sbr.rel (%p300) target = $region40
    $region39: #{down_blk_forward.4} parent=5 // pred_region
      // Predicated region
      $region41: #{down_blk_forward.4} parent=39 // pred_check
        %p303 = pneg %p46
      $region42: #{down_blk_forward.4} parent=39 // pred_check_branch
        %305 = sbr.rel (%p303) target = $region44
      $region43: #{down_blk_forward.4} parent=39 // pred_region
        %p306 = scmp.lt.s32.totalorder %s21, 1
        %s307 = scalar_select %p306, %s21, 1
        %s308 = smul.addr %s307, 32
        %s309 = smul.addr %s308, 8
        %s310 = scalar_lea.vmem %s0, %s309
      $region44: #{down_blk_forward.4} parent=39 // pred_fallthru
        _
      // Predicated region
      $region45: #{down_blk_forward.4} parent=39 // pred_check
        %p311 = pneg %p166
      $region46: #{down_blk_forward.4} parent=39 // pred_check_branch
        %313 = sbr.rel (%p311) target = $region48
      $region47: #{down_blk_forward.4} parent=39 // pred_region
        %p314 = scmp.lt.s32.totalorder %s21, 1
        %s315 = scalar_select %p314, %s21, 1
        %s316 = smul.addr %s315, 32
        %s317 = smul.addr %s316, 8
        %s318 = scalar_lea.vmem %s5, %s317
      $region48: #{down_blk_forward.4} parent=39 // pred_fallthru
        _
    $region40: #{down_blk_forward.4} parent=5 // pred_fallthru
      _
    %p319 = scmp.le.s32.totalorder 1, %s14
    %p320 = scmp.lt.s32.totalorder %s14, 3
    %p321 = pnand %p319, %p320
    %p322 = pneg %p321
    // Predicated region
    $region49: #{down_blk_forward.4} parent=5 // pred_check
      _
    $region50: #{down_blk_forward.4} parent=5 // pred_check_branch
      %324 = sbr.rel (%p321) target = $region52
    $region51: #{down_blk_forward.4} parent=5 // pred_region
      %s325 = ssub.s32 %s14, 1
      %p326 = scmp.lt.s32.totalorder %s23, 1
      %s327 = scalar_select %p326, %s23, 1
      %s328 = smul.addr %s327, 32
      %s329 = smul.addr %s328, 8
      %s330 = scalar_lea.vmem %s0, %s329
      %p331 = pneg %p52
      %p332 = pneg %p49
      %p333 = scmp.lt.s32.totalorder %s24, 0
      %s334 = scalar_select %p333, %s24, 0
      %s335 = smul.addr %s334, 4
      %s336 = scalar_lea.vmem %s1, %s335
      %p337 = pneg %p78
      %p338 = pneg %p75
      %p339 = scmp.lt.s32.totalorder %s24, 0
      %s340 = scalar_select %p339, %s24, 0
      %s341 = scalar_lea.vmem %s2, %s340
      %p342 = pneg %p104
      %p343 = pneg %p101
      %p344 = pneg %p125
      %p345 = pneg %p122
      %p346 = pneg %p146
      %p347 = pneg %p143
      %p348 = scmp.lt.s32.totalorder %s23, 1
      %s349 = scalar_select %p348, %s23, 1
      %s350 = smul.addr %s349, 32
      %s351 = smul.addr %s350, 8
      %s352 = scalar_lea.vmem %s5, %s351
      %p353 = pneg %p172
      %p354 = pneg %p169
      %p355 = scmp.lt.s32.totalorder %s24, 0
      %s356 = scalar_select %p355, %s24, 0
      %s357 = smul.addr %s356, 4
      %s358 = scalar_lea.vmem %s6, %s357
      %p359 = pneg %p198
      %p360 = pneg %p195
      %p361 = scmp.lt.s32.totalorder %s24, 0
      %s362 = scalar_select %p361, %s24, 0
      %s363 = scalar_lea.vmem %s7, %s362
      %p364 = pneg %p224
      %p365 = pneg %p221
      %p366 = pneg %p252
      %p367 = pneg %p249
      %p368 = scmp.lt.s32.totalorder %s23, 1
      %s369 = scalar_select %p368, %s23, 1
      %p370 = scmp.lt.s32.totalorder %s24, 0
      %s371 = scalar_select %p370, %s24, 0
      %s372 = smul.addr %s369, 32
      %s373 = sadd.s32 %s371, %s372
      %s374 = smul.addr %s373, 8
      %s375 = scalar_lea.vmem %s8, %s374
      %p376 = scmp.lt.s32.totalorder %s23, 1
      %s377 = scalar_select %p376, %s23, 1
      %s378 = smul.addr %s377, 32
      %s379 = smul.addr %s378, 8
      %s380 = scalar_lea.vmem %s0, %s379
      %p381 = scmp.lt.s32.totalorder %s24, 0
      %s382 = scalar_select %p381, %s24, 0
      %s383 = smul.addr %s382, 4
      %s384 = scalar_lea.vmem %s1, %s383
      %p385 = scmp.lt.s32.totalorder %s24, 0
      %s386 = scalar_select %p385, %s24, 0
      %s387 = scalar_lea.vmem %s2, %s386
      %p388 = scmp.lt.s32.totalorder %s23, 1
      %s389 = scalar_select %p388, %s23, 1
      %s390 = smul.addr %s389, 32
      %s391 = smul.addr %s390, 8
      %s392 = scalar_lea.vmem %s5, %s391
      %p393 = scmp.lt.s32.totalorder %s24, 0
      %s394 = scalar_select %p393, %s24, 0
      %s395 = smul.addr %s394, 4
      %s396 = scalar_lea.vmem %s6, %s395
      %p397 = scmp.lt.s32.totalorder %s24, 0
      %s398 = scalar_select %p397, %s24, 0
      %s399 = scalar_lea.vmem %s7, %s398
      %p400 = scmp.lt.s32.totalorder %s23, 1
      %s401 = scalar_select %p400, %s23, 1
      %p402 = scmp.lt.s32.totalorder %s24, 0
      %s403 = scalar_select %p402, %s24, 0
      %s404 = smul.addr %s401, 32
      %s405 = sadd.s32 %s403, %s404
      %s406 = smul.addr %s405, 8
      %s407 = scalar_lea.vmem %s8, %s406
      %p409 = scmp.eq.s32.totalorder %s24, 0
      // Predicated region
      $region53: #{down_blk_forward.4} parent=51 // pred_check
        %p410 = pneg %p409
      $region54: #{down_blk_forward.4} parent=51 // pred_check_branch
        %412 = sbr.rel (%p410) target = $region56
      $region55: #{down_blk_forward.4} parent=51 // pred_region
        %v413 = vld [vmem:[%s380] sm:$0xff]
        %v414 = vld [vmem:[%s380 + $0x8] sm:$0xff]
        %v415 = vld [vmem:[%s380 + $0x10] sm:$0xff]
        %v416 = vld [vmem:[%s380 + $0x18] sm:$0xff]
        %v417 = vld [vmem:[%s380 + $0x20] sm:$0xff]
        %v418 = vld [vmem:[%s380 + $0x28] sm:$0xff]
        %v419 = vld [vmem:[%s380 + $0x30] sm:$0xff]
        %v420 = vld [vmem:[%s380 + $0x38] sm:$0xff]
        %v421 = vld [vmem:[%s380 + $0x40] sm:$0xff]
        %v422 = vld [vmem:[%s380 + $0x48] sm:$0xff]
        %v423 = vld [vmem:[%s380 + $0x50] sm:$0xff]
        %v424 = vld [vmem:[%s380 + $0x58] sm:$0xff]
        %v425 = vld [vmem:[%s380 + $0x60] sm:$0xff]
        %v426 = vld [vmem:[%s380 + $0x68] sm:$0xff]
        %v427 = vld [vmem:[%s380 + $0x70] sm:$0xff]
        %v428 = vld [vmem:[%s380 + $0x78] sm:$0xff]
        %v429 = vld [vmem:[%s380 + $0x80] sm:$0xff]
        %v430 = vld [vmem:[%s380 + $0x88] sm:$0xff]
        %v431 = vld [vmem:[%s380 + $0x90] sm:$0xff]
        %v432 = vld [vmem:[%s380 + $0x98] sm:$0xff]
        %v433 = vld [vmem:[%s380 + $0xa0] sm:$0xff]
        %v434 = vld [vmem:[%s380 + $0xa8] sm:$0xff]
        %v435 = vld [vmem:[%s380 + $0xb0] sm:$0xff]
        %v436 = vld [vmem:[%s380 + $0xb8] sm:$0xff]
        %v437 = vld [vmem:[%s380 + $0xc0] sm:$0xff]
        %v438 = vld [vmem:[%s380 + $0xc8] sm:$0xff]
        %v439 = vld [vmem:[%s380 + $0xd0] sm:$0xff]
        %v440 = vld [vmem:[%s380 + $0xd8] sm:$0xff]
        %v441 = vld [vmem:[%s380 + $0xe0] sm:$0xff]
        %v442 = vld [vmem:[%s380 + $0xe8] sm:$0xff]
        %v443 = vld [vmem:[%s380 + $0xf0] sm:$0xff]
        %v444 = vld [vmem:[%s380 + $0xf8] sm:$0xff]
        %v445 = vld [vmem:[%s3] sm:$0x1]
        %v447 = vlaneseq
        %v448 = vshrl.u32 %v447, 7
        %v449 = vsub.s32 0, %v448
        %v450 = vrot.slane %v445, %v449
        %v452 = vmul.f32 %v413, %v450
        %v453 = vmul.f32 %v414, %v450
        %v454 = vmul.f32 %v415, %v450
        %v455 = vmul.f32 %v416, %v450
        %v456 = vmul.f32 %v417, %v450
        %v457 = vmul.f32 %v418, %v450
        %v458 = vmul.f32 %v419, %v450
        %v459 = vmul.f32 %v420, %v450
        %v460 = vmul.f32 %v421, %v450
        %v461 = vmul.f32 %v422, %v450
        %v462 = vmul.f32 %v423, %v450
        %v463 = vmul.f32 %v424, %v450
        %v464 = vmul.f32 %v425, %v450
        %v465 = vmul.f32 %v426, %v450
        %v466 = vmul.f32 %v427, %v450
        %v467 = vmul.f32 %v428, %v450
        %v468 = vmul.f32 %v429, %v450
        %v469 = vmul.f32 %v430, %v450
        %v470 = vmul.f32 %v431, %v450
        %v471 = vmul.f32 %v432, %v450
        %v472 = vmul.f32 %v433, %v450
        %v473 = vmul.f32 %v434, %v450
        %v474 = vmul.f32 %v435, %v450
        %v475 = vmul.f32 %v436, %v450
        %v476 = vmul.f32 %v437, %v450
        %v477 = vmul.f32 %v438, %v450
        %v478 = vmul.f32 %v439, %v450
        %v479 = vmul.f32 %v440, %v450
        %v480 = vmul.f32 %v441, %v450
        %v481 = vmul.f32 %v442, %v450
        %v482 = vmul.f32 %v443, %v450
        %v483 = vmul.f32 %v444, %v450
        %v484 = vld [vmem:[%s4] sm:$0x1]
        %v486 = vlaneseq
        %v487 = vshrl.u32 %v486, 7
        %v488 = vsub.s32 0, %v487
        %v489 = vrot.slane %v484, %v488
        %v491 = vadd.f32 %v452, %v489
        %v492 = vadd.f32 %v453, %v489
        %v493 = vadd.f32 %v454, %v489
        %v494 = vadd.f32 %v455, %v489
        %v495 = vadd.f32 %v456, %v489
        %v496 = vadd.f32 %v457, %v489
        %v497 = vadd.f32 %v458, %v489
        %v498 = vadd.f32 %v459, %v489
        %v499 = vadd.f32 %v460, %v489
        %v500 = vadd.f32 %v461, %v489
        %v501 = vadd.f32 %v462, %v489
        %v502 = vadd.f32 %v463, %v489
        %v503 = vadd.f32 %v464, %v489
        %v504 = vadd.f32 %v465, %v489
        %v505 = vadd.f32 %v466, %v489
        %v506 = vadd.f32 %v467, %v489
        %v507 = vadd.f32 %v468, %v489
        %v508 = vadd.f32 %v469, %v489
        %v509 = vadd.f32 %v470, %v489
        %v510 = vadd.f32 %v471, %v489
        %v511 = vadd.f32 %v472, %v489
        %v512 = vadd.f32 %v473, %v489
        %v513 = vadd.f32 %v474, %v489
        %v514 = vadd.f32 %v475, %v489
        %v515 = vadd.f32 %v476, %v489
        %v516 = vadd.f32 %v477, %v489
        %v517 = vadd.f32 %v478, %v489
        %v518 = vadd.f32 %v479, %v489
        %v519 = vadd.f32 %v480, %v489
        %v520 = vadd.f32 %v481, %v489
        %v521 = vadd.f32 %v482, %v489
        %v522 = vadd.f32 %v483, %v489
        %v523 = vxor.u32 %v491, 2147483648
        %v524 = vxor.u32 %v492, 2147483648
        %v525 = vxor.u32 %v493, 2147483648
        %v526 = vxor.u32 %v494, 2147483648
        %v527 = vxor.u32 %v495, 2147483648
        %v528 = vxor.u32 %v496, 2147483648
        %v529 = vxor.u32 %v497, 2147483648
        %v530 = vxor.u32 %v498, 2147483648
        %v531 = vxor.u32 %v499, 2147483648
        %v532 = vxor.u32 %v500, 2147483648
        %v533 = vxor.u32 %v501, 2147483648
        %v534 = vxor.u32 %v502, 2147483648
        %v535 = vxor.u32 %v503, 2147483648
        %v536 = vxor.u32 %v504, 2147483648
        %v537 = vxor.u32 %v505, 2147483648
        %v538 = vxor.u32 %v506, 2147483648
        %v539 = vxor.u32 %v507, 2147483648
        %v540 = vxor.u32 %v508, 2147483648
        %v541 = vxor.u32 %v509, 2147483648
        %v542 = vxor.u32 %v510, 2147483648
        %v543 = vxor.u32 %v511, 2147483648
        %v544 = vxor.u32 %v512, 2147483648
        %v545 = vxor.u32 %v513, 2147483648
        %v546 = vxor.u32 %v514, 2147483648
        %v547 = vxor.u32 %v515, 2147483648
        %v548 = vxor.u32 %v516, 2147483648
        %v549 = vxor.u32 %v517, 2147483648
        %v550 = vxor.u32 %v518, 2147483648
        %v551 = vxor.u32 %v519, 2147483648
        %v552 = vxor.u32 %v520, 2147483648
        %v553 = vxor.u32 %v521, 2147483648
        %v554 = vxor.u32 %v522, 2147483648
        %v555 = vmul.f32 %v523, 1.442695
        %v556 = vpow.pop %v555
        %v557 = vmul.f32 %v524, 1.442695
        %v558 = vpow.pop %v557
        %v559 = vmul.f32 %v525, 1.442695
        %v560 = vpow.pop %v559
        %v561 = vmul.f32 %v526, 1.442695
        %v562 = vpow.pop %v561
        %v563 = vmul.f32 %v527, 1.442695
        %v564 = vpow.pop %v563
        %v565 = vmul.f32 %v528, 1.442695
        %v566 = vpow.pop %v565
        %v567 = vmul.f32 %v529, 1.442695
        %v568 = vpow.pop %v567
        %v569 = vmul.f32 %v530, 1.442695
        %v570 = vpow.pop %v569
        %v571 = vmul.f32 %v531, 1.442695
        %v572 = vpow.pop %v571
        %v573 = vmul.f32 %v532, 1.442695
        %v574 = vpow.pop %v573
        %v575 = vmul.f32 %v533, 1.442695
        %v576 = vpow.pop %v575
        %v577 = vmul.f32 %v534, 1.442695
        %v578 = vpow.pop %v577
        %v579 = vmul.f32 %v535, 1.442695
        %v580 = vpow.pop %v579
        %v581 = vmul.f32 %v536, 1.442695
        %v582 = vpow.pop %v581
        %v583 = vmul.f32 %v537, 1.442695
        %v584 = vpow.pop %v583
        %v585 = vmul.f32 %v538, 1.442695
        %v586 = vpow.pop %v585
        %v587 = vmul.f32 %v539, 1.442695
        %v588 = vpow.pop %v587
        %v589 = vmul.f32 %v540, 1.442695
        %v590 = vpow.pop %v589
        %v591 = vmul.f32 %v541, 1.442695
        %v592 = vpow.pop %v591
        %v593 = vmul.f32 %v542, 1.442695
        %v594 = vpow.pop %v593
        %v595 = vmul.f32 %v543, 1.442695
        %v596 = vpow.pop %v595
        %v597 = vmul.f32 %v544, 1.442695
        %v598 = vpow.pop %v597
        %v599 = vmul.f32 %v545, 1.442695
        %v600 = vpow.pop %v599
        %v601 = vmul.f32 %v546, 1.442695
        %v602 = vpow.pop %v601
        %v603 = vmul.f32 %v547, 1.442695
        %v604 = vpow.pop %v603
        %v605 = vmul.f32 %v548, 1.442695
        %v606 = vpow.pop %v605
        %v607 = vmul.f32 %v549, 1.442695
        %v608 = vpow.pop %v607
        %v609 = vmul.f32 %v550, 1.442695
        %v610 = vpow.pop %v609
        %v611 = vmul.f32 %v551, 1.442695
        %v612 = vpow.pop %v611
        %v613 = vmul.f32 %v552, 1.442695
        %v614 = vpow.pop %v613
        %v615 = vmul.f32 %v553, 1.442695
        %v616 = vpow.pop %v615
        %v617 = vmul.f32 %v554, 1.442695
        %v618 = vpow.pop %v617
        %v619 = vadd.f32 %v556, 1.0
        %v620 = vadd.f32 %v558, 1.0
        %v621 = vadd.f32 %v560, 1.0
        %v622 = vadd.f32 %v562, 1.0
        %v623 = vadd.f32 %v564, 1.0
        %v624 = vadd.f32 %v566, 1.0
        %v625 = vadd.f32 %v568, 1.0
        %v626 = vadd.f32 %v570, 1.0
        %v627 = vadd.f32 %v572, 1.0
        %v628 = vadd.f32 %v574, 1.0
        %v629 = vadd.f32 %v576, 1.0
        %v630 = vadd.f32 %v578, 1.0
        %v631 = vadd.f32 %v580, 1.0
        %v632 = vadd.f32 %v582, 1.0
        %v633 = vadd.f32 %v584, 1.0
        %v634 = vadd.f32 %v586, 1.0
        %v635 = vadd.f32 %v588, 1.0
        %v636 = vadd.f32 %v590, 1.0
        %v637 = vadd.f32 %v592, 1.0
        %v638 = vadd.f32 %v594, 1.0
        %v639 = vadd.f32 %v596, 1.0
        %v640 = vadd.f32 %v598, 1.0
        %v641 = vadd.f32 %v600, 1.0
        %v642 = vadd.f32 %v602, 1.0
        %v643 = vadd.f32 %v604, 1.0
        %v644 = vadd.f32 %v606, 1.0
        %v645 = vadd.f32 %v608, 1.0
        %v646 = vadd.f32 %v610, 1.0
        %v647 = vadd.f32 %v612, 1.0
        %v648 = vadd.f32 %v614, 1.0
        %v649 = vadd.f32 %v616, 1.0
        %v650 = vadd.f32 %v618, 1.0
        %v651 = vrcp.pop %v619
        %v652 = vmul.f32 1.0, %v651
        %v653 = vrcp.pop %v620
        %v654 = vmul.f32 1.0, %v653
        %v655 = vrcp.pop %v621
        %v656 = vmul.f32 1.0, %v655
        %v657 = vrcp.pop %v622
        %v658 = vmul.f32 1.0, %v657
        %v659 = vrcp.pop %v623
        %v660 = vmul.f32 1.0, %v659
        %v661 = vrcp.pop %v624
        %v662 = vmul.f32 1.0, %v661
        %v663 = vrcp.pop %v625
        %v664 = vmul.f32 1.0, %v663
        %v665 = vrcp.pop %v626
        %v666 = vmul.f32 1.0, %v665
        %v667 = vrcp.pop %v627
        %v668 = vmul.f32 1.0, %v667
        %v669 = vrcp.pop %v628
        %v670 = vmul.f32 1.0, %v669
        %v671 = vrcp.pop %v629
        %v672 = vmul.f32 1.0, %v671
        %v673 = vrcp.pop %v630
        %v674 = vmul.f32 1.0, %v673
        %v675 = vrcp.pop %v631
        %v676 = vmul.f32 1.0, %v675
        %v677 = vrcp.pop %v632
        %v678 = vmul.f32 1.0, %v677
        %v679 = vrcp.pop %v633
        %v680 = vmul.f32 1.0, %v679
        %v681 = vrcp.pop %v634
        %v682 = vmul.f32 1.0, %v681
        %v683 = vrcp.pop %v635
        %v684 = vmul.f32 1.0, %v683
        %v685 = vrcp.pop %v636
        %v686 = vmul.f32 1.0, %v685
        %v687 = vrcp.pop %v637
        %v688 = vmul.f32 1.0, %v687
        %v689 = vrcp.pop %v638
        %v690 = vmul.f32 1.0, %v689
        %v691 = vrcp.pop %v639
        %v692 = vmul.f32 1.0, %v691
        %v693 = vrcp.pop %v640
        %v694 = vmul.f32 1.0, %v693
        %v695 = vrcp.pop %v641
        %v696 = vmul.f32 1.0, %v695
        %v697 = vrcp.pop %v642
        %v698 = vmul.f32 1.0, %v697
        %v699 = vrcp.pop %v643
        %v700 = vmul.f32 1.0, %v699
        %v701 = vrcp.pop %v644
        %v702 = vmul.f32 1.0, %v701
        %v703 = vrcp.pop %v645
        %v704 = vmul.f32 1.0, %v703
        %v705 = vrcp.pop %v646
        %v706 = vmul.f32 1.0, %v705
        %v707 = vrcp.pop %v647
        %v708 = vmul.f32 1.0, %v707
        %v709 = vrcp.pop %v648
        %v710 = vmul.f32 1.0, %v709
        %v711 = vrcp.pop %v649
        %v712 = vmul.f32 1.0, %v711
        %v713 = vrcp.pop %v650
        %v714 = vmul.f32 1.0, %v713
        %v715 = vmul.f32 %v491, %v652
        %v716 = vmul.f32 %v492, %v654
        %v717 = vmul.f32 %v493, %v656
        %v718 = vmul.f32 %v494, %v658
        %v719 = vmul.f32 %v495, %v660
        %v720 = vmul.f32 %v496, %v662
        %v721 = vmul.f32 %v497, %v664
        %v722 = vmul.f32 %v498, %v666
        %v723 = vmul.f32 %v499, %v668
        %v724 = vmul.f32 %v500, %v670
        %v725 = vmul.f32 %v501, %v672
        %v726 = vmul.f32 %v502, %v674
        %v727 = vmul.f32 %v503, %v676
        %v728 = vmul.f32 %v504, %v678
        %v729 = vmul.f32 %v505, %v680
        %v730 = vmul.f32 %v506, %v682
        %v731 = vmul.f32 %v507, %v684
        %v732 = vmul.f32 %v508, %v686
        %v733 = vmul.f32 %v509, %v688
        %v734 = vmul.f32 %v510, %v690
        %v735 = vmul.f32 %v511, %v692
        %v736 = vmul.f32 %v512, %v694
        %v737 = vmul.f32 %v513, %v696
        %v738 = vmul.f32 %v514, %v698
        %v739 = vmul.f32 %v515, %v700
        %v740 = vmul.f32 %v516, %v702
        %v741 = vmul.f32 %v517, %v704
        %v742 = vmul.f32 %v518, %v706
        %v743 = vmul.f32 %v519, %v708
        %v744 = vmul.f32 %v520, %v710
        %v745 = vmul.f32 %v521, %v712
        %v746 = vmul.f32 %v522, %v714
        %v747 = vpack.c.bf16 %v716, %v715
        %v748 = vpack.c.bf16 %v718, %v717
        %v749 = vpack.c.bf16 %v720, %v719
        %v750 = vpack.c.bf16 %v722, %v721
        %v751 = vpack.c.bf16 %v724, %v723
        %v752 = vpack.c.bf16 %v726, %v725
        %v753 = vpack.c.bf16 %v728, %v727
        %v754 = vpack.c.bf16 %v730, %v729
        %v755 = vpack.c.bf16 %v732, %v731
        %v756 = vpack.c.bf16 %v734, %v733
        %v757 = vpack.c.bf16 %v736, %v735
        %v758 = vpack.c.bf16 %v738, %v737
        %v759 = vpack.c.bf16 %v740, %v739
        %v760 = vpack.c.bf16 %v742, %v741
        %v761 = vpack.c.bf16 %v744, %v743
        %v762 = vpack.c.bf16 %v746, %v745
        %763 = vst [vmem:[#allocation2] sm:$0xff] 0
        %764 = vst [vmem:[#allocation2 + $0x8] sm:$0xf] 0
        %765 = vst [vmem:[#allocation2 + $0xc] sm:$0xff] 0
        %766 = vst [vmem:[#allocation2 + $0x14] sm:$0xf] 0
        %767 = vst [vmem:[#allocation2 + $0x18] sm:$0xff] 0
        %768 = vst [vmem:[#allocation2 + $0x20] sm:$0xf] 0
        %769 = vst [vmem:[#allocation2 + $0x24] sm:$0xff] 0
        %770 = vst [vmem:[#allocation2 + $0x2c] sm:$0xf] 0
        %771 = vst [vmem:[#allocation2 + $0x30] sm:$0xff] 0
        %772 = vst [vmem:[#allocation2 + $0x38] sm:$0xf] 0
        %773 = vst [vmem:[#allocation2 + $0x3c] sm:$0xff] 0
        %774 = vst [vmem:[#allocation2 + $0x44] sm:$0xf] 0
        %775 = vst [vmem:[#allocation2 + $0x48] sm:$0xff] 0
        %776 = vst [vmem:[#allocation2 + $0x50] sm:$0xf] 0
        %777 = vst [vmem:[#allocation2 + $0x54] sm:$0xff] 0
        %778 = vst [vmem:[#allocation2 + $0x5c] sm:$0xf] 0
        %779 = vst [vmem:[#allocation2 + $0x60] sm:$0xff] 0
        %780 = vst [vmem:[#allocation2 + $0x68] sm:$0xf] 0
        %781 = vst [vmem:[#allocation2 + $0x6c] sm:$0xff] 0
        %782 = vst [vmem:[#allocation2 + $0x74] sm:$0xf] 0
        %783 = vst [vmem:[#allocation2 + $0x78] sm:$0xff] 0
        %784 = vst [vmem:[#allocation2 + $0x80] sm:$0xf] 0
        %785 = vst [vmem:[#allocation2 + $0x84] sm:$0xff] 0
        %786 = vst [vmem:[#allocation2 + $0x8c] sm:$0xf] 0
        %787 = vst [vmem:[#allocation2 + $0x90] sm:$0xff] 0
        %788 = vst [vmem:[#allocation2 + $0x98] sm:$0xf] 0
        %789 = vst [vmem:[#allocation2 + $0x9c] sm:$0xff] 0
        %790 = vst [vmem:[#allocation2 + $0xa4] sm:$0xf] 0
        %791 = vst [vmem:[#allocation2 + $0xa8] sm:$0xff] 0
        %792 = vst [vmem:[#allocation2 + $0xb0] sm:$0xf] 0
        %793 = vst [vmem:[#allocation2 + $0xb4] sm:$0xff] 0
        %794 = vst [vmem:[#allocation2 + $0xbc] sm:$0xf] 0
        %795 = vst [vmem:[#allocation2 + $0xc0] sm:$0xff] 0
        %796 = vst [vmem:[#allocation2 + $0xc8] sm:$0xf] 0
        %797 = vst [vmem:[#allocation2 + $0xcc] sm:$0xff] 0
        %798 = vst [vmem:[#allocation2 + $0xd4] sm:$0xf] 0
        %799 = vst [vmem:[#allocation2 + $0xd8] sm:$0xff] 0
        %800 = vst [vmem:[#allocation2 + $0xe0] sm:$0xf] 0
        %801 = vst [vmem:[#allocation2 + $0xe4] sm:$0xff] 0
        %802 = vst [vmem:[#allocation2 + $0xec] sm:$0xf] 0
        %803 = vst [vmem:[#allocation2 + $0xf0] sm:$0xff] 0
        %804 = vst [vmem:[#allocation2 + $0xf8] sm:$0xf] 0
        %805 = vst [vmem:[#allocation2 + $0xfc] sm:$0xff] 0
        %806 = vst [vmem:[#allocation2 + $0x104] sm:$0xf] 0
        %807 = vst [vmem:[#allocation2 + $0x108] sm:$0xff] 0
        %808 = vst [vmem:[#allocation2 + $0x110] sm:$0xf] 0
        %809 = vst [vmem:[#allocation2 + $0x114] sm:$0xff] 0
        %810 = vst [vmem:[#allocation2 + $0x11c] sm:$0xf] 0
        %811 = vst [vmem:[#allocation2 + $0x120] sm:$0xff] 0
        %812 = vst [vmem:[#allocation2 + $0x128] sm:$0xf] 0
        %813 = vst [vmem:[#allocation2 + $0x12c] sm:$0xff] 0
        %814 = vst [vmem:[#allocation2 + $0x134] sm:$0xf] 0
        %815 = vst [vmem:[#allocation2 + $0x138] sm:$0xff] 0
        %816 = vst [vmem:[#allocation2 + $0x140] sm:$0xf] 0
        %817 = vst [vmem:[#allocation2 + $0x144] sm:$0xff] 0
        %818 = vst [vmem:[#allocation2 + $0x14c] sm:$0xf] 0
        %819 = vst [vmem:[#allocation2 + $0x150] sm:$0xff] 0
        %820 = vst [vmem:[#allocation2 + $0x158] sm:$0xf] 0
        %821 = vst [vmem:[#allocation2 + $0x15c] sm:$0xff] 0
        %822 = vst [vmem:[#allocation2 + $0x164] sm:$0xf] 0
        %823 = vst [vmem:[#allocation2 + $0x168] sm:$0xff] 0
        %824 = vst [vmem:[#allocation2 + $0x170] sm:$0xf] 0
        %825 = vst [vmem:[#allocation2 + $0x174] sm:$0xff] 0
        %826 = vst [vmem:[#allocation2 + $0x17c] sm:$0xf] 0
        %827 = vst [vmem:[#allocation2 + $0x180] sm:$0xff] 0
        %828 = vst [vmem:[#allocation2 + $0x188] sm:$0xf] 0
        %829 = vst [vmem:[#allocation2 + $0x18c] sm:$0xff] 0
        %830 = vst [vmem:[#allocation2 + $0x194] sm:$0xf] 0
        %831 = vst [vmem:[#allocation2 + $0x198] sm:$0xff] 0
        %832 = vst [vmem:[#allocation2 + $0x1a0] sm:$0xf] 0
        %833 = vst [vmem:[#allocation2 + $0x1a4] sm:$0xff] 0
        %834 = vst [vmem:[#allocation2 + $0x1ac] sm:$0xf] 0
        %v851 = vunpack.c.l.b16 %v747
        %v852 = vunpack.c.h.b16 %v747
        %v853 = vunpack.c.l.b16 %v748
        %v854 = vunpack.c.h.b16 %v748
        %v855 = vunpack.c.l.b16 %v749
        %v856 = vunpack.c.h.b16 %v749
        %v857 = vunpack.c.l.b16 %v750
        %v858 = vunpack.c.h.b16 %v750
        %v859 = vunpack.c.l.b16 %v751
        %v860 = vunpack.c.h.b16 %v751
        %v861 = vunpack.c.l.b16 %v752
        %v862 = vunpack.c.h.b16 %v752
        %v863 = vunpack.c.l.b16 %v753
        %v864 = vunpack.c.h.b16 %v753
        %v865 = vunpack.c.l.b16 %v754
        %v866 = vunpack.c.h.b16 %v754
        %v867 = vunpack.c.l.b16 %v755
        %v868 = vunpack.c.h.b16 %v755
        %v869 = vunpack.c.l.b16 %v756
        %v870 = vunpack.c.h.b16 %v756
        %v871 = vunpack.c.l.b16 %v757
        %v872 = vunpack.c.h.b16 %v757
        %v873 = vunpack.c.l.b16 %v758
        %v874 = vunpack.c.h.b16 %v758
        %v875 = vunpack.c.l.b16 %v759
        %v876 = vunpack.c.h.b16 %v759
        %v877 = vunpack.c.l.b16 %v760
        %v878 = vunpack.c.h.b16 %v760
        %v879 = vunpack.c.l.b16 %v761
        %v880 = vunpack.c.h.b16 %v761
        %v881 = vunpack.c.l.b16 %v762
        %v882 = vunpack.c.h.b16 %v762
        %v883 = vpack.c.b16 %v851, %v851
        %v884 = vpack.c.b16 %v852, %v852
        %v885 = vpack.c.b16 %v853, %v853
        %v886 = vpack.c.b16 %v854, %v854
        %v887 = vpack.c.b16 %v855, %v855
        %v888 = vpack.c.b16 %v856, %v856
        %v889 = vpack.c.b16 %v857, %v857
        %v890 = vpack.c.b16 %v858, %v858
        %v891 = vpack.c.b16 %v859, %v859
        %v892 = vpack.c.b16 %v860, %v860
        %v893 = vpack.c.b16 %v861, %v861
        %v894 = vpack.c.b16 %v862, %v862
        %v895 = vpack.c.b16 %v863, %v863
        %v896 = vpack.c.b16 %v864, %v864
        %v897 = vpack.c.b16 %v865, %v865
        %v898 = vpack.c.b16 %v866, %v866
        %v899 = vpack.c.b16 %v867, %v867
        %v900 = vpack.c.b16 %v868, %v868
        %v901 = vpack.c.b16 %v869, %v869
        %v902 = vpack.c.b16 %v870, %v870
        %v903 = vpack.c.b16 %v871, %v871
        %v904 = vpack.c.b16 %v872, %v872
        %v905 = vpack.c.b16 %v873, %v873
        %v906 = vpack.c.b16 %v874, %v874
        %v907 = vpack.c.b16 %v875, %v875
        %v908 = vpack.c.b16 %v876, %v876
        %v909 = vpack.c.b16 %v877, %v877
        %v910 = vpack.c.b16 %v878, %v878
        %v911 = vpack.c.b16 %v879, %v879
        %v912 = vpack.c.b16 %v880, %v880
        %v913 = vpack.c.b16 %v881, %v881
        %v914 = vpack.c.b16 %v882, %v882
        %vm915 = vsmask.f32 256
        %vm916 = vsmask.f32 4368
        %vm917 = vmor %vm915, %vm916
        %v919 = vshrl.u32 %v883, 16
        %v921 = vrot.slane %v919, 7
        %v922 = vshll.u32 %v883, 16
        %v924 = vor.u32 %v921, %v922
        %v925 = vrot.slane %v921, 4
        %v927 = vshrl.u32 %v884, 16
        %v929 = vrot.slane %v927, 7
        %v930 = vshll.u32 %v884, 16
        %v932 = vor.u32 %v929, %v930
        %v933 = vsel %vm917, %v925, %v932
        %v935 = vshrl.u32 %v885, 16
        %v937 = vrot.slane %v935, 7
        %v938 = vshll.u32 %v885, 16
        %v940 = vor.u32 %v937, %v938
        %v941 = vrot.slane %v937, 4
        %v943 = vshrl.u32 %v886, 16
        %v945 = vrot.slane %v943, 7
        %v946 = vshll.u32 %v886, 16
        %v948 = vor.u32 %v945, %v946
        %v949 = vsel %vm917, %v941, %v948
        %v951 = vshrl.u32 %v887, 16
        %v953 = vrot.slane %v951, 7
        %v954 = vshll.u32 %v887, 16
        %v956 = vor.u32 %v953, %v954
        %v957 = vrot.slane %v953, 4
        %v959 = vshrl.u32 %v888, 16
        %v961 = vrot.slane %v959, 7
        %v962 = vshll.u32 %v888, 16
        %v964 = vor.u32 %v961, %v962
        %v965 = vsel %vm917, %v957, %v964
        %v967 = vshrl.u32 %v889, 16
        %v969 = vrot.slane %v967, 7
        %v970 = vshll.u32 %v889, 16
        %v972 = vor.u32 %v969, %v970
        %v973 = vrot.slane %v969, 4
        %v975 = vshrl.u32 %v890, 16
        %v977 = vrot.slane %v975, 7
        %v978 = vshll.u32 %v890, 16
        %v980 = vor.u32 %v977, %v978
        %v981 = vsel %vm917, %v973, %v980
        %v983 = vshrl.u32 %v891, 16
        %v985 = vrot.slane %v983, 7
        %v986 = vshll.u32 %v891, 16
        %v988 = vor.u32 %v985, %v986
        %v989 = vrot.slane %v985, 4
        %v991 = vshrl.u32 %v892, 16
        %v993 = vrot.slane %v991, 7
        %v994 = vshll.u32 %v892, 16
        %v996 = vor.u32 %v993, %v994
        %v997 = vsel %vm917, %v989, %v996
        %v999 = vshrl.u32 %v893, 16
        %v1001 = vrot.slane %v999, 7
        %v1002 = vshll.u32 %v893, 16
        %v1004 = vor.u32 %v1001, %v1002
        %v1005 = vrot.slane %v1001, 4
        %v1007 = vshrl.u32 %v894, 16
        %v1009 = vrot.slane %v1007, 7
        %v1010 = vshll.u32 %v894, 16
        %v1012 = vor.u32 %v1009, %v1010
        %v1013 = vsel %vm917, %v1005, %v1012
        %v1015 = vshrl.u32 %v895, 16
        %v1017 = vrot.slane %v1015, 7
        %v1018 = vshll.u32 %v895, 16
        %v1020 = vor.u32 %v1017, %v1018
        %v1021 = vrot.slane %v1017, 4
        %v1023 = vshrl.u32 %v896, 16
        %v1025 = vrot.slane %v1023, 7
        %v1026 = vshll.u32 %v896, 16
        %v1028 = vor.u32 %v1025, %v1026
        %v1029 = vsel %vm917, %v1021, %v1028
        %v1031 = vshrl.u32 %v897, 16
        %v1033 = vrot.slane %v1031, 7
        %v1034 = vshll.u32 %v897, 16
        %v1036 = vor.u32 %v1033, %v1034
        %v1037 = vrot.slane %v1033, 4
        %v1039 = vshrl.u32 %v898, 16
        %v1041 = vrot.slane %v1039, 7
        %v1042 = vshll.u32 %v898, 16
        %v1044 = vor.u32 %v1041, %v1042
        %v1045 = vsel %vm917, %v1037, %v1044
        %v1047 = vshrl.u32 %v899, 16
        %v1049 = vrot.slane %v1047, 7
        %v1050 = vshll.u32 %v899, 16
        %v1052 = vor.u32 %v1049, %v1050
        %v1053 = vrot.slane %v1049, 4
        %v1055 = vshrl.u32 %v900, 16
        %v1057 = vrot.slane %v1055, 7
        %v1058 = vshll.u32 %v900, 16
        %v1060 = vor.u32 %v1057, %v1058
        %v1061 = vsel %vm917, %v1053, %v1060
        %v1063 = vshrl.u32 %v901, 16
        %v1065 = vrot.slane %v1063, 7
        %v1066 = vshll.u32 %v901, 16
        %v1068 = vor.u32 %v1065, %v1066
        %v1069 = vrot.slane %v1065, 4
        %v1071 = vshrl.u32 %v902, 16
        %v1073 = vrot.slane %v1071, 7
        %v1074 = vshll.u32 %v902, 16
        %v1076 = vor.u32 %v1073, %v1074
        %v1077 = vsel %vm917, %v1069, %v1076
        %v1079 = vshrl.u32 %v903, 16
        %v1081 = vrot.slane %v1079, 7
        %v1082 = vshll.u32 %v903, 16
        %v1084 = vor.u32 %v1081, %v1082
        %v1085 = vrot.slane %v1081, 4
        %v1087 = vshrl.u32 %v904, 16
        %v1089 = vrot.slane %v1087, 7
        %v1090 = vshll.u32 %v904, 16
        %v1092 = vor.u32 %v1089, %v1090
        %v1093 = vsel %vm917, %v1085, %v1092
        %v1095 = vshrl.u32 %v905, 16
        %v1097 = vrot.slane %v1095, 7
        %v1098 = vshll.u32 %v905, 16
        %v1100 = vor.u32 %v1097, %v1098
        %v1101 = vrot.slane %v1097, 4
        %v1103 = vshrl.u32 %v906, 16
        %v1105 = vrot.slane %v1103, 7
        %v1106 = vshll.u32 %v906, 16
        %v1108 = vor.u32 %v1105, %v1106
        %v1109 = vsel %vm917, %v1101, %v1108
        %v1111 = vshrl.u32 %v907, 16
        %v1113 = vrot.slane %v1111, 7
        %v1114 = vshll.u32 %v907, 16
        %v1116 = vor.u32 %v1113, %v1114
        %v1117 = vrot.slane %v1113, 4
        %v1119 = vshrl.u32 %v908, 16
        %v1121 = vrot.slane %v1119, 7
        %v1122 = vshll.u32 %v908, 16
        %v1124 = vor.u32 %v1121, %v1122
        %v1125 = vsel %vm917, %v1117, %v1124
        %v1127 = vshrl.u32 %v909, 16
        %v1129 = vrot.slane %v1127, 7
        %v1130 = vshll.u32 %v909, 16
        %v1132 = vor.u32 %v1129, %v1130
        %v1133 = vrot.slane %v1129, 4
        %v1135 = vshrl.u32 %v910, 16
        %v1137 = vrot.slane %v1135, 7
        %v1138 = vshll.u32 %v910, 16
        %v1140 = vor.u32 %v1137, %v1138
        %v1141 = vsel %vm917, %v1133, %v1140
        %v1143 = vshrl.u32 %v911, 16
        %v1145 = vrot.slane %v1143, 7
        %v1146 = vshll.u32 %v911, 16
        %v1148 = vor.u32 %v1145, %v1146
        %v1149 = vrot.slane %v1145, 4
        %v1151 = vshrl.u32 %v912, 16
        %v1153 = vrot.slane %v1151, 7
        %v1154 = vshll.u32 %v912, 16
        %v1156 = vor.u32 %v1153, %v1154
        %v1157 = vsel %vm917, %v1149, %v1156
        %v1159 = vshrl.u32 %v913, 16
        %v1161 = vrot.slane %v1159, 7
        %v1162 = vshll.u32 %v913, 16
        %v1164 = vor.u32 %v1161, %v1162
        %v1165 = vrot.slane %v1161, 4
        %v1167 = vshrl.u32 %v914, 16
        %v1169 = vrot.slane %v1167, 7
        %v1170 = vshll.u32 %v914, 16
        %v1172 = vor.u32 %v1169, %v1170
        %v1173 = vsel %vm917, %v1165, %v1172
        %s1206 = scalar_lea.vmem [#allocation2], 24
        %vm1207 = vcmask 1043456
        %vm1208 = vsmask.f32 7938
        %vm1209 = vmand %vm1207, %vm1208
        %v1210 = vld [vmem:[%s1206] sm:$0xf]
        %v1211 = vsel %vm1209, %v924, %v1210
        %1212 = vst [vmem:[%s1206] sm:$0xf] %v1211
        %1213 = vst [vmem:[%s1206 + $0xc] sm:$0xf] %v933
        %v1214 = vld [vmem:[%s1206 + $0x18] sm:$0xf]
        %v1215 = vsel %vm1209, %v940, %v1214
        %1216 = vst [vmem:[%s1206 + $0x18] sm:$0xf] %v1215
        %1217 = vst [vmem:[%s1206 + $0x24] sm:$0xf] %v949
        %v1218 = vld [vmem:[%s1206 + $0x30] sm:$0xf]
        %v1219 = vsel %vm1209, %v956, %v1218
        %1220 = vst [vmem:[%s1206 + $0x30] sm:$0xf] %v1219
        %1221 = vst [vmem:[%s1206 + $0x3c] sm:$0xf] %v965
        %v1222 = vld [vmem:[%s1206 + $0x48] sm:$0xf]
        %v1223 = vsel %vm1209, %v972, %v1222
        %1224 = vst [vmem:[%s1206 + $0x48] sm:$0xf] %v1223
        %1225 = vst [vmem:[%s1206 + $0x54] sm:$0xf] %v981
        %v1226 = vld [vmem:[%s1206 + $0x60] sm:$0xf]
        %v1227 = vsel %vm1209, %v988, %v1226
        %1228 = vst [vmem:[%s1206 + $0x60] sm:$0xf] %v1227
        %1229 = vst [vmem:[%s1206 + $0x6c] sm:$0xf] %v997
        %v1230 = vld [vmem:[%s1206 + $0x78] sm:$0xf]
        %v1231 = vsel %vm1209, %v1004, %v1230
        %1232 = vst [vmem:[%s1206 + $0x78] sm:$0xf] %v1231
        %1233 = vst [vmem:[%s1206 + $0x84] sm:$0xf] %v1013
        %v1234 = vld [vmem:[%s1206 + $0x90] sm:$0xf]
        %v1235 = vsel %vm1209, %v1020, %v1234
        %1236 = vst [vmem:[%s1206 + $0x90] sm:$0xf] %v1235
        %1237 = vst [vmem:[%s1206 + $0x9c] sm:$0xf] %v1029
        %v1238 = vld [vmem:[%s1206 + $0xa8] sm:$0xf]
        %v1239 = vsel %vm1209, %v1036, %v1238
        %1240 = vst [vmem:[%s1206 + $0xa8] sm:$0xf] %v1239
        %1241 = vst [vmem:[%s1206 + $0xb4] sm:$0xf] %v1045
        %v1242 = vld [vmem:[%s1206 + $0xc0] sm:$0xf]
        %v1243 = vsel %vm1209, %v1052, %v1242
        %1244 = vst [vmem:[%s1206 + $0xc0] sm:$0xf] %v1243
        %1245 = vst [vmem:[%s1206 + $0xcc] sm:$0xf] %v1061
        %v1246 = vld [vmem:[%s1206 + $0xd8] sm:$0xf]
        %v1247 = vsel %vm1209, %v1068, %v1246
        %1248 = vst [vmem:[%s1206 + $0xd8] sm:$0xf] %v1247
        %1249 = vst [vmem:[%s1206 + $0xe4] sm:$0xf] %v1077
        %v1250 = vld [vmem:[%s1206 + $0xf0] sm:$0xf]
        %v1251 = vsel %vm1209, %v1084, %v1250
        %1252 = vst [vmem:[%s1206 + $0xf0] sm:$0xf] %v1251
        %1253 = vst [vmem:[%s1206 + $0xfc] sm:$0xf] %v1093
        %v1254 = vld [vmem:[%s1206 + $0x108] sm:$0xf]
        %v1255 = vsel %vm1209, %v1100, %v1254
        %1256 = vst [vmem:[%s1206 + $0x108] sm:$0xf] %v1255
        %1257 = vst [vmem:[%s1206 + $0x114] sm:$0xf] %v1109
        %v1258 = vld [vmem:[%s1206 + $0x120] sm:$0xf]
        %v1259 = vsel %vm1209, %v1116, %v1258
        %1260 = vst [vmem:[%s1206 + $0x120] sm:$0xf] %v1259
        %1261 = vst [vmem:[%s1206 + $0x12c] sm:$0xf] %v1125
        %v1262 = vld [vmem:[%s1206 + $0x138] sm:$0xf]
        %v1263 = vsel %vm1209, %v1132, %v1262
        %1264 = vst [vmem:[%s1206 + $0x138] sm:$0xf] %v1263
        %1265 = vst [vmem:[%s1206 + $0x144] sm:$0xf] %v1141
        %v1266 = vld [vmem:[%s1206 + $0x150] sm:$0xf]
        %v1267 = vsel %vm1209, %v1148, %v1266
        %1268 = vst [vmem:[%s1206 + $0x150] sm:$0xf] %v1267
        %1269 = vst [vmem:[%s1206 + $0x15c] sm:$0xf] %v1157
        %v1270 = vld [vmem:[%s1206 + $0x168] sm:$0xf]
        %v1271 = vsel %vm1209, %v1164, %v1270
        %1272 = vst [vmem:[%s1206 + $0x168] sm:$0xf] %v1271
        %1273 = vst [vmem:[%s1206 + $0x174] sm:$0xf] %v1173
        %1306 = vst [vmem:[%s1206 + $0x4] sm:$0xf] %v883
        %1307 = vst [vmem:[%s1206 + $0x10] sm:$0xf] %v884
        %1308 = vst [vmem:[%s1206 + $0x1c] sm:$0xf] %v885
        %1309 = vst [vmem:[%s1206 + $0x28] sm:$0xf] %v886
        %1310 = vst [vmem:[%s1206 + $0x34] sm:$0xf] %v887
        %1311 = vst [vmem:[%s1206 + $0x40] sm:$0xf] %v888
        %1312 = vst [vmem:[%s1206 + $0x4c] sm:$0xf] %v889
        %1313 = vst [vmem:[%s1206 + $0x58] sm:$0xf] %v890
        %1314 = vst [vmem:[%s1206 + $0x64] sm:$0xf] %v891
        %1315 = vst [vmem:[%s1206 + $0x70] sm:$0xf] %v892
        %1316 = vst [vmem:[%s1206 + $0x7c] sm:$0xf] %v893
        %1317 = vst [vmem:[%s1206 + $0x88] sm:$0xf] %v894
        %1318 = vst [vmem:[%s1206 + $0x94] sm:$0xf] %v895
        %1319 = vst [vmem:[%s1206 + $0xa0] sm:$0xf] %v896
        %1320 = vst [vmem:[%s1206 + $0xac] sm:$0xf] %v897
        %1321 = vst [vmem:[%s1206 + $0xb8] sm:$0xf] %v898
        %1322 = vst [vmem:[%s1206 + $0xc4] sm:$0xf] %v899
        %1323 = vst [vmem:[%s1206 + $0xd0] sm:$0xf] %v900
        %1324 = vst [vmem:[%s1206 + $0xdc] sm:$0xf] %v901
        %1325 = vst [vmem:[%s1206 + $0xe8] sm:$0xf] %v902
        %1326 = vst [vmem:[%s1206 + $0xf4] sm:$0xf] %v903
        %1327 = vst [vmem:[%s1206 + $0x100] sm:$0xf] %v904
        %1328 = vst [vmem:[%s1206 + $0x10c] sm:$0xf] %v905
        %1329 = vst [vmem:[%s1206 + $0x118] sm:$0xf] %v906
        %1330 = vst [vmem:[%s1206 + $0x124] sm:$0xf] %v907
        %1331 = vst [vmem:[%s1206 + $0x130] sm:$0xf] %v908
        %1332 = vst [vmem:[%s1206 + $0x13c] sm:$0xf] %v909
        %1333 = vst [vmem:[%s1206 + $0x148] sm:$0xf] %v910
        %1334 = vst [vmem:[%s1206 + $0x154] sm:$0xf] %v911
        %1335 = vst [vmem:[%s1206 + $0x160] sm:$0xf] %v912
        %1336 = vst [vmem:[%s1206 + $0x16c] sm:$0xf] %v913
        %1337 = vst [vmem:[%s1206 + $0x178] sm:$0xf] %v914
        %vm1338 = vsmask.f32 3328
        %vm1339 = vsmask.f32 7440
        %vm1340 = vmor %vm1338, %vm1339
        %v1341 = vrot.slane %v919, 4
        %v1342 = vrot.slane %v922, 5
        %v1343 = vor.u32 %v1341, %v1342
        %v1344 = vrot.slane %v1343, 4
        %v1345 = vrot.slane %v930, 5
        %v1346 = vsel %vm1340, %v1344, %v1345
        %v1347 = vrot.slane %v927, 4
        %v1348 = vor.u32 %v1347, %v1345
        %v1349 = vrot.slane %v1348, 4
        %v1350 = vrot.slane %v935, 4
        %v1351 = vrot.slane %v938, 5
        %v1352 = vor.u32 %v1350, %v1351
        %v1353 = vrot.slane %v1352, 4
        %v1354 = vrot.slane %v946, 5
        %v1355 = vsel %vm1340, %v1353, %v1354
        %v1356 = vrot.slane %v943, 4
        %v1357 = vor.u32 %v1356, %v1354
        %v1358 = vrot.slane %v1357, 4
        %v1359 = vrot.slane %v951, 4
        %v1360 = vrot.slane %v954, 5
        %v1361 = vor.u32 %v1359, %v1360
        %v1362 = vrot.slane %v1361, 4
        %v1363 = vrot.slane %v962, 5
        %v1364 = vsel %vm1340, %v1362, %v1363
        %v1365 = vrot.slane %v959, 4
        %v1366 = vor.u32 %v1365, %v1363
        %v1367 = vrot.slane %v1366, 4
        %v1368 = vrot.slane %v967, 4
        %v1369 = vrot.slane %v970, 5
        %v1370 = vor.u32 %v1368, %v1369
        %v1371 = vrot.slane %v1370, 4
        %v1372 = vrot.slane %v978, 5
        %v1373 = vsel %vm1340, %v1371, %v1372
        %v1374 = vrot.slane %v975, 4
        %v1375 = vor.u32 %v1374, %v1372
        %v1376 = vrot.slane %v1375, 4
        %v1377 = vrot.slane %v983, 4
        %v1378 = vrot.slane %v986, 5
        %v1379 = vor.u32 %v1377, %v1378
        %v1380 = vrot.slane %v1379, 4
        %v1381 = vrot.slane %v994, 5
        %v1382 = vsel %vm1340, %v1380, %v1381
        %v1383 = vrot.slane %v991, 4
        %v1384 = vor.u32 %v1383, %v1381
        %v1385 = vrot.slane %v1384, 4
        %v1386 = vrot.slane %v999, 4
        %v1387 = vrot.slane %v1002, 5
        %v1388 = vor.u32 %v1386, %v1387
        %v1389 = vrot.slane %v1388, 4
        %v1390 = vrot.slane %v1010, 5
        %v1391 = vsel %vm1340, %v1389, %v1390
        %v1392 = vrot.slane %v1007, 4
        %v1393 = vor.u32 %v1392, %v1390
        %v1394 = vrot.slane %v1393, 4
        %v1395 = vrot.slane %v1015, 4
        %v1396 = vrot.slane %v1018, 5
        %v1397 = vor.u32 %v1395, %v1396
        %v1398 = vrot.slane %v1397, 4
        %v1399 = vrot.slane %v1026, 5
        %v1400 = vsel %vm1340, %v1398, %v1399
        %v1401 = vrot.slane %v1023, 4
        %v1402 = vor.u32 %v1401, %v1399
        %v1403 = vrot.slane %v1402, 4
        %v1404 = vrot.slane %v1031, 4
        %v1405 = vrot.slane %v1034, 5
        %v1406 = vor.u32 %v1404, %v1405
        %v1407 = vrot.slane %v1406, 4
        %v1408 = vrot.slane %v1042, 5
        %v1409 = vsel %vm1340, %v1407, %v1408
        %v1410 = vrot.slane %v1039, 4
        %v1411 = vor.u32 %v1410, %v1408
        %v1412 = vrot.slane %v1411, 4
        %v1413 = vrot.slane %v1047, 4
        %v1414 = vrot.slane %v1050, 5
        %v1415 = vor.u32 %v1413, %v1414
        %v1416 = vrot.slane %v1415, 4
        %v1417 = vrot.slane %v1058, 5
        %v1418 = vsel %vm1340, %v1416, %v1417
        %v1419 = vrot.slane %v1055, 4
        %v1420 = vor.u32 %v1419, %v1417
        %v1421 = vrot.slane %v1420, 4
        %v1422 = vrot.slane %v1063, 4
        %v1423 = vrot.slane %v1066, 5
        %v1424 = vor.u32 %v1422, %v1423
        %v1425 = vrot.slane %v1424, 4
        %v1426 = vrot.slane %v1074, 5
        %v1427 = vsel %vm1340, %v1425, %v1426
        %v1428 = vrot.slane %v1071, 4
        %v1429 = vor.u32 %v1428, %v1426
        %v1430 = vrot.slane %v1429, 4
        %v1431 = vrot.slane %v1079, 4
        %v1432 = vrot.slane %v1082, 5
        %v1433 = vor.u32 %v1431, %v1432
        %v1434 = vrot.slane %v1433, 4
        %v1435 = vrot.slane %v1090, 5
        %v1436 = vsel %vm1340, %v1434, %v1435
        %v1437 = vrot.slane %v1087, 4
        %v1438 = vor.u32 %v1437, %v1435
        %v1439 = vrot.slane %v1438, 4
        %v1440 = vrot.slane %v1095, 4
        %v1441 = vrot.slane %v1098, 5
        %v1442 = vor.u32 %v1440, %v1441
        %v1443 = vrot.slane %v1442, 4
        %v1444 = vrot.slane %v1106, 5
        %v1445 = vsel %vm1340, %v1443, %v1444
        %v1446 = vrot.slane %v1103, 4
        %v1447 = vor.u32 %v1446, %v1444
        %v1448 = vrot.slane %v1447, 4
        %v1449 = vrot.slane %v1111, 4
        %v1450 = vrot.slane %v1114, 5
        %v1451 = vor.u32 %v1449, %v1450
        %v1452 = vrot.slane %v1451, 4
        %v1453 = vrot.slane %v1122, 5
        %v1454 = vsel %vm1340, %v1452, %v1453
        %v1455 = vrot.slane %v1119, 4
        %v1456 = vor.u32 %v1455, %v1453
        %v1457 = vrot.slane %v1456, 4
        %v1458 = vrot.slane %v1127, 4
        %v1459 = vrot.slane %v1130, 5
        %v1460 = vor.u32 %v1458, %v1459
        %v1461 = vrot.slane %v1460, 4
        %v1462 = vrot.slane %v1138, 5
        %v1463 = vsel %vm1340, %v1461, %v1462
        %v1464 = vrot.slane %v1135, 4
        %v1465 = vor.u32 %v1464, %v1462
        %v1466 = vrot.slane %v1465, 4
        %v1467 = vrot.slane %v1143, 4
        %v1468 = vrot.slane %v1146, 5
        %v1469 = vor.u32 %v1467, %v1468
        %v1470 = vrot.slane %v1469, 4
        %v1471 = vrot.slane %v1154, 5
        %v1472 = vsel %vm1340, %v1470, %v1471
        %v1473 = vrot.slane %v1151, 4
        %v1474 = vor.u32 %v1473, %v1471
        %v1475 = vrot.slane %v1474, 4
        %v1476 = vrot.slane %v1159, 4
        %v1477 = vrot.slane %v1162, 5
        %v1478 = vor.u32 %v1476, %v1477
        %v1479 = vrot.slane %v1478, 4
        %v1480 = vrot.slane %v1170, 5
        %v1481 = vsel %vm1340, %v1479, %v1480
        %v1482 = vrot.slane %v1167, 4
        %v1483 = vor.u32 %v1482, %v1480
        %v1484 = vrot.slane %v1483, 4
        %1517 = vst [vmem:[%s1206 + $0x8] sm:$0xf] %v1346
        %vm1518 = vmand %vm1207, %vm1338
        %v1519 = vld [vmem:[%s1206 + $0x14] sm:$0xf]
        %v1520 = vsel %vm1518, %v1349, %v1519
        %1521 = vst [vmem:[%s1206 + $0x14] sm:$0xf] %v1520
        %1522 = vst [vmem:[%s1206 + $0x20] sm:$0xf] %v1355
        %v1523 = vld [vmem:[%s1206 + $0x2c] sm:$0xf]
        %v1524 = vsel %vm1518, %v1358, %v1523
        %1525 = vst [vmem:[%s1206 + $0x2c] sm:$0xf] %v1524
        %1526 = vst [vmem:[%s1206 + $0x38] sm:$0xf] %v1364
        %v1527 = vld [vmem:[%s1206 + $0x44] sm:$0xf]
        %v1528 = vsel %vm1518, %v1367, %v1527
        %1529 = vst [vmem:[%s1206 + $0x44] sm:$0xf] %v1528
        %1530 = vst [vmem:[%s1206 + $0x50] sm:$0xf] %v1373
        %v1531 = vld [vmem:[%s1206 + $0x5c] sm:$0xf]
        %v1532 = vsel %vm1518, %v1376, %v1531
        %1533 = vst [vmem:[%s1206 + $0x5c] sm:$0xf] %v1532
        %1534 = vst [vmem:[%s1206 + $0x68] sm:$0xf] %v1382
        %v1535 = vld [vmem:[%s1206 + $0x74] sm:$0xf]
        %v1536 = vsel %vm1518, %v1385, %v1535
        %1537 = vst [vmem:[%s1206 + $0x74] sm:$0xf] %v1536
        %1538 = vst [vmem:[%s1206 + $0x80] sm:$0xf] %v1391
        %v1539 = vld [vmem:[%s1206 + $0x8c] sm:$0xf]
        %v1540 = vsel %vm1518, %v1394, %v1539
        %1541 = vst [vmem:[%s1206 + $0x8c] sm:$0xf] %v1540
        %1542 = vst [vmem:[%s1206 + $0x98] sm:$0xf] %v1400
        %v1543 = vld [vmem:[%s1206 + $0xa4] sm:$0xf]
        %v1544 = vsel %vm1518, %v1403, %v1543
        %1545 = vst [vmem:[%s1206 + $0xa4] sm:$0xf] %v1544
        %1546 = vst [vmem:[%s1206 + $0xb0] sm:$0xf] %v1409
        %v1547 = vld [vmem:[%s1206 + $0xbc] sm:$0xf]
        %v1548 = vsel %vm1518, %v1412, %v1547
        %1549 = vst [vmem:[%s1206 + $0xbc] sm:$0xf] %v1548
        %1550 = vst [vmem:[%s1206 + $0xc8] sm:$0xf] %v1418
        %v1551 = vld [vmem:[%s1206 + $0xd4] sm:$0xf]
        %v1552 = vsel %vm1518, %v1421, %v1551
        %1553 = vst [vmem:[%s1206 + $0xd4] sm:$0xf] %v1552
        %1554 = vst [vmem:[%s1206 + $0xe0] sm:$0xf] %v1427
        %v1555 = vld [vmem:[%s1206 + $0xec] sm:$0xf]
        %v1556 = vsel %vm1518, %v1430, %v1555
        %1557 = vst [vmem:[%s1206 + $0xec] sm:$0xf] %v1556
        %1558 = vst [vmem:[%s1206 + $0xf8] sm:$0xf] %v1436
        %v1559 = vld [vmem:[%s1206 + $0x104] sm:$0xf]
        %v1560 = vsel %vm1518, %v1439, %v1559
        %1561 = vst [vmem:[%s1206 + $0x104] sm:$0xf] %v1560
        %1562 = vst [vmem:[%s1206 + $0x110] sm:$0xf] %v1445
        %v1563 = vld [vmem:[%s1206 + $0x11c] sm:$0xf]
        %v1564 = vsel %vm1518, %v1448, %v1563
        %1565 = vst [vmem:[%s1206 + $0x11c] sm:$0xf] %v1564
        %1566 = vst [vmem:[%s1206 + $0x128] sm:$0xf] %v1454
        %v1567 = vld [vmem:[%s1206 + $0x134] sm:$0xf]
        %v1568 = vsel %vm1518, %v1457, %v1567
        %1569 = vst [vmem:[%s1206 + $0x134] sm:$0xf] %v1568
        %1570 = vst [vmem:[%s1206 + $0x140] sm:$0xf] %v1463
        %v1571 = vld [vmem:[%s1206 + $0x14c] sm:$0xf]
        %v1572 = vsel %vm1518, %v1466, %v1571
        %1573 = vst [vmem:[%s1206 + $0x14c] sm:$0xf] %v1572
        %1574 = vst [vmem:[%s1206 + $0x158] sm:$0xf] %v1472
        %v1575 = vld [vmem:[%s1206 + $0x164] sm:$0xf]
        %v1576 = vsel %vm1518, %v1475, %v1575
        %1577 = vst [vmem:[%s1206 + $0x164] sm:$0xf] %v1576
        %1578 = vst [vmem:[%s1206 + $0x170] sm:$0xf] %v1481
        %v1579 = vld [vmem:[%s1206 + $0x17c] sm:$0xf]
        %v1580 = vsel %vm1518, %v1484, %v1579
        %1581 = vst [vmem:[%s1206 + $0x17c] sm:$0xf] %v1580
      $region56: #{down_blk_forward.4} parent=51 // pred_fallthru
        _
      %v1582 = vld [vmem:[#allocation2] sm:$0xff]
      %v1583 = vld [vmem:[#allocation2 + $0x8] sm:$0xf]
      %v1584 = vld [vmem:[#allocation2 + $0xc] sm:$0xff]
      %v1585 = vld [vmem:[#allocation2 + $0x14] sm:$0xf]
      %v1586 = vld [vmem:[#allocation2 + $0x18] sm:$0xff]
      %v1587 = vld [vmem:[#allocation2 + $0x20] sm:$0xf]
      %v1588 = vld [vmem:[#allocation2 + $0x24] sm:$0xff]
      %v1589 = vld [vmem:[#allocation2 + $0x2c] sm:$0xf]
      %v1590 = vld [vmem:[#allocation2 + $0x30] sm:$0xff]
      %v1591 = vld [vmem:[#allocation2 + $0x38] sm:$0xf]
      %v1592 = vld [vmem:[#allocation2 + $0x3c] sm:$0xff]
      %v1593 = vld [vmem:[#allocation2 + $0x44] sm:$0xf]
      %v1594 = vld [vmem:[#allocation2 + $0x48] sm:$0xff]
      %v1595 = vld [vmem:[#allocation2 + $0x50] sm:$0xf]
      %v1596 = vld [vmem:[#allocation2 + $0x54] sm:$0xff]
      %v1597 = vld [vmem:[#allocation2 + $0x5c] sm:$0xf]
      %v1598 = vld [vmem:[#allocation2 + $0x60] sm:$0xff]
      %v1599 = vld [vmem:[#allocation2 + $0x68] sm:$0xf]
      %v1600 = vld [vmem:[#allocation2 + $0x6c] sm:$0xff]
      %v1601 = vld [vmem:[#allocation2 + $0x74] sm:$0xf]
      %v1602 = vld [vmem:[#allocation2 + $0x78] sm:$0xff]
      %v1603 = vld [vmem:[#allocation2 + $0x80] sm:$0xf]
      %v1604 = vld [vmem:[#allocation2 + $0x84] sm:$0xff]
      %v1605 = vld [vmem:[#allocation2 + $0x8c] sm:$0xf]
      %v1606 = vld [vmem:[#allocation2 + $0x90] sm:$0xff]
      %v1607 = vld [vmem:[#allocation2 + $0x98] sm:$0xf]
      %v1608 = vld [vmem:[#allocation2 + $0x9c] sm:$0xff]
      %v1609 = vld [vmem:[#allocation2 + $0xa4] sm:$0xf]
      %v1610 = vld [vmem:[#allocation2 + $0xa8] sm:$0xff]
      %v1611 = vld [vmem:[#allocation2 + $0xb0] sm:$0xf]
      %v1612 = vld [vmem:[#allocation2 + $0xb4] sm:$0xff]
      %v1613 = vld [vmem:[#allocation2 + $0xbc] sm:$0xf]
      %v1614 = vld [vmem:[#allocation2 + $0xc0] sm:$0xff]
      %v1615 = vld [vmem:[#allocation2 + $0xc8] sm:$0xf]
      %v1616 = vld [vmem:[#allocation2 + $0xcc] sm:$0xff]
      %v1617 = vld [vmem:[#allocation2 + $0xd4] sm:$0xf]
      %v1618 = vld [vmem:[#allocation2 + $0xd8] sm:$0xff]
      %v1619 = vld [vmem:[#allocation2 + $0xe0] sm:$0xf]
      %v1620 = vld [vmem:[#allocation2 + $0xe4] sm:$0xff]
      %v1621 = vld [vmem:[#allocation2 + $0xec] sm:$0xf]
      %v1622 = vld [vmem:[#allocation2 + $0xf0] sm:$0xff]
      %v1623 = vld [vmem:[#allocation2 + $0xf8] sm:$0xf]
      %v1624 = vld [vmem:[#allocation2 + $0xfc] sm:$0xff]
      %v1625 = vld [vmem:[#allocation2 + $0x104] sm:$0xf]
      %v1626 = vld [vmem:[#allocation2 + $0x108] sm:$0xff]
      %v1627 = vld [vmem:[#allocation2 + $0x110] sm:$0xf]
      %v1628 = vld [vmem:[#allocation2 + $0x114] sm:$0xff]
      %v1629 = vld [vmem:[#allocation2 + $0x11c] sm:$0xf]
      %v1630 = vld [vmem:[#allocation2 + $0x120] sm:$0xff]
      %v1631 = vld [vmem:[#allocation2 + $0x128] sm:$0xf]
      %v1632 = vld [vmem:[#allocation2 + $0x12c] sm:$0xff]
      %v1633 = vld [vmem:[#allocation2 + $0x134] sm:$0xf]
      %v1634 = vld [vmem:[#allocation2 + $0x138] sm:$0xff]
      %v1635 = vld [vmem:[#allocation2 + $0x140] sm:$0xf]
      %v1636 = vld [vmem:[#allocation2 + $0x144] sm:$0xff]
      %v1637 = vld [vmem:[#allocation2 + $0x14c] sm:$0xf]
      %v1638 = vld [vmem:[#allocation2 + $0x150] sm:$0xff]
      %v1639 = vld [vmem:[#allocation2 + $0x158] sm:$0xf]
      %v1640 = vld [vmem:[#allocation2 + $0x15c] sm:$0xff]
      %v1641 = vld [vmem:[#allocation2 + $0x164] sm:$0xf]
      %v1642 = vld [vmem:[#allocation2 + $0x168] sm:$0xff]
      %v1643 = vld [vmem:[#allocation2 + $0x170] sm:$0xf]
      %v1644 = vld [vmem:[#allocation2 + $0x174] sm:$0xff]
      %v1645 = vld [vmem:[#allocation2 + $0x17c] sm:$0xf]
      %v1646 = vld [vmem:[%s384] sm:$0xf]
      %v1647 = vld [vmem:[%s384 + $0x4] sm:$0xf]
      %v1648 = vld [vmem:[%s384 + $0x8] sm:$0xf]
      %v1649 = vld [vmem:[%s384 + $0xc] sm:$0xf]
      %v1650 = vld [vmem:[%s384 + $0x10] sm:$0xf]
      %v1651 = vld [vmem:[%s384 + $0x14] sm:$0xf]
      %v1652 = vld [vmem:[%s384 + $0x18] sm:$0xf]
      %v1653 = vld [vmem:[%s384 + $0x1c] sm:$0xf]
      %v1654 = vld [vmem:[%s384 + $0x20] sm:$0xf]
      %v1655 = vld [vmem:[%s384 + $0x24] sm:$0xf]
      %v1656 = vld [vmem:[%s384 + $0x28] sm:$0xf]
      %v1657 = vld [vmem:[%s384 + $0x2c] sm:$0xf]
      %v1658 = vld [vmem:[%s384 + $0x30] sm:$0xf]
      %v1659 = vld [vmem:[%s384 + $0x34] sm:$0xf]
      %v1660 = vld [vmem:[%s384 + $0x38] sm:$0xf]
      %v1661 = vld [vmem:[%s384 + $0x3c] sm:$0xf]
      %v1662 = vld [vmem:[%s384 + $0x40] sm:$0xf]
      %v1663 = vld [vmem:[%s384 + $0x44] sm:$0xf]
      %v1664 = vld [vmem:[%s384 + $0x48] sm:$0xf]
      %v1665 = vld [vmem:[%s384 + $0x4c] sm:$0xf]
      %v1666 = vld [vmem:[%s384 + $0x50] sm:$0xf]
      %v1667 = vld [vmem:[%s384 + $0x54] sm:$0xf]
      %v1668 = vld [vmem:[%s384 + $0x58] sm:$0xf]
      %v1669 = vld [vmem:[%s384 + $0x5c] sm:$0xf]
      %v1670 = vld [vmem:[%s384 + $0x60] sm:$0xf]
      %v1671 = vld [vmem:[%s384 + $0x64] sm:$0xf]
      %v1672 = vld [vmem:[%s384 + $0x68] sm:$0xf]
      %v1673 = vld [vmem:[%s384 + $0x6c] sm:$0xf]
      %v1674 = vld [vmem:[%s384 + $0x70] sm:$0xf]
      %v1675 = vld [vmem:[%s384 + $0x74] sm:$0xf]
      %v1676 = vld [vmem:[%s384 + $0x78] sm:$0xf]
      %v1677 = vld [vmem:[%s384 + $0x7c] sm:$0xf]
      %v1678 = vld [vmem:[%s384 + $0x80] sm:$0xf]
      %v1679 = vld [vmem:[%s384 + $0x84] sm:$0xf]
      %v1680 = vld [vmem:[%s384 + $0x88] sm:$0xf]
      %v1681 = vld [vmem:[%s384 + $0x8c] sm:$0xf]
      %v1682 = vld [vmem:[%s384 + $0x90] sm:$0xf]
      %v1683 = vld [vmem:[%s384 + $0x94] sm:$0xf]
      %v1684 = vld [vmem:[%s384 + $0x98] sm:$0xf]
      %v1685 = vld [vmem:[%s384 + $0x9c] sm:$0xf]
      %v1686 = vld [vmem:[%s384 + $0xa0] sm:$0xf]
      %v1687 = vld [vmem:[%s384 + $0xa4] sm:$0xf]
      %v1688 = vld [vmem:[%s384 + $0xa8] sm:$0xf]
      %v1689 = vld [vmem:[%s384 + $0xac] sm:$0xf]
      %v1690 = vld [vmem:[%s384 + $0xb0] sm:$0xf]
      %v1691 = vld [vmem:[%s384 + $0xb4] sm:$0xf]
      %v1692 = vld [vmem:[%s384 + $0xb8] sm:$0xf]
      %v1693 = vld [vmem:[%s384 + $0xbc] sm:$0xf]
      %s1694 = scalar_lea.vmem [#allocation2], 24
      %v1695 = vld [vmem:[%s1694] sm:$0xff]
      %v1696 = vld [vmem:[%s1694 + $0x8] sm:$0xf]
      %v1697 = vld [vmem:[%s1694 + $0xc] sm:$0xff]
      %v1698 = vld [vmem:[%s1694 + $0x14] sm:$0xf]
      %v1699 = vld [vmem:[%s1694 + $0x18] sm:$0xff]
      %v1700 = vld [vmem:[%s1694 + $0x20] sm:$0xf]
      %v1701 = vld [vmem:[%s1694 + $0x24] sm:$0xff]
      %v1702 = vld [vmem:[%s1694 + $0x2c] sm:$0xf]
      %v1703 = vld [vmem:[%s1694 + $0x30] sm:$0xff]
      %v1704 = vld [vmem:[%s1694 + $0x38] sm:$0xf]
      %v1705 = vld [vmem:[%s1694 + $0x3c] sm:$0xff]
      %v1706 = vld [vmem:[%s1694 + $0x44] sm:$0xf]
      %v1707 = vld [vmem:[%s1694 + $0x48] sm:$0xff]
      %v1708 = vld [vmem:[%s1694 + $0x50] sm:$0xf]
      %v1709 = vld [vmem:[%s1694 + $0x54] sm:$0xff]
      %v1710 = vld [vmem:[%s1694 + $0x5c] sm:$0xf]
      %v1711 = vld [vmem:[%s1694 + $0x60] sm:$0xff]
      %v1712 = vld [vmem:[%s1694 + $0x68] sm:$0xf]
      %v1713 = vld [vmem:[%s1694 + $0x6c] sm:$0xff]
      %v1714 = vld [vmem:[%s1694 + $0x74] sm:$0xf]
      %v1715 = vld [vmem:[%s1694 + $0x78] sm:$0xff]
      %v1716 = vld [vmem:[%s1694 + $0x80] sm:$0xf]
      %v1717 = vld [vmem:[%s1694 + $0x84] sm:$0xff]
      %v1718 = vld [vmem:[%s1694 + $0x8c] sm:$0xf]
      %v1719 = vld [vmem:[%s1694 + $0x90] sm:$0xff]
      %v1720 = vld [vmem:[%s1694 + $0x98] sm:$0xf]
      %v1721 = vld [vmem:[%s1694 + $0x9c] sm:$0xff]
      %v1722 = vld [vmem:[%s1694 + $0xa4] sm:$0xf]
      %v1723 = vld [vmem:[%s1694 + $0xa8] sm:$0xff]
      %v1724 = vld [vmem:[%s1694 + $0xb0] sm:$0xf]
      %v1725 = vld [vmem:[%s1694 + $0xb4] sm:$0xff]
      %v1726 = vld [vmem:[%s1694 + $0xbc] sm:$0xf]
      %v1727 = vld [vmem:[%s1694 + $0xc0] sm:$0xff]
      %v1728 = vld [vmem:[%s1694 + $0xc8] sm:$0xf]
      %v1729 = vld [vmem:[%s1694 + $0xcc] sm:$0xff]
      %v1730 = vld [vmem:[%s1694 + $0xd4] sm:$0xf]
      %v1731 = vld [vmem:[%s1694 + $0xd8] sm:$0xff]
      %v1732 = vld [vmem:[%s1694 + $0xe0] sm:$0xf]
      %v1733 = vld [vmem:[%s1694 + $0xe4] sm:$0xff]
      %v1734 = vld [vmem:[%s1694 + $0xec] sm:$0xf]
      %v1735 = vld [vmem:[%s1694 + $0xf0] sm:$0xff]
      %v1736 = vld [vmem:[%s1694 + $0xf8] sm:$0xf]
      %v1737 = vld [vmem:[%s1694 + $0xfc] sm:$0xff]
      %v1738 = vld [vmem:[%s1694 + $0x104] sm:$0xf]
      %v1739 = vld [vmem:[%s1694 + $0x108] sm:$0xff]
      %v1740 = vld [vmem:[%s1694 + $0x110] sm:$0xf]
      %v1741 = vld [vmem:[%s1694 + $0x114] sm:$0xff]
      %v1742 = vld [vmem:[%s1694 + $0x11c] sm:$0xf]
      %v1743 = vld [vmem:[%s1694 + $0x120] sm:$0xff]
      %v1744 = vld [vmem:[%s1694 + $0x128] sm:$0xf]
      %v1745 = vld [vmem:[%s1694 + $0x12c] sm:$0xff]
      %v1746 = vld [vmem:[%s1694 + $0x134] sm:$0xf]
      %v1747 = vld [vmem:[%s1694 + $0x138] sm:$0xff]
      %v1748 = vld [vmem:[%s1694 + $0x140] sm:$0xf]
      %v1749 = vld [vmem:[%s1694 + $0x144] sm:$0xff]
      %v1750 = vld [vmem:[%s1694 + $0x14c] sm:$0xf]
      %v1751 = vld [vmem:[%s1694 + $0x150] sm:$0xff]
      %v1752 = vld [vmem:[%s1694 + $0x158] sm:$0xf]
      %v1753 = vld [vmem:[%s1694 + $0x15c] sm:$0xff]
      %v1754 = vld [vmem:[%s1694 + $0x164] sm:$0xf]
      %v1755 = vld [vmem:[%s1694 + $0x168] sm:$0xff]
      %v1756 = vld [vmem:[%s1694 + $0x170] sm:$0xf]
      %v1757 = vld [vmem:[%s1694 + $0x174] sm:$0xff]
      %v1758 = vld [vmem:[%s1694 + $0x17c] sm:$0xf]
      %s1759 = scalar_lea.vmem %s384, 192
      %v1760 = vld [vmem:[%s1759] sm:$0xf]
      %v1761 = vld [vmem:[%s1759 + $0x4] sm:$0xf]
      %v1762 = vld [vmem:[%s1759 + $0x8] sm:$0xf]
      %v1763 = vld [vmem:[%s1759 + $0xc] sm:$0xf]
      %v1764 = vld [vmem:[%s1759 + $0x10] sm:$0xf]
      %v1765 = vld [vmem:[%s1759 + $0x14] sm:$0xf]
      %v1766 = vld [vmem:[%s1759 + $0x18] sm:$0xf]
      %v1767 = vld [vmem:[%s1759 + $0x1c] sm:$0xf]
      %v1768 = vld [vmem:[%s1759 + $0x20] sm:$0xf]
      %v1769 = vld [vmem:[%s1759 + $0x24] sm:$0xf]
      %v1770 = vld [vmem:[%s1759 + $0x28] sm:$0xf]
      %v1771 = vld [vmem:[%s1759 + $0x2c] sm:$0xf]
      %v1772 = vld [vmem:[%s1759 + $0x30] sm:$0xf]
      %v1773 = vld [vmem:[%s1759 + $0x34] sm:$0xf]
      %v1774 = vld [vmem:[%s1759 + $0x38] sm:$0xf]
      %v1775 = vld [vmem:[%s1759 + $0x3c] sm:$0xf]
      %v1776 = vld [vmem:[%s1759 + $0x40] sm:$0xf]
      %v1777 = vld [vmem:[%s1759 + $0x44] sm:$0xf]
      %v1778 = vld [vmem:[%s1759 + $0x48] sm:$0xf]
      %v1779 = vld [vmem:[%s1759 + $0x4c] sm:$0xf]
      %v1780 = vld [vmem:[%s1759 + $0x50] sm:$0xf]
      %v1781 = vld [vmem:[%s1759 + $0x54] sm:$0xf]
      %v1782 = vld [vmem:[%s1759 + $0x58] sm:$0xf]
      %v1783 = vld [vmem:[%s1759 + $0x5c] sm:$0xf]
      %v1784 = vld [vmem:[%s1759 + $0x60] sm:$0xf]
      %v1785 = vld [vmem:[%s1759 + $0x64] sm:$0xf]
      %v1786 = vld [vmem:[%s1759 + $0x68] sm:$0xf]
      %v1787 = vld [vmem:[%s1759 + $0x6c] sm:$0xf]
      %v1788 = vld [vmem:[%s1759 + $0x70] sm:$0xf]
      %v1789 = vld [vmem:[%s1759 + $0x74] sm:$0xf]
      %v1790 = vld [vmem:[%s1759 + $0x78] sm:$0xf]
      %v1791 = vld [vmem:[%s1759 + $0x7c] sm:$0xf]
      %v1792 = vld [vmem:[%s1759 + $0x80] sm:$0xf]
      %v1793 = vld [vmem:[%s1759 + $0x84] sm:$0xf]
      %v1794 = vld [vmem:[%s1759 + $0x88] sm:$0xf]
      %v1795 = vld [vmem:[%s1759 + $0x8c] sm:$0xf]
      %v1796 = vld [vmem:[%s1759 + $0x90] sm:$0xf]
      %v1797 = vld [vmem:[%s1759 + $0x94] sm:$0xf]
      %v1798 = vld [vmem:[%s1759 + $0x98] sm:$0xf]
      %v1799 = vld [vmem:[%s1759 + $0x9c] sm:$0xf]
      %v1800 = vld [vmem:[%s1759 + $0xa0] sm:$0xf]
      %v1801 = vld [vmem:[%s1759 + $0xa4] sm:$0xf]
      %v1802 = vld [vmem:[%s1759 + $0xa8] sm:$0xf]
      %v1803 = vld [vmem:[%s1759 + $0xac] sm:$0xf]
      %v1804 = vld [vmem:[%s1759 + $0xb0] sm:$0xf]
      %v1805 = vld [vmem:[%s1759 + $0xb4] sm:$0xf]
      %v1806 = vld [vmem:[%s1759 + $0xb8] sm:$0xf]
      %v1807 = vld [vmem:[%s1759 + $0xbc] sm:$0xf]
      %v1872 = vunpack.c.l.b16 %v1695
      %v1873 = vunpack.c.h.b16 %v1695
      %v1874 = vunpack.c.l.b16 %v1696
      %v1875 = vunpack.c.l.b16 %v1697
      %v1876 = vunpack.c.h.b16 %v1697
      %v1877 = vunpack.c.l.b16 %v1698
      %v1878 = vunpack.c.l.b16 %v1699
      %v1879 = vunpack.c.h.b16 %v1699
      %v1880 = vunpack.c.l.b16 %v1700
      %v1881 = vunpack.c.l.b16 %v1701
      %v1882 = vunpack.c.h.b16 %v1701
      %v1883 = vunpack.c.l.b16 %v1702
      %v1884 = vunpack.c.l.b16 %v1703
      %v1885 = vunpack.c.h.b16 %v1703
      %v1886 = vunpack.c.l.b16 %v1704
      %v1887 = vunpack.c.l.b16 %v1705
      %v1888 = vunpack.c.h.b16 %v1705
      %v1889 = vunpack.c.l.b16 %v1706
      %v1890 = vunpack.c.l.b16 %v1707
      %v1891 = vunpack.c.h.b16 %v1707
      %v1892 = vunpack.c.l.b16 %v1708
      %v1893 = vunpack.c.l.b16 %v1709
      %v1894 = vunpack.c.h.b16 %v1709
      %v1895 = vunpack.c.l.b16 %v1710
      %v1896 = vunpack.c.l.b16 %v1711
      %v1897 = vunpack.c.h.b16 %v1711
      %v1898 = vunpack.c.l.b16 %v1712
      %v1899 = vunpack.c.l.b16 %v1713
      %v1900 = vunpack.c.h.b16 %v1713
      %v1901 = vunpack.c.l.b16 %v1714
      %v1902 = vunpack.c.l.b16 %v1715
      %v1903 = vunpack.c.h.b16 %v1715
      %v1904 = vunpack.c.l.b16 %v1716
      %v1905 = vunpack.c.l.b16 %v1717
      %v1906 = vunpack.c.h.b16 %v1717
      %v1907 = vunpack.c.l.b16 %v1718
      %v1908 = vunpack.c.l.b16 %v1719
      %v1909 = vunpack.c.h.b16 %v1719
      %v1910 = vunpack.c.l.b16 %v1720
      %v1911 = vunpack.c.l.b16 %v1721
      %v1912 = vunpack.c.h.b16 %v1721
      %v1913 = vunpack.c.l.b16 %v1722
      %v1914 = vunpack.c.l.b16 %v1723
      %v1915 = vunpack.c.h.b16 %v1723
      %v1916 = vunpack.c.l.b16 %v1724
      %v1917 = vunpack.c.l.b16 %v1725
      %v1918 = vunpack.c.h.b16 %v1725
      %v1919 = vunpack.c.l.b16 %v1726
      %v1920 = vunpack.c.l.b16 %v1727
      %v1921 = vunpack.c.h.b16 %v1727
      %v1922 = vunpack.c.l.b16 %v1728
      %v1923 = vunpack.c.l.b16 %v1729
      %v1924 = vunpack.c.h.b16 %v1729
      %v1925 = vunpack.c.l.b16 %v1730
      %v1926 = vunpack.c.l.b16 %v1731
      %v1927 = vunpack.c.h.b16 %v1731
      %v1928 = vunpack.c.l.b16 %v1732
      %v1929 = vunpack.c.l.b16 %v1733
      %v1930 = vunpack.c.h.b16 %v1733
      %v1931 = vunpack.c.l.b16 %v1734
      %v1932 = vunpack.c.l.b16 %v1735
      %v1933 = vunpack.c.h.b16 %v1735
      %v1934 = vunpack.c.l.b16 %v1736
      %v1935 = vunpack.c.l.b16 %v1737
      %v1936 = vunpack.c.h.b16 %v1737
      %v1937 = vunpack.c.l.b16 %v1738
      %v1938 = vunpack.c.l.b16 %v1739
      %v1939 = vunpack.c.h.b16 %v1739
      %v1940 = vunpack.c.l.b16 %v1740
      %v1941 = vunpack.c.l.b16 %v1741
      %v1942 = vunpack.c.h.b16 %v1741
      %v1943 = vunpack.c.l.b16 %v1742
      %v1944 = vunpack.c.l.b16 %v1743
      %v1945 = vunpack.c.h.b16 %v1743
      %v1946 = vunpack.c.l.b16 %v1744
      %v1947 = vunpack.c.l.b16 %v1745
      %v1948 = vunpack.c.h.b16 %v1745
      %v1949 = vunpack.c.l.b16 %v1746
      %v1950 = vunpack.c.l.b16 %v1747
      %v1951 = vunpack.c.h.b16 %v1747
      %v1952 = vunpack.c.l.b16 %v1748
      %v1953 = vunpack.c.l.b16 %v1749
      %v1954 = vunpack.c.h.b16 %v1749
      %v1955 = vunpack.c.l.b16 %v1750
      %v1956 = vunpack.c.l.b16 %v1751
      %v1957 = vunpack.c.h.b16 %v1751
      %v1958 = vunpack.c.l.b16 %v1752
      %v1959 = vunpack.c.l.b16 %v1753
      %v1960 = vunpack.c.h.b16 %v1753
      %v1961 = vunpack.c.l.b16 %v1754
      %v1962 = vunpack.c.l.b16 %v1755
      %v1963 = vunpack.c.h.b16 %v1755
      %v1964 = vunpack.c.l.b16 %v1756
      %v1965 = vunpack.c.l.b16 %v1757
      %v1966 = vunpack.c.h.b16 %v1757
      %v1967 = vunpack.c.l.b16 %v1758
      %v1968 = vpack.c.b16 %v1875, %v1872
      %v1969 = vpack.c.b16 %v1876, %v1873
      %v1970 = vpack.c.b16 %v1877, %v1874
      %v1971 = vpack.c.b16 %v1881, %v1878
      %v1972 = vpack.c.b16 %v1882, %v1879
      %v1973 = vpack.c.b16 %v1883, %v1880
      %v1974 = vpack.c.b16 %v1887, %v1884
      %v1975 = vpack.c.b16 %v1888, %v1885
      %v1976 = vpack.c.b16 %v1889, %v1886
      %v1977 = vpack.c.b16 %v1893, %v1890
      %v1978 = vpack.c.b16 %v1894, %v1891
      %v1979 = vpack.c.b16 %v1895, %v1892
      %v1980 = vpack.c.b16 %v1899, %v1896
      %v1981 = vpack.c.b16 %v1900, %v1897
      %v1982 = vpack.c.b16 %v1901, %v1898
      %v1983 = vpack.c.b16 %v1905, %v1902
      %v1984 = vpack.c.b16 %v1906, %v1903
      %v1985 = vpack.c.b16 %v1907, %v1904
      %v1986 = vpack.c.b16 %v1911, %v1908
      %v1987 = vpack.c.b16 %v1912, %v1909
      %v1988 = vpack.c.b16 %v1913, %v1910
      %v1989 = vpack.c.b16 %v1917, %v1914
      %v1990 = vpack.c.b16 %v1918, %v1915
      %v1991 = vpack.c.b16 %v1919, %v1916
      %v1992 = vpack.c.b16 %v1923, %v1920
      %v1993 = vpack.c.b16 %v1924, %v1921
      %v1994 = vpack.c.b16 %v1925, %v1922
      %v1995 = vpack.c.b16 %v1929, %v1926
      %v1996 = vpack.c.b16 %v1930, %v1927
      %v1997 = vpack.c.b16 %v1931, %v1928
      %v1998 = vpack.c.b16 %v1935, %v1932
      %v1999 = vpack.c.b16 %v1936, %v1933
      %v2000 = vpack.c.b16 %v1937, %v1934
      %v2001 = vpack.c.b16 %v1941, %v1938
      %v2002 = vpack.c.b16 %v1942, %v1939
      %v2003 = vpack.c.b16 %v1943, %v1940
      %v2004 = vpack.c.b16 %v1947, %v1944
      %v2005 = vpack.c.b16 %v1948, %v1945
      %v2006 = vpack.c.b16 %v1949, %v1946
      %v2007 = vpack.c.b16 %v1953, %v1950
      %v2008 = vpack.c.b16 %v1954, %v1951
      %v2009 = vpack.c.b16 %v1955, %v1952
      %v2010 = vpack.c.b16 %v1959, %v1956
      %v2011 = vpack.c.b16 %v1960, %v1957
      %v2012 = vpack.c.b16 %v1961, %v1958
      %v2013 = vpack.c.b16 %v1965, %v1962
      %v2014 = vpack.c.b16 %v1966, %v1963
      %v2015 = vpack.c.b16 %v1967, %v1964
      %v2112 = vunpack.c.l.b16 %v1760
      %v2113 = vunpack.c.l.b16 %v1761
      %v2114 = vunpack.c.l.b16 %v1762
      %v2115 = vunpack.c.l.b16 %v1763
      %v2116 = vunpack.c.l.b16 %v1764
      %v2117 = vunpack.c.l.b16 %v1765
      %v2118 = vunpack.c.l.b16 %v1766
      %v2119 = vunpack.c.l.b16 %v1767
      %v2120 = vunpack.c.l.b16 %v1768
      %v2121 = vunpack.c.l.b16 %v1769
      %v2122 = vunpack.c.l.b16 %v1770
      %v2123 = vunpack.c.l.b16 %v1771
      %v2124 = vunpack.c.l.b16 %v1772
      %v2125 = vunpack.c.l.b16 %v1773
      %v2126 = vunpack.c.l.b16 %v1774
      %v2127 = vunpack.c.l.b16 %v1775
      %v2128 = vunpack.c.l.b16 %v1776
      %v2129 = vunpack.c.l.b16 %v1777
      %v2130 = vunpack.c.l.b16 %v1778
      %v2131 = vunpack.c.l.b16 %v1779
      %v2132 = vunpack.c.l.b16 %v1780
      %v2133 = vunpack.c.l.b16 %v1781
      %v2134 = vunpack.c.l.b16 %v1782
      %v2135 = vunpack.c.l.b16 %v1783
      %v2136 = vunpack.c.l.b16 %v1784
      %v2137 = vunpack.c.l.b16 %v1785
      %v2138 = vunpack.c.l.b16 %v1786
      %v2139 = vunpack.c.l.b16 %v1787
      %v2140 = vunpack.c.l.b16 %v1788
      %v2141 = vunpack.c.l.b16 %v1789
      %v2142 = vunpack.c.l.b16 %v1790
      %v2143 = vunpack.c.l.b16 %v1791
      %v2144 = vunpack.c.l.b16 %v1792
      %v2145 = vunpack.c.l.b16 %v1793
      %v2146 = vunpack.c.l.b16 %v1794
      %v2147 = vunpack.c.l.b16 %v1795
      %v2148 = vunpack.c.l.b16 %v1796
      %v2149 = vunpack.c.l.b16 %v1797
      %v2150 = vunpack.c.l.b16 %v1798
      %v2151 = vunpack.c.l.b16 %v1799
      %v2152 = vunpack.c.l.b16 %v1800
      %v2153 = vunpack.c.l.b16 %v1801
      %v2154 = vunpack.c.l.b16 %v1802
      %v2155 = vunpack.c.l.b16 %v1803
      %v2156 = vunpack.c.l.b16 %v1804
      %v2157 = vunpack.c.l.b16 %v1805
      %v2158 = vunpack.c.l.b16 %v1806
      %v2159 = vunpack.c.l.b16 %v1807
      %v2160 = vpack.c.b16 %v2113, %v2112
      %v2161 = vpack.c.b16 %v2115, %v2114
      %v2162 = vpack.c.b16 %v2117, %v2116
      %v2163 = vpack.c.b16 %v2119, %v2118
      %v2164 = vpack.c.b16 %v2121, %v2120
      %v2165 = vpack.c.b16 %v2123, %v2122
      %v2166 = vpack.c.b16 %v2125, %v2124
      %v2167 = vpack.c.b16 %v2127, %v2126
      %v2168 = vpack.c.b16 %v2129, %v2128
      %v2169 = vpack.c.b16 %v2131, %v2130
      %v2170 = vpack.c.b16 %v2133, %v2132
      %v2171 = vpack.c.b16 %v2135, %v2134
      %v2172 = vpack.c.b16 %v2137, %v2136
      %v2173 = vpack.c.b16 %v2139, %v2138
      %v2174 = vpack.c.b16 %v2141, %v2140
      %v2175 = vpack.c.b16 %v2143, %v2142
      %v2176 = vpack.c.b16 %v2145, %v2144
      %v2177 = vpack.c.b16 %v2147, %v2146
      %v2178 = vpack.c.b16 %v2149, %v2148
      %v2179 = vpack.c.b16 %v2151, %v2150
      %v2180 = vpack.c.b16 %v2153, %v2152
      %v2181 = vpack.c.b16 %v2155, %v2154
      %v2182 = vpack.c.b16 %v2157, %v2156
      %v2183 = vpack.c.b16 %v2159, %v2158
      %2208 = vmatprep.subr.bf16.mxu0 0
      %2209 = vmatpush1.bf16.msra.mxu0 %v2167
      %2210 = vmatprep.subr.bf16.mxu0 0
      %2211 = vmatpush1.bf16.msra.mxu0 %v2166
      %2212 = vmatprep.subr.bf16.mxu0 0
      %2213 = vmatpush1.bf16.msra.mxu0 %v2165
      %2214 = vmatprep.subr.bf16.mxu0 0
      %2215 = vmatpush1.bf16.msra.mxu0 %v2164
      %2216 = vmatprep.subr.bf16.mxu0 0
      %2217 = vmatpush1.bf16.msra.mxu0 %v2163
      %2218 = vmatprep.subr.bf16.mxu0 0
      %2219 = vmatpush1.bf16.msra.mxu0 %v2162
      %2220 = vmatprep.subr.bf16.mxu0 0
      %2221 = vmatpush1.bf16.msra.mxu0 %v2161
      %2222 = vmatprep.subr.bf16.mxu0 0
      %2223 = vmatpush1.bf16.msra.mxu0 %v2160
      %2224 = vmatprep.subr.bf16.mxu0 0
      %2225 = vmatpush2.bf16.msra.mxu0 %v2175
      %2226 = vmatprep.subr.bf16.mxu0 0
      %2227 = vmatpush2.bf16.msra.mxu0 %v2174
      %2228 = vmatprep.subr.bf16.mxu0 0
      %2229 = vmatpush2.bf16.msra.mxu0 %v2173
      %2230 = vmatprep.subr.bf16.mxu0 0
      %2231 = vmatpush2.bf16.msra.mxu0 %v2172
      %2232 = vmatprep.subr.bf16.mxu0 0
      %2233 = vmatpush2.bf16.msra.mxu0 %v2171
      %2234 = vmatprep.subr.bf16.mxu0 0
      %2235 = vmatpush2.bf16.msra.mxu0 %v2170
      %2236 = vmatprep.subr.bf16.mxu0 0
      %2237 = vmatpush2.bf16.msra.mxu0 %v2169
      %2238 = vmatprep.subr.bf16.mxu0 0
      %2239 = vmatpush2.bf16.msra.mxu0 %v2168
      %2240 = vmatprep.mubr.bf16.mxu0 %v1969
      %2241 = vmatmul.mubr.bf16.gmra.mxu0 %v1968
      %v2242 = vpop.f32.mrf.mxu0
      %v2243 = vadd.f32 0.0, %v2242
      %v2244 = vpop.f32.mrf.mxu0
      %v2245 = vpop.f32.mrf.mxu0
      %v2246 = vadd.f32 0.0, %v2245
      %v2247 = vpop.f32.mrf.mxu0
      %2248 = vmatprep.mubr.bf16.mxu0 %v1972
      %2249 = vmatmul.mubr.bf16.gmra.mxu0 %v1971
      %v2250 = vpop.f32.mrf.mxu0
      %v2251 = vadd.f32 0.0, %v2250
      %v2252 = vpop.f32.mrf.mxu0
      %v2253 = vpop.f32.mrf.mxu0
      %v2254 = vadd.f32 0.0, %v2253
      %v2255 = vpop.f32.mrf.mxu0
      %2256 = vmatprep.mubr.bf16.mxu0 %v1975
      %2257 = vmatmul.mubr.bf16.gmra.mxu0 %v1974
      %v2258 = vpop.f32.mrf.mxu0
      %v2259 = vadd.f32 0.0, %v2258
      %v2260 = vpop.f32.mrf.mxu0
      %v2261 = vpop.f32.mrf.mxu0
      %v2262 = vadd.f32 0.0, %v2261
      %v2263 = vpop.f32.mrf.mxu0
      %2264 = vmatprep.mubr.bf16.mxu0 %v1978
      %2265 = vmatmul.mubr.bf16.gmra.mxu0 %v1977
      %v2266 = vpop.f32.mrf.mxu0
      %v2267 = vadd.f32 0.0, %v2266
      %v2268 = vpop.f32.mrf.mxu0
      %v2269 = vpop.f32.mrf.mxu0
      %v2270 = vadd.f32 0.0, %v2269
      %v2271 = vpop.f32.mrf.mxu0
      %2272 = vmatprep.mubr.bf16.mxu0 %v1981
      %2273 = vmatmul.mubr.bf16.gmra.mxu0 %v1980
      %v2274 = vpop.f32.mrf.mxu0
      %v2275 = vadd.f32 0.0, %v2274
      %v2276 = vpop.f32.mrf.mxu0
      %v2277 = vpop.f32.mrf.mxu0
      %v2278 = vadd.f32 0.0, %v2277
      %v2279 = vpop.f32.mrf.mxu0
      %2280 = vmatprep.mubr.bf16.mxu0 %v1984
      %2281 = vmatmul.mubr.bf16.gmra.mxu0 %v1983
      %v2282 = vpop.f32.mrf.mxu0
      %v2283 = vadd.f32 0.0, %v2282
      %v2284 = vpop.f32.mrf.mxu0
      %v2285 = vpop.f32.mrf.mxu0
      %v2286 = vadd.f32 0.0, %v2285
      %v2287 = vpop.f32.mrf.mxu0
      %2288 = vmatprep.mubr.bf16.mxu0 %v1987
      %2289 = vmatmul.mubr.bf16.gmra.mxu0 %v1986
      %v2290 = vpop.f32.mrf.mxu0
      %v2291 = vadd.f32 0.0, %v2290
      %v2292 = vpop.f32.mrf.mxu0
      %v2293 = vpop.f32.mrf.mxu0
      %v2294 = vadd.f32 0.0, %v2293
      %v2295 = vpop.f32.mrf.mxu0
      %2296 = vmatprep.mubr.bf16.mxu0 %v1990
      %2297 = vmatmul.mubr.bf16.gmra.mxu0 %v1989
      %v2298 = vpop.f32.mrf.mxu0
      %v2299 = vadd.f32 0.0, %v2298
      %v2300 = vpop.f32.mrf.mxu0
      %v2301 = vpop.f32.mrf.mxu0
      %v2302 = vadd.f32 0.0, %v2301
      %v2303 = vpop.f32.mrf.mxu0
      %2304 = vmatprep.mubr.bf16.mxu0 %v1993
      %2305 = vmatmul.mubr.bf16.gmra.mxu0 %v1992
      %v2306 = vpop.f32.mrf.mxu0
      %v2307 = vadd.f32 0.0, %v2306
      %v2308 = vpop.f32.mrf.mxu0
      %v2309 = vpop.f32.mrf.mxu0
      %v2310 = vadd.f32 0.0, %v2309
      %v2311 = vpop.f32.mrf.mxu0
      %2312 = vmatprep.mubr.bf16.mxu0 %v1996
      %2313 = vmatmul.mubr.bf16.gmra.mxu0 %v1995
      %v2314 = vpop.f32.mrf.mxu0
      %v2315 = vadd.f32 0.0, %v2314
      %v2316 = vpop.f32.mrf.mxu0
      %v2317 = vpop.f32.mrf.mxu0
      %v2318 = vadd.f32 0.0, %v2317
      %v2319 = vpop.f32.mrf.mxu0
      %2320 = vmatprep.mubr.bf16.mxu0 %v1999
      %2321 = vmatmul.mubr.bf16.gmra.mxu0 %v1998
      %v2322 = vpop.f32.mrf.mxu0
      %v2323 = vadd.f32 0.0, %v2322
      %v2324 = vpop.f32.mrf.mxu0
      %v2325 = vpop.f32.mrf.mxu0
      %v2326 = vadd.f32 0.0, %v2325
      %v2327 = vpop.f32.mrf.mxu0
      %2328 = vmatprep.mubr.bf16.mxu0 %v2002
      %2329 = vmatmul.mubr.bf16.gmra.mxu0 %v2001
      %v2330 = vpop.f32.mrf.mxu0
      %v2331 = vadd.f32 0.0, %v2330
      %v2332 = vpop.f32.mrf.mxu0
      %v2333 = vpop.f32.mrf.mxu0
      %v2334 = vadd.f32 0.0, %v2333
      %v2335 = vpop.f32.mrf.mxu0
      %2336 = vmatprep.mubr.bf16.mxu0 %v2005
      %2337 = vmatmul.mubr.bf16.gmra.mxu0 %v2004
      %v2338 = vpop.f32.mrf.mxu0
      %v2339 = vadd.f32 0.0, %v2338
      %v2340 = vpop.f32.mrf.mxu0
      %v2341 = vpop.f32.mrf.mxu0
      %v2342 = vadd.f32 0.0, %v2341
      %v2343 = vpop.f32.mrf.mxu0
      %2344 = vmatprep.mubr.bf16.mxu0 %v2008
      %2345 = vmatmul.mubr.bf16.gmra.mxu0 %v2007
      %v2346 = vpop.f32.mrf.mxu0
      %v2347 = vadd.f32 0.0, %v2346
      %v2348 = vpop.f32.mrf.mxu0
      %v2349 = vpop.f32.mrf.mxu0
      %v2350 = vadd.f32 0.0, %v2349
      %v2351 = vpop.f32.mrf.mxu0
      %2352 = vmatprep.mubr.bf16.mxu0 %v2011
      %2353 = vmatmul.mubr.bf16.gmra.mxu0 %v2010
      %v2354 = vpop.f32.mrf.mxu0
      %v2355 = vadd.f32 0.0, %v2354
      %v2356 = vpop.f32.mrf.mxu0
      %v2357 = vpop.f32.mrf.mxu0
      %v2358 = vadd.f32 0.0, %v2357
      %v2359 = vpop.f32.mrf.mxu0
      %2360 = vmatprep.mubr.bf16.mxu0 %v2014
      %2361 = vmatmul.mubr.bf16.gmra.mxu0 %v2013
      %v2362 = vpop.f32.mrf.mxu0
      %v2363 = vadd.f32 0.0, %v2362
      %v2364 = vpop.f32.mrf.mxu0
      %v2365 = vpop.f32.mrf.mxu0
      %v2366 = vadd.f32 0.0, %v2365
      %v2367 = vpop.f32.mrf.mxu0
      %2368 = vdwg.mxu0
      %2369 = vmatprep.subr.bf16.mxu0 0
      %2370 = vmatpush1.bf16.msra.mxu0 %v2183
      %2371 = vmatprep.subr.bf16.mxu0 0
      %2372 = vmatpush1.bf16.msra.mxu0 %v2182
      %2373 = vmatprep.subr.bf16.mxu0 0
      %2374 = vmatpush1.bf16.msra.mxu0 %v2181
      %2375 = vmatprep.subr.bf16.mxu0 0
      %2376 = vmatpush1.bf16.msra.mxu0 %v2180
      %2377 = vmatprep.subr.bf16.mxu0 0
      %2378 = vmatpush1.bf16.msra.mxu0 %v2179
      %2379 = vmatprep.subr.bf16.mxu0 0
      %2380 = vmatpush1.bf16.msra.mxu0 %v2178
      %2381 = vmatprep.subr.bf16.mxu0 0
      %2382 = vmatpush1.bf16.msra.mxu0 %v2177
      %2383 = vmatprep.subr.bf16.mxu0 0
      %2384 = vmatpush1.bf16.msra.mxu0 %v2176
      %2385 = vmatprep.subr.bf16.mxu0 0
      %2386 = vmatpush2.bf16.msra.mxu0 0
      %2387 = vmatprep.subr.bf16.mxu0 0
      %2388 = vmatpush2.bf16.msra.mxu0 0
      %2389 = vmatprep.subr.bf16.mxu0 0
      %2390 = vmatpush2.bf16.msra.mxu0 0
      %2391 = vmatprep.subr.bf16.mxu0 0
      %2392 = vmatpush2.bf16.msra.mxu0 0
      %2393 = vmatprep.subr.bf16.mxu0 0
      %2394 = vmatpush2.bf16.msra.mxu0 0
      %2395 = vmatprep.subr.bf16.mxu0 0
      %2396 = vmatpush2.bf16.msra.mxu0 0
      %2397 = vmatprep.subr.bf16.mxu0 0
      %2398 = vmatpush2.bf16.msra.mxu0 0
      %2399 = vmatprep.subr.bf16.mxu0 0
      %2400 = vmatpush2.bf16.msra.mxu0 0
      %2401 = vmatprep.mubr.bf16.mxu0 0
      %2402 = vmatmul.mubr.bf16.gmra.mxu0 %v1970
      %v2403 = vpop.f32.mrf.mxu0
      %v2404 = vadd.f32 %v2243, %v2403
      %v2405 = vpop.f32.mrf.mxu0
      %v2406 = vpop.f32.mrf.mxu0
      %v2407 = vadd.f32 %v2246, %v2406
      %v2408 = vpop.f32.mrf.mxu0
      %2409 = vmatprep.mubr.bf16.mxu0 0
      %2410 = vmatmul.mubr.bf16.gmra.mxu0 %v1973
      %v2411 = vpop.f32.mrf.mxu0
      %v2412 = vadd.f32 %v2251, %v2411
      %v2413 = vpop.f32.mrf.mxu0
      %v2414 = vpop.f32.mrf.mxu0
      %v2415 = vadd.f32 %v2254, %v2414
      %v2416 = vpop.f32.mrf.mxu0
      %2417 = vmatprep.mubr.bf16.mxu0 0
      %2418 = vmatmul.mubr.bf16.gmra.mxu0 %v1976
      %v2419 = vpop.f32.mrf.mxu0
      %v2420 = vadd.f32 %v2259, %v2419
      %v2421 = vpop.f32.mrf.mxu0
      %v2422 = vpop.f32.mrf.mxu0
      %v2423 = vadd.f32 %v2262, %v2422
      %v2424 = vpop.f32.mrf.mxu0
      %2425 = vmatprep.mubr.bf16.mxu0 0
      %2426 = vmatmul.mubr.bf16.gmra.mxu0 %v1979
      %v2427 = vpop.f32.mrf.mxu0
      %v2428 = vadd.f32 %v2267, %v2427
      %v2429 = vpop.f32.mrf.mxu0
      %v2430 = vpop.f32.mrf.mxu0
      %v2431 = vadd.f32 %v2270, %v2430
      %v2432 = vpop.f32.mrf.mxu0
      %2433 = vmatprep.mubr.bf16.mxu0 0
      %2434 = vmatmul.mubr.bf16.gmra.mxu0 %v1982
      %v2435 = vpop.f32.mrf.mxu0
      %v2436 = vadd.f32 %v2275, %v2435
      %v2437 = vpop.f32.mrf.mxu0
      %v2438 = vpop.f32.mrf.mxu0
      %v2439 = vadd.f32 %v2278, %v2438
      %v2440 = vpop.f32.mrf.mxu0
      %2441 = vmatprep.mubr.bf16.mxu0 0
      %2442 = vmatmul.mubr.bf16.gmra.mxu0 %v1985
      %v2443 = vpop.f32.mrf.mxu0
      %v2444 = vadd.f32 %v2283, %v2443
      %v2445 = vpop.f32.mrf.mxu0
      %v2446 = vpop.f32.mrf.mxu0
      %v2447 = vadd.f32 %v2286, %v2446
      %v2448 = vpop.f32.mrf.mxu0
      %2449 = vmatprep.mubr.bf16.mxu0 0
      %2450 = vmatmul.mubr.bf16.gmra.mxu0 %v1988
      %v2451 = vpop.f32.mrf.mxu0
      %v2452 = vadd.f32 %v2291, %v2451
      %v2453 = vpop.f32.mrf.mxu0
      %v2454 = vpop.f32.mrf.mxu0
      %v2455 = vadd.f32 %v2294, %v2454
      %v2456 = vpop.f32.mrf.mxu0
      %2457 = vmatprep.mubr.bf16.mxu0 0
      %2458 = vmatmul.mubr.bf16.gmra.mxu0 %v1991
      %v2459 = vpop.f32.mrf.mxu0
      %v2460 = vadd.f32 %v2299, %v2459
      %v2461 = vpop.f32.mrf.mxu0
      %v2462 = vpop.f32.mrf.mxu0
      %v2463 = vadd.f32 %v2302, %v2462
      %v2464 = vpop.f32.mrf.mxu0
      %2465 = vmatprep.mubr.bf16.mxu0 0
      %2466 = vmatmul.mubr.bf16.gmra.mxu0 %v1994
      %v2467 = vpop.f32.mrf.mxu0
      %v2468 = vadd.f32 %v2307, %v2467
      %v2469 = vpop.f32.mrf.mxu0
      %v2470 = vpop.f32.mrf.mxu0
      %v2471 = vadd.f32 %v2310, %v2470
      %v2472 = vpop.f32.mrf.mxu0
      %2473 = vmatprep.mubr.bf16.mxu0 0
      %2474 = vmatmul.mubr.bf16.gmra.mxu0 %v1997
      %v2475 = vpop.f32.mrf.mxu0
      %v2476 = vadd.f32 %v2315, %v2475
      %v2477 = vpop.f32.mrf.mxu0
      %v2478 = vpop.f32.mrf.mxu0
      %v2479 = vadd.f32 %v2318, %v2478
      %v2480 = vpop.f32.mrf.mxu0
      %2481 = vmatprep.mubr.bf16.mxu0 0
      %2482 = vmatmul.mubr.bf16.gmra.mxu0 %v2000
      %v2483 = vpop.f32.mrf.mxu0
      %v2484 = vadd.f32 %v2323, %v2483
      %v2485 = vpop.f32.mrf.mxu0
      %v2486 = vpop.f32.mrf.mxu0
      %v2487 = vadd.f32 %v2326, %v2486
      %v2488 = vpop.f32.mrf.mxu0
      %2489 = vmatprep.mubr.bf16.mxu0 0
      %2490 = vmatmul.mubr.bf16.gmra.mxu0 %v2003
      %v2491 = vpop.f32.mrf.mxu0
      %v2492 = vadd.f32 %v2331, %v2491
      %v2493 = vpop.f32.mrf.mxu0
      %v2494 = vpop.f32.mrf.mxu0
      %v2495 = vadd.f32 %v2334, %v2494
      %v2496 = vpop.f32.mrf.mxu0
      %2497 = vmatprep.mubr.bf16.mxu0 0
      %2498 = vmatmul.mubr.bf16.gmra.mxu0 %v2006
      %v2499 = vpop.f32.mrf.mxu0
      %v2500 = vadd.f32 %v2339, %v2499
      %v2501 = vpop.f32.mrf.mxu0
      %v2502 = vpop.f32.mrf.mxu0
      %v2503 = vadd.f32 %v2342, %v2502
      %v2504 = vpop.f32.mrf.mxu0
      %2505 = vmatprep.mubr.bf16.mxu0 0
      %2506 = vmatmul.mubr.bf16.gmra.mxu0 %v2009
      %v2507 = vpop.f32.mrf.mxu0
      %v2508 = vadd.f32 %v2347, %v2507
      %v2509 = vpop.f32.mrf.mxu0
      %v2510 = vpop.f32.mrf.mxu0
      %v2511 = vadd.f32 %v2350, %v2510
      %v2512 = vpop.f32.mrf.mxu0
      %2513 = vmatprep.mubr.bf16.mxu0 0
      %2514 = vmatmul.mubr.bf16.gmra.mxu0 %v2012
      %v2515 = vpop.f32.mrf.mxu0
      %v2516 = vadd.f32 %v2355, %v2515
      %v2517 = vpop.f32.mrf.mxu0
      %v2518 = vpop.f32.mrf.mxu0
      %v2519 = vadd.f32 %v2358, %v2518
      %v2520 = vpop.f32.mrf.mxu0
      %2521 = vmatprep.mubr.bf16.mxu0 0
      %2522 = vmatmul.mubr.bf16.gmra.mxu0 %v2015
      %v2523 = vpop.f32.mrf.mxu0
      %v2524 = vadd.f32 %v2363, %v2523
      %v2525 = vpop.f32.mrf.mxu0
      %v2526 = vpop.f32.mrf.mxu0
      %v2527 = vadd.f32 %v2366, %v2526
      %v2528 = vpop.f32.mrf.mxu0
      %2529 = vdwg.mxu0
      %v2594 = vunpack.c.l.b16 %v1582
      %v2595 = vunpack.c.h.b16 %v1582
      %v2596 = vunpack.c.l.b16 %v1583
      %v2597 = vunpack.c.l.b16 %v1584
      %v2598 = vunpack.c.h.b16 %v1584
      %v2599 = vunpack.c.l.b16 %v1585
      %v2600 = vunpack.c.l.b16 %v1586
      %v2601 = vunpack.c.h.b16 %v1586
      %v2602 = vunpack.c.l.b16 %v1587
      %v2603 = vunpack.c.l.b16 %v1588
      %v2604 = vunpack.c.h.b16 %v1588
      %v2605 = vunpack.c.l.b16 %v1589
      %v2606 = vunpack.c.l.b16 %v1590
      %v2607 = vunpack.c.h.b16 %v1590
      %v2608 = vunpack.c.l.b16 %v1591
      %v2609 = vunpack.c.l.b16 %v1592
      %v2610 = vunpack.c.h.b16 %v1592
      %v2611 = vunpack.c.l.b16 %v1593
      %v2612 = vunpack.c.l.b16 %v1594
      %v2613 = vunpack.c.h.b16 %v1594
      %v2614 = vunpack.c.l.b16 %v1595
      %v2615 = vunpack.c.l.b16 %v1596
      %v2616 = vunpack.c.h.b16 %v1596
      %v2617 = vunpack.c.l.b16 %v1597
      %v2618 = vunpack.c.l.b16 %v1598
      %v2619 = vunpack.c.h.b16 %v1598
      %v2620 = vunpack.c.l.b16 %v1599
      %v2621 = vunpack.c.l.b16 %v1600
      %v2622 = vunpack.c.h.b16 %v1600
      %v2623 = vunpack.c.l.b16 %v1601
      %v2624 = vunpack.c.l.b16 %v1602
      %v2625 = vunpack.c.h.b16 %v1602
      %v2626 = vunpack.c.l.b16 %v1603
      %v2627 = vunpack.c.l.b16 %v1604
      %v2628 = vunpack.c.h.b16 %v1604
      %v2629 = vunpack.c.l.b16 %v1605
      %v2630 = vunpack.c.l.b16 %v1606
      %v2631 = vunpack.c.h.b16 %v1606
      %v2632 = vunpack.c.l.b16 %v1607
      %v2633 = vunpack.c.l.b16 %v1608
      %v2634 = vunpack.c.h.b16 %v1608
      %v2635 = vunpack.c.l.b16 %v1609
      %v2636 = vunpack.c.l.b16 %v1610
      %v2637 = vunpack.c.h.b16 %v1610
      %v2638 = vunpack.c.l.b16 %v1611
      %v2639 = vunpack.c.l.b16 %v1612
      %v2640 = vunpack.c.h.b16 %v1612
      %v2641 = vunpack.c.l.b16 %v1613
      %v2642 = vunpack.c.l.b16 %v1614
      %v2643 = vunpack.c.h.b16 %v1614
      %v2644 = vunpack.c.l.b16 %v1615
      %v2645 = vunpack.c.l.b16 %v1616
      %v2646 = vunpack.c.h.b16 %v1616
      %v2647 = vunpack.c.l.b16 %v1617
      %v2648 = vunpack.c.l.b16 %v1618
      %v2649 = vunpack.c.h.b16 %v1618
      %v2650 = vunpack.c.l.b16 %v1619
      %v2651 = vunpack.c.l.b16 %v1620
      %v2652 = vunpack.c.h.b16 %v1620
      %v2653 = vunpack.c.l.b16 %v1621
      %v2654 = vunpack.c.l.b16 %v1622
      %v2655 = vunpack.c.h.b16 %v1622
      %v2656 = vunpack.c.l.b16 %v1623
      %v2657 = vunpack.c.l.b16 %v1624
      %v2658 = vunpack.c.h.b16 %v1624
      %v2659 = vunpack.c.l.b16 %v1625
      %v2660 = vunpack.c.l.b16 %v1626
      %v2661 = vunpack.c.h.b16 %v1626
      %v2662 = vunpack.c.l.b16 %v1627
      %v2663 = vunpack.c.l.b16 %v1628
      %v2664 = vunpack.c.h.b16 %v1628
      %v2665 = vunpack.c.l.b16 %v1629
      %v2666 = vunpack.c.l.b16 %v1630
      %v2667 = vunpack.c.h.b16 %v1630
      %v2668 = vunpack.c.l.b16 %v1631
      %v2669 = vunpack.c.l.b16 %v1632
      %v2670 = vunpack.c.h.b16 %v1632
      %v2671 = vunpack.c.l.b16 %v1633
      %v2672 = vunpack.c.l.b16 %v1634
      %v2673 = vunpack.c.h.b16 %v1634
      %v2674 = vunpack.c.l.b16 %v1635
      %v2675 = vunpack.c.l.b16 %v1636
      %v2676 = vunpack.c.h.b16 %v1636
      %v2677 = vunpack.c.l.b16 %v1637
      %v2678 = vunpack.c.l.b16 %v1638
      %v2679 = vunpack.c.h.b16 %v1638
      %v2680 = vunpack.c.l.b16 %v1639
      %v2681 = vunpack.c.l.b16 %v1640
      %v2682 = vunpack.c.h.b16 %v1640
      %v2683 = vunpack.c.l.b16 %v1641
      %v2684 = vunpack.c.l.b16 %v1642
      %v2685 = vunpack.c.h.b16 %v1642
      %v2686 = vunpack.c.l.b16 %v1643
      %v2687 = vunpack.c.l.b16 %v1644
      %v2688 = vunpack.c.h.b16 %v1644
      %v2689 = vunpack.c.l.b16 %v1645
      %v2690 = vpack.c.b16 %v2597, %v2594
      %v2691 = vpack.c.b16 %v2598, %v2595
      %v2692 = vpack.c.b16 %v2599, %v2596
      %v2693 = vpack.c.b16 %v2603, %v2600
      %v2694 = vpack.c.b16 %v2604, %v2601
      %v2695 = vpack.c.b16 %v2605, %v2602
      %v2696 = vpack.c.b16 %v2609, %v2606
      %v2697 = vpack.c.b16 %v2610, %v2607
      %v2698 = vpack.c.b16 %v2611, %v2608
      %v2699 = vpack.c.b16 %v2615, %v2612
      %v2700 = vpack.c.b16 %v2616, %v2613
      %v2701 = vpack.c.b16 %v2617, %v2614
      %v2702 = vpack.c.b16 %v2621, %v2618
      %v2703 = vpack.c.b16 %v2622, %v2619
      %v2704 = vpack.c.b16 %v2623, %v2620
      %v2705 = vpack.c.b16 %v2627, %v2624
      %v2706 = vpack.c.b16 %v2628, %v2625
      %v2707 = vpack.c.b16 %v2629, %v2626
      %v2708 = vpack.c.b16 %v2633, %v2630
      %v2709 = vpack.c.b16 %v2634, %v2631
      %v2710 = vpack.c.b16 %v2635, %v2632
      %v2711 = vpack.c.b16 %v2639, %v2636
      %v2712 = vpack.c.b16 %v2640, %v2637
      %v2713 = vpack.c.b16 %v2641, %v2638
      %v2714 = vpack.c.b16 %v2645, %v2642
      %v2715 = vpack.c.b16 %v2646, %v2643
      %v2716 = vpack.c.b16 %v2647, %v2644
      %v2717 = vpack.c.b16 %v2651, %v2648
      %v2718 = vpack.c.b16 %v2652, %v2649
      %v2719 = vpack.c.b16 %v2653, %v2650
      %v2720 = vpack.c.b16 %v2657, %v2654
      %v2721 = vpack.c.b16 %v2658, %v2655
      %v2722 = vpack.c.b16 %v2659, %v2656
      %v2723 = vpack.c.b16 %v2663, %v2660
      %v2724 = vpack.c.b16 %v2664, %v2661
      %v2725 = vpack.c.b16 %v2665, %v2662
      %v2726 = vpack.c.b16 %v2669, %v2666
      %v2727 = vpack.c.b16 %v2670, %v2667
      %v2728 = vpack.c.b16 %v2671, %v2668
      %v2729 = vpack.c.b16 %v2675, %v2672
      %v2730 = vpack.c.b16 %v2676, %v2673
      %v2731 = vpack.c.b16 %v2677, %v2674
      %v2732 = vpack.c.b16 %v2681, %v2678
      %v2733 = vpack.c.b16 %v2682, %v2679
      %v2734 = vpack.c.b16 %v2683, %v2680
      %v2735 = vpack.c.b16 %v2687, %v2684
      %v2736 = vpack.c.b16 %v2688, %v2685
      %v2737 = vpack.c.b16 %v2689, %v2686
      %v2834 = vunpack.c.l.b16 %v1646
      %v2835 = vunpack.c.l.b16 %v1647
      %v2836 = vunpack.c.l.b16 %v1648
      %v2837 = vunpack.c.l.b16 %v1649
      %v2838 = vunpack.c.l.b16 %v1650
      %v2839 = vunpack.c.l.b16 %v1651
      %v2840 = vunpack.c.l.b16 %v1652
      %v2841 = vunpack.c.l.b16 %v1653
      %v2842 = vunpack.c.l.b16 %v1654
      %v2843 = vunpack.c.l.b16 %v1655
      %v2844 = vunpack.c.l.b16 %v1656
      %v2845 = vunpack.c.l.b16 %v1657
      %v2846 = vunpack.c.l.b16 %v1658
      %v2847 = vunpack.c.l.b16 %v1659
      %v2848 = vunpack.c.l.b16 %v1660
      %v2849 = vunpack.c.l.b16 %v1661
      %v2850 = vunpack.c.l.b16 %v1662
      %v2851 = vunpack.c.l.b16 %v1663
      %v2852 = vunpack.c.l.b16 %v1664
      %v2853 = vunpack.c.l.b16 %v1665
      %v2854 = vunpack.c.l.b16 %v1666
      %v2855 = vunpack.c.l.b16 %v1667
      %v2856 = vunpack.c.l.b16 %v1668
      %v2857 = vunpack.c.l.b16 %v1669
      %v2858 = vunpack.c.l.b16 %v1670
      %v2859 = vunpack.c.l.b16 %v1671
      %v2860 = vunpack.c.l.b16 %v1672
      %v2861 = vunpack.c.l.b16 %v1673
      %v2862 = vunpack.c.l.b16 %v1674
      %v2863 = vunpack.c.l.b16 %v1675
      %v2864 = vunpack.c.l.b16 %v1676
      %v2865 = vunpack.c.l.b16 %v1677
      %v2866 = vunpack.c.l.b16 %v1678
      %v2867 = vunpack.c.l.b16 %v1679
      %v2868 = vunpack.c.l.b16 %v1680
      %v2869 = vunpack.c.l.b16 %v1681
      %v2870 = vunpack.c.l.b16 %v1682
      %v2871 = vunpack.c.l.b16 %v1683
      %v2872 = vunpack.c.l.b16 %v1684
      %v2873 = vunpack.c.l.b16 %v1685
      %v2874 = vunpack.c.l.b16 %v1686
      %v2875 = vunpack.c.l.b16 %v1687
      %v2876 = vunpack.c.l.b16 %v1688
      %v2877 = vunpack.c.l.b16 %v1689
      %v2878 = vunpack.c.l.b16 %v1690
      %v2879 = vunpack.c.l.b16 %v1691
      %v2880 = vunpack.c.l.b16 %v1692
      %v2881 = vunpack.c.l.b16 %v1693
      %v2882 = vpack.c.b16 %v2835, %v2834
      %v2883 = vpack.c.b16 %v2837, %v2836
      %v2884 = vpack.c.b16 %v2839, %v2838
      %v2885 = vpack.c.b16 %v2841, %v2840
      %v2886 = vpack.c.b16 %v2843, %v2842
      %v2887 = vpack.c.b16 %v2845, %v2844
      %v2888 = vpack.c.b16 %v2847, %v2846
      %v2889 = vpack.c.b16 %v2849, %v2848
      %v2890 = vpack.c.b16 %v2851, %v2850
      %v2891 = vpack.c.b16 %v2853, %v2852
      %v2892 = vpack.c.b16 %v2855, %v2854
      %v2893 = vpack.c.b16 %v2857, %v2856
      %v2894 = vpack.c.b16 %v2859, %v2858
      %v2895 = vpack.c.b16 %v2861, %v2860
      %v2896 = vpack.c.b16 %v2863, %v2862
      %v2897 = vpack.c.b16 %v2865, %v2864
      %v2898 = vpack.c.b16 %v2867, %v2866
      %v2899 = vpack.c.b16 %v2869, %v2868
      %v2900 = vpack.c.b16 %v2871, %v2870
      %v2901 = vpack.c.b16 %v2873, %v2872
      %v2902 = vpack.c.b16 %v2875, %v2874
      %v2903 = vpack.c.b16 %v2877, %v2876
      %v2904 = vpack.c.b16 %v2879, %v2878
      %v2905 = vpack.c.b16 %v2881, %v2880
      %2930 = vmatprep.subr.bf16.mxu0 0
      %2931 = vmatpush1.bf16.msra.mxu0 %v2889
      %2932 = vmatprep.subr.bf16.mxu0 0
      %2933 = vmatpush1.bf16.msra.mxu0 %v2888
      %2934 = vmatprep.subr.bf16.mxu0 0
      %2935 = vmatpush1.bf16.msra.mxu0 %v2887
      %2936 = vmatprep.subr.bf16.mxu0 0
      %2937 = vmatpush1.bf16.msra.mxu0 %v2886
      %2938 = vmatprep.subr.bf16.mxu0 0
      %2939 = vmatpush1.bf16.msra.mxu0 %v2885
      %2940 = vmatprep.subr.bf16.mxu0 0
      %2941 = vmatpush1.bf16.msra.mxu0 %v2884
      %2942 = vmatprep.subr.bf16.mxu0 0
      %2943 = vmatpush1.bf16.msra.mxu0 %v2883
      %2944 = vmatprep.subr.bf16.mxu0 0
      %2945 = vmatpush1.bf16.msra.mxu0 %v2882
      %2946 = vmatprep.subr.bf16.mxu0 0
      %2947 = vmatpush2.bf16.msra.mxu0 %v2897
      %2948 = vmatprep.subr.bf16.mxu0 0
      %2949 = vmatpush2.bf16.msra.mxu0 %v2896
      %2950 = vmatprep.subr.bf16.mxu0 0
      %2951 = vmatpush2.bf16.msra.mxu0 %v2895
      %2952 = vmatprep.subr.bf16.mxu0 0
      %2953 = vmatpush2.bf16.msra.mxu0 %v2894
      %2954 = vmatprep.subr.bf16.mxu0 0
      %2955 = vmatpush2.bf16.msra.mxu0 %v2893
      %2956 = vmatprep.subr.bf16.mxu0 0
      %2957 = vmatpush2.bf16.msra.mxu0 %v2892
      %2958 = vmatprep.subr.bf16.mxu0 0
      %2959 = vmatpush2.bf16.msra.mxu0 %v2891
      %2960 = vmatprep.subr.bf16.mxu0 0
      %2961 = vmatpush2.bf16.msra.mxu0 %v2890
      %2962 = vmatprep.mubr.bf16.mxu0 %v2691
      %2963 = vmatmul.mubr.bf16.gmra.mxu0 %v2690
      %v2964 = vpop.f32.mrf.mxu0
      %v2965 = vadd.f32 %v2404, %v2964
      %v2966 = vpop.f32.mrf.mxu0
      %v2967 = vpop.f32.mrf.mxu0
      %v2968 = vadd.f32 %v2407, %v2967
      %v2969 = vpop.f32.mrf.mxu0
      %2970 = vmatprep.mubr.bf16.mxu0 %v2694
      %2971 = vmatmul.mubr.bf16.gmra.mxu0 %v2693
      %v2972 = vpop.f32.mrf.mxu0
      %v2973 = vadd.f32 %v2412, %v2972
      %v2974 = vpop.f32.mrf.mxu0
      %v2975 = vpop.f32.mrf.mxu0
      %v2976 = vadd.f32 %v2415, %v2975
      %v2977 = vpop.f32.mrf.mxu0
      %2978 = vmatprep.mubr.bf16.mxu0 %v2697
      %2979 = vmatmul.mubr.bf16.gmra.mxu0 %v2696
      %v2980 = vpop.f32.mrf.mxu0
      %v2981 = vadd.f32 %v2420, %v2980
      %v2982 = vpop.f32.mrf.mxu0
      %v2983 = vpop.f32.mrf.mxu0
      %v2984 = vadd.f32 %v2423, %v2983
      %v2985 = vpop.f32.mrf.mxu0
      %2986 = vmatprep.mubr.bf16.mxu0 %v2700
      %2987 = vmatmul.mubr.bf16.gmra.mxu0 %v2699
      %v2988 = vpop.f32.mrf.mxu0
      %v2989 = vadd.f32 %v2428, %v2988
      %v2990 = vpop.f32.mrf.mxu0
      %v2991 = vpop.f32.mrf.mxu0
      %v2992 = vadd.f32 %v2431, %v2991
      %v2993 = vpop.f32.mrf.mxu0
      %2994 = vmatprep.mubr.bf16.mxu0 %v2703
      %2995 = vmatmul.mubr.bf16.gmra.mxu0 %v2702
      %v2996 = vpop.f32.mrf.mxu0
      %v2997 = vadd.f32 %v2436, %v2996
      %v2998 = vpop.f32.mrf.mxu0
      %v2999 = vpop.f32.mrf.mxu0
      %v3000 = vadd.f32 %v2439, %v2999
      %v3001 = vpop.f32.mrf.mxu0
      %3002 = vmatprep.mubr.bf16.mxu0 %v2706
      %3003 = vmatmul.mubr.bf16.gmra.mxu0 %v2705
      %v3004 = vpop.f32.mrf.mxu0
      %v3005 = vadd.f32 %v2444, %v3004
      %v3006 = vpop.f32.mrf.mxu0
      %v3007 = vpop.f32.mrf.mxu0
      %v3008 = vadd.f32 %v2447, %v3007
      %v3009 = vpop.f32.mrf.mxu0
      %3010 = vmatprep.mubr.bf16.mxu0 %v2709
      %3011 = vmatmul.mubr.bf16.gmra.mxu0 %v2708
      %v3012 = vpop.f32.mrf.mxu0
      %v3013 = vadd.f32 %v2452, %v3012
      %v3014 = vpop.f32.mrf.mxu0
      %v3015 = vpop.f32.mrf.mxu0
      %v3016 = vadd.f32 %v2455, %v3015
      %v3017 = vpop.f32.mrf.mxu0
      %3018 = vmatprep.mubr.bf16.mxu0 %v2712
      %3019 = vmatmul.mubr.bf16.gmra.mxu0 %v2711
      %v3020 = vpop.f32.mrf.mxu0
      %v3021 = vadd.f32 %v2460, %v3020
      %v3022 = vpop.f32.mrf.mxu0
      %v3023 = vpop.f32.mrf.mxu0
      %v3024 = vadd.f32 %v2463, %v3023
      %v3025 = vpop.f32.mrf.mxu0
      %3026 = vmatprep.mubr.bf16.mxu0 %v2715
      %3027 = vmatmul.mubr.bf16.gmra.mxu0 %v2714
      %v3028 = vpop.f32.mrf.mxu0
      %v3029 = vadd.f32 %v2468, %v3028
      %v3030 = vpop.f32.mrf.mxu0
      %v3031 = vpop.f32.mrf.mxu0
      %v3032 = vadd.f32 %v2471, %v3031
      %v3033 = vpop.f32.mrf.mxu0
      %3034 = vmatprep.mubr.bf16.mxu0 %v2718
      %3035 = vmatmul.mubr.bf16.gmra.mxu0 %v2717
      %v3036 = vpop.f32.mrf.mxu0
      %v3037 = vadd.f32 %v2476, %v3036
      %v3038 = vpop.f32.mrf.mxu0
      %v3039 = vpop.f32.mrf.mxu0
      %v3040 = vadd.f32 %v2479, %v3039
      %v3041 = vpop.f32.mrf.mxu0
      %3042 = vmatprep.mubr.bf16.mxu0 %v2721
      %3043 = vmatmul.mubr.bf16.gmra.mxu0 %v2720
      %v3044 = vpop.f32.mrf.mxu0
      %v3045 = vadd.f32 %v2484, %v3044
      %v3046 = vpop.f32.mrf.mxu0
      %v3047 = vpop.f32.mrf.mxu0
      %v3048 = vadd.f32 %v2487, %v3047
      %v3049 = vpop.f32.mrf.mxu0
      %3050 = vmatprep.mubr.bf16.mxu0 %v2724
      %3051 = vmatmul.mubr.bf16.gmra.mxu0 %v2723
      %v3052 = vpop.f32.mrf.mxu0
      %v3053 = vadd.f32 %v2492, %v3052
      %v3054 = vpop.f32.mrf.mxu0
      %v3055 = vpop.f32.mrf.mxu0
      %v3056 = vadd.f32 %v2495, %v3055
      %v3057 = vpop.f32.mrf.mxu0
      %3058 = vmatprep.mubr.bf16.mxu0 %v2727
      %3059 = vmatmul.mubr.bf16.gmra.mxu0 %v2726
      %v3060 = vpop.f32.mrf.mxu0
      %v3061 = vadd.f32 %v2500, %v3060
      %v3062 = vpop.f32.mrf.mxu0
      %v3063 = vpop.f32.mrf.mxu0
      %v3064 = vadd.f32 %v2503, %v3063
      %v3065 = vpop.f32.mrf.mxu0
      %3066 = vmatprep.mubr.bf16.mxu0 %v2730
      %3067 = vmatmul.mubr.bf16.gmra.mxu0 %v2729
      %v3068 = vpop.f32.mrf.mxu0
      %v3069 = vadd.f32 %v2508, %v3068
      %v3070 = vpop.f32.mrf.mxu0
      %v3071 = vpop.f32.mrf.mxu0
      %v3072 = vadd.f32 %v2511, %v3071
      %v3073 = vpop.f32.mrf.mxu0
      %3074 = vmatprep.mubr.bf16.mxu0 %v2733
      %3075 = vmatmul.mubr.bf16.gmra.mxu0 %v2732
      %v3076 = vpop.f32.mrf.mxu0
      %v3077 = vadd.f32 %v2516, %v3076
      %v3078 = vpop.f32.mrf.mxu0
      %v3079 = vpop.f32.mrf.mxu0
      %v3080 = vadd.f32 %v2519, %v3079
      %v3081 = vpop.f32.mrf.mxu0
      %3082 = vmatprep.mubr.bf16.mxu0 %v2736
      %3083 = vmatmul.mubr.bf16.gmra.mxu0 %v2735
      %v3084 = vpop.f32.mrf.mxu0
      %v3085 = vadd.f32 %v2524, %v3084
      %v3086 = vpop.f32.mrf.mxu0
      %v3087 = vpop.f32.mrf.mxu0
      %v3088 = vadd.f32 %v2527, %v3087
      %v3089 = vpop.f32.mrf.mxu0
      %3090 = vdwg.mxu0
      %3091 = vmatprep.subr.bf16.mxu0 0
      %3092 = vmatpush1.bf16.msra.mxu0 %v2905
      %3093 = vmatprep.subr.bf16.mxu0 0
      %3094 = vmatpush1.bf16.msra.mxu0 %v2904
      %3095 = vmatprep.subr.bf16.mxu0 0
      %3096 = vmatpush1.bf16.msra.mxu0 %v2903
      %3097 = vmatprep.subr.bf16.mxu0 0
      %3098 = vmatpush1.bf16.msra.mxu0 %v2902
      %3099 = vmatprep.subr.bf16.mxu0 0
      %3100 = vmatpush1.bf16.msra.mxu0 %v2901
      %3101 = vmatprep.subr.bf16.mxu0 0
      %3102 = vmatpush1.bf16.msra.mxu0 %v2900
      %3103 = vmatprep.subr.bf16.mxu0 0
      %3104 = vmatpush1.bf16.msra.mxu0 %v2899
      %3105 = vmatprep.subr.bf16.mxu0 0
      %3106 = vmatpush1.bf16.msra.mxu0 %v2898
      %3107 = vmatprep.subr.bf16.mxu0 0
      %3108 = vmatpush2.bf16.msra.mxu0 0
      %3109 = vmatprep.subr.bf16.mxu0 0
      %3110 = vmatpush2.bf16.msra.mxu0 0
      %3111 = vmatprep.subr.bf16.mxu0 0
      %3112 = vmatpush2.bf16.msra.mxu0 0
      %3113 = vmatprep.subr.bf16.mxu0 0
      %3114 = vmatpush2.bf16.msra.mxu0 0
      %3115 = vmatprep.subr.bf16.mxu0 0
      %3116 = vmatpush2.bf16.msra.mxu0 0
      %3117 = vmatprep.subr.bf16.mxu0 0
      %3118 = vmatpush2.bf16.msra.mxu0 0
      %3119 = vmatprep.subr.bf16.mxu0 0
      %3120 = vmatpush2.bf16.msra.mxu0 0
      %3121 = vmatprep.subr.bf16.mxu0 0
      %3122 = vmatpush2.bf16.msra.mxu0 0
      %3123 = vmatprep.mubr.bf16.mxu0 0
      %3124 = vmatmul.mubr.bf16.gmra.mxu0 %v2692
      %v3125 = vpop.f32.mrf.mxu0
      %v3126 = vadd.f32 %v2965, %v3125
      %v3127 = vpop.f32.mrf.mxu0
      %v3128 = vpop.f32.mrf.mxu0
      %v3129 = vadd.f32 %v2968, %v3128
      %v3130 = vpop.f32.mrf.mxu0
      %3131 = vmatprep.mubr.bf16.mxu0 0
      %3132 = vmatmul.mubr.bf16.gmra.mxu0 %v2695
      %v3133 = vpop.f32.mrf.mxu0
      %v3134 = vadd.f32 %v2973, %v3133
      %v3135 = vpop.f32.mrf.mxu0
      %v3136 = vpop.f32.mrf.mxu0
      %v3137 = vadd.f32 %v2976, %v3136
      %v3138 = vpop.f32.mrf.mxu0
      %3139 = vmatprep.mubr.bf16.mxu0 0
      %3140 = vmatmul.mubr.bf16.gmra.mxu0 %v2698
      %v3141 = vpop.f32.mrf.mxu0
      %v3142 = vadd.f32 %v2981, %v3141
      %v3143 = vpop.f32.mrf.mxu0
      %v3144 = vpop.f32.mrf.mxu0
      %v3145 = vadd.f32 %v2984, %v3144
      %v3146 = vpop.f32.mrf.mxu0
      %3147 = vmatprep.mubr.bf16.mxu0 0
      %3148 = vmatmul.mubr.bf16.gmra.mxu0 %v2701
      %v3149 = vpop.f32.mrf.mxu0
      %v3150 = vadd.f32 %v2989, %v3149
      %v3151 = vpop.f32.mrf.mxu0
      %v3152 = vpop.f32.mrf.mxu0
      %v3153 = vadd.f32 %v2992, %v3152
      %v3154 = vpop.f32.mrf.mxu0
      %3155 = vmatprep.mubr.bf16.mxu0 0
      %3156 = vmatmul.mubr.bf16.gmra.mxu0 %v2704
      %v3157 = vpop.f32.mrf.mxu0
      %v3158 = vadd.f32 %v2997, %v3157
      %v3159 = vpop.f32.mrf.mxu0
      %v3160 = vpop.f32.mrf.mxu0
      %v3161 = vadd.f32 %v3000, %v3160
      %v3162 = vpop.f32.mrf.mxu0
      %3163 = vmatprep.mubr.bf16.mxu0 0
      %3164 = vmatmul.mubr.bf16.gmra.mxu0 %v2707
      %v3165 = vpop.f32.mrf.mxu0
      %v3166 = vadd.f32 %v3005, %v3165
      %v3167 = vpop.f32.mrf.mxu0
      %v3168 = vpop.f32.mrf.mxu0
      %v3169 = vadd.f32 %v3008, %v3168
      %v3170 = vpop.f32.mrf.mxu0
      %3171 = vmatprep.mubr.bf16.mxu0 0
      %3172 = vmatmul.mubr.bf16.gmra.mxu0 %v2710
      %v3173 = vpop.f32.mrf.mxu0
      %v3174 = vadd.f32 %v3013, %v3173
      %v3175 = vpop.f32.mrf.mxu0
      %v3176 = vpop.f32.mrf.mxu0
      %v3177 = vadd.f32 %v3016, %v3176
      %v3178 = vpop.f32.mrf.mxu0
      %3179 = vmatprep.mubr.bf16.mxu0 0
      %3180 = vmatmul.mubr.bf16.gmra.mxu0 %v2713
      %v3181 = vpop.f32.mrf.mxu0
      %v3182 = vadd.f32 %v3021, %v3181
      %v3183 = vpop.f32.mrf.mxu0
      %v3184 = vpop.f32.mrf.mxu0
      %v3185 = vadd.f32 %v3024, %v3184
      %v3186 = vpop.f32.mrf.mxu0
      %3187 = vmatprep.mubr.bf16.mxu0 0
      %3188 = vmatmul.mubr.bf16.gmra.mxu0 %v2716
      %v3189 = vpop.f32.mrf.mxu0
      %v3190 = vadd.f32 %v3029, %v3189
      %v3191 = vpop.f32.mrf.mxu0
      %v3192 = vpop.f32.mrf.mxu0
      %v3193 = vadd.f32 %v3032, %v3192
      %v3194 = vpop.f32.mrf.mxu0
      %3195 = vmatprep.mubr.bf16.mxu0 0
      %3196 = vmatmul.mubr.bf16.gmra.mxu0 %v2719
      %v3197 = vpop.f32.mrf.mxu0
      %v3198 = vadd.f32 %v3037, %v3197
      %v3199 = vpop.f32.mrf.mxu0
      %v3200 = vpop.f32.mrf.mxu0
      %v3201 = vadd.f32 %v3040, %v3200
      %v3202 = vpop.f32.mrf.mxu0
      %3203 = vmatprep.mubr.bf16.mxu0 0
      %3204 = vmatmul.mubr.bf16.gmra.mxu0 %v2722
      %v3205 = vpop.f32.mrf.mxu0
      %v3206 = vadd.f32 %v3045, %v3205
      %v3207 = vpop.f32.mrf.mxu0
      %v3208 = vpop.f32.mrf.mxu0
      %v3209 = vadd.f32 %v3048, %v3208
      %v3210 = vpop.f32.mrf.mxu0
      %3211 = vmatprep.mubr.bf16.mxu0 0
      %3212 = vmatmul.mubr.bf16.gmra.mxu0 %v2725
      %v3213 = vpop.f32.mrf.mxu0
      %v3214 = vadd.f32 %v3053, %v3213
      %v3215 = vpop.f32.mrf.mxu0
      %v3216 = vpop.f32.mrf.mxu0
      %v3217 = vadd.f32 %v3056, %v3216
      %v3218 = vpop.f32.mrf.mxu0
      %3219 = vmatprep.mubr.bf16.mxu0 0
      %3220 = vmatmul.mubr.bf16.gmra.mxu0 %v2728
      %v3221 = vpop.f32.mrf.mxu0
      %v3222 = vadd.f32 %v3061, %v3221
      %v3223 = vpop.f32.mrf.mxu0
      %v3224 = vpop.f32.mrf.mxu0
      %v3225 = vadd.f32 %v3064, %v3224
      %v3226 = vpop.f32.mrf.mxu0
      %3227 = vmatprep.mubr.bf16.mxu0 0
      %3228 = vmatmul.mubr.bf16.gmra.mxu0 %v2731
      %v3229 = vpop.f32.mrf.mxu0
      %v3230 = vadd.f32 %v3069, %v3229
      %v3231 = vpop.f32.mrf.mxu0
      %v3232 = vpop.f32.mrf.mxu0
      %v3233 = vadd.f32 %v3072, %v3232
      %v3234 = vpop.f32.mrf.mxu0
      %3235 = vmatprep.mubr.bf16.mxu0 0
      %3236 = vmatmul.mubr.bf16.gmra.mxu0 %v2734
      %v3237 = vpop.f32.mrf.mxu0
      %v3238 = vadd.f32 %v3077, %v3237
      %v3239 = vpop.f32.mrf.mxu0
      %v3240 = vpop.f32.mrf.mxu0
      %v3241 = vadd.f32 %v3080, %v3240
      %v3242 = vpop.f32.mrf.mxu0
      %3243 = vmatprep.mubr.bf16.mxu0 0
      %3244 = vmatmul.mubr.bf16.gmra.mxu0 %v2737
      %v3245 = vpop.f32.mrf.mxu0
      %v3246 = vadd.f32 %v3085, %v3245
      %v3247 = vpop.f32.mrf.mxu0
      %v3248 = vpop.f32.mrf.mxu0
      %v3249 = vadd.f32 %v3088, %v3248
      %v3250 = vpop.f32.mrf.mxu0
      %3251 = vdwg.mxu0
      %s3252 = scalar_lea.vmem [#allocation2], 48
      %v3253 = vld [vmem:[%s3252] sm:$0xff]
      %v3254 = vld [vmem:[%s3252 + $0x8] sm:$0xf]
      %v3255 = vld [vmem:[%s3252 + $0xc] sm:$0xff]
      %v3256 = vld [vmem:[%s3252 + $0x14] sm:$0xf]
      %v3257 = vld [vmem:[%s3252 + $0x18] sm:$0xff]
      %v3258 = vld [vmem:[%s3252 + $0x20] sm:$0xf]
      %v3259 = vld [vmem:[%s3252 + $0x24] sm:$0xff]
      %v3260 = vld [vmem:[%s3252 + $0x2c] sm:$0xf]
      %v3261 = vld [vmem:[%s3252 + $0x30] sm:$0xff]
      %v3262 = vld [vmem:[%s3252 + $0x38] sm:$0xf]
      %v3263 = vld [vmem:[%s3252 + $0x3c] sm:$0xff]
      %v3264 = vld [vmem:[%s3252 + $0x44] sm:$0xf]
      %v3265 = vld [vmem:[%s3252 + $0x48] sm:$0xff]
      %v3266 = vld [vmem:[%s3252 + $0x50] sm:$0xf]
      %v3267 = vld [vmem:[%s3252 + $0x54] sm:$0xff]
      %v3268 = vld [vmem:[%s3252 + $0x5c] sm:$0xf]
      %v3269 = vld [vmem:[%s3252 + $0x60] sm:$0xff]
      %v3270 = vld [vmem:[%s3252 + $0x68] sm:$0xf]
      %v3271 = vld [vmem:[%s3252 + $0x6c] sm:$0xff]
      %v3272 = vld [vmem:[%s3252 + $0x74] sm:$0xf]
      %v3273 = vld [vmem:[%s3252 + $0x78] sm:$0xff]
      %v3274 = vld [vmem:[%s3252 + $0x80] sm:$0xf]
      %v3275 = vld [vmem:[%s3252 + $0x84] sm:$0xff]
      %v3276 = vld [vmem:[%s3252 + $0x8c] sm:$0xf]
      %v3277 = vld [vmem:[%s3252 + $0x90] sm:$0xff]
      %v3278 = vld [vmem:[%s3252 + $0x98] sm:$0xf]
      %v3279 = vld [vmem:[%s3252 + $0x9c] sm:$0xff]
      %v3280 = vld [vmem:[%s3252 + $0xa4] sm:$0xf]
      %v3281 = vld [vmem:[%s3252 + $0xa8] sm:$0xff]
      %v3282 = vld [vmem:[%s3252 + $0xb0] sm:$0xf]
      %v3283 = vld [vmem:[%s3252 + $0xb4] sm:$0xff]
      %v3284 = vld [vmem:[%s3252 + $0xbc] sm:$0xf]
      %v3285 = vld [vmem:[%s3252 + $0xc0] sm:$0xff]
      %v3286 = vld [vmem:[%s3252 + $0xc8] sm:$0xf]
      %v3287 = vld [vmem:[%s3252 + $0xcc] sm:$0xff]
      %v3288 = vld [vmem:[%s3252 + $0xd4] sm:$0xf]
      %v3289 = vld [vmem:[%s3252 + $0xd8] sm:$0xff]
      %v3290 = vld [vmem:[%s3252 + $0xe0] sm:$0xf]
      %v3291 = vld [vmem:[%s3252 + $0xe4] sm:$0xff]
      %v3292 = vld [vmem:[%s3252 + $0xec] sm:$0xf]
      %v3293 = vld [vmem:[%s3252 + $0xf0] sm:$0xff]
      %v3294 = vld [vmem:[%s3252 + $0xf8] sm:$0xf]
      %v3295 = vld [vmem:[%s3252 + $0xfc] sm:$0xff]
      %v3296 = vld [vmem:[%s3252 + $0x104] sm:$0xf]
      %v3297 = vld [vmem:[%s3252 + $0x108] sm:$0xff]
      %v3298 = vld [vmem:[%s3252 + $0x110] sm:$0xf]
      %v3299 = vld [vmem:[%s3252 + $0x114] sm:$0xff]
      %v3300 = vld [vmem:[%s3252 + $0x11c] sm:$0xf]
      %v3301 = vld [vmem:[%s3252 + $0x120] sm:$0xff]
      %v3302 = vld [vmem:[%s3252 + $0x128] sm:$0xf]
      %v3303 = vld [vmem:[%s3252 + $0x12c] sm:$0xff]
      %v3304 = vld [vmem:[%s3252 + $0x134] sm:$0xf]
      %v3305 = vld [vmem:[%s3252 + $0x138] sm:$0xff]
      %v3306 = vld [vmem:[%s3252 + $0x140] sm:$0xf]
      %v3307 = vld [vmem:[%s3252 + $0x144] sm:$0xff]
      %v3308 = vld [vmem:[%s3252 + $0x14c] sm:$0xf]
      %v3309 = vld [vmem:[%s3252 + $0x150] sm:$0xff]
      %v3310 = vld [vmem:[%s3252 + $0x158] sm:$0xf]
      %v3311 = vld [vmem:[%s3252 + $0x15c] sm:$0xff]
      %v3312 = vld [vmem:[%s3252 + $0x164] sm:$0xf]
      %v3313 = vld [vmem:[%s3252 + $0x168] sm:$0xff]
      %v3314 = vld [vmem:[%s3252 + $0x170] sm:$0xf]
      %v3315 = vld [vmem:[%s3252 + $0x174] sm:$0xff]
      %v3316 = vld [vmem:[%s3252 + $0x17c] sm:$0xf]
      %s3317 = scalar_lea.vmem %s384, 384
      %v3318 = vld [vmem:[%s3317] sm:$0xf]
      %v3319 = vld [vmem:[%s3317 + $0x4] sm:$0xf]
      %v3320 = vld [vmem:[%s3317 + $0x8] sm:$0xf]
      %v3321 = vld [vmem:[%s3317 + $0xc] sm:$0xf]
      %v3322 = vld [vmem:[%s3317 + $0x10] sm:$0xf]
      %v3323 = vld [vmem:[%s3317 + $0x14] sm:$0xf]
      %v3324 = vld [vmem:[%s3317 + $0x18] sm:$0xf]
      %v3325 = vld [vmem:[%s3317 + $0x1c] sm:$0xf]
      %v3326 = vld [vmem:[%s3317 + $0x20] sm:$0xf]
      %v3327 = vld [vmem:[%s3317 + $0x24] sm:$0xf]
      %v3328 = vld [vmem:[%s3317 + $0x28] sm:$0xf]
      %v3329 = vld [vmem:[%s3317 + $0x2c] sm:$0xf]
      %v3330 = vld [vmem:[%s3317 + $0x30] sm:$0xf]
      %v3331 = vld [vmem:[%s3317 + $0x34] sm:$0xf]
      %v3332 = vld [vmem:[%s3317 + $0x38] sm:$0xf]
      %v3333 = vld [vmem:[%s3317 + $0x3c] sm:$0xf]
      %v3334 = vld [vmem:[%s3317 + $0x40] sm:$0xf]
      %v3335 = vld [vmem:[%s3317 + $0x44] sm:$0xf]
      %v3336 = vld [vmem:[%s3317 + $0x48] sm:$0xf]
      %v3337 = vld [vmem:[%s3317 + $0x4c] sm:$0xf]
      %v3338 = vld [vmem:[%s3317 + $0x50] sm:$0xf]
      %v3339 = vld [vmem:[%s3317 + $0x54] sm:$0xf]
      %v3340 = vld [vmem:[%s3317 + $0x58] sm:$0xf]
      %v3341 = vld [vmem:[%s3317 + $0x5c] sm:$0xf]
      %v3342 = vld [vmem:[%s3317 + $0x60] sm:$0xf]
      %v3343 = vld [vmem:[%s3317 + $0x64] sm:$0xf]
      %v3344 = vld [vmem:[%s3317 + $0x68] sm:$0xf]
      %v3345 = vld [vmem:[%s3317 + $0x6c] sm:$0xf]
      %v3346 = vld [vmem:[%s3317 + $0x70] sm:$0xf]
      %v3347 = vld [vmem:[%s3317 + $0x74] sm:$0xf]
      %v3348 = vld [vmem:[%s3317 + $0x78] sm:$0xf]
      %v3349 = vld [vmem:[%s3317 + $0x7c] sm:$0xf]
      %v3350 = vld [vmem:[%s3317 + $0x80] sm:$0xf]
      %v3351 = vld [vmem:[%s3317 + $0x84] sm:$0xf]
      %v3352 = vld [vmem:[%s3317 + $0x88] sm:$0xf]
      %v3353 = vld [vmem:[%s3317 + $0x8c] sm:$0xf]
      %v3354 = vld [vmem:[%s3317 + $0x90] sm:$0xf]
      %v3355 = vld [vmem:[%s3317 + $0x94] sm:$0xf]
      %v3356 = vld [vmem:[%s3317 + $0x98] sm:$0xf]
      %v3357 = vld [vmem:[%s3317 + $0x9c] sm:$0xf]
      %v3358 = vld [vmem:[%s3317 + $0xa0] sm:$0xf]
      %v3359 = vld [vmem:[%s3317 + $0xa4] sm:$0xf]
      %v3360 = vld [vmem:[%s3317 + $0xa8] sm:$0xf]
      %v3361 = vld [vmem:[%s3317 + $0xac] sm:$0xf]
      %v3362 = vld [vmem:[%s3317 + $0xb0] sm:$0xf]
      %v3363 = vld [vmem:[%s3317 + $0xb4] sm:$0xf]
      %v3364 = vld [vmem:[%s3317 + $0xb8] sm:$0xf]
      %v3365 = vld [vmem:[%s3317 + $0xbc] sm:$0xf]
      %v3430 = vunpack.c.l.b16 %v3253
      %v3431 = vunpack.c.h.b16 %v3253
      %v3432 = vunpack.c.l.b16 %v3254
      %v3433 = vunpack.c.l.b16 %v3255
      %v3434 = vunpack.c.h.b16 %v3255
      %v3435 = vunpack.c.l.b16 %v3256
      %v3436 = vunpack.c.l.b16 %v3257
      %v3437 = vunpack.c.h.b16 %v3257
      %v3438 = vunpack.c.l.b16 %v3258
      %v3439 = vunpack.c.l.b16 %v3259
      %v3440 = vunpack.c.h.b16 %v3259
      %v3441 = vunpack.c.l.b16 %v3260
      %v3442 = vunpack.c.l.b16 %v3261
      %v3443 = vunpack.c.h.b16 %v3261
      %v3444 = vunpack.c.l.b16 %v3262
      %v3445 = vunpack.c.l.b16 %v3263
      %v3446 = vunpack.c.h.b16 %v3263
      %v3447 = vunpack.c.l.b16 %v3264
      %v3448 = vunpack.c.l.b16 %v3265
      %v3449 = vunpack.c.h.b16 %v3265
      %v3450 = vunpack.c.l.b16 %v3266
      %v3451 = vunpack.c.l.b16 %v3267
      %v3452 = vunpack.c.h.b16 %v3267
      %v3453 = vunpack.c.l.b16 %v3268
      %v3454 = vunpack.c.l.b16 %v3269
      %v3455 = vunpack.c.h.b16 %v3269
      %v3456 = vunpack.c.l.b16 %v3270
      %v3457 = vunpack.c.l.b16 %v3271
      %v3458 = vunpack.c.h.b16 %v3271
      %v3459 = vunpack.c.l.b16 %v3272
      %v3460 = vunpack.c.l.b16 %v3273
      %v3461 = vunpack.c.h.b16 %v3273
      %v3462 = vunpack.c.l.b16 %v3274
      %v3463 = vunpack.c.l.b16 %v3275
      %v3464 = vunpack.c.h.b16 %v3275
      %v3465 = vunpack.c.l.b16 %v3276
      %v3466 = vunpack.c.l.b16 %v3277
      %v3467 = vunpack.c.h.b16 %v3277
      %v3468 = vunpack.c.l.b16 %v3278
      %v3469 = vunpack.c.l.b16 %v3279
      %v3470 = vunpack.c.h.b16 %v3279
      %v3471 = vunpack.c.l.b16 %v3280
      %v3472 = vunpack.c.l.b16 %v3281
      %v3473 = vunpack.c.h.b16 %v3281
      %v3474 = vunpack.c.l.b16 %v3282
      %v3475 = vunpack.c.l.b16 %v3283
      %v3476 = vunpack.c.h.b16 %v3283
      %v3477 = vunpack.c.l.b16 %v3284
      %v3478 = vunpack.c.l.b16 %v3285
      %v3479 = vunpack.c.h.b16 %v3285
      %v3480 = vunpack.c.l.b16 %v3286
      %v3481 = vunpack.c.l.b16 %v3287
      %v3482 = vunpack.c.h.b16 %v3287
      %v3483 = vunpack.c.l.b16 %v3288
      %v3484 = vunpack.c.l.b16 %v3289
      %v3485 = vunpack.c.h.b16 %v3289
      %v3486 = vunpack.c.l.b16 %v3290
      %v3487 = vunpack.c.l.b16 %v3291
      %v3488 = vunpack.c.h.b16 %v3291
      %v3489 = vunpack.c.l.b16 %v3292
      %v3490 = vunpack.c.l.b16 %v3293
      %v3491 = vunpack.c.h.b16 %v3293
      %v3492 = vunpack.c.l.b16 %v3294
      %v3493 = vunpack.c.l.b16 %v3295
      %v3494 = vunpack.c.h.b16 %v3295
      %v3495 = vunpack.c.l.b16 %v3296
      %v3496 = vunpack.c.l.b16 %v3297
      %v3497 = vunpack.c.h.b16 %v3297
      %v3498 = vunpack.c.l.b16 %v3298
      %v3499 = vunpack.c.l.b16 %v3299
      %v3500 = vunpack.c.h.b16 %v3299
      %v3501 = vunpack.c.l.b16 %v3300
      %v3502 = vunpack.c.l.b16 %v3301
      %v3503 = vunpack.c.h.b16 %v3301
      %v3504 = vunpack.c.l.b16 %v3302
      %v3505 = vunpack.c.l.b16 %v3303
      %v3506 = vunpack.c.h.b16 %v3303
      %v3507 = vunpack.c.l.b16 %v3304
      %v3508 = vunpack.c.l.b16 %v3305
      %v3509 = vunpack.c.h.b16 %v3305
      %v3510 = vunpack.c.l.b16 %v3306
      %v3511 = vunpack.c.l.b16 %v3307
      %v3512 = vunpack.c.h.b16 %v3307
      %v3513 = vunpack.c.l.b16 %v3308
      %v3514 = vunpack.c.l.b16 %v3309
      %v3515 = vunpack.c.h.b16 %v3309
      %v3516 = vunpack.c.l.b16 %v3310
      %v3517 = vunpack.c.l.b16 %v3311
      %v3518 = vunpack.c.h.b16 %v3311
      %v3519 = vunpack.c.l.b16 %v3312
      %v3520 = vunpack.c.l.b16 %v3313
      %v3521 = vunpack.c.h.b16 %v3313
      %v3522 = vunpack.c.l.b16 %v3314
      %v3523 = vunpack.c.l.b16 %v3315
      %v3524 = vunpack.c.h.b16 %v3315
      %v3525 = vunpack.c.l.b16 %v3316
      %v3526 = vpack.c.b16 %v3433, %v3430
      %v3527 = vpack.c.b16 %v3434, %v3431
      %v3528 = vpack.c.b16 %v3435, %v3432
      %v3529 = vpack.c.b16 %v3439, %v3436
      %v3530 = vpack.c.b16 %v3440, %v3437
      %v3531 = vpack.c.b16 %v3441, %v3438
      %v3532 = vpack.c.b16 %v3445, %v3442
      %v3533 = vpack.c.b16 %v3446, %v3443
      %v3534 = vpack.c.b16 %v3447, %v3444
      %v3535 = vpack.c.b16 %v3451, %v3448
      %v3536 = vpack.c.b16 %v3452, %v3449
      %v3537 = vpack.c.b16 %v3453, %v3450
      %v3538 = vpack.c.b16 %v3457, %v3454
      %v3539 = vpack.c.b16 %v3458, %v3455
      %v3540 = vpack.c.b16 %v3459, %v3456
      %v3541 = vpack.c.b16 %v3463, %v3460
      %v3542 = vpack.c.b16 %v3464, %v3461
      %v3543 = vpack.c.b16 %v3465, %v3462
      %v3544 = vpack.c.b16 %v3469, %v3466
      %v3545 = vpack.c.b16 %v3470, %v3467
      %v3546 = vpack.c.b16 %v3471, %v3468
      %v3547 = vpack.c.b16 %v3475, %v3472
      %v3548 = vpack.c.b16 %v3476, %v3473
      %v3549 = vpack.c.b16 %v3477, %v3474
      %v3550 = vpack.c.b16 %v3481, %v3478
      %v3551 = vpack.c.b16 %v3482, %v3479
      %v3552 = vpack.c.b16 %v3483, %v3480
      %v3553 = vpack.c.b16 %v3487, %v3484
      %v3554 = vpack.c.b16 %v3488, %v3485
      %v3555 = vpack.c.b16 %v3489, %v3486
      %v3556 = vpack.c.b16 %v3493, %v3490
      %v3557 = vpack.c.b16 %v3494, %v3491
      %v3558 = vpack.c.b16 %v3495, %v3492
      %v3559 = vpack.c.b16 %v3499, %v3496
      %v3560 = vpack.c.b16 %v3500, %v3497
      %v3561 = vpack.c.b16 %v3501, %v3498
      %v3562 = vpack.c.b16 %v3505, %v3502
      %v3563 = vpack.c.b16 %v3506, %v3503
      %v3564 = vpack.c.b16 %v3507, %v3504
      %v3565 = vpack.c.b16 %v3511, %v3508
      %v3566 = vpack.c.b16 %v3512, %v3509
      %v3567 = vpack.c.b16 %v3513, %v3510
      %v3568 = vpack.c.b16 %v3517, %v3514
      %v3569 = vpack.c.b16 %v3518, %v3515
      %v3570 = vpack.c.b16 %v3519, %v3516
      %v3571 = vpack.c.b16 %v3523, %v3520
      %v3572 = vpack.c.b16 %v3524, %v3521
      %v3573 = vpack.c.b16 %v3525, %v3522
      %v3670 = vunpack.c.l.b16 %v3318
      %v3671 = vunpack.c.l.b16 %v3319
      %v3672 = vunpack.c.l.b16 %v3320
      %v3673 = vunpack.c.l.b16 %v3321
      %v3674 = vunpack.c.l.b16 %v3322
      %v3675 = vunpack.c.l.b16 %v3323
      %v3676 = vunpack.c.l.b16 %v3324
      %v3677 = vunpack.c.l.b16 %v3325
      %v3678 = vunpack.c.l.b16 %v3326
      %v3679 = vunpack.c.l.b16 %v3327
      %v3680 = vunpack.c.l.b16 %v3328
      %v3681 = vunpack.c.l.b16 %v3329
      %v3682 = vunpack.c.l.b16 %v3330
      %v3683 = vunpack.c.l.b16 %v3331
      %v3684 = vunpack.c.l.b16 %v3332
      %v3685 = vunpack.c.l.b16 %v3333
      %v3686 = vunpack.c.l.b16 %v3334
      %v3687 = vunpack.c.l.b16 %v3335
      %v3688 = vunpack.c.l.b16 %v3336
      %v3689 = vunpack.c.l.b16 %v3337
      %v3690 = vunpack.c.l.b16 %v3338
      %v3691 = vunpack.c.l.b16 %v3339
      %v3692 = vunpack.c.l.b16 %v3340
      %v3693 = vunpack.c.l.b16 %v3341
      %v3694 = vunpack.c.l.b16 %v3342
      %v3695 = vunpack.c.l.b16 %v3343
      %v3696 = vunpack.c.l.b16 %v3344
      %v3697 = vunpack.c.l.b16 %v3345
      %v3698 = vunpack.c.l.b16 %v3346
      %v3699 = vunpack.c.l.b16 %v3347
      %v3700 = vunpack.c.l.b16 %v3348
      %v3701 = vunpack.c.l.b16 %v3349
      %v3702 = vunpack.c.l.b16 %v3350
      %v3703 = vunpack.c.l.b16 %v3351
      %v3704 = vunpack.c.l.b16 %v3352
      %v3705 = vunpack.c.l.b16 %v3353
      %v3706 = vunpack.c.l.b16 %v3354
      %v3707 = vunpack.c.l.b16 %v3355
      %v3708 = vunpack.c.l.b16 %v3356
      %v3709 = vunpack.c.l.b16 %v3357
      %v3710 = vunpack.c.l.b16 %v3358
      %v3711 = vunpack.c.l.b16 %v3359
      %v3712 = vunpack.c.l.b16 %v3360
      %v3713 = vunpack.c.l.b16 %v3361
      %v3714 = vunpack.c.l.b16 %v3362
      %v3715 = vunpack.c.l.b16 %v3363
      %v3716 = vunpack.c.l.b16 %v3364
      %v3717 = vunpack.c.l.b16 %v3365
      %v3718 = vpack.c.b16 %v3671, %v3670
      %v3719 = vpack.c.b16 %v3673, %v3672
      %v3720 = vpack.c.b16 %v3675, %v3674
      %v3721 = vpack.c.b16 %v3677, %v3676
      %v3722 = vpack.c.b16 %v3679, %v3678
      %v3723 = vpack.c.b16 %v3681, %v3680
      %v3724 = vpack.c.b16 %v3683, %v3682
      %v3725 = vpack.c.b16 %v3685, %v3684
      %v3726 = vpack.c.b16 %v3687, %v3686
      %v3727 = vpack.c.b16 %v3689, %v3688
      %v3728 = vpack.c.b16 %v3691, %v3690
      %v3729 = vpack.c.b16 %v3693, %v3692
      %v3730 = vpack.c.b16 %v3695, %v3694
      %v3731 = vpack.c.b16 %v3697, %v3696
      %v3732 = vpack.c.b16 %v3699, %v3698
      %v3733 = vpack.c.b16 %v3701, %v3700
      %v3734 = vpack.c.b16 %v3703, %v3702
      %v3735 = vpack.c.b16 %v3705, %v3704
      %v3736 = vpack.c.b16 %v3707, %v3706
      %v3737 = vpack.c.b16 %v3709, %v3708
      %v3738 = vpack.c.b16 %v3711, %v3710
      %v3739 = vpack.c.b16 %v3713, %v3712
      %v3740 = vpack.c.b16 %v3715, %v3714
      %v3741 = vpack.c.b16 %v3717, %v3716
      %3766 = vmatprep.subr.bf16.mxu0 0
      %3767 = vmatpush1.bf16.msra.mxu0 %v3725
      %3768 = vmatprep.subr.bf16.mxu0 0
      %3769 = vmatpush1.bf16.msra.mxu0 %v3724
      %3770 = vmatprep.subr.bf16.mxu0 0
      %3771 = vmatpush1.bf16.msra.mxu0 %v3723
      %3772 = vmatprep.subr.bf16.mxu0 0
      %3773 = vmatpush1.bf16.msra.mxu0 %v3722
      %3774 = vmatprep.subr.bf16.mxu0 0
      %3775 = vmatpush1.bf16.msra.mxu0 %v3721
      %3776 = vmatprep.subr.bf16.mxu0 0
      %3777 = vmatpush1.bf16.msra.mxu0 %v3720
      %3778 = vmatprep.subr.bf16.mxu0 0
      %3779 = vmatpush1.bf16.msra.mxu0 %v3719
      %3780 = vmatprep.subr.bf16.mxu0 0
      %3781 = vmatpush1.bf16.msra.mxu0 %v3718
      %3782 = vmatprep.subr.bf16.mxu0 0
      %3783 = vmatpush2.bf16.msra.mxu0 %v3733
      %3784 = vmatprep.subr.bf16.mxu0 0
      %3785 = vmatpush2.bf16.msra.mxu0 %v3732
      %3786 = vmatprep.subr.bf16.mxu0 0
      %3787 = vmatpush2.bf16.msra.mxu0 %v3731
      %3788 = vmatprep.subr.bf16.mxu0 0
      %3789 = vmatpush2.bf16.msra.mxu0 %v3730
      %3790 = vmatprep.subr.bf16.mxu0 0
      %3791 = vmatpush2.bf16.msra.mxu0 %v3729
      %3792 = vmatprep.subr.bf16.mxu0 0
      %3793 = vmatpush2.bf16.msra.mxu0 %v3728
      %3794 = vmatprep.subr.bf16.mxu0 0
      %3795 = vmatpush2.bf16.msra.mxu0 %v3727
      %3796 = vmatprep.subr.bf16.mxu0 0
      %3797 = vmatpush2.bf16.msra.mxu0 %v3726
      %3798 = vmatprep.mubr.bf16.mxu0 %v3527
      %3799 = vmatmul.mubr.bf16.gmra.mxu0 %v3526
      %v3800 = vpop.f32.mrf.mxu0
      %v3801 = vadd.f32 0.0, %v3800
      %v3802 = vpop.f32.mrf.mxu0
      %v3803 = vpop.f32.mrf.mxu0
      %v3804 = vadd.f32 0.0, %v3803
      %v3805 = vpop.f32.mrf.mxu0
      %3806 = vmatprep.mubr.bf16.mxu0 %v3530
      %3807 = vmatmul.mubr.bf16.gmra.mxu0 %v3529
      %v3808 = vpop.f32.mrf.mxu0
      %v3809 = vadd.f32 0.0, %v3808
      %v3810 = vpop.f32.mrf.mxu0
      %v3811 = vpop.f32.mrf.mxu0
      %v3812 = vadd.f32 0.0, %v3811
      %v3813 = vpop.f32.mrf.mxu0
      %3814 = vmatprep.mubr.bf16.mxu0 %v3533
      %3815 = vmatmul.mubr.bf16.gmra.mxu0 %v3532
      %v3816 = vpop.f32.mrf.mxu0
      %v3817 = vadd.f32 0.0, %v3816
      %v3818 = vpop.f32.mrf.mxu0
      %v3819 = vpop.f32.mrf.mxu0
      %v3820 = vadd.f32 0.0, %v3819
      %v3821 = vpop.f32.mrf.mxu0
      %3822 = vmatprep.mubr.bf16.mxu0 %v3536
      %3823 = vmatmul.mubr.bf16.gmra.mxu0 %v3535
      %v3824 = vpop.f32.mrf.mxu0
      %v3825 = vadd.f32 0.0, %v3824
      %v3826 = vpop.f32.mrf.mxu0
      %v3827 = vpop.f32.mrf.mxu0
      %v3828 = vadd.f32 0.0, %v3827
      %v3829 = vpop.f32.mrf.mxu0
      %3830 = vmatprep.mubr.bf16.mxu0 %v3539
      %3831 = vmatmul.mubr.bf16.gmra.mxu0 %v3538
      %v3832 = vpop.f32.mrf.mxu0
      %v3833 = vadd.f32 0.0, %v3832
      %v3834 = vpop.f32.mrf.mxu0
      %v3835 = vpop.f32.mrf.mxu0
      %v3836 = vadd.f32 0.0, %v3835
      %v3837 = vpop.f32.mrf.mxu0
      %3838 = vmatprep.mubr.bf16.mxu0 %v3542
      %3839 = vmatmul.mubr.bf16.gmra.mxu0 %v3541
      %v3840 = vpop.f32.mrf.mxu0
      %v3841 = vadd.f32 0.0, %v3840
      %v3842 = vpop.f32.mrf.mxu0
      %v3843 = vpop.f32.mrf.mxu0
      %v3844 = vadd.f32 0.0, %v3843
      %v3845 = vpop.f32.mrf.mxu0
      %3846 = vmatprep.mubr.bf16.mxu0 %v3545
      %3847 = vmatmul.mubr.bf16.gmra.mxu0 %v3544
      %v3848 = vpop.f32.mrf.mxu0
      %v3849 = vadd.f32 0.0, %v3848
      %v3850 = vpop.f32.mrf.mxu0
      %v3851 = vpop.f32.mrf.mxu0
      %v3852 = vadd.f32 0.0, %v3851
      %v3853 = vpop.f32.mrf.mxu0
      %3854 = vmatprep.mubr.bf16.mxu0 %v3548
      %3855 = vmatmul.mubr.bf16.gmra.mxu0 %v3547
      %v3856 = vpop.f32.mrf.mxu0
      %v3857 = vadd.f32 0.0, %v3856
      %v3858 = vpop.f32.mrf.mxu0
      %v3859 = vpop.f32.mrf.mxu0
      %v3860 = vadd.f32 0.0, %v3859
      %v3861 = vpop.f32.mrf.mxu0
      %3862 = vmatprep.mubr.bf16.mxu0 %v3551
      %3863 = vmatmul.mubr.bf16.gmra.mxu0 %v3550
      %v3864 = vpop.f32.mrf.mxu0
      %v3865 = vadd.f32 0.0, %v3864
      %v3866 = vpop.f32.mrf.mxu0
      %v3867 = vpop.f32.mrf.mxu0
      %v3868 = vadd.f32 0.0, %v3867
      %v3869 = vpop.f32.mrf.mxu0
      %3870 = vmatprep.mubr.bf16.mxu0 %v3554
      %3871 = vmatmul.mubr.bf16.gmra.mxu0 %v3553
      %v3872 = vpop.f32.mrf.mxu0
      %v3873 = vadd.f32 0.0, %v3872
      %v3874 = vpop.f32.mrf.mxu0
      %v3875 = vpop.f32.mrf.mxu0
      %v3876 = vadd.f32 0.0, %v3875
      %v3877 = vpop.f32.mrf.mxu0
      %3878 = vmatprep.mubr.bf16.mxu0 %v3557
      %3879 = vmatmul.mubr.bf16.gmra.mxu0 %v3556
      %v3880 = vpop.f32.mrf.mxu0
      %v3881 = vadd.f32 0.0, %v3880
      %v3882 = vpop.f32.mrf.mxu0
      %v3883 = vpop.f32.mrf.mxu0
      %v3884 = vadd.f32 0.0, %v3883
      %v3885 = vpop.f32.mrf.mxu0
      %3886 = vmatprep.mubr.bf16.mxu0 %v3560
      %3887 = vmatmul.mubr.bf16.gmra.mxu0 %v3559
      %v3888 = vpop.f32.mrf.mxu0
      %v3889 = vadd.f32 0.0, %v3888
      %v3890 = vpop.f32.mrf.mxu0
      %v3891 = vpop.f32.mrf.mxu0
      %v3892 = vadd.f32 0.0, %v3891
      %v3893 = vpop.f32.mrf.mxu0
      %3894 = vmatprep.mubr.bf16.mxu0 %v3563
      %3895 = vmatmul.mubr.bf16.gmra.mxu0 %v3562
      %v3896 = vpop.f32.mrf.mxu0
      %v3897 = vadd.f32 0.0, %v3896
      %v3898 = vpop.f32.mrf.mxu0
      %v3899 = vpop.f32.mrf.mxu0
      %v3900 = vadd.f32 0.0, %v3899
      %v3901 = vpop.f32.mrf.mxu0
      %3902 = vmatprep.mubr.bf16.mxu0 %v3566
      %3903 = vmatmul.mubr.bf16.gmra.mxu0 %v3565
      %v3904 = vpop.f32.mrf.mxu0
      %v3905 = vadd.f32 0.0, %v3904
      %v3906 = vpop.f32.mrf.mxu0
      %v3907 = vpop.f32.mrf.mxu0
      %v3908 = vadd.f32 0.0, %v3907
      %v3909 = vpop.f32.mrf.mxu0
      %3910 = vmatprep.mubr.bf16.mxu0 %v3569
      %3911 = vmatmul.mubr.bf16.gmra.mxu0 %v3568
      %v3912 = vpop.f32.mrf.mxu0
      %v3913 = vadd.f32 0.0, %v3912
      %v3914 = vpop.f32.mrf.mxu0
      %v3915 = vpop.f32.mrf.mxu0
      %v3916 = vadd.f32 0.0, %v3915
      %v3917 = vpop.f32.mrf.mxu0
      %3918 = vmatprep.mubr.bf16.mxu0 %v3572
      %3919 = vmatmul.mubr.bf16.gmra.mxu0 %v3571
      %v3920 = vpop.f32.mrf.mxu0
      %v3921 = vadd.f32 0.0, %v3920
      %v3922 = vpop.f32.mrf.mxu0
      %v3923 = vpop.f32.mrf.mxu0
      %v3924 = vadd.f32 0.0, %v3923
      %v3925 = vpop.f32.mrf.mxu0
      %3926 = vdwg.mxu0
      %3927 = vmatprep.subr.bf16.mxu0 0
      %3928 = vmatpush1.bf16.msra.mxu0 %v3741
      %3929 = vmatprep.subr.bf16.mxu0 0
      %3930 = vmatpush1.bf16.msra.mxu0 %v3740
      %3931 = vmatprep.subr.bf16.mxu0 0
      %3932 = vmatpush1.bf16.msra.mxu0 %v3739
      %3933 = vmatprep.subr.bf16.mxu0 0
      %3934 = vmatpush1.bf16.msra.mxu0 %v3738
      %3935 = vmatprep.subr.bf16.mxu0 0
      %3936 = vmatpush1.bf16.msra.mxu0 %v3737
      %3937 = vmatprep.subr.bf16.mxu0 0
      %3938 = vmatpush1.bf16.msra.mxu0 %v3736
      %3939 = vmatprep.subr.bf16.mxu0 0
      %3940 = vmatpush1.bf16.msra.mxu0 %v3735
      %3941 = vmatprep.subr.bf16.mxu0 0
      %3942 = vmatpush1.bf16.msra.mxu0 %v3734
      %3943 = vmatprep.subr.bf16.mxu0 0
      %3944 = vmatpush2.bf16.msra.mxu0 0
      %3945 = vmatprep.subr.bf16.mxu0 0
      %3946 = vmatpush2.bf16.msra.mxu0 0
      %3947 = vmatprep.subr.bf16.mxu0 0
      %3948 = vmatpush2.bf16.msra.mxu0 0
      %3949 = vmatprep.subr.bf16.mxu0 0
      %3950 = vmatpush2.bf16.msra.mxu0 0
      %3951 = vmatprep.subr.bf16.mxu0 0
      %3952 = vmatpush2.bf16.msra.mxu0 0
      %3953 = vmatprep.subr.bf16.mxu0 0
      %3954 = vmatpush2.bf16.msra.mxu0 0
      %3955 = vmatprep.subr.bf16.mxu0 0
      %3956 = vmatpush2.bf16.msra.mxu0 0
      %3957 = vmatprep.subr.bf16.mxu0 0
      %3958 = vmatpush2.bf16.msra.mxu0 0
      %3959 = vmatprep.mubr.bf16.mxu0 0
      %3960 = vmatmul.mubr.bf16.gmra.mxu0 %v3528
      %v3961 = vpop.f32.mrf.mxu0
      %v3962 = vadd.f32 %v3801, %v3961
      %v3963 = vpop.f32.mrf.mxu0
      %v3964 = vpop.f32.mrf.mxu0
      %v3965 = vadd.f32 %v3804, %v3964
      %v3966 = vpop.f32.mrf.mxu0
      %3967 = vmatprep.mubr.bf16.mxu0 0
      %3968 = vmatmul.mubr.bf16.gmra.mxu0 %v3531
      %v3969 = vpop.f32.mrf.mxu0
      %v3970 = vadd.f32 %v3809, %v3969
      %v3971 = vpop.f32.mrf.mxu0
      %v3972 = vpop.f32.mrf.mxu0
      %v3973 = vadd.f32 %v3812, %v3972
      %v3974 = vpop.f32.mrf.mxu0
      %3975 = vmatprep.mubr.bf16.mxu0 0
      %3976 = vmatmul.mubr.bf16.gmra.mxu0 %v3534
      %v3977 = vpop.f32.mrf.mxu0
      %v3978 = vadd.f32 %v3817, %v3977
      %v3979 = vpop.f32.mrf.mxu0
      %v3980 = vpop.f32.mrf.mxu0
      %v3981 = vadd.f32 %v3820, %v3980
      %v3982 = vpop.f32.mrf.mxu0
      %3983 = vmatprep.mubr.bf16.mxu0 0
      %3984 = vmatmul.mubr.bf16.gmra.mxu0 %v3537
      %v3985 = vpop.f32.mrf.mxu0
      %v3986 = vadd.f32 %v3825, %v3985
      %v3987 = vpop.f32.mrf.mxu0
      %v3988 = vpop.f32.mrf.mxu0
      %v3989 = vadd.f32 %v3828, %v3988
      %v3990 = vpop.f32.mrf.mxu0
      %3991 = vmatprep.mubr.bf16.mxu0 0
      %3992 = vmatmul.mubr.bf16.gmra.mxu0 %v3540
      %v3993 = vpop.f32.mrf.mxu0
      %v3994 = vadd.f32 %v3833, %v3993
      %v3995 = vpop.f32.mrf.mxu0
      %v3996 = vpop.f32.mrf.mxu0
      %v3997 = vadd.f32 %v3836, %v3996
      %v3998 = vpop.f32.mrf.mxu0
      %3999 = vmatprep.mubr.bf16.mxu0 0
      %4000 = vmatmul.mubr.bf16.gmra.mxu0 %v3543
      %v4001 = vpop.f32.mrf.mxu0
      %v4002 = vadd.f32 %v3841, %v4001
      %v4003 = vpop.f32.mrf.mxu0
      %v4004 = vpop.f32.mrf.mxu0
      %v4005 = vadd.f32 %v3844, %v4004
      %v4006 = vpop.f32.mrf.mxu0
      %4007 = vmatprep.mubr.bf16.mxu0 0
      %4008 = vmatmul.mubr.bf16.gmra.mxu0 %v3546
      %v4009 = vpop.f32.mrf.mxu0
      %v4010 = vadd.f32 %v3849, %v4009
      %v4011 = vpop.f32.mrf.mxu0
      %v4012 = vpop.f32.mrf.mxu0
      %v4013 = vadd.f32 %v3852, %v4012
      %v4014 = vpop.f32.mrf.mxu0
      %4015 = vmatprep.mubr.bf16.mxu0 0
      %4016 = vmatmul.mubr.bf16.gmra.mxu0 %v3549
      %v4017 = vpop.f32.mrf.mxu0
      %v4018 = vadd.f32 %v3857, %v4017
      %v4019 = vpop.f32.mrf.mxu0
      %v4020 = vpop.f32.mrf.mxu0
      %v4021 = vadd.f32 %v3860, %v4020
      %v4022 = vpop.f32.mrf.mxu0
      %4023 = vmatprep.mubr.bf16.mxu0 0
      %4024 = vmatmul.mubr.bf16.gmra.mxu0 %v3552
      %v4025 = vpop.f32.mrf.mxu0
      %v4026 = vadd.f32 %v3865, %v4025
      %v4027 = vpop.f32.mrf.mxu0
      %v4028 = vpop.f32.mrf.mxu0
      %v4029 = vadd.f32 %v3868, %v4028
      %v4030 = vpop.f32.mrf.mxu0
      %4031 = vmatprep.mubr.bf16.mxu0 0
      %4032 = vmatmul.mubr.bf16.gmra.mxu0 %v3555
      %v4033 = vpop.f32.mrf.mxu0
      %v4034 = vadd.f32 %v3873, %v4033
      %v4035 = vpop.f32.mrf.mxu0
      %v4036 = vpop.f32.mrf.mxu0
      %v4037 = vadd.f32 %v3876, %v4036
      %v4038 = vpop.f32.mrf.mxu0
      %4039 = vmatprep.mubr.bf16.mxu0 0
      %4040 = vmatmul.mubr.bf16.gmra.mxu0 %v3558
      %v4041 = vpop.f32.mrf.mxu0
      %v4042 = vadd.f32 %v3881, %v4041
      %v4043 = vpop.f32.mrf.mxu0
      %v4044 = vpop.f32.mrf.mxu0
      %v4045 = vadd.f32 %v3884, %v4044
      %v4046 = vpop.f32.mrf.mxu0
      %4047 = vmatprep.mubr.bf16.mxu0 0
      %4048 = vmatmul.mubr.bf16.gmra.mxu0 %v3561
      %v4049 = vpop.f32.mrf.mxu0
      %v4050 = vadd.f32 %v3889, %v4049
      %v4051 = vpop.f32.mrf.mxu0
      %v4052 = vpop.f32.mrf.mxu0
      %v4053 = vadd.f32 %v3892, %v4052
      %v4054 = vpop.f32.mrf.mxu0
      %4055 = vmatprep.mubr.bf16.mxu0 0
      %4056 = vmatmul.mubr.bf16.gmra.mxu0 %v3564
      %v4057 = vpop.f32.mrf.mxu0
      %v4058 = vadd.f32 %v3897, %v4057
      %v4059 = vpop.f32.mrf.mxu0
      %v4060 = vpop.f32.mrf.mxu0
      %v4061 = vadd.f32 %v3900, %v4060
      %v4062 = vpop.f32.mrf.mxu0
      %4063 = vmatprep.mubr.bf16.mxu0 0
      %4064 = vmatmul.mubr.bf16.gmra.mxu0 %v3567
      %v4065 = vpop.f32.mrf.mxu0
      %v4066 = vadd.f32 %v3905, %v4065
      %v4067 = vpop.f32.mrf.mxu0
      %v4068 = vpop.f32.mrf.mxu0
      %v4069 = vadd.f32 %v3908, %v4068
      %v4070 = vpop.f32.mrf.mxu0
      %4071 = vmatprep.mubr.bf16.mxu0 0
      %4072 = vmatmul.mubr.bf16.gmra.mxu0 %v3570
      %v4073 = vpop.f32.mrf.mxu0
      %v4074 = vadd.f32 %v3913, %v4073
      %v4075 = vpop.f32.mrf.mxu0
      %v4076 = vpop.f32.mrf.mxu0
      %v4077 = vadd.f32 %v3916, %v4076
      %v4078 = vpop.f32.mrf.mxu0
      %4079 = vmatprep.mubr.bf16.mxu0 0
      %4080 = vmatmul.mubr.bf16.gmra.mxu0 %v3573
      %v4081 = vpop.f32.mrf.mxu0
      %v4082 = vadd.f32 %v3921, %v4081
      %v4083 = vpop.f32.mrf.mxu0
      %v4084 = vpop.f32.mrf.mxu0
      %v4085 = vadd.f32 %v3924, %v4084
      %v4086 = vpop.f32.mrf.mxu0
      %4087 = vdwg.mxu0
      %v4088 = vadd.f32 %v3126, %v3962
      %v4089 = vadd.f32 %v3129, %v3965
      %v4090 = vadd.f32 %v3134, %v3970
      %v4091 = vadd.f32 %v3137, %v3973
      %v4092 = vadd.f32 %v3142, %v3978
      %v4093 = vadd.f32 %v3145, %v3981
      %v4094 = vadd.f32 %v3150, %v3986
      %v4095 = vadd.f32 %v3153, %v3989
      %v4096 = vadd.f32 %v3158, %v3994
      %v4097 = vadd.f32 %v3161, %v3997
      %v4098 = vadd.f32 %v3166, %v4002
      %v4099 = vadd.f32 %v3169, %v4005
      %v4100 = vadd.f32 %v3174, %v4010
      %v4101 = vadd.f32 %v3177, %v4013
      %v4102 = vadd.f32 %v3182, %v4018
      %v4103 = vadd.f32 %v3185, %v4021
      %v4104 = vadd.f32 %v3190, %v4026
      %v4105 = vadd.f32 %v3193, %v4029
      %v4106 = vadd.f32 %v3198, %v4034
      %v4107 = vadd.f32 %v3201, %v4037
      %v4108 = vadd.f32 %v3206, %v4042
      %v4109 = vadd.f32 %v3209, %v4045
      %v4110 = vadd.f32 %v3214, %v4050
      %v4111 = vadd.f32 %v3217, %v4053
      %v4112 = vadd.f32 %v3222, %v4058
      %v4113 = vadd.f32 %v3225, %v4061
      %v4114 = vadd.f32 %v3230, %v4066
      %v4115 = vadd.f32 %v3233, %v4069
      %v4116 = vadd.f32 %v3238, %v4074
      %v4117 = vadd.f32 %v3241, %v4077
      %v4118 = vadd.f32 %v3246, %v4082
      %v4119 = vadd.f32 %v3249, %v4085
      %v4120 = vld [vmem:[%s387] sm:$0x1]
      %v4122 = vlaneseq
      %v4123 = vshrl.u32 %v4122, 7
      %v4124 = vsub.s32 0, %v4123
      %v4125 = vrot.slane %v4120, %v4124
      %v4127 = vadd.f32 %v4088, %v4125
      %v4128 = vadd.f32 %v4089, %v4125
      %v4129 = vadd.f32 %v4090, %v4125
      %v4130 = vadd.f32 %v4091, %v4125
      %v4131 = vadd.f32 %v4092, %v4125
      %v4132 = vadd.f32 %v4093, %v4125
      %v4133 = vadd.f32 %v4094, %v4125
      %v4134 = vadd.f32 %v4095, %v4125
      %v4135 = vadd.f32 %v4096, %v4125
      %v4136 = vadd.f32 %v4097, %v4125
      %v4137 = vadd.f32 %v4098, %v4125
      %v4138 = vadd.f32 %v4099, %v4125
      %v4139 = vadd.f32 %v4100, %v4125
      %v4140 = vadd.f32 %v4101, %v4125
      %v4141 = vadd.f32 %v4102, %v4125
      %v4142 = vadd.f32 %v4103, %v4125
      %v4143 = vadd.f32 %v4104, %v4125
      %v4144 = vadd.f32 %v4105, %v4125
      %v4145 = vadd.f32 %v4106, %v4125
      %v4146 = vadd.f32 %v4107, %v4125
      %v4147 = vadd.f32 %v4108, %v4125
      %v4148 = vadd.f32 %v4109, %v4125
      %v4149 = vadd.f32 %v4110, %v4125
      %v4150 = vadd.f32 %v4111, %v4125
      %v4151 = vadd.f32 %v4112, %v4125
      %v4152 = vadd.f32 %v4113, %v4125
      %v4153 = vadd.f32 %v4114, %v4125
      %v4154 = vadd.f32 %v4115, %v4125
      %v4155 = vadd.f32 %v4116, %v4125
      %v4156 = vadd.f32 %v4117, %v4125
      %v4157 = vadd.f32 %v4118, %v4125
      %v4158 = vadd.f32 %v4119, %v4125
      %v4159 = vld [vmem:[%s392] sm:$0xff]
      %v4160 = vld [vmem:[%s392 + $0x8] sm:$0xff]
      %v4161 = vld [vmem:[%s392 + $0x10] sm:$0xff]
      %v4162 = vld [vmem:[%s392 + $0x18] sm:$0xff]
      %v4163 = vld [vmem:[%s392 + $0x20] sm:$0xff]
      %v4164 = vld [vmem:[%s392 + $0x28] sm:$0xff]
      %v4165 = vld [vmem:[%s392 + $0x30] sm:$0xff]
      %v4166 = vld [vmem:[%s392 + $0x38] sm:$0xff]
      %v4167 = vld [vmem:[%s392 + $0x40] sm:$0xff]
      %v4168 = vld [vmem:[%s392 + $0x48] sm:$0xff]
      %v4169 = vld [vmem:[%s392 + $0x50] sm:$0xff]
      %v4170 = vld [vmem:[%s392 + $0x58] sm:$0xff]
      %v4171 = vld [vmem:[%s392 + $0x60] sm:$0xff]
      %v4172 = vld [vmem:[%s392 + $0x68] sm:$0xff]
      %v4173 = vld [vmem:[%s392 + $0x70] sm:$0xff]
      %v4174 = vld [vmem:[%s392 + $0x78] sm:$0xff]
      %v4175 = vld [vmem:[%s392 + $0x80] sm:$0xff]
      %v4176 = vld [vmem:[%s392 + $0x88] sm:$0xff]
      %v4177 = vld [vmem:[%s392 + $0x90] sm:$0xff]
      %v4178 = vld [vmem:[%s392 + $0x98] sm:$0xff]
      %v4179 = vld [vmem:[%s392 + $0xa0] sm:$0xff]
      %v4180 = vld [vmem:[%s392 + $0xa8] sm:$0xff]
      %v4181 = vld [vmem:[%s392 + $0xb0] sm:$0xff]
      %v4182 = vld [vmem:[%s392 + $0xb8] sm:$0xff]
      %v4183 = vld [vmem:[%s392 + $0xc0] sm:$0xff]
      %v4184 = vld [vmem:[%s392 + $0xc8] sm:$0xff]
      %v4185 = vld [vmem:[%s392 + $0xd0] sm:$0xff]
      %v4186 = vld [vmem:[%s392 + $0xd8] sm:$0xff]
      %v4187 = vld [vmem:[%s392 + $0xe0] sm:$0xff]
      %v4188 = vld [vmem:[%s392 + $0xe8] sm:$0xff]
      %v4189 = vld [vmem:[%s392 + $0xf0] sm:$0xff]
      %v4190 = vld [vmem:[%s392 + $0xf8] sm:$0xff]
      %v4191 = vpack.c.bf16 %v4160, %v4159
      %v4192 = vpack.c.bf16 %v4162, %v4161
      %v4193 = vpack.c.bf16 %v4164, %v4163
      %v4194 = vpack.c.bf16 %v4166, %v4165
      %v4195 = vpack.c.bf16 %v4168, %v4167
      %v4196 = vpack.c.bf16 %v4170, %v4169
      %v4197 = vpack.c.bf16 %v4172, %v4171
      %v4198 = vpack.c.bf16 %v4174, %v4173
      %v4199 = vpack.c.bf16 %v4176, %v4175
      %v4200 = vpack.c.bf16 %v4178, %v4177
      %v4201 = vpack.c.bf16 %v4180, %v4179
      %v4202 = vpack.c.bf16 %v4182, %v4181
      %v4203 = vpack.c.bf16 %v4184, %v4183
      %v4204 = vpack.c.bf16 %v4186, %v4185
      %v4205 = vpack.c.bf16 %v4188, %v4187
      %v4206 = vpack.c.bf16 %v4190, %v4189
      %v4207 = vld [vmem:[%s396] sm:$0xf]
      %v4208 = vld [vmem:[%s396 + $0x4] sm:$0xf]
      %v4209 = vld [vmem:[%s396 + $0x8] sm:$0xf]
      %v4210 = vld [vmem:[%s396 + $0xc] sm:$0xf]
      %v4211 = vld [vmem:[%s396 + $0x10] sm:$0xf]
      %v4212 = vld [vmem:[%s396 + $0x14] sm:$0xf]
      %v4213 = vld [vmem:[%s396 + $0x18] sm:$0xf]
      %v4214 = vld [vmem:[%s396 + $0x1c] sm:$0xf]
      %v4215 = vld [vmem:[%s396 + $0x20] sm:$0xf]
      %v4216 = vld [vmem:[%s396 + $0x24] sm:$0xf]
      %v4217 = vld [vmem:[%s396 + $0x28] sm:$0xf]
      %v4218 = vld [vmem:[%s396 + $0x2c] sm:$0xf]
      %v4219 = vld [vmem:[%s396 + $0x30] sm:$0xf]
      %v4220 = vld [vmem:[%s396 + $0x34] sm:$0xf]
      %v4221 = vld [vmem:[%s396 + $0x38] sm:$0xf]
      %v4222 = vld [vmem:[%s396 + $0x3c] sm:$0xf]
      %v4223 = vld [vmem:[%s399] sm:$0x1]
      %v4225 = vlaneseq
      %v4226 = vshrl.u32 %v4225, 7
      %v4227 = vsub.s32 0, %v4226
      %v4228 = vrot.slane %v4223, %v4227
      %v4246 = vunpack.c.l.b16 %v4207
      %v4247 = vunpack.c.l.b16 %v4208
      %v4248 = vunpack.c.l.b16 %v4209
      %v4249 = vunpack.c.l.b16 %v4210
      %v4250 = vunpack.c.l.b16 %v4211
      %v4251 = vunpack.c.l.b16 %v4212
      %v4252 = vunpack.c.l.b16 %v4213
      %v4253 = vunpack.c.l.b16 %v4214
      %v4254 = vunpack.c.l.b16 %v4215
      %v4255 = vunpack.c.l.b16 %v4216
      %v4256 = vunpack.c.l.b16 %v4217
      %v4257 = vunpack.c.l.b16 %v4218
      %v4258 = vunpack.c.l.b16 %v4219
      %v4259 = vunpack.c.l.b16 %v4220
      %v4260 = vunpack.c.l.b16 %v4221
      %v4261 = vunpack.c.l.b16 %v4222
      %v4262 = vpack.c.b16 %v4247, %v4246
      %v4263 = vpack.c.b16 %v4249, %v4248
      %v4264 = vpack.c.b16 %v4251, %v4250
      %v4265 = vpack.c.b16 %v4253, %v4252
      %v4266 = vpack.c.b16 %v4255, %v4254
      %v4267 = vpack.c.b16 %v4257, %v4256
      %v4268 = vpack.c.b16 %v4259, %v4258
      %v4269 = vpack.c.b16 %v4261, %v4260
      %4278 = vmatprep.subr.bf16.mxu0 0
      %4279 = vmatpush1.bf16.msra.mxu0 %v4269
      %4280 = vmatprep.subr.bf16.mxu0 0
      %4281 = vmatpush1.bf16.msra.mxu0 %v4268
      %4282 = vmatprep.subr.bf16.mxu0 0
      %4283 = vmatpush1.bf16.msra.mxu0 %v4267
      %4284 = vmatprep.subr.bf16.mxu0 0
      %4285 = vmatpush1.bf16.msra.mxu0 %v4266
      %4286 = vmatprep.subr.bf16.mxu0 0
      %4287 = vmatpush1.bf16.msra.mxu0 %v4265
      %4288 = vmatprep.subr.bf16.mxu0 0
      %4289 = vmatpush1.bf16.msra.mxu0 %v4264
      %4290 = vmatprep.subr.bf16.mxu0 0
      %4291 = vmatpush1.bf16.msra.mxu0 %v4263
      %4292 = vmatprep.subr.bf16.mxu0 0
      %4293 = vmatpush1.bf16.msra.mxu0 %v4262
      %4294 = vmatprep.subr.bf16.mxu0 0
      %4295 = vmatpush2.bf16.msra.mxu0 0
      %4296 = vmatprep.subr.bf16.mxu0 0
      %4297 = vmatpush2.bf16.msra.mxu0 0
      %4298 = vmatprep.subr.bf16.mxu0 0
      %4299 = vmatpush2.bf16.msra.mxu0 0
      %4300 = vmatprep.subr.bf16.mxu0 0
      %4301 = vmatpush2.bf16.msra.mxu0 0
      %4302 = vmatprep.subr.bf16.mxu0 0
      %4303 = vmatpush2.bf16.msra.mxu0 0
      %4304 = vmatprep.subr.bf16.mxu0 0
      %4305 = vmatpush2.bf16.msra.mxu0 0
      %4306 = vmatprep.subr.bf16.mxu0 0
      %4307 = vmatpush2.bf16.msra.mxu0 0
      %4308 = vmatprep.subr.bf16.mxu0 0
      %4309 = vmatpush2.bf16.msra.mxu0 0
      %4310 = vmatprep.mubr.bf16.mxu0 0
      %4311 = vmatmul.mubr.bf16.gmra.mxu0 %v4191
      %v4312 = vpop.f32.mrf.mxu0
      %v4313 = vadd.f32 %v4228, %v4312
      %v4314 = vpop.f32.mrf.mxu0
      %v4315 = vpop.f32.mrf.mxu0
      %v4316 = vadd.f32 %v4228, %v4315
      %v4317 = vpop.f32.mrf.mxu0
      %4318 = vmatprep.mubr.bf16.mxu0 0
      %4319 = vmatmul.mubr.bf16.gmra.mxu0 %v4192
      %v4320 = vpop.f32.mrf.mxu0
      %v4321 = vadd.f32 %v4228, %v4320
      %v4322 = vpop.f32.mrf.mxu0
      %v4323 = vpop.f32.mrf.mxu0
      %v4324 = vadd.f32 %v4228, %v4323
      %v4325 = vpop.f32.mrf.mxu0
      %4326 = vmatprep.mubr.bf16.mxu0 0
      %4327 = vmatmul.mubr.bf16.gmra.mxu0 %v4193
      %v4328 = vpop.f32.mrf.mxu0
      %v4329 = vadd.f32 %v4228, %v4328
      %v4330 = vpop.f32.mrf.mxu0
      %v4331 = vpop.f32.mrf.mxu0
      %v4332 = vadd.f32 %v4228, %v4331
      %v4333 = vpop.f32.mrf.mxu0
      %4334 = vmatprep.mubr.bf16.mxu0 0
      %4335 = vmatmul.mubr.bf16.gmra.mxu0 %v4194
      %v4336 = vpop.f32.mrf.mxu0
      %v4337 = vadd.f32 %v4228, %v4336
      %v4338 = vpop.f32.mrf.mxu0
      %v4339 = vpop.f32.mrf.mxu0
      %v4340 = vadd.f32 %v4228, %v4339
      %v4341 = vpop.f32.mrf.mxu0
      %4342 = vmatprep.mubr.bf16.mxu0 0
      %4343 = vmatmul.mubr.bf16.gmra.mxu0 %v4195
      %v4344 = vpop.f32.mrf.mxu0
      %v4345 = vadd.f32 %v4228, %v4344
      %v4346 = vpop.f32.mrf.mxu0
      %v4347 = vpop.f32.mrf.mxu0
      %v4348 = vadd.f32 %v4228, %v4347
      %v4349 = vpop.f32.mrf.mxu0
      %4350 = vmatprep.mubr.bf16.mxu0 0
      %4351 = vmatmul.mubr.bf16.gmra.mxu0 %v4196
      %v4352 = vpop.f32.mrf.mxu0
      %v4353 = vadd.f32 %v4228, %v4352
      %v4354 = vpop.f32.mrf.mxu0
      %v4355 = vpop.f32.mrf.mxu0
      %v4356 = vadd.f32 %v4228, %v4355
      %v4357 = vpop.f32.mrf.mxu0
      %4358 = vmatprep.mubr.bf16.mxu0 0
      %4359 = vmatmul.mubr.bf16.gmra.mxu0 %v4197
      %v4360 = vpop.f32.mrf.mxu0
      %v4361 = vadd.f32 %v4228, %v4360
      %v4362 = vpop.f32.mrf.mxu0
      %v4363 = vpop.f32.mrf.mxu0
      %v4364 = vadd.f32 %v4228, %v4363
      %v4365 = vpop.f32.mrf.mxu0
      %4366 = vmatprep.mubr.bf16.mxu0 0
      %4367 = vmatmul.mubr.bf16.gmra.mxu0 %v4198
      %v4368 = vpop.f32.mrf.mxu0
      %v4369 = vadd.f32 %v4228, %v4368
      %v4370 = vpop.f32.mrf.mxu0
      %v4371 = vpop.f32.mrf.mxu0
      %v4372 = vadd.f32 %v4228, %v4371
      %v4373 = vpop.f32.mrf.mxu0
      %4374 = vmatprep.mubr.bf16.mxu0 0
      %4375 = vmatmul.mubr.bf16.gmra.mxu0 %v4199
      %v4376 = vpop.f32.mrf.mxu0
      %v4377 = vadd.f32 %v4228, %v4376
      %v4378 = vpop.f32.mrf.mxu0
      %v4379 = vpop.f32.mrf.mxu0
      %v4380 = vadd.f32 %v4228, %v4379
      %v4381 = vpop.f32.mrf.mxu0
      %4382 = vmatprep.mubr.bf16.mxu0 0
      %4383 = vmatmul.mubr.bf16.gmra.mxu0 %v4200
      %v4384 = vpop.f32.mrf.mxu0
      %v4385 = vadd.f32 %v4228, %v4384
      %v4386 = vpop.f32.mrf.mxu0
      %v4387 = vpop.f32.mrf.mxu0
      %v4388 = vadd.f32 %v4228, %v4387
      %v4389 = vpop.f32.mrf.mxu0
      %4390 = vmatprep.mubr.bf16.mxu0 0
      %4391 = vmatmul.mubr.bf16.gmra.mxu0 %v4201
      %v4392 = vpop.f32.mrf.mxu0
      %v4393 = vadd.f32 %v4228, %v4392
      %v4394 = vpop.f32.mrf.mxu0
      %v4395 = vpop.f32.mrf.mxu0
      %v4396 = vadd.f32 %v4228, %v4395
      %v4397 = vpop.f32.mrf.mxu0
      %4398 = vmatprep.mubr.bf16.mxu0 0
      %4399 = vmatmul.mubr.bf16.gmra.mxu0 %v4202
      %v4400 = vpop.f32.mrf.mxu0
      %v4401 = vadd.f32 %v4228, %v4400
      %v4402 = vpop.f32.mrf.mxu0
      %v4403 = vpop.f32.mrf.mxu0
      %v4404 = vadd.f32 %v4228, %v4403
      %v4405 = vpop.f32.mrf.mxu0
      %4406 = vmatprep.mubr.bf16.mxu0 0
      %4407 = vmatmul.mubr.bf16.gmra.mxu0 %v4203
      %v4408 = vpop.f32.mrf.mxu0
      %v4409 = vadd.f32 %v4228, %v4408
      %v4410 = vpop.f32.mrf.mxu0
      %v4411 = vpop.f32.mrf.mxu0
      %v4412 = vadd.f32 %v4228, %v4411
      %v4413 = vpop.f32.mrf.mxu0
      %4414 = vmatprep.mubr.bf16.mxu0 0
      %4415 = vmatmul.mubr.bf16.gmra.mxu0 %v4204
      %v4416 = vpop.f32.mrf.mxu0
      %v4417 = vadd.f32 %v4228, %v4416
      %v4418 = vpop.f32.mrf.mxu0
      %v4419 = vpop.f32.mrf.mxu0
      %v4420 = vadd.f32 %v4228, %v4419
      %v4421 = vpop.f32.mrf.mxu0
      %4422 = vmatprep.mubr.bf16.mxu0 0
      %4423 = vmatmul.mubr.bf16.gmra.mxu0 %v4205
      %v4424 = vpop.f32.mrf.mxu0
      %v4425 = vadd.f32 %v4228, %v4424
      %v4426 = vpop.f32.mrf.mxu0
      %v4427 = vpop.f32.mrf.mxu0
      %v4428 = vadd.f32 %v4228, %v4427
      %v4429 = vpop.f32.mrf.mxu0
      %4430 = vmatprep.mubr.bf16.mxu0 0
      %4431 = vmatmul.mubr.bf16.gmra.mxu0 %v4206
      %v4432 = vpop.f32.mrf.mxu0
      %v4433 = vadd.f32 %v4228, %v4432
      %v4434 = vpop.f32.mrf.mxu0
      %v4435 = vpop.f32.mrf.mxu0
      %v4436 = vadd.f32 %v4228, %v4435
      %v4437 = vpop.f32.mrf.mxu0
      %4438 = vdwg.mxu0
      %v4439 = vadd.f32 %v4127, %v4313
      %v4440 = vadd.f32 %v4128, %v4316
      %v4441 = vadd.f32 %v4129, %v4321
      %v4442 = vadd.f32 %v4130, %v4324
      %v4443 = vadd.f32 %v4131, %v4329
      %v4444 = vadd.f32 %v4132, %v4332
      %v4445 = vadd.f32 %v4133, %v4337
      %v4446 = vadd.f32 %v4134, %v4340
      %v4447 = vadd.f32 %v4135, %v4345
      %v4448 = vadd.f32 %v4136, %v4348
      %v4449 = vadd.f32 %v4137, %v4353
      %v4450 = vadd.f32 %v4138, %v4356
      %v4451 = vadd.f32 %v4139, %v4361
      %v4452 = vadd.f32 %v4140, %v4364
      %v4453 = vadd.f32 %v4141, %v4369
      %v4454 = vadd.f32 %v4142, %v4372
      %v4455 = vadd.f32 %v4143, %v4377
      %v4456 = vadd.f32 %v4144, %v4380
      %v4457 = vadd.f32 %v4145, %v4385
      %v4458 = vadd.f32 %v4146, %v4388
      %v4459 = vadd.f32 %v4147, %v4393
      %v4460 = vadd.f32 %v4148, %v4396
      %v4461 = vadd.f32 %v4149, %v4401
      %v4462 = vadd.f32 %v4150, %v4404
      %v4463 = vadd.f32 %v4151, %v4409
      %v4464 = vadd.f32 %v4152, %v4412
      %v4465 = vadd.f32 %v4153, %v4417
      %v4466 = vadd.f32 %v4154, %v4420
      %v4467 = vadd.f32 %v4155, %v4425
      %v4468 = vadd.f32 %v4156, %v4428
      %v4469 = vadd.f32 %v4157, %v4433
      %v4470 = vadd.f32 %v4158, %v4436
      %4471 = vst [vmem:[%s407] sm:$0xff] %v4439
      %4472 = vst [vmem:[%s407 + $0x8] sm:$0xff] %v4440
      %4473 = vst [vmem:[%s407 + $0x10] sm:$0xff] %v4441
      %4474 = vst [vmem:[%s407 + $0x18] sm:$0xff] %v4442
      %4475 = vst [vmem:[%s407 + $0x20] sm:$0xff] %v4443
      %4476 = vst [vmem:[%s407 + $0x28] sm:$0xff] %v4444
      %4477 = vst [vmem:[%s407 + $0x30] sm:$0xff] %v4445
      %4478 = vst [vmem:[%s407 + $0x38] sm:$0xff] %v4446
      %4479 = vst [vmem:[%s407 + $0x40] sm:$0xff] %v4447
      %4480 = vst [vmem:[%s407 + $0x48] sm:$0xff] %v4448
      %4481 = vst [vmem:[%s407 + $0x50] sm:$0xff] %v4449
      %4482 = vst [vmem:[%s407 + $0x58] sm:$0xff] %v4450
      %4483 = vst [vmem:[%s407 + $0x60] sm:$0xff] %v4451
      %4484 = vst [vmem:[%s407 + $0x68] sm:$0xff] %v4452
      %4485 = vst [vmem:[%s407 + $0x70] sm:$0xff] %v4453
      %4486 = vst [vmem:[%s407 + $0x78] sm:$0xff] %v4454
      %4487 = vst [vmem:[%s407 + $0x80] sm:$0xff] %v4455
      %4488 = vst [vmem:[%s407 + $0x88] sm:$0xff] %v4456
      %4489 = vst [vmem:[%s407 + $0x90] sm:$0xff] %v4457
      %4490 = vst [vmem:[%s407 + $0x98] sm:$0xff] %v4458
      %4491 = vst [vmem:[%s407 + $0xa0] sm:$0xff] %v4459
      %4492 = vst [vmem:[%s407 + $0xa8] sm:$0xff] %v4460
      %4493 = vst [vmem:[%s407 + $0xb0] sm:$0xff] %v4461
      %4494 = vst [vmem:[%s407 + $0xb8] sm:$0xff] %v4462
      %4495 = vst [vmem:[%s407 + $0xc0] sm:$0xff] %v4463
      %4496 = vst [vmem:[%s407 + $0xc8] sm:$0xff] %v4464
      %4497 = vst [vmem:[%s407 + $0xd0] sm:$0xff] %v4465
      %4498 = vst [vmem:[%s407 + $0xd8] sm:$0xff] %v4466
      %4499 = vst [vmem:[%s407 + $0xe0] sm:$0xff] %v4467
      %4500 = vst [vmem:[%s407 + $0xe8] sm:$0xff] %v4468
      %4501 = vst [vmem:[%s407 + $0xf0] sm:$0xff] %v4469
      %4502 = vst [vmem:[%s407 + $0xf8] sm:$0xff] %v4470
      %p4503 = scmp.lt.s32.totalorder %s23, 1
      %s4504 = scalar_select %p4503, %s23, 1
      %p4505 = scmp.lt.s32.totalorder %s24, 0
      %s4506 = scalar_select %p4505, %s24, 0
      %s4507 = smul.addr %s4504, 32
      %s4508 = sadd.s32 %s4506, %s4507
      %s4509 = smul.addr %s4508, 8
      %s4510 = scalar_lea.vmem %s8, %s4509
      // Predicated region
      $region57: #{down_blk_forward.4} parent=51 // pred_check
        %p4511 = pneg %p249
      $region58: #{down_blk_forward.4} parent=51 // pred_check_branch
        %4513 = sbr.rel (%p4511) target = $region60
      $region59: #{down_blk_forward.4} parent=51 // pred_region
        _
      $region60: #{down_blk_forward.4} parent=51 // pred_fallthru
        _
    $region52: #{down_blk_forward.4} parent=5 // pred_fallthru
      _
    %p4514 = scmp.le.s32.totalorder 2, %s14
    // Predicated region
    $region61: #{down_blk_forward.4} parent=5 // pred_check
      %p4515 = pneg %p4514
    $region62: #{down_blk_forward.4} parent=5 // pred_check_branch
      %4517 = sbr.rel (%p4515) target = $region64
    $region63: #{down_blk_forward.4} parent=5 // pred_region
      %s4518 = ssub.s32 %s14, 2
      // Predicated region
      $region65: #{down_blk_forward.4} parent=63 // pred_check
        %p4519 = pneg %p255
      $region66: #{down_blk_forward.4} parent=63 // pred_check_branch
        %4521 = sbr.rel (%p4519) target = $region68
      $region67: #{down_blk_forward.4} parent=63 // pred_region
        %p4522 = scmp.lt.s32.totalorder %s25, 1
        %s4523 = scalar_select %p4522, %s25, 1
        %p4524 = scmp.lt.s32.totalorder %s26, 0
        %s4525 = scalar_select %p4524, %s26, 0
        %s4526 = smul.addr %s4523, 32
        %s4527 = sadd.s32 %s4525, %s4526
        %s4528 = smul.addr %s4527, 8
        %s4529 = scalar_lea.vmem %s8, %s4528
      $region68: #{down_blk_forward.4} parent=63 // pred_fallthru
        _
    $region64: #{down_blk_forward.4} parent=5 // pred_fallthru
      _
  $region6: #{down_blk_forward.4} parent=0 // loop_footer
    %s18 = sadd.s32 1, %s14
  $region7: #{down_blk_forward.4} parent=0 // loop_footer_branch
    %13 = sbr.rel target = $region3
  $region8: #{down_blk_forward.4} parent=0 // loop_exit
    _

// kernel: down_blk_forward.5
$region0: #{down_blk_forward.5}
  #allocation0 [shape = 'u32[]', space=smem, size = 0x4, offset = 0x4, fixed_abs, tag = 'smem constant byte address 0x4 - core index']
  #allocation1 [shape = 'u32[144,128]{1,0:T(1,128)}', space=vmem, size = 0x12000, scoped, tag = 'internal scratch']
  #allocation2 [shape = 'bf16[9,8,1024]{2,1,0:T(8,128)(2,1)}', space=vmem, size = 0x24000, scoped, tag = 'scratch operand']
  %s0 = inlined_call_operand.vmem [shape: f32[2,9,9,512], index: 0, kind: input, shape index: {}]
  %s1 = inlined_call_operand.vmem [shape: bf16[2,1024,128], index: 1, kind: input, shape index: {}]
  %s2 = inlined_call_operand.vmem [shape: f32[1,128], index: 2, kind: input, shape index: {}]
  %s3 = inlined_call_operand.vmem [shape: f32[2,8,8,128], index: 3, kind: output, shape index: {}]
  %s4 = sld [smem:[#allocation0]]
  $region49: #{down_blk_forward.5} parent=0
    _
  %s6 = ssub.s32 1, %s4
  %s7 = scalar_select 0, %s6, %s4
  loop: start=0, step=1, limit=4
  $region2: #{down_blk_forward.5} parent=0 // loop_pre_header
    _
  $region3: #{down_blk_forward.5} parent=0 // loop_header
    %s9 = sphi 0, %s13
    %p10 = scmp.ge.s32.totalorder %s9, 4
    %s16 = sphi 0, %s28
    %s17 = sphi 0, %s24
    %s18 = sphi 0, %s16
    %s19 = sphi 0, %s17
    %s20 = sphi 0, %s18
    %s21 = sphi 0, %s19
    %s31 = sphi 0, %s33
    %s34 = sphi 0, %s31
    %s35 = sphi 0, %s34
    %s51 = sphi 0, %s35
    %s57 = sphi 0, %s59
    %s60 = sphi 0, %s57
    %s61 = sphi 0, %s60
    %s77 = sphi 0, %s61
    %s83 = sphi 0, %s85
    %s86 = sphi 0, %s83
    %s87 = sphi 0, %s86
    %s103 = sphi 0, %s87
    %s111 = sphi 0, %s113
    %s114 = sphi 0, %s111
    %s115 = sphi 0, %s114
    %s131 = sphi 0, %s115
  $region4: #{down_blk_forward.5} parent=0 // loop_header_branch
    %12 = sbr.rel (%p10) target = $region8
  $region5: #{down_blk_forward.5} parent=0 // loop_body
    %s14 = ssub.s32 %s9, 1
    %s15 = ssub.s32 %s9, 2
    %s22 = sadd.s32 1, %s17
    %p23 = scmp.ge.s32.totalorder %s22, 1
    %s24 = scalar_select %p23, 0, %s22
    %s25 = sadd.s32 1, %s16
    %s26 = scalar_select %p23, %s25, %s16
    %p27 = scmp.ge.s32.totalorder %s26, 2
    %s28 = scalar_select %p27, 0, %s26
    %s29 = ssub.s32 %s16, %s28
    %p30 = scmp.eq.s32.totalorder %s29, 0
    %s32 = sadd.s32 %s31, 1
    %s33 = scalar_select %p30, %s31, %s32
    %p36 = pneg %p30
    %p37 = scmp.eq.s32.totalorder %s9, 1
    %p38 = por %p36, %p37
    %p39 = scmp.ne.s32.totalorder %s31, %s34
    %p40 = scmp.eq.s32.totalorder %s9, 0
    %p41 = por %p39, %p40
    %p42 = scmp.ne.s32.totalorder %s31, %s34
    %p43 = scmp.eq.s32.totalorder %s14, 1
    %p44 = por %p42, %p43
    %p45 = scmp.ne.s32.totalorder %s34, %s35
    %p46 = scmp.eq.s32.totalorder %s14, 0
    %p47 = por %p45, %p46
    %p48 = scmp.ne.s32.totalorder %s34, %s35
    %p49 = scmp.eq.s32.totalorder %s15, 1
    %p50 = por %p48, %p49
    %p52 = scmp.ne.s32.totalorder %s35, %s51
    %p53 = scmp.eq.s32.totalorder %s15, 0
    %p54 = por %p52, %p53
    %s55 = ssub.s32 %s17, %s24
    %p56 = scmp.eq.s32.totalorder %s55, 0
    %s58 = sadd.s32 %s57, 1
    %s59 = scalar_select %p56, %s57, %s58
    %p62 = pneg %p56
    %p63 = scmp.eq.s32.totalorder %s9, 1
    %p64 = por %p62, %p63
    %p65 = scmp.ne.s32.totalorder %s57, %s60
    %p66 = scmp.eq.s32.totalorder %s9, 0
    %p67 = por %p65, %p66
    %p68 = scmp.ne.s32.totalorder %s57, %s60
    %p69 = scmp.eq.s32.totalorder %s14, 1
    %p70 = por %p68, %p69
    %p71 = scmp.ne.s32.totalorder %s60, %s61
    %p72 = scmp.eq.s32.totalorder %s14, 0
    %p73 = por %p71, %p72
    %p74 = scmp.ne.s32.totalorder %s60, %s61
    %p75 = scmp.eq.s32.totalorder %s15, 1
    %p76 = por %p74, %p75
    %p78 = scmp.ne.s32.totalorder %s61, %s77
    %p79 = scmp.eq.s32.totalorder %s15, 0
    %p80 = por %p78, %p79
    %s81 = ssub.s32 %s17, %s24
    %p82 = scmp.eq.s32.totalorder %s81, 0
    %s84 = sadd.s32 %s83, 1
    %s85 = scalar_select %p82, %s83, %s84
    %p88 = pneg %p82
    %p89 = scmp.eq.s32.totalorder %s9, 1
    %p90 = por %p88, %p89
    %p91 = scmp.ne.s32.totalorder %s83, %s86
    %p92 = scmp.eq.s32.totalorder %s9, 0
    %p93 = por %p91, %p92
    %p94 = scmp.ne.s32.totalorder %s83, %s86
    %p95 = scmp.eq.s32.totalorder %s14, 1
    %p96 = por %p94, %p95
    %p97 = scmp.ne.s32.totalorder %s86, %s87
    %p98 = scmp.eq.s32.totalorder %s14, 0
    %p99 = por %p97, %p98
    %p100 = scmp.ne.s32.totalorder %s86, %s87
    %p101 = scmp.eq.s32.totalorder %s15, 1
    %p102 = por %p100, %p101
    %p104 = scmp.ne.s32.totalorder %s87, %s103
    %p105 = scmp.eq.s32.totalorder %s15, 0
    %p106 = por %p104, %p105
    %s107 = ssub.s32 %s16, %s28
    %s108 = ssub.s32 %s17, %s24
    %s109 = sor.u32 %s107, %s108
    %p110 = scmp.eq.s32.totalorder %s109, 0
    %s112 = sadd.s32 %s111, 1
    %s113 = scalar_select %p110, %s111, %s112
    %p116 = pneg %p110
    %p117 = scmp.eq.s32.totalorder %s9, 1
    %p118 = por %p116, %p117
    %p119 = scmp.ne.s32.totalorder %s111, %s114
    %p120 = scmp.eq.s32.totalorder %s9, 0
    %p121 = por %p119, %p120
    %p122 = scmp.ne.s32.totalorder %s111, %s114
    %p123 = scmp.eq.s32.totalorder %s14, 1
    %p124 = por %p122, %p123
    %p125 = scmp.ne.s32.totalorder %s114, %s115
    %p126 = scmp.eq.s32.totalorder %s14, 0
    %p127 = por %p125, %p126
    %p128 = scmp.ne.s32.totalorder %s114, %s115
    %p129 = scmp.eq.s32.totalorder %s15, 1
    %p130 = por %p128, %p129
    %p132 = scmp.ne.s32.totalorder %s115, %s131
    %p133 = scmp.eq.s32.totalorder %s15, 0
    %p134 = por %p132, %p133
    %p135 = scmp.le.s32.totalorder 1, %s9
    %p136 = scmp.lt.s32.totalorder %s9, 3
    %p137 = pnand %p135, %p136
    %p138 = pneg %p137
    // Predicated region
    $region9: #{down_blk_forward.5} parent=5 // pred_check
      _
    $region10: #{down_blk_forward.5} parent=5 // pred_check_branch
      %140 = sbr.rel (%p137) target = $region12
    $region11: #{down_blk_forward.5} parent=5 // pred_region
      %s141 = ssub.s32 %s9, 1
      // Predicated region
      $region13: #{down_blk_forward.5} parent=11 // pred_check
        %p142 = pneg %p73
      $region14: #{down_blk_forward.5} parent=11 // pred_check_branch
        %144 = sbr.rel (%p142) target = $region16
      $region15: #{down_blk_forward.5} parent=11 // pred_region
        %p145 = scmp.lt.s32.totalorder %s19, 0
        %s146 = scalar_select %p145, %s19, 0
        %s147 = smul.addr %s146, 4
        %s148 = scalar_lea.vmem %s1, %s147
      $region16: #{down_blk_forward.5} parent=11 // pred_fallthru
        _
      // Predicated region
      $region17: #{down_blk_forward.5} parent=11 // pred_check
        %p149 = pneg %p99
      $region18: #{down_blk_forward.5} parent=11 // pred_check_branch
        %151 = sbr.rel (%p149) target = $region20
      $region19: #{down_blk_forward.5} parent=11 // pred_region
        %p152 = scmp.lt.s32.totalorder %s19, 0
        %s153 = scalar_select %p152, %s19, 0
        %s154 = scalar_lea.vmem %s2, %s153
      $region20: #{down_blk_forward.5} parent=11 // pred_fallthru
        _
    $region12: #{down_blk_forward.5} parent=5 // pred_fallthru
      _
    %p155 = scmp.lt.s32.totalorder %s9, 2
    // Predicated region
    $region21: #{down_blk_forward.5} parent=5 // pred_check
      %p156 = pneg %p155
    $region22: #{down_blk_forward.5} parent=5 // pred_check_branch
      %158 = sbr.rel (%p156) target = $region24
    $region23: #{down_blk_forward.5} parent=5 // pred_region
      // Predicated region
      $region25: #{down_blk_forward.5} parent=23 // pred_check
        %p159 = pneg %p41
      $region26: #{down_blk_forward.5} parent=23 // pred_check_branch
        %161 = sbr.rel (%p159) target = $region28
      $region27: #{down_blk_forward.5} parent=23 // pred_region
        %p162 = scmp.lt.s32.totalorder %s16, 1
        %s163 = scalar_select %p162, %s16, 1
        %s164 = smul.addr %s163, 72
        %s165 = smul.addr %s164, 8
        %s166 = scalar_lea.vmem %s0, %s165
      $region28: #{down_blk_forward.5} parent=23 // pred_fallthru
        _
    $region24: #{down_blk_forward.5} parent=5 // pred_fallthru
      _
    %p167 = scmp.le.s32.totalorder 1, %s9
    %p168 = scmp.lt.s32.totalorder %s9, 3
    %p169 = pnand %p167, %p168
    %p170 = pneg %p169
    // Predicated region
    $region29: #{down_blk_forward.5} parent=5 // pred_check
      _
    $region30: #{down_blk_forward.5} parent=5 // pred_check_branch
      %172 = sbr.rel (%p169) target = $region32
    $region31: #{down_blk_forward.5} parent=5 // pred_region
      %s173 = ssub.s32 %s9, 1
      %p174 = scmp.lt.s32.totalorder %s18, 1
      %s175 = scalar_select %p174, %s18, 1
      %s176 = smul.addr %s175, 72
      %s177 = smul.addr %s176, 8
      %s178 = scalar_lea.vmem %s0, %s177
      %p179 = pneg %p47
      %p180 = pneg %p44
      %p181 = scmp.lt.s32.totalorder %s19, 0
      %s182 = scalar_select %p181, %s19, 0
      %s183 = smul.addr %s182, 4
      %s184 = scalar_lea.vmem %s1, %s183
      %p185 = pneg %p73
      %p186 = pneg %p70
      %p187 = scmp.lt.s32.totalorder %s19, 0
      %s188 = scalar_select %p187, %s19, 0
      %s189 = scalar_lea.vmem %s2, %s188
      %p190 = pneg %p99
      %p191 = pneg %p96
      %p192 = pneg %p127
      %p193 = pneg %p124
      %p194 = scmp.lt.s32.totalorder %s18, 1
      %s195 = scalar_select %p194, %s18, 1
      %p196 = scmp.lt.s32.totalorder %s19, 0
      %s197 = scalar_select %p196, %s19, 0
      %s198 = smul.addr %s195, 8
      %s199 = sadd.s32 %s197, %s198
      %s200 = smul.addr %s199, 8
      %s201 = scalar_lea.vmem %s3, %s200
      %p202 = scmp.lt.s32.totalorder %s18, 1
      %s203 = scalar_select %p202, %s18, 1
      %s204 = smul.addr %s203, 72
      %s205 = smul.addr %s204, 8
      %s206 = scalar_lea.vmem %s0, %s205
      %p207 = scmp.lt.s32.totalorder %s19, 0
      %s208 = scalar_select %p207, %s19, 0
      %s209 = smul.addr %s208, 4
      %s210 = scalar_lea.vmem %s1, %s209
      %p211 = scmp.lt.s32.totalorder %s19, 0
      %s212 = scalar_select %p211, %s19, 0
      %s213 = scalar_lea.vmem %s2, %s212
      %p214 = scmp.lt.s32.totalorder %s18, 1
      %s215 = scalar_select %p214, %s18, 1
      %p216 = scmp.lt.s32.totalorder %s19, 0
      %s217 = scalar_select %p216, %s19, 0
      %s218 = smul.addr %s215, 8
      %s219 = sadd.s32 %s217, %s218
      %s220 = smul.addr %s219, 8
      %s221 = scalar_lea.vmem %s3, %s220
      %p223 = scmp.eq.s32.totalorder %s19, 0
      // Predicated region
      $region33: #{down_blk_forward.5} parent=31 // pred_check
        %p224 = pneg %p223
      $region34: #{down_blk_forward.5} parent=31 // pred_check_branch
        %226 = sbr.rel (%p224) target = $region36
      $region35: #{down_blk_forward.5} parent=31 // pred_region
        %v227 = vld [vmem:[%s206] sm:$0xff]
        %v228 = vld [vmem:[%s206 + $0x8] sm:$0xff]
        %v229 = vld [vmem:[%s206 + $0x10] sm:$0xff]
        %v230 = vld [vmem:[%s206 + $0x18] sm:$0xff]
        %v231 = vld [vmem:[%s206 + $0x20] sm:$0x1]
        %v232 = vld [vmem:[%s206 + $0x28] sm:$0x1]
        %v233 = vld [vmem:[%s206 + $0x30] sm:$0x1]
        %v234 = vld [vmem:[%s206 + $0x38] sm:$0x1]
        %v235 = vld [vmem:[%s206 + $0x40] sm:$0xff]
        %v236 = vld [vmem:[%s206 + $0x48] sm:$0xff]
        %v237 = vld [vmem:[%s206 + $0x50] sm:$0xff]
        %v238 = vld [vmem:[%s206 + $0x58] sm:$0xff]
        %v239 = vld [vmem:[%s206 + $0x60] sm:$0x1]
        %v240 = vld [vmem:[%s206 + $0x68] sm:$0x1]
        %v241 = vld [vmem:[%s206 + $0x70] sm:$0x1]
        %v242 = vld [vmem:[%s206 + $0x78] sm:$0x1]
        %v243 = vld [vmem:[%s206 + $0x80] sm:$0xff]
        %v244 = vld [vmem:[%s206 + $0x88] sm:$0xff]
        %v245 = vld [vmem:[%s206 + $0x90] sm:$0xff]
        %v246 = vld [vmem:[%s206 + $0x98] sm:$0xff]
        %v247 = vld [vmem:[%s206 + $0xa0] sm:$0x1]
        %v248 = vld [vmem:[%s206 + $0xa8] sm:$0x1]
        %v249 = vld [vmem:[%s206 + $0xb0] sm:$0x1]
        %v250 = vld [vmem:[%s206 + $0xb8] sm:$0x1]
        %v251 = vld [vmem:[%s206 + $0xc0] sm:$0xff]
        %v252 = vld [vmem:[%s206 + $0xc8] sm:$0xff]
        %v253 = vld [vmem:[%s206 + $0xd0] sm:$0xff]
        %v254 = vld [vmem:[%s206 + $0xd8] sm:$0xff]
        %v255 = vld [vmem:[%s206 + $0xe0] sm:$0x1]
        %v256 = vld [vmem:[%s206 + $0xe8] sm:$0x1]
        %v257 = vld [vmem:[%s206 + $0xf0] sm:$0x1]
        %v258 = vld [vmem:[%s206 + $0xf8] sm:$0x1]
        %v259 = vld [vmem:[%s206 + $0x100] sm:$0xff]
        %v260 = vld [vmem:[%s206 + $0x108] sm:$0xff]
        %v261 = vld [vmem:[%s206 + $0x110] sm:$0xff]
        %v262 = vld [vmem:[%s206 + $0x118] sm:$0xff]
        %v263 = vld [vmem:[%s206 + $0x120] sm:$0x1]
        %v264 = vld [vmem:[%s206 + $0x128] sm:$0x1]
        %v265 = vld [vmem:[%s206 + $0x130] sm:$0x1]
        %v266 = vld [vmem:[%s206 + $0x138] sm:$0x1]
        %v267 = vld [vmem:[%s206 + $0x140] sm:$0xff]
        %v268 = vld [vmem:[%s206 + $0x148] sm:$0xff]
        %v269 = vld [vmem:[%s206 + $0x150] sm:$0xff]
        %v270 = vld [vmem:[%s206 + $0x158] sm:$0xff]
        %v271 = vld [vmem:[%s206 + $0x160] sm:$0x1]
        %v272 = vld [vmem:[%s206 + $0x168] sm:$0x1]
        %v273 = vld [vmem:[%s206 + $0x170] sm:$0x1]
        %v274 = vld [vmem:[%s206 + $0x178] sm:$0x1]
        %v275 = vld [vmem:[%s206 + $0x180] sm:$0xff]
        %v276 = vld [vmem:[%s206 + $0x188] sm:$0xff]
        %v277 = vld [vmem:[%s206 + $0x190] sm:$0xff]
        %v278 = vld [vmem:[%s206 + $0x198] sm:$0xff]
        %v279 = vld [vmem:[%s206 + $0x1a0] sm:$0x1]
        %v280 = vld [vmem:[%s206 + $0x1a8] sm:$0x1]
        %v281 = vld [vmem:[%s206 + $0x1b0] sm:$0x1]
        %v282 = vld [vmem:[%s206 + $0x1b8] sm:$0x1]
        %v283 = vld [vmem:[%s206 + $0x1c0] sm:$0xff]
        %v284 = vld [vmem:[%s206 + $0x1c8] sm:$0xff]
        %v285 = vld [vmem:[%s206 + $0x1d0] sm:$0xff]
        %v286 = vld [vmem:[%s206 + $0x1d8] sm:$0xff]
        %v287 = vld [vmem:[%s206 + $0x1e0] sm:$0x1]
        %v288 = vld [vmem:[%s206 + $0x1e8] sm:$0x1]
        %v289 = vld [vmem:[%s206 + $0x1f0] sm:$0x1]
        %v290 = vld [vmem:[%s206 + $0x1f8] sm:$0x1]
        %v291 = vld [vmem:[%s206 + $0x200] sm:$0xff]
        %v292 = vld [vmem:[%s206 + $0x208] sm:$0xff]
        %v293 = vld [vmem:[%s206 + $0x210] sm:$0xff]
        %v294 = vld [vmem:[%s206 + $0x218] sm:$0xff]
        %v295 = vld [vmem:[%s206 + $0x220] sm:$0x1]
        %v296 = vld [vmem:[%s206 + $0x228] sm:$0x1]
        %v297 = vld [vmem:[%s206 + $0x230] sm:$0x1]
        %v298 = vld [vmem:[%s206 + $0x238] sm:$0x1]
        %v299 = vpack.c.bf16 %v231, %v227
        %v300 = vpack.c.bf16 %v232, %v228
        %v301 = vpack.c.bf16 %v233, %v229
        %v302 = vpack.c.bf16 %v234, %v230
        %v303 = vpack.c.bf16 %v239, %v235
        %v304 = vpack.c.bf16 %v240, %v236
        %v305 = vpack.c.bf16 %v241, %v237
        %v306 = vpack.c.bf16 %v242, %v238
        %v307 = vpack.c.bf16 %v247, %v243
        %v308 = vpack.c.bf16 %v248, %v244
        %v309 = vpack.c.bf16 %v249, %v245
        %v310 = vpack.c.bf16 %v250, %v246
        %v311 = vpack.c.bf16 %v255, %v251
        %v312 = vpack.c.bf16 %v256, %v252
        %v313 = vpack.c.bf16 %v257, %v253
        %v314 = vpack.c.bf16 %v258, %v254
        %v315 = vpack.c.bf16 %v263, %v259
        %v316 = vpack.c.bf16 %v264, %v260
        %v317 = vpack.c.bf16 %v265, %v261
        %v318 = vpack.c.bf16 %v266, %v262
        %v319 = vpack.c.bf16 %v271, %v267
        %v320 = vpack.c.bf16 %v272, %v268
        %v321 = vpack.c.bf16 %v273, %v269
        %v322 = vpack.c.bf16 %v274, %v270
        %v323 = vpack.c.bf16 %v279, %v275
        %v324 = vpack.c.bf16 %v280, %v276
        %v325 = vpack.c.bf16 %v281, %v277
        %v326 = vpack.c.bf16 %v282, %v278
        %v327 = vpack.c.bf16 %v287, %v283
        %v328 = vpack.c.bf16 %v288, %v284
        %v329 = vpack.c.bf16 %v289, %v285
        %v330 = vpack.c.bf16 %v290, %v286
        %v331 = vpack.c.bf16 %v295, %v291
        %v332 = vpack.c.bf16 %v296, %v292
        %v333 = vpack.c.bf16 %v297, %v293
        %v334 = vpack.c.bf16 %v298, %v294
        %v371 = vunpack.c.l.b16 %v299
        %v372 = vunpack.c.l.b16 %v300
        %v373 = vunpack.c.l.b16 %v301
        %v374 = vunpack.c.l.b16 %v302
        %v375 = vunpack.c.l.b16 %v303
        %v376 = vunpack.c.l.b16 %v304
        %v377 = vunpack.c.l.b16 %v305
        %v378 = vunpack.c.l.b16 %v306
        %v379 = vunpack.c.l.b16 %v307
        %v380 = vunpack.c.l.b16 %v308
        %v381 = vunpack.c.l.b16 %v309
        %v382 = vunpack.c.l.b16 %v310
        %v383 = vunpack.c.l.b16 %v311
        %v384 = vunpack.c.l.b16 %v312
        %v385 = vunpack.c.l.b16 %v313
        %v386 = vunpack.c.l.b16 %v314
        %v387 = vunpack.c.l.b16 %v315
        %v388 = vunpack.c.l.b16 %v316
        %v389 = vunpack.c.l.b16 %v317
        %v390 = vunpack.c.l.b16 %v318
        %v391 = vunpack.c.l.b16 %v319
        %v392 = vunpack.c.l.b16 %v320
        %v393 = vunpack.c.l.b16 %v321
        %v394 = vunpack.c.l.b16 %v322
        %v395 = vunpack.c.l.b16 %v323
        %v396 = vunpack.c.l.b16 %v324
        %v397 = vunpack.c.l.b16 %v325
        %v398 = vunpack.c.l.b16 %v326
        %v399 = vunpack.c.l.b16 %v327
        %v400 = vunpack.c.l.b16 %v328
        %v401 = vunpack.c.l.b16 %v329
        %v402 = vunpack.c.l.b16 %v330
        %v403 = vunpack.c.l.b16 %v331
        %v404 = vunpack.c.l.b16 %v332
        %v405 = vunpack.c.l.b16 %v333
        %v406 = vunpack.c.l.b16 %v334
        %v407 = vpack.c.b16 %v372, %v371
        %v408 = vpack.c.b16 %v374, %v373
        %v409 = vpack.c.b16 %v376, %v375
        %v410 = vpack.c.b16 %v378, %v377
        %v411 = vpack.c.b16 %v380, %v379
        %v412 = vpack.c.b16 %v382, %v381
        %v413 = vpack.c.b16 %v384, %v383
        %v414 = vpack.c.b16 %v386, %v385
        %v415 = vpack.c.b16 %v388, %v387
        %v416 = vpack.c.b16 %v390, %v389
        %v417 = vpack.c.b16 %v392, %v391
        %v418 = vpack.c.b16 %v394, %v393
        %v419 = vpack.c.b16 %v396, %v395
        %v420 = vpack.c.b16 %v398, %v397
        %v421 = vpack.c.b16 %v400, %v399
        %v422 = vpack.c.b16 %v402, %v401
        %v423 = vpack.c.b16 %v404, %v403
        %v424 = vpack.c.b16 %v406, %v405
        %443 = vst [vmem:[#allocation2] sm:$0xff] %v407
        %444 = vst [vmem:[#allocation2 + $0x8] sm:$0xff] %v408
        %445 = vst [vmem:[#allocation2 + $0x20] sm:$0xff] %v409
        %446 = vst [vmem:[#allocation2 + $0x28] sm:$0xff] %v410
        %447 = vst [vmem:[#allocation2 + $0x40] sm:$0xff] %v411
        %448 = vst [vmem:[#allocation2 + $0x48] sm:$0xff] %v412
        %449 = vst [vmem:[#allocation2 + $0x60] sm:$0xff] %v413
        %450 = vst [vmem:[#allocation2 + $0x68] sm:$0xff] %v414
        %451 = vst [vmem:[#allocation2 + $0x80] sm:$0xff] %v415
        %452 = vst [vmem:[#allocation2 + $0x88] sm:$0xff] %v416
        %453 = vst [vmem:[#allocation2 + $0xa0] sm:$0xff] %v417
        %454 = vst [vmem:[#allocation2 + $0xa8] sm:$0xff] %v418
        %455 = vst [vmem:[#allocation2 + $0xc0] sm:$0xff] %v419
        %456 = vst [vmem:[#allocation2 + $0xc8] sm:$0xff] %v420
        %457 = vst [vmem:[#allocation2 + $0xe0] sm:$0xff] %v421
        %458 = vst [vmem:[#allocation2 + $0xe8] sm:$0xff] %v422
        %459 = vst [vmem:[#allocation2 + $0x100] sm:$0xff] %v423
        %460 = vst [vmem:[#allocation2 + $0x108] sm:$0xff] %v424
        %v461 = vunpack.c.h.b16 %v299
        %v462 = vunpack.c.h.b16 %v300
        %v463 = vunpack.c.h.b16 %v301
        %v464 = vunpack.c.h.b16 %v302
        %v465 = vunpack.c.h.b16 %v303
        %v466 = vunpack.c.h.b16 %v304
        %v467 = vunpack.c.h.b16 %v305
        %v468 = vunpack.c.h.b16 %v306
        %v469 = vunpack.c.h.b16 %v307
        %v470 = vunpack.c.h.b16 %v308
        %v471 = vunpack.c.h.b16 %v309
        %v472 = vunpack.c.h.b16 %v310
        %v473 = vunpack.c.h.b16 %v311
        %v474 = vunpack.c.h.b16 %v312
        %v475 = vunpack.c.h.b16 %v313
        %v476 = vunpack.c.h.b16 %v314
        %v477 = vunpack.c.h.b16 %v315
        %v478 = vunpack.c.h.b16 %v316
        %v479 = vunpack.c.h.b16 %v317
        %v480 = vunpack.c.h.b16 %v318
        %v481 = vunpack.c.h.b16 %v319
        %v482 = vunpack.c.h.b16 %v320
        %v483 = vunpack.c.h.b16 %v321
        %v484 = vunpack.c.h.b16 %v322
        %v485 = vunpack.c.h.b16 %v323
        %v486 = vunpack.c.h.b16 %v324
        %v487 = vunpack.c.h.b16 %v325
        %v488 = vunpack.c.h.b16 %v326
        %v489 = vunpack.c.h.b16 %v327
        %v490 = vunpack.c.h.b16 %v328
        %v491 = vunpack.c.h.b16 %v329
        %v492 = vunpack.c.h.b16 %v330
        %v493 = vunpack.c.h.b16 %v331
        %v494 = vunpack.c.h.b16 %v332
        %v495 = vunpack.c.h.b16 %v333
        %v496 = vunpack.c.h.b16 %v334
        %v497 = vpack.c.b16 %v462, %v461
        %v498 = vpack.c.b16 %v464, %v463
        %v499 = vpack.c.b16 %v466, %v465
        %v500 = vpack.c.b16 %v468, %v467
        %v501 = vpack.c.b16 %v470, %v469
        %v502 = vpack.c.b16 %v472, %v471
        %v503 = vpack.c.b16 %v474, %v473
        %v504 = vpack.c.b16 %v476, %v475
        %v505 = vpack.c.b16 %v478, %v477
        %v506 = vpack.c.b16 %v480, %v479
        %v507 = vpack.c.b16 %v482, %v481
        %v508 = vpack.c.b16 %v484, %v483
        %v509 = vpack.c.b16 %v486, %v485
        %v510 = vpack.c.b16 %v488, %v487
        %v511 = vpack.c.b16 %v490, %v489
        %v512 = vpack.c.b16 %v492, %v491
        %v513 = vpack.c.b16 %v494, %v493
        %v514 = vpack.c.b16 %v496, %v495
        %vm515 = vsmask.f32 3328
        %vm516 = vsmask.f32 7440
        %vm517 = vmor %vm515, %vm516
        %v519 = vshrl.u32 %v407, 16
        %v521 = vrot.slane %v519, 4
        %v522 = vshll.u32 %v407, 16
        %v524 = vrot.slane %v522, 5
        %v525 = vor.u32 %v521, %v524
        %v526 = vrot.slane %v525, 4
        %v528 = vshll.u32 %v497, 16
        %v530 = vrot.slane %v528, 5
        %v531 = vsel %vm517, %v526, %v530
        %v533 = vshrl.u32 %v408, 16
        %v535 = vrot.slane %v533, 4
        %v536 = vshll.u32 %v408, 16
        %v538 = vrot.slane %v536, 5
        %v539 = vor.u32 %v535, %v538
        %v540 = vrot.slane %v539, 4
        %v542 = vshll.u32 %v498, 16
        %v544 = vrot.slane %v542, 5
        %v545 = vsel %vm517, %v540, %v544
        %v547 = vshrl.u32 %v409, 16
        %v549 = vrot.slane %v547, 4
        %v550 = vshll.u32 %v409, 16
        %v552 = vrot.slane %v550, 5
        %v553 = vor.u32 %v549, %v552
        %v554 = vrot.slane %v553, 4
        %v556 = vshll.u32 %v499, 16
        %v558 = vrot.slane %v556, 5
        %v559 = vsel %vm517, %v554, %v558
        %v561 = vshrl.u32 %v410, 16
        %v563 = vrot.slane %v561, 4
        %v564 = vshll.u32 %v410, 16
        %v566 = vrot.slane %v564, 5
        %v567 = vor.u32 %v563, %v566
        %v568 = vrot.slane %v567, 4
        %v570 = vshll.u32 %v500, 16
        %v572 = vrot.slane %v570, 5
        %v573 = vsel %vm517, %v568, %v572
        %v575 = vshrl.u32 %v411, 16
        %v577 = vrot.slane %v575, 4
        %v578 = vshll.u32 %v411, 16
        %v580 = vrot.slane %v578, 5
        %v581 = vor.u32 %v577, %v580
        %v582 = vrot.slane %v581, 4
        %v584 = vshll.u32 %v501, 16
        %v586 = vrot.slane %v584, 5
        %v587 = vsel %vm517, %v582, %v586
        %v589 = vshrl.u32 %v412, 16
        %v591 = vrot.slane %v589, 4
        %v592 = vshll.u32 %v412, 16
        %v594 = vrot.slane %v592, 5
        %v595 = vor.u32 %v591, %v594
        %v596 = vrot.slane %v595, 4
        %v598 = vshll.u32 %v502, 16
        %v600 = vrot.slane %v598, 5
        %v601 = vsel %vm517, %v596, %v600
        %v603 = vshrl.u32 %v413, 16
        %v605 = vrot.slane %v603, 4
        %v606 = vshll.u32 %v413, 16
        %v608 = vrot.slane %v606, 5
        %v609 = vor.u32 %v605, %v608
        %v610 = vrot.slane %v609, 4
        %v612 = vshll.u32 %v503, 16
        %v614 = vrot.slane %v612, 5
        %v615 = vsel %vm517, %v610, %v614
        %v617 = vshrl.u32 %v414, 16
        %v619 = vrot.slane %v617, 4
        %v620 = vshll.u32 %v414, 16
        %v622 = vrot.slane %v620, 5
        %v623 = vor.u32 %v619, %v622
        %v624 = vrot.slane %v623, 4
        %v626 = vshll.u32 %v504, 16
        %v628 = vrot.slane %v626, 5
        %v629 = vsel %vm517, %v624, %v628
        %v631 = vshrl.u32 %v415, 16
        %v633 = vrot.slane %v631, 4
        %v634 = vshll.u32 %v415, 16
        %v636 = vrot.slane %v634, 5
        %v637 = vor.u32 %v633, %v636
        %v638 = vrot.slane %v637, 4
        %v640 = vshll.u32 %v505, 16
        %v642 = vrot.slane %v640, 5
        %v643 = vsel %vm517, %v638, %v642
        %v645 = vshrl.u32 %v416, 16
        %v647 = vrot.slane %v645, 4
        %v648 = vshll.u32 %v416, 16
        %v650 = vrot.slane %v648, 5
        %v651 = vor.u32 %v647, %v650
        %v652 = vrot.slane %v651, 4
        %v654 = vshll.u32 %v506, 16
        %v656 = vrot.slane %v654, 5
        %v657 = vsel %vm517, %v652, %v656
        %v659 = vshrl.u32 %v417, 16
        %v661 = vrot.slane %v659, 4
        %v662 = vshll.u32 %v417, 16
        %v664 = vrot.slane %v662, 5
        %v665 = vor.u32 %v661, %v664
        %v666 = vrot.slane %v665, 4
        %v668 = vshll.u32 %v507, 16
        %v670 = vrot.slane %v668, 5
        %v671 = vsel %vm517, %v666, %v670
        %v673 = vshrl.u32 %v418, 16
        %v675 = vrot.slane %v673, 4
        %v676 = vshll.u32 %v418, 16
        %v678 = vrot.slane %v676, 5
        %v679 = vor.u32 %v675, %v678
        %v680 = vrot.slane %v679, 4
        %v682 = vshll.u32 %v508, 16
        %v684 = vrot.slane %v682, 5
        %v685 = vsel %vm517, %v680, %v684
        %v687 = vshrl.u32 %v419, 16
        %v689 = vrot.slane %v687, 4
        %v690 = vshll.u32 %v419, 16
        %v692 = vrot.slane %v690, 5
        %v693 = vor.u32 %v689, %v692
        %v694 = vrot.slane %v693, 4
        %v696 = vshll.u32 %v509, 16
        %v698 = vrot.slane %v696, 5
        %v699 = vsel %vm517, %v694, %v698
        %v701 = vshrl.u32 %v420, 16
        %v703 = vrot.slane %v701, 4
        %v704 = vshll.u32 %v420, 16
        %v706 = vrot.slane %v704, 5
        %v707 = vor.u32 %v703, %v706
        %v708 = vrot.slane %v707, 4
        %v710 = vshll.u32 %v510, 16
        %v712 = vrot.slane %v710, 5
        %v713 = vsel %vm517, %v708, %v712
        %v715 = vshrl.u32 %v421, 16
        %v717 = vrot.slane %v715, 4
        %v718 = vshll.u32 %v421, 16
        %v720 = vrot.slane %v718, 5
        %v721 = vor.u32 %v717, %v720
        %v722 = vrot.slane %v721, 4
        %v724 = vshll.u32 %v511, 16
        %v726 = vrot.slane %v724, 5
        %v727 = vsel %vm517, %v722, %v726
        %v729 = vshrl.u32 %v422, 16
        %v731 = vrot.slane %v729, 4
        %v732 = vshll.u32 %v422, 16
        %v734 = vrot.slane %v732, 5
        %v735 = vor.u32 %v731, %v734
        %v736 = vrot.slane %v735, 4
        %v738 = vshll.u32 %v512, 16
        %v740 = vrot.slane %v738, 5
        %v741 = vsel %vm517, %v736, %v740
        %v743 = vshrl.u32 %v423, 16
        %v745 = vrot.slane %v743, 4
        %v746 = vshll.u32 %v423, 16
        %v748 = vrot.slane %v746, 5
        %v749 = vor.u32 %v745, %v748
        %v750 = vrot.slane %v749, 4
        %v752 = vshll.u32 %v513, 16
        %v754 = vrot.slane %v752, 5
        %v755 = vsel %vm517, %v750, %v754
        %v757 = vshrl.u32 %v424, 16
        %v759 = vrot.slane %v757, 4
        %v760 = vshll.u32 %v424, 16
        %v762 = vrot.slane %v760, 5
        %v763 = vor.u32 %v759, %v762
        %v764 = vrot.slane %v763, 4
        %v766 = vshll.u32 %v514, 16
        %v768 = vrot.slane %v766, 5
        %v769 = vsel %vm517, %v764, %v768
        %788 = vst [vmem:[#allocation2 + $0x10] sm:$0xff] %v531
        %789 = vst [vmem:[#allocation2 + $0x18] sm:$0xff] %v545
        %790 = vst [vmem:[#allocation2 + $0x30] sm:$0xff] %v559
        %791 = vst [vmem:[#allocation2 + $0x38] sm:$0xff] %v573
        %792 = vst [vmem:[#allocation2 + $0x50] sm:$0xff] %v587
        %793 = vst [vmem:[#allocation2 + $0x58] sm:$0xff] %v601
        %794 = vst [vmem:[#allocation2 + $0x70] sm:$0xff] %v615
        %795 = vst [vmem:[#allocation2 + $0x78] sm:$0xff] %v629
        %796 = vst [vmem:[#allocation2 + $0x90] sm:$0xff] %v643
        %797 = vst [vmem:[#allocation2 + $0x98] sm:$0xff] %v657
        %798 = vst [vmem:[#allocation2 + $0xb0] sm:$0xff] %v671
        %799 = vst [vmem:[#allocation2 + $0xb8] sm:$0xff] %v685
        %800 = vst [vmem:[#allocation2 + $0xd0] sm:$0xff] %v699
        %801 = vst [vmem:[#allocation2 + $0xd8] sm:$0xff] %v713
        %802 = vst [vmem:[#allocation2 + $0xf0] sm:$0xff] %v727
        %803 = vst [vmem:[#allocation2 + $0xf8] sm:$0xff] %v741
        %804 = vst [vmem:[#allocation2 + $0x110] sm:$0xff] %v755
        %805 = vst [vmem:[#allocation2 + $0x118] sm:$0xff] %v769
      $region36: #{down_blk_forward.5} parent=31 // pred_fallthru
        _
      %v806 = vld [vmem:[#allocation2] sm:$0xff]
      %v807 = vld [vmem:[#allocation2 + $0x8] sm:$0xff]
      %v808 = vld [vmem:[#allocation2 + $0x10] sm:$0xff]
      %v809 = vld [vmem:[#allocation2 + $0x18] sm:$0xff]
      %v810 = vld [vmem:[#allocation2 + $0x20] sm:$0xff]
      %v811 = vld [vmem:[#allocation2 + $0x28] sm:$0xff]
      %v812 = vld [vmem:[#allocation2 + $0x30] sm:$0xff]
      %v813 = vld [vmem:[#allocation2 + $0x38] sm:$0xff]
      %v814 = vld [vmem:[#allocation2 + $0x40] sm:$0xff]
      %v815 = vld [vmem:[#allocation2 + $0x48] sm:$0xff]
      %v816 = vld [vmem:[#allocation2 + $0x50] sm:$0xff]
      %v817 = vld [vmem:[#allocation2 + $0x58] sm:$0xff]
      %v818 = vld [vmem:[#allocation2 + $0x60] sm:$0xff]
      %v819 = vld [vmem:[#allocation2 + $0x68] sm:$0xff]
      %v820 = vld [vmem:[#allocation2 + $0x70] sm:$0xff]
      %v821 = vld [vmem:[#allocation2 + $0x78] sm:$0xff]
      %v822 = vld [vmem:[#allocation2 + $0x80] sm:$0xff]
      %v823 = vld [vmem:[#allocation2 + $0x88] sm:$0xff]
      %v824 = vld [vmem:[#allocation2 + $0x90] sm:$0xff]
      %v825 = vld [vmem:[#allocation2 + $0x98] sm:$0xff]
      %v826 = vld [vmem:[#allocation2 + $0xa0] sm:$0xff]
      %v827 = vld [vmem:[#allocation2 + $0xa8] sm:$0xff]
      %v828 = vld [vmem:[#allocation2 + $0xb0] sm:$0xff]
      %v829 = vld [vmem:[#allocation2 + $0xb8] sm:$0xff]
      %v830 = vld [vmem:[#allocation2 + $0xc0] sm:$0xff]
      %v831 = vld [vmem:[#allocation2 + $0xc8] sm:$0xff]
      %v832 = vld [vmem:[#allocation2 + $0xd0] sm:$0xff]
      %v833 = vld [vmem:[#allocation2 + $0xd8] sm:$0xff]
      %v834 = vld [vmem:[#allocation2 + $0xe0] sm:$0xff]
      %v835 = vld [vmem:[#allocation2 + $0xe8] sm:$0xff]
      %v836 = vld [vmem:[#allocation2 + $0xf0] sm:$0xff]
      %v837 = vld [vmem:[#allocation2 + $0xf8] sm:$0xff]
      %v838 = vld [vmem:[%s210] sm:$0xf]
      %v839 = vld [vmem:[%s210 + $0x4] sm:$0xf]
      %v840 = vld [vmem:[%s210 + $0x8] sm:$0xf]
      %v841 = vld [vmem:[%s210 + $0xc] sm:$0xf]
      %v842 = vld [vmem:[%s210 + $0x10] sm:$0xf]
      %v843 = vld [vmem:[%s210 + $0x14] sm:$0xf]
      %v844 = vld [vmem:[%s210 + $0x18] sm:$0xf]
      %v845 = vld [vmem:[%s210 + $0x1c] sm:$0xf]
      %v846 = vld [vmem:[%s210 + $0x20] sm:$0xf]
      %v847 = vld [vmem:[%s210 + $0x24] sm:$0xf]
      %v848 = vld [vmem:[%s210 + $0x28] sm:$0xf]
      %v849 = vld [vmem:[%s210 + $0x2c] sm:$0xf]
      %v850 = vld [vmem:[%s210 + $0x30] sm:$0xf]
      %v851 = vld [vmem:[%s210 + $0x34] sm:$0xf]
      %v852 = vld [vmem:[%s210 + $0x38] sm:$0xf]
      %v853 = vld [vmem:[%s210 + $0x3c] sm:$0xf]
      %v854 = vld [vmem:[%s210 + $0x40] sm:$0xf]
      %v855 = vld [vmem:[%s210 + $0x44] sm:$0xf]
      %v856 = vld [vmem:[%s210 + $0x48] sm:$0xf]
      %v857 = vld [vmem:[%s210 + $0x4c] sm:$0xf]
      %v858 = vld [vmem:[%s210 + $0x50] sm:$0xf]
      %v859 = vld [vmem:[%s210 + $0x54] sm:$0xf]
      %v860 = vld [vmem:[%s210 + $0x58] sm:$0xf]
      %v861 = vld [vmem:[%s210 + $0x5c] sm:$0xf]
      %v862 = vld [vmem:[%s210 + $0x60] sm:$0xf]
      %v863 = vld [vmem:[%s210 + $0x64] sm:$0xf]
      %v864 = vld [vmem:[%s210 + $0x68] sm:$0xf]
      %v865 = vld [vmem:[%s210 + $0x6c] sm:$0xf]
      %v866 = vld [vmem:[%s210 + $0x70] sm:$0xf]
      %v867 = vld [vmem:[%s210 + $0x74] sm:$0xf]
      %v868 = vld [vmem:[%s210 + $0x78] sm:$0xf]
      %v869 = vld [vmem:[%s210 + $0x7c] sm:$0xf]
      %v870 = vld [vmem:[%s210 + $0x80] sm:$0xf]
      %v871 = vld [vmem:[%s210 + $0x84] sm:$0xf]
      %v872 = vld [vmem:[%s210 + $0x88] sm:$0xf]
      %v873 = vld [vmem:[%s210 + $0x8c] sm:$0xf]
      %v874 = vld [vmem:[%s210 + $0x90] sm:$0xf]
      %v875 = vld [vmem:[%s210 + $0x94] sm:$0xf]
      %v876 = vld [vmem:[%s210 + $0x98] sm:$0xf]
      %v877 = vld [vmem:[%s210 + $0x9c] sm:$0xf]
      %v878 = vld [vmem:[%s210 + $0xa0] sm:$0xf]
      %v879 = vld [vmem:[%s210 + $0xa4] sm:$0xf]
      %v880 = vld [vmem:[%s210 + $0xa8] sm:$0xf]
      %v881 = vld [vmem:[%s210 + $0xac] sm:$0xf]
      %v882 = vld [vmem:[%s210 + $0xb0] sm:$0xf]
      %v883 = vld [vmem:[%s210 + $0xb4] sm:$0xf]
      %v884 = vld [vmem:[%s210 + $0xb8] sm:$0xf]
      %v885 = vld [vmem:[%s210 + $0xbc] sm:$0xf]
      %v886 = vld [vmem:[%s210 + $0xc0] sm:$0xf]
      %v887 = vld [vmem:[%s210 + $0xc4] sm:$0xf]
      %v888 = vld [vmem:[%s210 + $0xc8] sm:$0xf]
      %v889 = vld [vmem:[%s210 + $0xcc] sm:$0xf]
      %v890 = vld [vmem:[%s210 + $0xd0] sm:$0xf]
      %v891 = vld [vmem:[%s210 + $0xd4] sm:$0xf]
      %v892 = vld [vmem:[%s210 + $0xd8] sm:$0xf]
      %v893 = vld [vmem:[%s210 + $0xdc] sm:$0xf]
      %v894 = vld [vmem:[%s210 + $0xe0] sm:$0xf]
      %v895 = vld [vmem:[%s210 + $0xe4] sm:$0xf]
      %v896 = vld [vmem:[%s210 + $0xe8] sm:$0xf]
      %v897 = vld [vmem:[%s210 + $0xec] sm:$0xf]
      %v898 = vld [vmem:[%s210 + $0xf0] sm:$0xf]
      %v899 = vld [vmem:[%s210 + $0xf4] sm:$0xf]
      %v900 = vld [vmem:[%s210 + $0xf8] sm:$0xf]
      %v901 = vld [vmem:[%s210 + $0xfc] sm:$0xf]
      %v902 = vld [vmem:[%s210 + $0x100] sm:$0xf]
      %v903 = vld [vmem:[%s210 + $0x104] sm:$0xf]
      %v904 = vld [vmem:[%s210 + $0x108] sm:$0xf]
      %v905 = vld [vmem:[%s210 + $0x10c] sm:$0xf]
      %v906 = vld [vmem:[%s210 + $0x110] sm:$0xf]
      %v907 = vld [vmem:[%s210 + $0x114] sm:$0xf]
      %v908 = vld [vmem:[%s210 + $0x118] sm:$0xf]
      %v909 = vld [vmem:[%s210 + $0x11c] sm:$0xf]
      %v910 = vld [vmem:[%s210 + $0x120] sm:$0xf]
      %v911 = vld [vmem:[%s210 + $0x124] sm:$0xf]
      %v912 = vld [vmem:[%s210 + $0x128] sm:$0xf]
      %v913 = vld [vmem:[%s210 + $0x12c] sm:$0xf]
      %v914 = vld [vmem:[%s210 + $0x130] sm:$0xf]
      %v915 = vld [vmem:[%s210 + $0x134] sm:$0xf]
      %v916 = vld [vmem:[%s210 + $0x138] sm:$0xf]
      %v917 = vld [vmem:[%s210 + $0x13c] sm:$0xf]
      %v918 = vld [vmem:[%s210 + $0x140] sm:$0xf]
      %v919 = vld [vmem:[%s210 + $0x144] sm:$0xf]
      %v920 = vld [vmem:[%s210 + $0x148] sm:$0xf]
      %v921 = vld [vmem:[%s210 + $0x14c] sm:$0xf]
      %v922 = vld [vmem:[%s210 + $0x150] sm:$0xf]
      %v923 = vld [vmem:[%s210 + $0x154] sm:$0xf]
      %v924 = vld [vmem:[%s210 + $0x158] sm:$0xf]
      %v925 = vld [vmem:[%s210 + $0x15c] sm:$0xf]
      %v926 = vld [vmem:[%s210 + $0x160] sm:$0xf]
      %v927 = vld [vmem:[%s210 + $0x164] sm:$0xf]
      %v928 = vld [vmem:[%s210 + $0x168] sm:$0xf]
      %v929 = vld [vmem:[%s210 + $0x16c] sm:$0xf]
      %v930 = vld [vmem:[%s210 + $0x170] sm:$0xf]
      %v931 = vld [vmem:[%s210 + $0x174] sm:$0xf]
      %v932 = vld [vmem:[%s210 + $0x178] sm:$0xf]
      %v933 = vld [vmem:[%s210 + $0x17c] sm:$0xf]
      %v934 = vld [vmem:[%s210 + $0x180] sm:$0xf]
      %v935 = vld [vmem:[%s210 + $0x184] sm:$0xf]
      %v936 = vld [vmem:[%s210 + $0x188] sm:$0xf]
      %v937 = vld [vmem:[%s210 + $0x18c] sm:$0xf]
      %v938 = vld [vmem:[%s210 + $0x190] sm:$0xf]
      %v939 = vld [vmem:[%s210 + $0x194] sm:$0xf]
      %v940 = vld [vmem:[%s210 + $0x198] sm:$0xf]
      %v941 = vld [vmem:[%s210 + $0x19c] sm:$0xf]
      %v942 = vld [vmem:[%s210 + $0x1a0] sm:$0xf]
      %v943 = vld [vmem:[%s210 + $0x1a4] sm:$0xf]
      %v944 = vld [vmem:[%s210 + $0x1a8] sm:$0xf]
      %v945 = vld [vmem:[%s210 + $0x1ac] sm:$0xf]
      %v946 = vld [vmem:[%s210 + $0x1b0] sm:$0xf]
      %v947 = vld [vmem:[%s210 + $0x1b4] sm:$0xf]
      %v948 = vld [vmem:[%s210 + $0x1b8] sm:$0xf]
      %v949 = vld [vmem:[%s210 + $0x1bc] sm:$0xf]
      %v950 = vld [vmem:[%s210 + $0x1c0] sm:$0xf]
      %v951 = vld [vmem:[%s210 + $0x1c4] sm:$0xf]
      %v952 = vld [vmem:[%s210 + $0x1c8] sm:$0xf]
      %v953 = vld [vmem:[%s210 + $0x1cc] sm:$0xf]
      %v954 = vld [vmem:[%s210 + $0x1d0] sm:$0xf]
      %v955 = vld [vmem:[%s210 + $0x1d4] sm:$0xf]
      %v956 = vld [vmem:[%s210 + $0x1d8] sm:$0xf]
      %v957 = vld [vmem:[%s210 + $0x1dc] sm:$0xf]
      %v958 = vld [vmem:[%s210 + $0x1e0] sm:$0xf]
      %v959 = vld [vmem:[%s210 + $0x1e4] sm:$0xf]
      %v960 = vld [vmem:[%s210 + $0x1e8] sm:$0xf]
      %v961 = vld [vmem:[%s210 + $0x1ec] sm:$0xf]
      %v962 = vld [vmem:[%s210 + $0x1f0] sm:$0xf]
      %v963 = vld [vmem:[%s210 + $0x1f4] sm:$0xf]
      %v964 = vld [vmem:[%s210 + $0x1f8] sm:$0xf]
      %v965 = vld [vmem:[%s210 + $0x1fc] sm:$0xf]
      %s966 = scalar_lea.vmem [#allocation2], 32
      %v967 = vld [vmem:[%s966] sm:$0xff]
      %v968 = vld [vmem:[%s966 + $0x8] sm:$0xff]
      %v969 = vld [vmem:[%s966 + $0x10] sm:$0xff]
      %v970 = vld [vmem:[%s966 + $0x18] sm:$0xff]
      %v971 = vld [vmem:[%s966 + $0x20] sm:$0xff]
      %v972 = vld [vmem:[%s966 + $0x28] sm:$0xff]
      %v973 = vld [vmem:[%s966 + $0x30] sm:$0xff]
      %v974 = vld [vmem:[%s966 + $0x38] sm:$0xff]
      %v975 = vld [vmem:[%s966 + $0x40] sm:$0xff]
      %v976 = vld [vmem:[%s966 + $0x48] sm:$0xff]
      %v977 = vld [vmem:[%s966 + $0x50] sm:$0xff]
      %v978 = vld [vmem:[%s966 + $0x58] sm:$0xff]
      %v979 = vld [vmem:[%s966 + $0x60] sm:$0xff]
      %v980 = vld [vmem:[%s966 + $0x68] sm:$0xff]
      %v981 = vld [vmem:[%s966 + $0x70] sm:$0xff]
      %v982 = vld [vmem:[%s966 + $0x78] sm:$0xff]
      %v983 = vld [vmem:[%s966 + $0x80] sm:$0xff]
      %v984 = vld [vmem:[%s966 + $0x88] sm:$0xff]
      %v985 = vld [vmem:[%s966 + $0x90] sm:$0xff]
      %v986 = vld [vmem:[%s966 + $0x98] sm:$0xff]
      %v987 = vld [vmem:[%s966 + $0xa0] sm:$0xff]
      %v988 = vld [vmem:[%s966 + $0xa8] sm:$0xff]
      %v989 = vld [vmem:[%s966 + $0xb0] sm:$0xff]
      %v990 = vld [vmem:[%s966 + $0xb8] sm:$0xff]
      %v991 = vld [vmem:[%s966 + $0xc0] sm:$0xff]
      %v992 = vld [vmem:[%s966 + $0xc8] sm:$0xff]
      %v993 = vld [vmem:[%s966 + $0xd0] sm:$0xff]
      %v994 = vld [vmem:[%s966 + $0xd8] sm:$0xff]
      %v995 = vld [vmem:[%s966 + $0xe0] sm:$0xff]
      %v996 = vld [vmem:[%s966 + $0xe8] sm:$0xff]
      %v997 = vld [vmem:[%s966 + $0xf0] sm:$0xff]
      %v998 = vld [vmem:[%s966 + $0xf8] sm:$0xff]
      %s999 = scalar_lea.vmem %s210, 512
      %v1000 = vld [vmem:[%s999] sm:$0xf]
      %v1001 = vld [vmem:[%s999 + $0x4] sm:$0xf]
      %v1002 = vld [vmem:[%s999 + $0x8] sm:$0xf]
      %v1003 = vld [vmem:[%s999 + $0xc] sm:$0xf]
      %v1004 = vld [vmem:[%s999 + $0x10] sm:$0xf]
      %v1005 = vld [vmem:[%s999 + $0x14] sm:$0xf]
      %v1006 = vld [vmem:[%s999 + $0x18] sm:$0xf]
      %v1007 = vld [vmem:[%s999 + $0x1c] sm:$0xf]
      %v1008 = vld [vmem:[%s999 + $0x20] sm:$0xf]
      %v1009 = vld [vmem:[%s999 + $0x24] sm:$0xf]
      %v1010 = vld [vmem:[%s999 + $0x28] sm:$0xf]
      %v1011 = vld [vmem:[%s999 + $0x2c] sm:$0xf]
      %v1012 = vld [vmem:[%s999 + $0x30] sm:$0xf]
      %v1013 = vld [vmem:[%s999 + $0x34] sm:$0xf]
      %v1014 = vld [vmem:[%s999 + $0x38] sm:$0xf]
      %v1015 = vld [vmem:[%s999 + $0x3c] sm:$0xf]
      %v1016 = vld [vmem:[%s999 + $0x40] sm:$0xf]
      %v1017 = vld [vmem:[%s999 + $0x44] sm:$0xf]
      %v1018 = vld [vmem:[%s999 + $0x48] sm:$0xf]
      %v1019 = vld [vmem:[%s999 + $0x4c] sm:$0xf]
      %v1020 = vld [vmem:[%s999 + $0x50] sm:$0xf]
      %v1021 = vld [vmem:[%s999 + $0x54] sm:$0xf]
      %v1022 = vld [vmem:[%s999 + $0x58] sm:$0xf]
      %v1023 = vld [vmem:[%s999 + $0x5c] sm:$0xf]
      %v1024 = vld [vmem:[%s999 + $0x60] sm:$0xf]
      %v1025 = vld [vmem:[%s999 + $0x64] sm:$0xf]
      %v1026 = vld [vmem:[%s999 + $0x68] sm:$0xf]
      %v1027 = vld [vmem:[%s999 + $0x6c] sm:$0xf]
      %v1028 = vld [vmem:[%s999 + $0x70] sm:$0xf]
      %v1029 = vld [vmem:[%s999 + $0x74] sm:$0xf]
      %v1030 = vld [vmem:[%s999 + $0x78] sm:$0xf]
      %v1031 = vld [vmem:[%s999 + $0x7c] sm:$0xf]
      %v1032 = vld [vmem:[%s999 + $0x80] sm:$0xf]
      %v1033 = vld [vmem:[%s999 + $0x84] sm:$0xf]
      %v1034 = vld [vmem:[%s999 + $0x88] sm:$0xf]
      %v1035 = vld [vmem:[%s999 + $0x8c] sm:$0xf]
      %v1036 = vld [vmem:[%s999 + $0x90] sm:$0xf]
      %v1037 = vld [vmem:[%s999 + $0x94] sm:$0xf]
      %v1038 = vld [vmem:[%s999 + $0x98] sm:$0xf]
      %v1039 = vld [vmem:[%s999 + $0x9c] sm:$0xf]
      %v1040 = vld [vmem:[%s999 + $0xa0] sm:$0xf]
      %v1041 = vld [vmem:[%s999 + $0xa4] sm:$0xf]
      %v1042 = vld [vmem:[%s999 + $0xa8] sm:$0xf]
      %v1043 = vld [vmem:[%s999 + $0xac] sm:$0xf]
      %v1044 = vld [vmem:[%s999 + $0xb0] sm:$0xf]
      %v1045 = vld [vmem:[%s999 + $0xb4] sm:$0xf]
      %v1046 = vld [vmem:[%s999 + $0xb8] sm:$0xf]
      %v1047 = vld [vmem:[%s999 + $0xbc] sm:$0xf]
      %v1048 = vld [vmem:[%s999 + $0xc0] sm:$0xf]
      %v1049 = vld [vmem:[%s999 + $0xc4] sm:$0xf]
      %v1050 = vld [vmem:[%s999 + $0xc8] sm:$0xf]
      %v1051 = vld [vmem:[%s999 + $0xcc] sm:$0xf]
      %v1052 = vld [vmem:[%s999 + $0xd0] sm:$0xf]
      %v1053 = vld [vmem:[%s999 + $0xd4] sm:$0xf]
      %v1054 = vld [vmem:[%s999 + $0xd8] sm:$0xf]
      %v1055 = vld [vmem:[%s999 + $0xdc] sm:$0xf]
      %v1056 = vld [vmem:[%s999 + $0xe0] sm:$0xf]
      %v1057 = vld [vmem:[%s999 + $0xe4] sm:$0xf]
      %v1058 = vld [vmem:[%s999 + $0xe8] sm:$0xf]
      %v1059 = vld [vmem:[%s999 + $0xec] sm:$0xf]
      %v1060 = vld [vmem:[%s999 + $0xf0] sm:$0xf]
      %v1061 = vld [vmem:[%s999 + $0xf4] sm:$0xf]
      %v1062 = vld [vmem:[%s999 + $0xf8] sm:$0xf]
      %v1063 = vld [vmem:[%s999 + $0xfc] sm:$0xf]
      %v1064 = vld [vmem:[%s999 + $0x100] sm:$0xf]
      %v1065 = vld [vmem:[%s999 + $0x104] sm:$0xf]
      %v1066 = vld [vmem:[%s999 + $0x108] sm:$0xf]
      %v1067 = vld [vmem:[%s999 + $0x10c] sm:$0xf]
      %v1068 = vld [vmem:[%s999 + $0x110] sm:$0xf]
      %v1069 = vld [vmem:[%s999 + $0x114] sm:$0xf]
      %v1070 = vld [vmem:[%s999 + $0x118] sm:$0xf]
      %v1071 = vld [vmem:[%s999 + $0x11c] sm:$0xf]
      %v1072 = vld [vmem:[%s999 + $0x120] sm:$0xf]
      %v1073 = vld [vmem:[%s999 + $0x124] sm:$0xf]
      %v1074 = vld [vmem:[%s999 + $0x128] sm:$0xf]
      %v1075 = vld [vmem:[%s999 + $0x12c] sm:$0xf]
      %v1076 = vld [vmem:[%s999 + $0x130] sm:$0xf]
      %v1077 = vld [vmem:[%s999 + $0x134] sm:$0xf]
      %v1078 = vld [vmem:[%s999 + $0x138] sm:$0xf]
      %v1079 = vld [vmem:[%s999 + $0x13c] sm:$0xf]
      %v1080 = vld [vmem:[%s999 + $0x140] sm:$0xf]
      %v1081 = vld [vmem:[%s999 + $0x144] sm:$0xf]
      %v1082 = vld [vmem:[%s999 + $0x148] sm:$0xf]
      %v1083 = vld [vmem:[%s999 + $0x14c] sm:$0xf]
      %v1084 = vld [vmem:[%s999 + $0x150] sm:$0xf]
      %v1085 = vld [vmem:[%s999 + $0x154] sm:$0xf]
      %v1086 = vld [vmem:[%s999 + $0x158] sm:$0xf]
      %v1087 = vld [vmem:[%s999 + $0x15c] sm:$0xf]
      %v1088 = vld [vmem:[%s999 + $0x160] sm:$0xf]
      %v1089 = vld [vmem:[%s999 + $0x164] sm:$0xf]
      %v1090 = vld [vmem:[%s999 + $0x168] sm:$0xf]
      %v1091 = vld [vmem:[%s999 + $0x16c] sm:$0xf]
      %v1092 = vld [vmem:[%s999 + $0x170] sm:$0xf]
      %v1093 = vld [vmem:[%s999 + $0x174] sm:$0xf]
      %v1094 = vld [vmem:[%s999 + $0x178] sm:$0xf]
      %v1095 = vld [vmem:[%s999 + $0x17c] sm:$0xf]
      %v1096 = vld [vmem:[%s999 + $0x180] sm:$0xf]
      %v1097 = vld [vmem:[%s999 + $0x184] sm:$0xf]
      %v1098 = vld [vmem:[%s999 + $0x188] sm:$0xf]
      %v1099 = vld [vmem:[%s999 + $0x18c] sm:$0xf]
      %v1100 = vld [vmem:[%s999 + $0x190] sm:$0xf]
      %v1101 = vld [vmem:[%s999 + $0x194] sm:$0xf]
      %v1102 = vld [vmem:[%s999 + $0x198] sm:$0xf]
      %v1103 = vld [vmem:[%s999 + $0x19c] sm:$0xf]
      %v1104 = vld [vmem:[%s999 + $0x1a0] sm:$0xf]
      %v1105 = vld [vmem:[%s999 + $0x1a4] sm:$0xf]
      %v1106 = vld [vmem:[%s999 + $0x1a8] sm:$0xf]
      %v1107 = vld [vmem:[%s999 + $0x1ac] sm:$0xf]
      %v1108 = vld [vmem:[%s999 + $0x1b0] sm:$0xf]
      %v1109 = vld [vmem:[%s999 + $0x1b4] sm:$0xf]
      %v1110 = vld [vmem:[%s999 + $0x1b8] sm:$0xf]
      %v1111 = vld [vmem:[%s999 + $0x1bc] sm:$0xf]
      %v1112 = vld [vmem:[%s999 + $0x1c0] sm:$0xf]
      %v1113 = vld [vmem:[%s999 + $0x1c4] sm:$0xf]
      %v1114 = vld [vmem:[%s999 + $0x1c8] sm:$0xf]
      %v1115 = vld [vmem:[%s999 + $0x1cc] sm:$0xf]
      %v1116 = vld [vmem:[%s999 + $0x1d0] sm:$0xf]
      %v1117 = vld [vmem:[%s999 + $0x1d4] sm:$0xf]
      %v1118 = vld [vmem:[%s999 + $0x1d8] sm:$0xf]
      %v1119 = vld [vmem:[%s999 + $0x1dc] sm:$0xf]
      %v1120 = vld [vmem:[%s999 + $0x1e0] sm:$0xf]
      %v1121 = vld [vmem:[%s999 + $0x1e4] sm:$0xf]
      %v1122 = vld [vmem:[%s999 + $0x1e8] sm:$0xf]
      %v1123 = vld [vmem:[%s999 + $0x1ec] sm:$0xf]
      %v1124 = vld [vmem:[%s999 + $0x1f0] sm:$0xf]
      %v1125 = vld [vmem:[%s999 + $0x1f4] sm:$0xf]
      %v1126 = vld [vmem:[%s999 + $0x1f8] sm:$0xf]
      %v1127 = vld [vmem:[%s999 + $0x1fc] sm:$0xf]
      %v1160 = vunpack.c.l.b16 %v967
      %v1161 = vunpack.c.h.b16 %v967
      %v1162 = vunpack.c.l.b16 %v968
      %v1163 = vunpack.c.h.b16 %v968
      %v1164 = vunpack.c.l.b16 %v969
      %v1165 = vunpack.c.h.b16 %v969
      %v1166 = vunpack.c.l.b16 %v970
      %v1167 = vunpack.c.h.b16 %v970
      %v1168 = vunpack.c.l.b16 %v971
      %v1169 = vunpack.c.h.b16 %v971
      %v1170 = vunpack.c.l.b16 %v972
      %v1171 = vunpack.c.h.b16 %v972
      %v1172 = vunpack.c.l.b16 %v973
      %v1173 = vunpack.c.h.b16 %v973
      %v1174 = vunpack.c.l.b16 %v974
      %v1175 = vunpack.c.h.b16 %v974
      %v1176 = vunpack.c.l.b16 %v975
      %v1177 = vunpack.c.h.b16 %v975
      %v1178 = vunpack.c.l.b16 %v976
      %v1179 = vunpack.c.h.b16 %v976
      %v1180 = vunpack.c.l.b16 %v977
      %v1181 = vunpack.c.h.b16 %v977
      %v1182 = vunpack.c.l.b16 %v978
      %v1183 = vunpack.c.h.b16 %v978
      %v1184 = vunpack.c.l.b16 %v979
      %v1185 = vunpack.c.h.b16 %v979
      %v1186 = vunpack.c.l.b16 %v980
      %v1187 = vunpack.c.h.b16 %v980
      %v1188 = vunpack.c.l.b16 %v981
      %v1189 = vunpack.c.h.b16 %v981
      %v1190 = vunpack.c.l.b16 %v982
      %v1191 = vunpack.c.h.b16 %v982
      %v1192 = vunpack.c.l.b16 %v983
      %v1193 = vunpack.c.h.b16 %v983
      %v1194 = vunpack.c.l.b16 %v984
      %v1195 = vunpack.c.h.b16 %v984
      %v1196 = vunpack.c.l.b16 %v985
      %v1197 = vunpack.c.h.b16 %v985
      %v1198 = vunpack.c.l.b16 %v986
      %v1199 = vunpack.c.h.b16 %v986
      %v1200 = vunpack.c.l.b16 %v987
      %v1201 = vunpack.c.h.b16 %v987
      %v1202 = vunpack.c.l.b16 %v988
      %v1203 = vunpack.c.h.b16 %v988
      %v1204 = vunpack.c.l.b16 %v989
      %v1205 = vunpack.c.h.b16 %v989
      %v1206 = vunpack.c.l.b16 %v990
      %v1207 = vunpack.c.h.b16 %v990
      %v1208 = vunpack.c.l.b16 %v991
      %v1209 = vunpack.c.h.b16 %v991
      %v1210 = vunpack.c.l.b16 %v992
      %v1211 = vunpack.c.h.b16 %v992
      %v1212 = vunpack.c.l.b16 %v993
      %v1213 = vunpack.c.h.b16 %v993
      %v1214 = vunpack.c.l.b16 %v994
      %v1215 = vunpack.c.h.b16 %v994
      %v1216 = vunpack.c.l.b16 %v995
      %v1217 = vunpack.c.h.b16 %v995
      %v1218 = vunpack.c.l.b16 %v996
      %v1219 = vunpack.c.h.b16 %v996
      %v1220 = vunpack.c.l.b16 %v997
      %v1221 = vunpack.c.h.b16 %v997
      %v1222 = vunpack.c.l.b16 %v998
      %v1223 = vunpack.c.h.b16 %v998
      %v1224 = vpack.c.b16 %v1168, %v1160
      %v1225 = vpack.c.b16 %v1169, %v1161
      %v1226 = vpack.c.b16 %v1170, %v1162
      %v1227 = vpack.c.b16 %v1171, %v1163
      %v1228 = vpack.c.b16 %v1172, %v1164
      %v1229 = vpack.c.b16 %v1173, %v1165
      %v1230 = vpack.c.b16 %v1174, %v1166
      %v1231 = vpack.c.b16 %v1175, %v1167
      %v1232 = vpack.c.b16 %v1184, %v1176
      %v1233 = vpack.c.b16 %v1185, %v1177
      %v1234 = vpack.c.b16 %v1186, %v1178
      %v1235 = vpack.c.b16 %v1187, %v1179
      %v1236 = vpack.c.b16 %v1188, %v1180
      %v1237 = vpack.c.b16 %v1189, %v1181
      %v1238 = vpack.c.b16 %v1190, %v1182
      %v1239 = vpack.c.b16 %v1191, %v1183
      %v1240 = vpack.c.b16 %v1200, %v1192
      %v1241 = vpack.c.b16 %v1201, %v1193
      %v1242 = vpack.c.b16 %v1202, %v1194
      %v1243 = vpack.c.b16 %v1203, %v1195
      %v1244 = vpack.c.b16 %v1204, %v1196
      %v1245 = vpack.c.b16 %v1205, %v1197
      %v1246 = vpack.c.b16 %v1206, %v1198
      %v1247 = vpack.c.b16 %v1207, %v1199
      %v1248 = vpack.c.b16 %v1216, %v1208
      %v1249 = vpack.c.b16 %v1217, %v1209
      %v1250 = vpack.c.b16 %v1218, %v1210
      %v1251 = vpack.c.b16 %v1219, %v1211
      %v1252 = vpack.c.b16 %v1220, %v1212
      %v1253 = vpack.c.b16 %v1221, %v1213
      %v1254 = vpack.c.b16 %v1222, %v1214
      %v1255 = vpack.c.b16 %v1223, %v1215
      %v1416 = vunpack.c.l.b16 %v1000
      %v1417 = vunpack.c.l.b16 %v1001
      %v1418 = vunpack.c.l.b16 %v1002
      %v1419 = vunpack.c.l.b16 %v1003
      %v1420 = vunpack.c.l.b16 %v1004
      %v1421 = vunpack.c.l.b16 %v1005
      %v1422 = vunpack.c.l.b16 %v1006
      %v1423 = vunpack.c.l.b16 %v1007
      %v1424 = vunpack.c.l.b16 %v1008
      %v1425 = vunpack.c.l.b16 %v1009
      %v1426 = vunpack.c.l.b16 %v1010
      %v1427 = vunpack.c.l.b16 %v1011
      %v1428 = vunpack.c.l.b16 %v1012
      %v1429 = vunpack.c.l.b16 %v1013
      %v1430 = vunpack.c.l.b16 %v1014
      %v1431 = vunpack.c.l.b16 %v1015
      %v1432 = vunpack.c.l.b16 %v1016
      %v1433 = vunpack.c.l.b16 %v1017
      %v1434 = vunpack.c.l.b16 %v1018
      %v1435 = vunpack.c.l.b16 %v1019
      %v1436 = vunpack.c.l.b16 %v1020
      %v1437 = vunpack.c.l.b16 %v1021
      %v1438 = vunpack.c.l.b16 %v1022
      %v1439 = vunpack.c.l.b16 %v1023
      %v1440 = vunpack.c.l.b16 %v1024
      %v1441 = vunpack.c.l.b16 %v1025
      %v1442 = vunpack.c.l.b16 %v1026
      %v1443 = vunpack.c.l.b16 %v1027
      %v1444 = vunpack.c.l.b16 %v1028
      %v1445 = vunpack.c.l.b16 %v1029
      %v1446 = vunpack.c.l.b16 %v1030
      %v1447 = vunpack.c.l.b16 %v1031
      %v1448 = vunpack.c.l.b16 %v1032
      %v1449 = vunpack.c.l.b16 %v1033
      %v1450 = vunpack.c.l.b16 %v1034
      %v1451 = vunpack.c.l.b16 %v1035
      %v1452 = vunpack.c.l.b16 %v1036
      %v1453 = vunpack.c.l.b16 %v1037
      %v1454 = vunpack.c.l.b16 %v1038
      %v1455 = vunpack.c.l.b16 %v1039
      %v1456 = vunpack.c.l.b16 %v1040
      %v1457 = vunpack.c.l.b16 %v1041
      %v1458 = vunpack.c.l.b16 %v1042
      %v1459 = vunpack.c.l.b16 %v1043
      %v1460 = vunpack.c.l.b16 %v1044
      %v1461 = vunpack.c.l.b16 %v1045
      %v1462 = vunpack.c.l.b16 %v1046
      %v1463 = vunpack.c.l.b16 %v1047
      %v1464 = vunpack.c.l.b16 %v1048
      %v1465 = vunpack.c.l.b16 %v1049
      %v1466 = vunpack.c.l.b16 %v1050
      %v1467 = vunpack.c.l.b16 %v1051
      %v1468 = vunpack.c.l.b16 %v1052
      %v1469 = vunpack.c.l.b16 %v1053
      %v1470 = vunpack.c.l.b16 %v1054
      %v1471 = vunpack.c.l.b16 %v1055
      %v1472 = vunpack.c.l.b16 %v1056
      %v1473 = vunpack.c.l.b16 %v1057
      %v1474 = vunpack.c.l.b16 %v1058
      %v1475 = vunpack.c.l.b16 %v1059
      %v1476 = vunpack.c.l.b16 %v1060
      %v1477 = vunpack.c.l.b16 %v1061
      %v1478 = vunpack.c.l.b16 %v1062
      %v1479 = vunpack.c.l.b16 %v1063
      %v1480 = vunpack.c.l.b16 %v1064
      %v1481 = vunpack.c.l.b16 %v1065
      %v1482 = vunpack.c.l.b16 %v1066
      %v1483 = vunpack.c.l.b16 %v1067
      %v1484 = vunpack.c.l.b16 %v1068
      %v1485 = vunpack.c.l.b16 %v1069
      %v1486 = vunpack.c.l.b16 %v1070
      %v1487 = vunpack.c.l.b16 %v1071
      %v1488 = vunpack.c.l.b16 %v1072
      %v1489 = vunpack.c.l.b16 %v1073
      %v1490 = vunpack.c.l.b16 %v1074
      %v1491 = vunpack.c.l.b16 %v1075
      %v1492 = vunpack.c.l.b16 %v1076
      %v1493 = vunpack.c.l.b16 %v1077
      %v1494 = vunpack.c.l.b16 %v1078
      %v1495 = vunpack.c.l.b16 %v1079
      %v1496 = vunpack.c.l.b16 %v1080
      %v1497 = vunpack.c.l.b16 %v1081
      %v1498 = vunpack.c.l.b16 %v1082
      %v1499 = vunpack.c.l.b16 %v1083
      %v1500 = vunpack.c.l.b16 %v1084
      %v1501 = vunpack.c.l.b16 %v1085
      %v1502 = vunpack.c.l.b16 %v1086
      %v1503 = vunpack.c.l.b16 %v1087
      %v1504 = vunpack.c.l.b16 %v1088
      %v1505 = vunpack.c.l.b16 %v1089
      %v1506 = vunpack.c.l.b16 %v1090
      %v1507 = vunpack.c.l.b16 %v1091
      %v1508 = vunpack.c.l.b16 %v1092
      %v1509 = vunpack.c.l.b16 %v1093
      %v1510 = vunpack.c.l.b16 %v1094
      %v1511 = vunpack.c.l.b16 %v1095
      %v1512 = vunpack.c.l.b16 %v1096
      %v1513 = vunpack.c.l.b16 %v1097
      %v1514 = vunpack.c.l.b16 %v1098
      %v1515 = vunpack.c.l.b16 %v1099
      %v1516 = vunpack.c.l.b16 %v1100
      %v1517 = vunpack.c.l.b16 %v1101
      %v1518 = vunpack.c.l.b16 %v1102
      %v1519 = vunpack.c.l.b16 %v1103
      %v1520 = vunpack.c.l.b16 %v1104
      %v1521 = vunpack.c.l.b16 %v1105
      %v1522 = vunpack.c.l.b16 %v1106
      %v1523 = vunpack.c.l.b16 %v1107
      %v1524 = vunpack.c.l.b16 %v1108
      %v1525 = vunpack.c.l.b16 %v1109
      %v1526 = vunpack.c.l.b16 %v1110
      %v1527 = vunpack.c.l.b16 %v1111
      %v1528 = vunpack.c.l.b16 %v1112
      %v1529 = vunpack.c.l.b16 %v1113
      %v1530 = vunpack.c.l.b16 %v1114
      %v1531 = vunpack.c.l.b16 %v1115
      %v1532 = vunpack.c.l.b16 %v1116
      %v1533 = vunpack.c.l.b16 %v1117
      %v1534 = vunpack.c.l.b16 %v1118
      %v1535 = vunpack.c.l.b16 %v1119
      %v1536 = vunpack.c.l.b16 %v1120
      %v1537 = vunpack.c.l.b16 %v1121
      %v1538 = vunpack.c.l.b16 %v1122
      %v1539 = vunpack.c.l.b16 %v1123
      %v1540 = vunpack.c.l.b16 %v1124
      %v1541 = vunpack.c.l.b16 %v1125
      %v1542 = vunpack.c.l.b16 %v1126
      %v1543 = vunpack.c.l.b16 %v1127
      %v1544 = vpack.c.b16 %v1417, %v1416
      %v1545 = vpack.c.b16 %v1419, %v1418
      %v1546 = vpack.c.b16 %v1421, %v1420
      %v1547 = vpack.c.b16 %v1423, %v1422
      %v1548 = vpack.c.b16 %v1425, %v1424
      %v1549 = vpack.c.b16 %v1427, %v1426
      %v1550 = vpack.c.b16 %v1429, %v1428
      %v1551 = vpack.c.b16 %v1431, %v1430
      %v1552 = vpack.c.b16 %v1433, %v1432
      %v1553 = vpack.c.b16 %v1435, %v1434
      %v1554 = vpack.c.b16 %v1437, %v1436
      %v1555 = vpack.c.b16 %v1439, %v1438
      %v1556 = vpack.c.b16 %v1441, %v1440
      %v1557 = vpack.c.b16 %v1443, %v1442
      %v1558 = vpack.c.b16 %v1445, %v1444
      %v1559 = vpack.c.b16 %v1447, %v1446
      %v1560 = vpack.c.b16 %v1449, %v1448
      %v1561 = vpack.c.b16 %v1451, %v1450
      %v1562 = vpack.c.b16 %v1453, %v1452
      %v1563 = vpack.c.b16 %v1455, %v1454
      %v1564 = vpack.c.b16 %v1457, %v1456
      %v1565 = vpack.c.b16 %v1459, %v1458
      %v1566 = vpack.c.b16 %v1461, %v1460
      %v1567 = vpack.c.b16 %v1463, %v1462
      %v1568 = vpack.c.b16 %v1465, %v1464
      %v1569 = vpack.c.b16 %v1467, %v1466
      %v1570 = vpack.c.b16 %v1469, %v1468
      %v1571 = vpack.c.b16 %v1471, %v1470
      %v1572 = vpack.c.b16 %v1473, %v1472
      %v1573 = vpack.c.b16 %v1475, %v1474
      %v1574 = vpack.c.b16 %v1477, %v1476
      %v1575 = vpack.c.b16 %v1479, %v1478
      %v1576 = vpack.c.b16 %v1481, %v1480
      %v1577 = vpack.c.b16 %v1483, %v1482
      %v1578 = vpack.c.b16 %v1485, %v1484
      %v1579 = vpack.c.b16 %v1487, %v1486
      %v1580 = vpack.c.b16 %v1489, %v1488
      %v1581 = vpack.c.b16 %v1491, %v1490
      %v1582 = vpack.c.b16 %v1493, %v1492
      %v1583 = vpack.c.b16 %v1495, %v1494
      %v1584 = vpack.c.b16 %v1497, %v1496
      %v1585 = vpack.c.b16 %v1499, %v1498
      %v1586 = vpack.c.b16 %v1501, %v1500
      %v1587 = vpack.c.b16 %v1503, %v1502
      %v1588 = vpack.c.b16 %v1505, %v1504
      %v1589 = vpack.c.b16 %v1507, %v1506
      %v1590 = vpack.c.b16 %v1509, %v1508
      %v1591 = vpack.c.b16 %v1511, %v1510
      %v1592 = vpack.c.b16 %v1513, %v1512
      %v1593 = vpack.c.b16 %v1515, %v1514
      %v1594 = vpack.c.b16 %v1517, %v1516
      %v1595 = vpack.c.b16 %v1519, %v1518
      %v1596 = vpack.c.b16 %v1521, %v1520
      %v1597 = vpack.c.b16 %v1523, %v1522
      %v1598 = vpack.c.b16 %v1525, %v1524
      %v1599 = vpack.c.b16 %v1527, %v1526
      %v1600 = vpack.c.b16 %v1529, %v1528
      %v1601 = vpack.c.b16 %v1531, %v1530
      %v1602 = vpack.c.b16 %v1533, %v1532
      %v1603 = vpack.c.b16 %v1535, %v1534
      %v1604 = vpack.c.b16 %v1537, %v1536
      %v1605 = vpack.c.b16 %v1539, %v1538
      %v1606 = vpack.c.b16 %v1541, %v1540
      %v1607 = vpack.c.b16 %v1543, %v1542
      %1672 = vmatprep.subr.bf16.mxu0 0
      %1673 = vmatpush1.bf16.msra.mxu0 %v1551
      %1674 = vmatprep.subr.bf16.mxu0 0
      %1675 = vmatpush1.bf16.msra.mxu0 %v1550
      %1676 = vmatprep.subr.bf16.mxu0 0
      %1677 = vmatpush1.bf16.msra.mxu0 %v1549
      %1678 = vmatprep.subr.bf16.mxu0 0
      %1679 = vmatpush1.bf16.msra.mxu0 %v1548
      %1680 = vmatprep.subr.bf16.mxu0 0
      %1681 = vmatpush1.bf16.msra.mxu0 %v1547
      %1682 = vmatprep.subr.bf16.mxu0 0
      %1683 = vmatpush1.bf16.msra.mxu0 %v1546
      %1684 = vmatprep.subr.bf16.mxu0 0
      %1685 = vmatpush1.bf16.msra.mxu0 %v1545
      %1686 = vmatprep.subr.bf16.mxu0 0
      %1687 = vmatpush1.bf16.msra.mxu0 %v1544
      %1688 = vmatprep.subr.bf16.mxu0 0
      %1689 = vmatpush2.bf16.msra.mxu0 %v1559
      %1690 = vmatprep.subr.bf16.mxu0 0
      %1691 = vmatpush2.bf16.msra.mxu0 %v1558
      %1692 = vmatprep.subr.bf16.mxu0 0
      %1693 = vmatpush2.bf16.msra.mxu0 %v1557
      %1694 = vmatprep.subr.bf16.mxu0 0
      %1695 = vmatpush2.bf16.msra.mxu0 %v1556
      %1696 = vmatprep.subr.bf16.mxu0 0
      %1697 = vmatpush2.bf16.msra.mxu0 %v1555
      %1698 = vmatprep.subr.bf16.mxu0 0
      %1699 = vmatpush2.bf16.msra.mxu0 %v1554
      %1700 = vmatprep.subr.bf16.mxu0 0
      %1701 = vmatpush2.bf16.msra.mxu0 %v1553
      %1702 = vmatprep.subr.bf16.mxu0 0
      %1703 = vmatpush2.bf16.msra.mxu0 %v1552
      %1704 = vmatprep.mubr.bf16.mxu0 %v1225
      %1705 = vmatmul.mubr.bf16.gmra.mxu0 %v1224
      %v1706 = vpop.f32.mrf.mxu0
      %v1707 = vadd.f32 0.0, %v1706
      %v1708 = vpop.f32.mrf.mxu0
      %v1709 = vpop.f32.mrf.mxu0
      %v1710 = vadd.f32 0.0, %v1709
      %v1711 = vpop.f32.mrf.mxu0
      %1712 = vmatprep.mubr.bf16.mxu0 %v1233
      %1713 = vmatmul.mubr.bf16.gmra.mxu0 %v1232
      %v1714 = vpop.f32.mrf.mxu0
      %v1715 = vadd.f32 0.0, %v1714
      %v1716 = vpop.f32.mrf.mxu0
      %v1717 = vpop.f32.mrf.mxu0
      %v1718 = vadd.f32 0.0, %v1717
      %v1719 = vpop.f32.mrf.mxu0
      %1720 = vmatprep.mubr.bf16.mxu0 %v1241
      %1721 = vmatmul.mubr.bf16.gmra.mxu0 %v1240
      %v1722 = vpop.f32.mrf.mxu0
      %v1723 = vadd.f32 0.0, %v1722
      %v1724 = vpop.f32.mrf.mxu0
      %v1725 = vpop.f32.mrf.mxu0
      %v1726 = vadd.f32 0.0, %v1725
      %v1727 = vpop.f32.mrf.mxu0
      %1728 = vmatprep.mubr.bf16.mxu0 %v1249
      %1729 = vmatmul.mubr.bf16.gmra.mxu0 %v1248
      %v1730 = vpop.f32.mrf.mxu0
      %v1731 = vadd.f32 0.0, %v1730
      %v1732 = vpop.f32.mrf.mxu0
      %v1733 = vpop.f32.mrf.mxu0
      %v1734 = vadd.f32 0.0, %v1733
      %v1735 = vpop.f32.mrf.mxu0
      %1736 = vdwg.mxu0
      %1737 = vmatprep.subr.bf16.mxu0 0
      %1738 = vmatpush1.bf16.msra.mxu0 %v1567
      %1739 = vmatprep.subr.bf16.mxu0 0
      %1740 = vmatpush1.bf16.msra.mxu0 %v1566
      %1741 = vmatprep.subr.bf16.mxu0 0
      %1742 = vmatpush1.bf16.msra.mxu0 %v1565
      %1743 = vmatprep.subr.bf16.mxu0 0
      %1744 = vmatpush1.bf16.msra.mxu0 %v1564
      %1745 = vmatprep.subr.bf16.mxu0 0
      %1746 = vmatpush1.bf16.msra.mxu0 %v1563
      %1747 = vmatprep.subr.bf16.mxu0 0
      %1748 = vmatpush1.bf16.msra.mxu0 %v1562
      %1749 = vmatprep.subr.bf16.mxu0 0
      %1750 = vmatpush1.bf16.msra.mxu0 %v1561
      %1751 = vmatprep.subr.bf16.mxu0 0
      %1752 = vmatpush1.bf16.msra.mxu0 %v1560
      %1753 = vmatprep.subr.bf16.mxu0 0
      %1754 = vmatpush2.bf16.msra.mxu0 %v1575
      %1755 = vmatprep.subr.bf16.mxu0 0
      %1756 = vmatpush2.bf16.msra.mxu0 %v1574
      %1757 = vmatprep.subr.bf16.mxu0 0
      %1758 = vmatpush2.bf16.msra.mxu0 %v1573
      %1759 = vmatprep.subr.bf16.mxu0 0
      %1760 = vmatpush2.bf16.msra.mxu0 %v1572
      %1761 = vmatprep.subr.bf16.mxu0 0
      %1762 = vmatpush2.bf16.msra.mxu0 %v1571
      %1763 = vmatprep.subr.bf16.mxu0 0
      %1764 = vmatpush2.bf16.msra.mxu0 %v1570
      %1765 = vmatprep.subr.bf16.mxu0 0
      %1766 = vmatpush2.bf16.msra.mxu0 %v1569
      %1767 = vmatprep.subr.bf16.mxu0 0
      %1768 = vmatpush2.bf16.msra.mxu0 %v1568
      %1769 = vmatprep.mubr.bf16.mxu0 %v1227
      %1770 = vmatmul.mubr.bf16.gmra.mxu0 %v1226
      %v1771 = vpop.f32.mrf.mxu0
      %v1772 = vadd.f32 %v1707, %v1771
      %v1773 = vpop.f32.mrf.mxu0
      %v1774 = vpop.f32.mrf.mxu0
      %v1775 = vadd.f32 %v1710, %v1774
      %v1776 = vpop.f32.mrf.mxu0
      %1777 = vmatprep.mubr.bf16.mxu0 %v1235
      %1778 = vmatmul.mubr.bf16.gmra.mxu0 %v1234
      %v1779 = vpop.f32.mrf.mxu0
      %v1780 = vadd.f32 %v1715, %v1779
      %v1781 = vpop.f32.mrf.mxu0
      %v1782 = vpop.f32.mrf.mxu0
      %v1783 = vadd.f32 %v1718, %v1782
      %v1784 = vpop.f32.mrf.mxu0
      %1785 = vmatprep.mubr.bf16.mxu0 %v1243
      %1786 = vmatmul.mubr.bf16.gmra.mxu0 %v1242
      %v1787 = vpop.f32.mrf.mxu0
      %v1788 = vadd.f32 %v1723, %v1787
      %v1789 = vpop.f32.mrf.mxu0
      %v1790 = vpop.f32.mrf.mxu0
      %v1791 = vadd.f32 %v1726, %v1790
      %v1792 = vpop.f32.mrf.mxu0
      %1793 = vmatprep.mubr.bf16.mxu0 %v1251
      %1794 = vmatmul.mubr.bf16.gmra.mxu0 %v1250
      %v1795 = vpop.f32.mrf.mxu0
      %v1796 = vadd.f32 %v1731, %v1795
      %v1797 = vpop.f32.mrf.mxu0
      %v1798 = vpop.f32.mrf.mxu0
      %v1799 = vadd.f32 %v1734, %v1798
      %v1800 = vpop.f32.mrf.mxu0
      %1801 = vdwg.mxu0
      %1802 = vmatprep.subr.bf16.mxu0 0
      %1803 = vmatpush1.bf16.msra.mxu0 %v1583
      %1804 = vmatprep.subr.bf16.mxu0 0
      %1805 = vmatpush1.bf16.msra.mxu0 %v1582
      %1806 = vmatprep.subr.bf16.mxu0 0
      %1807 = vmatpush1.bf16.msra.mxu0 %v1581
      %1808 = vmatprep.subr.bf16.mxu0 0
      %1809 = vmatpush1.bf16.msra.mxu0 %v1580
      %1810 = vmatprep.subr.bf16.mxu0 0
      %1811 = vmatpush1.bf16.msra.mxu0 %v1579
      %1812 = vmatprep.subr.bf16.mxu0 0
      %1813 = vmatpush1.bf16.msra.mxu0 %v1578
      %1814 = vmatprep.subr.bf16.mxu0 0
      %1815 = vmatpush1.bf16.msra.mxu0 %v1577
      %1816 = vmatprep.subr.bf16.mxu0 0
      %1817 = vmatpush1.bf16.msra.mxu0 %v1576
      %1818 = vmatprep.subr.bf16.mxu0 0
      %1819 = vmatpush2.bf16.msra.mxu0 %v1591
      %1820 = vmatprep.subr.bf16.mxu0 0
      %1821 = vmatpush2.bf16.msra.mxu0 %v1590
      %1822 = vmatprep.subr.bf16.mxu0 0
      %1823 = vmatpush2.bf16.msra.mxu0 %v1589
      %1824 = vmatprep.subr.bf16.mxu0 0
      %1825 = vmatpush2.bf16.msra.mxu0 %v1588
      %1826 = vmatprep.subr.bf16.mxu0 0
      %1827 = vmatpush2.bf16.msra.mxu0 %v1587
      %1828 = vmatprep.subr.bf16.mxu0 0
      %1829 = vmatpush2.bf16.msra.mxu0 %v1586
      %1830 = vmatprep.subr.bf16.mxu0 0
      %1831 = vmatpush2.bf16.msra.mxu0 %v1585
      %1832 = vmatprep.subr.bf16.mxu0 0
      %1833 = vmatpush2.bf16.msra.mxu0 %v1584
      %1834 = vmatprep.mubr.bf16.mxu0 %v1229
      %1835 = vmatmul.mubr.bf16.gmra.mxu0 %v1228
      %v1836 = vpop.f32.mrf.mxu0
      %v1837 = vadd.f32 %v1772, %v1836
      %v1838 = vpop.f32.mrf.mxu0
      %v1839 = vpop.f32.mrf.mxu0
      %v1840 = vadd.f32 %v1775, %v1839
      %v1841 = vpop.f32.mrf.mxu0
      %1842 = vmatprep.mubr.bf16.mxu0 %v1237
      %1843 = vmatmul.mubr.bf16.gmra.mxu0 %v1236
      %v1844 = vpop.f32.mrf.mxu0
      %v1845 = vadd.f32 %v1780, %v1844
      %v1846 = vpop.f32.mrf.mxu0
      %v1847 = vpop.f32.mrf.mxu0
      %v1848 = vadd.f32 %v1783, %v1847
      %v1849 = vpop.f32.mrf.mxu0
      %1850 = vmatprep.mubr.bf16.mxu0 %v1245
      %1851 = vmatmul.mubr.bf16.gmra.mxu0 %v1244
      %v1852 = vpop.f32.mrf.mxu0
      %v1853 = vadd.f32 %v1788, %v1852
      %v1854 = vpop.f32.mrf.mxu0
      %v1855 = vpop.f32.mrf.mxu0
      %v1856 = vadd.f32 %v1791, %v1855
      %v1857 = vpop.f32.mrf.mxu0
      %1858 = vmatprep.mubr.bf16.mxu0 %v1253
      %1859 = vmatmul.mubr.bf16.gmra.mxu0 %v1252
      %v1860 = vpop.f32.mrf.mxu0
      %v1861 = vadd.f32 %v1796, %v1860
      %v1862 = vpop.f32.mrf.mxu0
      %v1863 = vpop.f32.mrf.mxu0
      %v1864 = vadd.f32 %v1799, %v1863
      %v1865 = vpop.f32.mrf.mxu0
      %1866 = vdwg.mxu0
      %1867 = vmatprep.subr.bf16.mxu0 0
      %1868 = vmatpush1.bf16.msra.mxu0 %v1599
      %1869 = vmatprep.subr.bf16.mxu0 0
      %1870 = vmatpush1.bf16.msra.mxu0 %v1598
      %1871 = vmatprep.subr.bf16.mxu0 0
      %1872 = vmatpush1.bf16.msra.mxu0 %v1597
      %1873 = vmatprep.subr.bf16.mxu0 0
      %1874 = vmatpush1.bf16.msra.mxu0 %v1596
      %1875 = vmatprep.subr.bf16.mxu0 0
      %1876 = vmatpush1.bf16.msra.mxu0 %v1595
      %1877 = vmatprep.subr.bf16.mxu0 0
      %1878 = vmatpush1.bf16.msra.mxu0 %v1594
      %1879 = vmatprep.subr.bf16.mxu0 0
      %1880 = vmatpush1.bf16.msra.mxu0 %v1593
      %1881 = vmatprep.subr.bf16.mxu0 0
      %1882 = vmatpush1.bf16.msra.mxu0 %v1592
      %1883 = vmatprep.subr.bf16.mxu0 0
      %1884 = vmatpush2.bf16.msra.mxu0 %v1607
      %1885 = vmatprep.subr.bf16.mxu0 0
      %1886 = vmatpush2.bf16.msra.mxu0 %v1606
      %1887 = vmatprep.subr.bf16.mxu0 0
      %1888 = vmatpush2.bf16.msra.mxu0 %v1605
      %1889 = vmatprep.subr.bf16.mxu0 0
      %1890 = vmatpush2.bf16.msra.mxu0 %v1604
      %1891 = vmatprep.subr.bf16.mxu0 0
      %1892 = vmatpush2.bf16.msra.mxu0 %v1603
      %1893 = vmatprep.subr.bf16.mxu0 0
      %1894 = vmatpush2.bf16.msra.mxu0 %v1602
      %1895 = vmatprep.subr.bf16.mxu0 0
      %1896 = vmatpush2.bf16.msra.mxu0 %v1601
      %1897 = vmatprep.subr.bf16.mxu0 0
      %1898 = vmatpush2.bf16.msra.mxu0 %v1600
      %1899 = vmatprep.mubr.bf16.mxu0 %v1231
      %1900 = vmatmul.mubr.bf16.gmra.mxu0 %v1230
      %v1901 = vpop.f32.mrf.mxu0
      %v1902 = vadd.f32 %v1837, %v1901
      %v1903 = vpop.f32.mrf.mxu0
      %v1904 = vpop.f32.mrf.mxu0
      %v1905 = vadd.f32 %v1840, %v1904
      %v1906 = vpop.f32.mrf.mxu0
      %1907 = vmatprep.mubr.bf16.mxu0 %v1239
      %1908 = vmatmul.mubr.bf16.gmra.mxu0 %v1238
      %v1909 = vpop.f32.mrf.mxu0
      %v1910 = vadd.f32 %v1845, %v1909
      %v1911 = vpop.f32.mrf.mxu0
      %v1912 = vpop.f32.mrf.mxu0
      %v1913 = vadd.f32 %v1848, %v1912
      %v1914 = vpop.f32.mrf.mxu0
      %1915 = vmatprep.mubr.bf16.mxu0 %v1247
      %1916 = vmatmul.mubr.bf16.gmra.mxu0 %v1246
      %v1917 = vpop.f32.mrf.mxu0
      %v1918 = vadd.f32 %v1853, %v1917
      %v1919 = vpop.f32.mrf.mxu0
      %v1920 = vpop.f32.mrf.mxu0
      %v1921 = vadd.f32 %v1856, %v1920
      %v1922 = vpop.f32.mrf.mxu0
      %1923 = vmatprep.mubr.bf16.mxu0 %v1255
      %1924 = vmatmul.mubr.bf16.gmra.mxu0 %v1254
      %v1925 = vpop.f32.mrf.mxu0
      %v1926 = vadd.f32 %v1861, %v1925
      %v1927 = vpop.f32.mrf.mxu0
      %v1928 = vpop.f32.mrf.mxu0
      %v1929 = vadd.f32 %v1864, %v1928
      %v1930 = vpop.f32.mrf.mxu0
      %1931 = vdwg.mxu0
      %v1964 = vunpack.c.l.b16 %v806
      %v1965 = vunpack.c.h.b16 %v806
      %v1966 = vunpack.c.l.b16 %v807
      %v1967 = vunpack.c.h.b16 %v807
      %v1968 = vunpack.c.l.b16 %v808
      %v1969 = vunpack.c.h.b16 %v808
      %v1970 = vunpack.c.l.b16 %v809
      %v1971 = vunpack.c.h.b16 %v809
      %v1972 = vunpack.c.l.b16 %v810
      %v1973 = vunpack.c.h.b16 %v810
      %v1974 = vunpack.c.l.b16 %v811
      %v1975 = vunpack.c.h.b16 %v811
      %v1976 = vunpack.c.l.b16 %v812
      %v1977 = vunpack.c.h.b16 %v812
      %v1978 = vunpack.c.l.b16 %v813
      %v1979 = vunpack.c.h.b16 %v813
      %v1980 = vunpack.c.l.b16 %v814
      %v1981 = vunpack.c.h.b16 %v814
      %v1982 = vunpack.c.l.b16 %v815
      %v1983 = vunpack.c.h.b16 %v815
      %v1984 = vunpack.c.l.b16 %v816
      %v1985 = vunpack.c.h.b16 %v816
      %v1986 = vunpack.c.l.b16 %v817
      %v1987 = vunpack.c.h.b16 %v817
      %v1988 = vunpack.c.l.b16 %v818
      %v1989 = vunpack.c.h.b16 %v818
      %v1990 = vunpack.c.l.b16 %v819
      %v1991 = vunpack.c.h.b16 %v819
      %v1992 = vunpack.c.l.b16 %v820
      %v1993 = vunpack.c.h.b16 %v820
      %v1994 = vunpack.c.l.b16 %v821
      %v1995 = vunpack.c.h.b16 %v821
      %v1996 = vunpack.c.l.b16 %v822
      %v1997 = vunpack.c.h.b16 %v822
      %v1998 = vunpack.c.l.b16 %v823
      %v1999 = vunpack.c.h.b16 %v823
      %v2000 = vunpack.c.l.b16 %v824
      %v2001 = vunpack.c.h.b16 %v824
      %v2002 = vunpack.c.l.b16 %v825
      %v2003 = vunpack.c.h.b16 %v825
      %v2004 = vunpack.c.l.b16 %v826
      %v2005 = vunpack.c.h.b16 %v826
      %v2006 = vunpack.c.l.b16 %v827
      %v2007 = vunpack.c.h.b16 %v827
      %v2008 = vunpack.c.l.b16 %v828
      %v2009 = vunpack.c.h.b16 %v828
      %v2010 = vunpack.c.l.b16 %v829
      %v2011 = vunpack.c.h.b16 %v829
      %v2012 = vunpack.c.l.b16 %v830
      %v2013 = vunpack.c.h.b16 %v830
      %v2014 = vunpack.c.l.b16 %v831
      %v2015 = vunpack.c.h.b16 %v831
      %v2016 = vunpack.c.l.b16 %v832
      %v2017 = vunpack.c.h.b16 %v832
      %v2018 = vunpack.c.l.b16 %v833
      %v2019 = vunpack.c.h.b16 %v833
      %v2020 = vunpack.c.l.b16 %v834
      %v2021 = vunpack.c.h.b16 %v834
      %v2022 = vunpack.c.l.b16 %v835
      %v2023 = vunpack.c.h.b16 %v835
      %v2024 = vunpack.c.l.b16 %v836
      %v2025 = vunpack.c.h.b16 %v836
      %v2026 = vunpack.c.l.b16 %v837
      %v2027 = vunpack.c.h.b16 %v837
      %v2028 = vpack.c.b16 %v1972, %v1964
      %v2029 = vpack.c.b16 %v1973, %v1965
      %v2030 = vpack.c.b16 %v1974, %v1966
      %v2031 = vpack.c.b16 %v1975, %v1967
      %v2032 = vpack.c.b16 %v1976, %v1968
      %v2033 = vpack.c.b16 %v1977, %v1969
      %v2034 = vpack.c.b16 %v1978, %v1970
      %v2035 = vpack.c.b16 %v1979, %v1971
      %v2036 = vpack.c.b16 %v1988, %v1980
      %v2037 = vpack.c.b16 %v1989, %v1981
      %v2038 = vpack.c.b16 %v1990, %v1982
      %v2039 = vpack.c.b16 %v1991, %v1983
      %v2040 = vpack.c.b16 %v1992, %v1984
      %v2041 = vpack.c.b16 %v1993, %v1985
      %v2042 = vpack.c.b16 %v1994, %v1986
      %v2043 = vpack.c.b16 %v1995, %v1987
      %v2044 = vpack.c.b16 %v2004, %v1996
      %v2045 = vpack.c.b16 %v2005, %v1997
      %v2046 = vpack.c.b16 %v2006, %v1998
      %v2047 = vpack.c.b16 %v2007, %v1999
      %v2048 = vpack.c.b16 %v2008, %v2000
      %v2049 = vpack.c.b16 %v2009, %v2001
      %v2050 = vpack.c.b16 %v2010, %v2002
      %v2051 = vpack.c.b16 %v2011, %v2003
      %v2052 = vpack.c.b16 %v2020, %v2012
      %v2053 = vpack.c.b16 %v2021, %v2013
      %v2054 = vpack.c.b16 %v2022, %v2014
      %v2055 = vpack.c.b16 %v2023, %v2015
      %v2056 = vpack.c.b16 %v2024, %v2016
      %v2057 = vpack.c.b16 %v2025, %v2017
      %v2058 = vpack.c.b16 %v2026, %v2018
      %v2059 = vpack.c.b16 %v2027, %v2019
      %v2220 = vunpack.c.l.b16 %v838
      %v2221 = vunpack.c.l.b16 %v839
      %v2222 = vunpack.c.l.b16 %v840
      %v2223 = vunpack.c.l.b16 %v841
      %v2224 = vunpack.c.l.b16 %v842
      %v2225 = vunpack.c.l.b16 %v843
      %v2226 = vunpack.c.l.b16 %v844
      %v2227 = vunpack.c.l.b16 %v845
      %v2228 = vunpack.c.l.b16 %v846
      %v2229 = vunpack.c.l.b16 %v847
      %v2230 = vunpack.c.l.b16 %v848
      %v2231 = vunpack.c.l.b16 %v849
      %v2232 = vunpack.c.l.b16 %v850
      %v2233 = vunpack.c.l.b16 %v851
      %v2234 = vunpack.c.l.b16 %v852
      %v2235 = vunpack.c.l.b16 %v853
      %v2236 = vunpack.c.l.b16 %v854
      %v2237 = vunpack.c.l.b16 %v855
      %v2238 = vunpack.c.l.b16 %v856
      %v2239 = vunpack.c.l.b16 %v857
      %v2240 = vunpack.c.l.b16 %v858
      %v2241 = vunpack.c.l.b16 %v859
      %v2242 = vunpack.c.l.b16 %v860
      %v2243 = vunpack.c.l.b16 %v861
      %v2244 = vunpack.c.l.b16 %v862
      %v2245 = vunpack.c.l.b16 %v863
      %v2246 = vunpack.c.l.b16 %v864
      %v2247 = vunpack.c.l.b16 %v865
      %v2248 = vunpack.c.l.b16 %v866
      %v2249 = vunpack.c.l.b16 %v867
      %v2250 = vunpack.c.l.b16 %v868
      %v2251 = vunpack.c.l.b16 %v869
      %v2252 = vunpack.c.l.b16 %v870
      %v2253 = vunpack.c.l.b16 %v871
      %v2254 = vunpack.c.l.b16 %v872
      %v2255 = vunpack.c.l.b16 %v873
      %v2256 = vunpack.c.l.b16 %v874
      %v2257 = vunpack.c.l.b16 %v875
      %v2258 = vunpack.c.l.b16 %v876
      %v2259 = vunpack.c.l.b16 %v877
      %v2260 = vunpack.c.l.b16 %v878
      %v2261 = vunpack.c.l.b16 %v879
      %v2262 = vunpack.c.l.b16 %v880
      %v2263 = vunpack.c.l.b16 %v881
      %v2264 = vunpack.c.l.b16 %v882
      %v2265 = vunpack.c.l.b16 %v883
      %v2266 = vunpack.c.l.b16 %v884
      %v2267 = vunpack.c.l.b16 %v885
      %v2268 = vunpack.c.l.b16 %v886
      %v2269 = vunpack.c.l.b16 %v887
      %v2270 = vunpack.c.l.b16 %v888
      %v2271 = vunpack.c.l.b16 %v889
      %v2272 = vunpack.c.l.b16 %v890
      %v2273 = vunpack.c.l.b16 %v891
      %v2274 = vunpack.c.l.b16 %v892
      %v2275 = vunpack.c.l.b16 %v893
      %v2276 = vunpack.c.l.b16 %v894
      %v2277 = vunpack.c.l.b16 %v895
      %v2278 = vunpack.c.l.b16 %v896
      %v2279 = vunpack.c.l.b16 %v897
      %v2280 = vunpack.c.l.b16 %v898
      %v2281 = vunpack.c.l.b16 %v899
      %v2282 = vunpack.c.l.b16 %v900
      %v2283 = vunpack.c.l.b16 %v901
      %v2284 = vunpack.c.l.b16 %v902
      %v2285 = vunpack.c.l.b16 %v903
      %v2286 = vunpack.c.l.b16 %v904
      %v2287 = vunpack.c.l.b16 %v905
      %v2288 = vunpack.c.l.b16 %v906
      %v2289 = vunpack.c.l.b16 %v907
      %v2290 = vunpack.c.l.b16 %v908
      %v2291 = vunpack.c.l.b16 %v909
      %v2292 = vunpack.c.l.b16 %v910
      %v2293 = vunpack.c.l.b16 %v911
      %v2294 = vunpack.c.l.b16 %v912
      %v2295 = vunpack.c.l.b16 %v913
      %v2296 = vunpack.c.l.b16 %v914
      %v2297 = vunpack.c.l.b16 %v915
      %v2298 = vunpack.c.l.b16 %v916
      %v2299 = vunpack.c.l.b16 %v917
      %v2300 = vunpack.c.l.b16 %v918
      %v2301 = vunpack.c.l.b16 %v919
      %v2302 = vunpack.c.l.b16 %v920
      %v2303 = vunpack.c.l.b16 %v921
      %v2304 = vunpack.c.l.b16 %v922
      %v2305 = vunpack.c.l.b16 %v923
      %v2306 = vunpack.c.l.b16 %v924
      %v2307 = vunpack.c.l.b16 %v925
      %v2308 = vunpack.c.l.b16 %v926
      %v2309 = vunpack.c.l.b16 %v927
      %v2310 = vunpack.c.l.b16 %v928
      %v2311 = vunpack.c.l.b16 %v929
      %v2312 = vunpack.c.l.b16 %v930
      %v2313 = vunpack.c.l.b16 %v931
      %v2314 = vunpack.c.l.b16 %v932
      %v2315 = vunpack.c.l.b16 %v933
      %v2316 = vunpack.c.l.b16 %v934
      %v2317 = vunpack.c.l.b16 %v935
      %v2318 = vunpack.c.l.b16 %v936
      %v2319 = vunpack.c.l.b16 %v937
      %v2320 = vunpack.c.l.b16 %v938
      %v2321 = vunpack.c.l.b16 %v939
      %v2322 = vunpack.c.l.b16 %v940
      %v2323 = vunpack.c.l.b16 %v941
      %v2324 = vunpack.c.l.b16 %v942
      %v2325 = vunpack.c.l.b16 %v943
      %v2326 = vunpack.c.l.b16 %v944
      %v2327 = vunpack.c.l.b16 %v945
      %v2328 = vunpack.c.l.b16 %v946
      %v2329 = vunpack.c.l.b16 %v947
      %v2330 = vunpack.c.l.b16 %v948
      %v2331 = vunpack.c.l.b16 %v949
      %v2332 = vunpack.c.l.b16 %v950
      %v2333 = vunpack.c.l.b16 %v951
      %v2334 = vunpack.c.l.b16 %v952
      %v2335 = vunpack.c.l.b16 %v953
      %v2336 = vunpack.c.l.b16 %v954
      %v2337 = vunpack.c.l.b16 %v955
      %v2338 = vunpack.c.l.b16 %v956
      %v2339 = vunpack.c.l.b16 %v957
      %v2340 = vunpack.c.l.b16 %v958
      %v2341 = vunpack.c.l.b16 %v959
      %v2342 = vunpack.c.l.b16 %v960
      %v2343 = vunpack.c.l.b16 %v961
      %v2344 = vunpack.c.l.b16 %v962
      %v2345 = vunpack.c.l.b16 %v963
      %v2346 = vunpack.c.l.b16 %v964
      %v2347 = vunpack.c.l.b16 %v965
      %v2348 = vpack.c.b16 %v2221, %v2220
      %v2349 = vpack.c.b16 %v2223, %v2222
      %v2350 = vpack.c.b16 %v2225, %v2224
      %v2351 = vpack.c.b16 %v2227, %v2226
      %v2352 = vpack.c.b16 %v2229, %v2228
      %v2353 = vpack.c.b16 %v2231, %v2230
      %v2354 = vpack.c.b16 %v2233, %v2232
      %v2355 = vpack.c.b16 %v2235, %v2234
      %v2356 = vpack.c.b16 %v2237, %v2236
      %v2357 = vpack.c.b16 %v2239, %v2238
      %v2358 = vpack.c.b16 %v2241, %v2240
      %v2359 = vpack.c.b16 %v2243, %v2242
      %v2360 = vpack.c.b16 %v2245, %v2244
      %v2361 = vpack.c.b16 %v2247, %v2246
      %v2362 = vpack.c.b16 %v2249, %v2248
      %v2363 = vpack.c.b16 %v2251, %v2250
      %v2364 = vpack.c.b16 %v2253, %v2252
      %v2365 = vpack.c.b16 %v2255, %v2254
      %v2366 = vpack.c.b16 %v2257, %v2256
      %v2367 = vpack.c.b16 %v2259, %v2258
      %v2368 = vpack.c.b16 %v2261, %v2260
      %v2369 = vpack.c.b16 %v2263, %v2262
      %v2370 = vpack.c.b16 %v2265, %v2264
      %v2371 = vpack.c.b16 %v2267, %v2266
      %v2372 = vpack.c.b16 %v2269, %v2268
      %v2373 = vpack.c.b16 %v2271, %v2270
      %v2374 = vpack.c.b16 %v2273, %v2272
      %v2375 = vpack.c.b16 %v2275, %v2274
      %v2376 = vpack.c.b16 %v2277, %v2276
      %v2377 = vpack.c.b16 %v2279, %v2278
      %v2378 = vpack.c.b16 %v2281, %v2280
      %v2379 = vpack.c.b16 %v2283, %v2282
      %v2380 = vpack.c.b16 %v2285, %v2284
      %v2381 = vpack.c.b16 %v2287, %v2286
      %v2382 = vpack.c.b16 %v2289, %v2288
      %v2383 = vpack.c.b16 %v2291, %v2290
      %v2384 = vpack.c.b16 %v2293, %v2292
      %v2385 = vpack.c.b16 %v2295, %v2294
      %v2386 = vpack.c.b16 %v2297, %v2296
      %v2387 = vpack.c.b16 %v2299, %v2298
      %v2388 = vpack.c.b16 %v2301, %v2300
      %v2389 = vpack.c.b16 %v2303, %v2302
      %v2390 = vpack.c.b16 %v2305, %v2304
      %v2391 = vpack.c.b16 %v2307, %v2306
      %v2392 = vpack.c.b16 %v2309, %v2308
      %v2393 = vpack.c.b16 %v2311, %v2310
      %v2394 = vpack.c.b16 %v2313, %v2312
      %v2395 = vpack.c.b16 %v2315, %v2314
      %v2396 = vpack.c.b16 %v2317, %v2316
      %v2397 = vpack.c.b16 %v2319, %v2318
      %v2398 = vpack.c.b16 %v2321, %v2320
      %v2399 = vpack.c.b16 %v2323, %v2322
      %v2400 = vpack.c.b16 %v2325, %v2324
      %v2401 = vpack.c.b16 %v2327, %v2326
      %v2402 = vpack.c.b16 %v2329, %v2328
      %v2403 = vpack.c.b16 %v2331, %v2330
      %v2404 = vpack.c.b16 %v2333, %v2332
      %v2405 = vpack.c.b16 %v2335, %v2334
      %v2406 = vpack.c.b16 %v2337, %v2336
      %v2407 = vpack.c.b16 %v2339, %v2338
      %v2408 = vpack.c.b16 %v2341, %v2340
      %v2409 = vpack.c.b16 %v2343, %v2342
      %v2410 = vpack.c.b16 %v2345, %v2344
      %v2411 = vpack.c.b16 %v2347, %v2346
      %2476 = vmatprep.subr.bf16.mxu0 0
      %2477 = vmatpush1.bf16.msra.mxu0 %v2355
      %2478 = vmatprep.subr.bf16.mxu0 0
      %2479 = vmatpush1.bf16.msra.mxu0 %v2354
      %2480 = vmatprep.subr.bf16.mxu0 0
      %2481 = vmatpush1.bf16.msra.mxu0 %v2353
      %2482 = vmatprep.subr.bf16.mxu0 0
      %2483 = vmatpush1.bf16.msra.mxu0 %v2352
      %2484 = vmatprep.subr.bf16.mxu0 0
      %2485 = vmatpush1.bf16.msra.mxu0 %v2351
      %2486 = vmatprep.subr.bf16.mxu0 0
      %2487 = vmatpush1.bf16.msra.mxu0 %v2350
      %2488 = vmatprep.subr.bf16.mxu0 0
      %2489 = vmatpush1.bf16.msra.mxu0 %v2349
      %2490 = vmatprep.subr.bf16.mxu0 0
      %2491 = vmatpush1.bf16.msra.mxu0 %v2348
      %2492 = vmatprep.subr.bf16.mxu0 0
      %2493 = vmatpush2.bf16.msra.mxu0 %v2363
      %2494 = vmatprep.subr.bf16.mxu0 0
      %2495 = vmatpush2.bf16.msra.mxu0 %v2362
      %2496 = vmatprep.subr.bf16.mxu0 0
      %2497 = vmatpush2.bf16.msra.mxu0 %v2361
      %2498 = vmatprep.subr.bf16.mxu0 0
      %2499 = vmatpush2.bf16.msra.mxu0 %v2360
      %2500 = vmatprep.subr.bf16.mxu0 0
      %2501 = vmatpush2.bf16.msra.mxu0 %v2359
      %2502 = vmatprep.subr.bf16.mxu0 0
      %2503 = vmatpush2.bf16.msra.mxu0 %v2358
      %2504 = vmatprep.subr.bf16.mxu0 0
      %2505 = vmatpush2.bf16.msra.mxu0 %v2357
      %2506 = vmatprep.subr.bf16.mxu0 0
      %2507 = vmatpush2.bf16.msra.mxu0 %v2356
      %2508 = vmatprep.mubr.bf16.mxu0 %v2029
      %2509 = vmatmul.mubr.bf16.gmra.mxu0 %v2028
      %v2510 = vpop.f32.mrf.mxu0
      %v2511 = vadd.f32 %v1902, %v2510
      %v2512 = vpop.f32.mrf.mxu0
      %v2513 = vpop.f32.mrf.mxu0
      %v2514 = vadd.f32 %v1905, %v2513
      %v2515 = vpop.f32.mrf.mxu0
      %2516 = vmatprep.mubr.bf16.mxu0 %v2037
      %2517 = vmatmul.mubr.bf16.gmra.mxu0 %v2036
      %v2518 = vpop.f32.mrf.mxu0
      %v2519 = vadd.f32 %v1910, %v2518
      %v2520 = vpop.f32.mrf.mxu0
      %v2521 = vpop.f32.mrf.mxu0
      %v2522 = vadd.f32 %v1913, %v2521
      %v2523 = vpop.f32.mrf.mxu0
      %2524 = vmatprep.mubr.bf16.mxu0 %v2045
      %2525 = vmatmul.mubr.bf16.gmra.mxu0 %v2044
      %v2526 = vpop.f32.mrf.mxu0
      %v2527 = vadd.f32 %v1918, %v2526
      %v2528 = vpop.f32.mrf.mxu0
      %v2529 = vpop.f32.mrf.mxu0
      %v2530 = vadd.f32 %v1921, %v2529
      %v2531 = vpop.f32.mrf.mxu0
      %2532 = vmatprep.mubr.bf16.mxu0 %v2053
      %2533 = vmatmul.mubr.bf16.gmra.mxu0 %v2052
      %v2534 = vpop.f32.mrf.mxu0
      %v2535 = vadd.f32 %v1926, %v2534
      %v2536 = vpop.f32.mrf.mxu0
      %v2537 = vpop.f32.mrf.mxu0
      %v2538 = vadd.f32 %v1929, %v2537
      %v2539 = vpop.f32.mrf.mxu0
      %2540 = vdwg.mxu0
      %2541 = vmatprep.subr.bf16.mxu0 0
      %2542 = vmatpush1.bf16.msra.mxu0 %v2371
      %2543 = vmatprep.subr.bf16.mxu0 0
      %2544 = vmatpush1.bf16.msra.mxu0 %v2370
      %2545 = vmatprep.subr.bf16.mxu0 0
      %2546 = vmatpush1.bf16.msra.mxu0 %v2369
      %2547 = vmatprep.subr.bf16.mxu0 0
      %2548 = vmatpush1.bf16.msra.mxu0 %v2368
      %2549 = vmatprep.subr.bf16.mxu0 0
      %2550 = vmatpush1.bf16.msra.mxu0 %v2367
      %2551 = vmatprep.subr.bf16.mxu0 0
      %2552 = vmatpush1.bf16.msra.mxu0 %v2366
      %2553 = vmatprep.subr.bf16.mxu0 0
      %2554 = vmatpush1.bf16.msra.mxu0 %v2365
      %2555 = vmatprep.subr.bf16.mxu0 0
      %2556 = vmatpush1.bf16.msra.mxu0 %v2364
      %2557 = vmatprep.subr.bf16.mxu0 0
      %2558 = vmatpush2.bf16.msra.mxu0 %v2379
      %2559 = vmatprep.subr.bf16.mxu0 0
      %2560 = vmatpush2.bf16.msra.mxu0 %v2378
      %2561 = vmatprep.subr.bf16.mxu0 0
      %2562 = vmatpush2.bf16.msra.mxu0 %v2377
      %2563 = vmatprep.subr.bf16.mxu0 0
      %2564 = vmatpush2.bf16.msra.mxu0 %v2376
      %2565 = vmatprep.subr.bf16.mxu0 0
      %2566 = vmatpush2.bf16.msra.mxu0 %v2375
      %2567 = vmatprep.subr.bf16.mxu0 0
      %2568 = vmatpush2.bf16.msra.mxu0 %v2374
      %2569 = vmatprep.subr.bf16.mxu0 0
      %2570 = vmatpush2.bf16.msra.mxu0 %v2373
      %2571 = vmatprep.subr.bf16.mxu0 0
      %2572 = vmatpush2.bf16.msra.mxu0 %v2372
      %2573 = vmatprep.mubr.bf16.mxu0 %v2031
      %2574 = vmatmul.mubr.bf16.gmra.mxu0 %v2030
      %v2575 = vpop.f32.mrf.mxu0
      %v2576 = vadd.f32 %v2511, %v2575
      %v2577 = vpop.f32.mrf.mxu0
      %v2578 = vpop.f32.mrf.mxu0
      %v2579 = vadd.f32 %v2514, %v2578
      %v2580 = vpop.f32.mrf.mxu0
      %2581 = vmatprep.mubr.bf16.mxu0 %v2039
      %2582 = vmatmul.mubr.bf16.gmra.mxu0 %v2038
      %v2583 = vpop.f32.mrf.mxu0
      %v2584 = vadd.f32 %v2519, %v2583
      %v2585 = vpop.f32.mrf.mxu0
      %v2586 = vpop.f32.mrf.mxu0
      %v2587 = vadd.f32 %v2522, %v2586
      %v2588 = vpop.f32.mrf.mxu0
      %2589 = vmatprep.mubr.bf16.mxu0 %v2047
      %2590 = vmatmul.mubr.bf16.gmra.mxu0 %v2046
      %v2591 = vpop.f32.mrf.mxu0
      %v2592 = vadd.f32 %v2527, %v2591
      %v2593 = vpop.f32.mrf.mxu0
      %v2594 = vpop.f32.mrf.mxu0
      %v2595 = vadd.f32 %v2530, %v2594
      %v2596 = vpop.f32.mrf.mxu0
      %2597 = vmatprep.mubr.bf16.mxu0 %v2055
      %2598 = vmatmul.mubr.bf16.gmra.mxu0 %v2054
      %v2599 = vpop.f32.mrf.mxu0
      %v2600 = vadd.f32 %v2535, %v2599
      %v2601 = vpop.f32.mrf.mxu0
      %v2602 = vpop.f32.mrf.mxu0
      %v2603 = vadd.f32 %v2538, %v2602
      %v2604 = vpop.f32.mrf.mxu0
      %2605 = vdwg.mxu0
      %2606 = vmatprep.subr.bf16.mxu0 0
      %2607 = vmatpush1.bf16.msra.mxu0 %v2387
      %2608 = vmatprep.subr.bf16.mxu0 0
      %2609 = vmatpush1.bf16.msra.mxu0 %v2386
      %2610 = vmatprep.subr.bf16.mxu0 0
      %2611 = vmatpush1.bf16.msra.mxu0 %v2385
      %2612 = vmatprep.subr.bf16.mxu0 0
      %2613 = vmatpush1.bf16.msra.mxu0 %v2384
      %2614 = vmatprep.subr.bf16.mxu0 0
      %2615 = vmatpush1.bf16.msra.mxu0 %v2383
      %2616 = vmatprep.subr.bf16.mxu0 0
      %2617 = vmatpush1.bf16.msra.mxu0 %v2382
      %2618 = vmatprep.subr.bf16.mxu0 0
      %2619 = vmatpush1.bf16.msra.mxu0 %v2381
      %2620 = vmatprep.subr.bf16.mxu0 0
      %2621 = vmatpush1.bf16.msra.mxu0 %v2380
      %2622 = vmatprep.subr.bf16.mxu0 0
      %2623 = vmatpush2.bf16.msra.mxu0 %v2395
      %2624 = vmatprep.subr.bf16.mxu0 0
      %2625 = vmatpush2.bf16.msra.mxu0 %v2394
      %2626 = vmatprep.subr.bf16.mxu0 0
      %2627 = vmatpush2.bf16.msra.mxu0 %v2393
      %2628 = vmatprep.subr.bf16.mxu0 0
      %2629 = vmatpush2.bf16.msra.mxu0 %v2392
      %2630 = vmatprep.subr.bf16.mxu0 0
      %2631 = vmatpush2.bf16.msra.mxu0 %v2391
      %2632 = vmatprep.subr.bf16.mxu0 0
      %2633 = vmatpush2.bf16.msra.mxu0 %v2390
      %2634 = vmatprep.subr.bf16.mxu0 0
      %2635 = vmatpush2.bf16.msra.mxu0 %v2389
      %2636 = vmatprep.subr.bf16.mxu0 0
      %2637 = vmatpush2.bf16.msra.mxu0 %v2388
      %2638 = vmatprep.mubr.bf16.mxu0 %v2033
      %2639 = vmatmul.mubr.bf16.gmra.mxu0 %v2032
      %v2640 = vpop.f32.mrf.mxu0
      %v2641 = vadd.f32 %v2576, %v2640
      %v2642 = vpop.f32.mrf.mxu0
      %v2643 = vpop.f32.mrf.mxu0
      %v2644 = vadd.f32 %v2579, %v2643
      %v2645 = vpop.f32.mrf.mxu0
      %2646 = vmatprep.mubr.bf16.mxu0 %v2041
      %2647 = vmatmul.mubr.bf16.gmra.mxu0 %v2040
      %v2648 = vpop.f32.mrf.mxu0
      %v2649 = vadd.f32 %v2584, %v2648
      %v2650 = vpop.f32.mrf.mxu0
      %v2651 = vpop.f32.mrf.mxu0
      %v2652 = vadd.f32 %v2587, %v2651
      %v2653 = vpop.f32.mrf.mxu0
      %2654 = vmatprep.mubr.bf16.mxu0 %v2049
      %2655 = vmatmul.mubr.bf16.gmra.mxu0 %v2048
      %v2656 = vpop.f32.mrf.mxu0
      %v2657 = vadd.f32 %v2592, %v2656
      %v2658 = vpop.f32.mrf.mxu0
      %v2659 = vpop.f32.mrf.mxu0
      %v2660 = vadd.f32 %v2595, %v2659
      %v2661 = vpop.f32.mrf.mxu0
      %2662 = vmatprep.mubr.bf16.mxu0 %v2057
      %2663 = vmatmul.mubr.bf16.gmra.mxu0 %v2056
      %v2664 = vpop.f32.mrf.mxu0
      %v2665 = vadd.f32 %v2600, %v2664
      %v2666 = vpop.f32.mrf.mxu0
      %v2667 = vpop.f32.mrf.mxu0
      %v2668 = vadd.f32 %v2603, %v2667
      %v2669 = vpop.f32.mrf.mxu0
      %2670 = vdwg.mxu0
      %2671 = vmatprep.subr.bf16.mxu0 0
      %2672 = vmatpush1.bf16.msra.mxu0 %v2403
      %2673 = vmatprep.subr.bf16.mxu0 0
      %2674 = vmatpush1.bf16.msra.mxu0 %v2402
      %2675 = vmatprep.subr.bf16.mxu0 0
      %2676 = vmatpush1.bf16.msra.mxu0 %v2401
      %2677 = vmatprep.subr.bf16.mxu0 0
      %2678 = vmatpush1.bf16.msra.mxu0 %v2400
      %2679 = vmatprep.subr.bf16.mxu0 0
      %2680 = vmatpush1.bf16.msra.mxu0 %v2399
      %2681 = vmatprep.subr.bf16.mxu0 0
      %2682 = vmatpush1.bf16.msra.mxu0 %v2398
      %2683 = vmatprep.subr.bf16.mxu0 0
      %2684 = vmatpush1.bf16.msra.mxu0 %v2397
      %2685 = vmatprep.subr.bf16.mxu0 0
      %2686 = vmatpush1.bf16.msra.mxu0 %v2396
      %2687 = vmatprep.subr.bf16.mxu0 0
      %2688 = vmatpush2.bf16.msra.mxu0 %v2411
      %2689 = vmatprep.subr.bf16.mxu0 0
      %2690 = vmatpush2.bf16.msra.mxu0 %v2410
      %2691 = vmatprep.subr.bf16.mxu0 0
      %2692 = vmatpush2.bf16.msra.mxu0 %v2409
      %2693 = vmatprep.subr.bf16.mxu0 0
      %2694 = vmatpush2.bf16.msra.mxu0 %v2408
      %2695 = vmatprep.subr.bf16.mxu0 0
      %2696 = vmatpush2.bf16.msra.mxu0 %v2407
      %2697 = vmatprep.subr.bf16.mxu0 0
      %2698 = vmatpush2.bf16.msra.mxu0 %v2406
      %2699 = vmatprep.subr.bf16.mxu0 0
      %2700 = vmatpush2.bf16.msra.mxu0 %v2405
      %2701 = vmatprep.subr.bf16.mxu0 0
      %2702 = vmatpush2.bf16.msra.mxu0 %v2404
      %2703 = vmatprep.mubr.bf16.mxu0 %v2035
      %2704 = vmatmul.mubr.bf16.gmra.mxu0 %v2034
      %v2705 = vpop.f32.mrf.mxu0
      %v2706 = vadd.f32 %v2641, %v2705
      %v2707 = vpop.f32.mrf.mxu0
      %v2708 = vpop.f32.mrf.mxu0
      %v2709 = vadd.f32 %v2644, %v2708
      %v2710 = vpop.f32.mrf.mxu0
      %2711 = vmatprep.mubr.bf16.mxu0 %v2043
      %2712 = vmatmul.mubr.bf16.gmra.mxu0 %v2042
      %v2713 = vpop.f32.mrf.mxu0
      %v2714 = vadd.f32 %v2649, %v2713
      %v2715 = vpop.f32.mrf.mxu0
      %v2716 = vpop.f32.mrf.mxu0
      %v2717 = vadd.f32 %v2652, %v2716
      %v2718 = vpop.f32.mrf.mxu0
      %2719 = vmatprep.mubr.bf16.mxu0 %v2051
      %2720 = vmatmul.mubr.bf16.gmra.mxu0 %v2050
      %v2721 = vpop.f32.mrf.mxu0
      %v2722 = vadd.f32 %v2657, %v2721
      %v2723 = vpop.f32.mrf.mxu0
      %v2724 = vpop.f32.mrf.mxu0
      %v2725 = vadd.f32 %v2660, %v2724
      %v2726 = vpop.f32.mrf.mxu0
      %2727 = vmatprep.mubr.bf16.mxu0 %v2059
      %2728 = vmatmul.mubr.bf16.gmra.mxu0 %v2058
      %v2729 = vpop.f32.mrf.mxu0
      %v2730 = vadd.f32 %v2665, %v2729
      %v2731 = vpop.f32.mrf.mxu0
      %v2732 = vpop.f32.mrf.mxu0
      %v2733 = vadd.f32 %v2668, %v2732
      %v2734 = vpop.f32.mrf.mxu0
      %2735 = vdwg.mxu0
      %v2736 = vld [vmem:[%s213] sm:$0x1]
      %v2738 = vlaneseq
      %v2739 = vshrl.u32 %v2738, 7
      %v2740 = vsub.s32 0, %v2739
      %v2741 = vrot.slane %v2736, %v2740
      %v2743 = vadd.f32 %v2706, %v2741
      %v2744 = vadd.f32 %v2709, %v2741
      %v2745 = vadd.f32 %v2714, %v2741
      %v2746 = vadd.f32 %v2717, %v2741
      %v2747 = vadd.f32 %v2722, %v2741
      %v2748 = vadd.f32 %v2725, %v2741
      %v2749 = vadd.f32 %v2730, %v2741
      %v2750 = vadd.f32 %v2733, %v2741
      %2751 = vst [vmem:[%s221] sm:$0xff] %v2743
      %2752 = vst [vmem:[%s221 + $0x8] sm:$0xff] %v2744
      %2753 = vst [vmem:[%s221 + $0x10] sm:$0xff] %v2745
      %2754 = vst [vmem:[%s221 + $0x18] sm:$0xff] %v2746
      %2755 = vst [vmem:[%s221 + $0x20] sm:$0xff] %v2747
      %2756 = vst [vmem:[%s221 + $0x28] sm:$0xff] %v2748
      %2757 = vst [vmem:[%s221 + $0x30] sm:$0xff] %v2749
      %2758 = vst [vmem:[%s221 + $0x38] sm:$0xff] %v2750
      %p2759 = scmp.lt.s32.totalorder %s18, 1
      %s2760 = scalar_select %p2759, %s18, 1
      %p2761 = scmp.lt.s32.totalorder %s19, 0
      %s2762 = scalar_select %p2761, %s19, 0
      %s2763 = smul.addr %s2760, 8
      %s2764 = sadd.s32 %s2762, %s2763
      %s2765 = smul.addr %s2764, 8
      %s2766 = scalar_lea.vmem %s3, %s2765
      // Predicated region
      $region37: #{down_blk_forward.5} parent=31 // pred_check
        %p2767 = pneg %p124
      $region38: #{down_blk_forward.5} parent=31 // pred_check_branch
        %2769 = sbr.rel (%p2767) target = $region40
      $region39: #{down_blk_forward.5} parent=31 // pred_region
        _
      $region40: #{down_blk_forward.5} parent=31 // pred_fallthru
        _
    $region32: #{down_blk_forward.5} parent=5 // pred_fallthru
      _
    %p2770 = scmp.le.s32.totalorder 2, %s9
    // Predicated region
    $region41: #{down_blk_forward.5} parent=5 // pred_check
      %p2771 = pneg %p2770
    $region42: #{down_blk_forward.5} parent=5 // pred_check_branch
      %2773 = sbr.rel (%p2771) target = $region44
    $region43: #{down_blk_forward.5} parent=5 // pred_region
      %s2774 = ssub.s32 %s9, 2
      // Predicated region
      $region45: #{down_blk_forward.5} parent=43 // pred_check
        %p2775 = pneg %p130
      $region46: #{down_blk_forward.5} parent=43 // pred_check_branch
        %2777 = sbr.rel (%p2775) target = $region48
      $region47: #{down_blk_forward.5} parent=43 // pred_region
        %p2778 = scmp.lt.s32.totalorder %s20, 1
        %s2779 = scalar_select %p2778, %s20, 1
        %p2780 = scmp.lt.s32.totalorder %s21, 0
        %s2781 = scalar_select %p2780, %s21, 0
        %s2782 = smul.addr %s2779, 8
        %s2783 = sadd.s32 %s2781, %s2782
        %s2784 = smul.addr %s2783, 8
        %s2785 = scalar_lea.vmem %s3, %s2784
      $region48: #{down_blk_forward.5} parent=43 // pred_fallthru
        _
    $region44: #{down_blk_forward.5} parent=5 // pred_fallthru
      _
  $region6: #{down_blk_forward.5} parent=0 // loop_footer
    %s13 = sadd.s32 1, %s9
  $region7: #{down_blk_forward.5} parent=0 // loop_footer_branch
    %8 = sbr.rel target = $region3
  $region8: #{down_blk_forward.5} parent=0 // loop_exit
    _

</llo_original>
